<compile_context>
chip_gen: v5e
topology: v5e:2x2
jax: 0.10.0
libtpu: 0.0.40
codegen_flags: <defaults>
</compile_context>

<pallas_src>
import jax
import jax.numpy as jnp
from jax.experimental import pallas as pl
from jax.experimental.pallas import tpu as pltpu


# ----------------------------- Pallas kernels ------------------------------ #

def conv_tower_kernel(x_ref, w1_ref, b1_ref, w2_ref, b2_ref, o_ref, xp1, xp2):
    """Fused conv1(3x3,pad1)+ReLU -> conv2(3x3,pad1)+ReLU.

    x_ref : (N, H, W, C0)   NHWC input
    w1_ref: (9*C0, C1)      tap-major im2col weight
    b1_ref: (1, C1)
    w2_ref: (9*C1, C2)
    b2_ref: (1, C2)
    o_ref : (N*H*W, C2)     bf16; rows are (n, h, w)-major  (== NHWC flatten)
    xp1   : (N, H+2, W+2, C0) VMEM scratch (zero halo)
    xp2   : (N, H+2, W+2, C1) VMEM scratch (zero halo)
    """
    N, H, W, C0 = x_ref.shape
    C1 = w1_ref.shape[1]

    def im2col(xp, cin):
        # 9 shifted views concatenated along lanes -> one large-K matmul.
        cols = [xp[:, kh:kh + H, kw:kw + W, :].reshape(N * H * W, cin)
                for kh in range(3) for kw in range(3)]
        return jnp.concatenate(cols, axis=1)          # (N*H*W, 9*cin)

    # ---- conv1: zero halo in VMEM scratch, single K=9*C0 matmul ----
    xp1[...] = jnp.zeros_like(xp1)
    xp1[:, 1:H + 1, 1:W + 1, :] = x_ref[...]
    p1 = im2col(xp1[...], C0)
    h1 = jnp.dot(p1, w1_ref[...], preferred_element_type=jnp.float32) + b1_ref[...]
    h1 = jnp.maximum(h1, 0.0)

    # ---- conv2: single K=9*C1 matmul ----
    xp2[...] = jnp.zeros_like(xp2)
    xp2[:, 1:H + 1, 1:W + 1, :] = h1.reshape(N, H, W, C1)
    p2 = im2col(xp2[...], C1)
    h2 = jnp.dot(p2, w2_ref[...], preferred_element_type=jnp.float32) + b2_ref[...]
    o_ref[...] = jnp.maximum(h2, 0.0).astype(o_ref.dtype)


def fc_heads_kernel(x_ref, ws_ref, bs_ref, wh_ref, out_ref, acc_ref):
    """fc_shared (K tiled over grid axis 1) + ReLU + fused actor/critic heads.

    Grid: (HS, KB) — axis 0 ("parallel") splits the 128 hidden units across
    cores, axis 1 ("arbitrary") tiles the F reduction.

    x_ref : (N, BK)        bf16 feature block (NHWC-flattened conv2 output)
    ws_ref: (1, BK, HID)   bf16 fc weight block (this core's hidden slice)
    bs_ref: (1, 1, HID)    f32 fc bias slice
    wh_ref: (1, HID, A+1)  f32 fused [actor | critic] head weight slice
    out_ref:(1, N, A+1)    f32 per-core partial head output
    acc_ref:(N, HID)       f32 accumulator scratch
    """
    k = pl.program_id(1)

    @pl.when(k == 0)
    def _():
        acc_ref[...] = jnp.zeros_like(acc_ref)

    acc_ref[...] += jnp.dot(x_ref[...], ws_ref[0],
                            preferred_element_type=jnp.float32)

    @pl.when(k == pl.num_programs(1) - 1)
    def _():
        h = jnp.maximum(acc_ref[...] + bs_ref[0], 0.0)          # (N, HID)
        out_ref[0] = jnp.dot(h, wh_ref[0], preferred_element_type=jnp.float32)


# --------------------------- parameter preparation -------------------------- #

def prepare_params(p):
    """One-time re-layout of torch-style weights for the kernels."""
    HS = 2                                         # hidden split (2 TCs on v7x)
    c0 = p["conv1_w"].shape[1]
    c1 = p["conv1_w"].shape[0]                     # 32
    c2 = p["conv2_w"].shape[0]                     # 64
    hid = p["fc_w"].shape[0]                       # 128
    flat = p["fc_w"].shape[1]                      # c2 * H * W
    hw = flat // c2
    A = p["actor_w"].shape[0]

    # conv weights: torch (Cout,Cin,3,3) -> (kh,kw,Cin,Cout) -> (9*Cin, Cout)
    w1 = jnp.transpose(p["conv1_w"], (2, 3, 1, 0)).reshape(9 * c0, c1)
    w2 = jnp.transpose(p["conv2_w"], (2, 3, 1, 0)).reshape(9 * c1, c2)

    # fc weight: fold the NCHW->NHWC flatten permutation into the columns,
    # transpose to (F, hid), split hidden across HS cores, cast to bf16.
    ws = p["fc_w"].reshape(hid, c2, hw).transpose(0, 2, 1).reshape(hid, flat)
    ws = ws.T.reshape(flat, HS, hid // HS).transpose(1, 0, 2)   # (HS, F, hid/HS)
    ws = ws.astype(jnp.bfloat16)
    bs = p["fc_b"].reshape(HS, 1, hid // HS)

    # actor & critic heads fused into one (hid, A+1) matrix, split along hidden.
    wh = jnp.concatenate([p["actor_w"].T, p["critic_w"].T], axis=1)
    wh = wh.reshape(HS, hid // HS, A + 1)
    bh = jnp.concatenate([p["actor_b"], p["critic_b"]]).reshape(1, A + 1)

    return {"w1": w1, "b1": p["conv1_b"].reshape(1, c1),
            "w2": w2, "b2": p["conv2_b"].reshape(1, c2),
            "ws": ws, "bs": bs, "wh": wh, "bh": bh}


# ------------------------------- forward pass ------------------------------- #

def _pick_k_block(f):
    for bk in (8192, 4096, 2048, 1024, 512, 256, 128):
        if f % bk == 0:
            return bk
    return f


def actor_critic_forward(state_nchw, prep):
    """state_nchw: (N, C, H, W) f32 -> (action_logits (N, A), value (N, 1))."""
    N, C0, H, W = state_nchw.shape
    C1 = prep["w1"].shape[1]
    C2 = prep["w2"].shape[1]
    x = jnp.transpose(state_nchw, (0, 2, 3, 1))                 # NCHW -> NHWC (tiny)

    # ---- fused conv tower ----
    feat = pl.pallas_call(
        conv_tower_kernel,
        grid=(1,),
        in_specs=[
            pl.BlockSpec((N, H, W, C0), lambda i: (0, 0, 0, 0)),
            pl.BlockSpec(prep["w1"].shape, lambda i: (0, 0)),
            pl.BlockSpec(prep["b1"].shape, lambda i: (0, 0)),
            pl.BlockSpec(prep["w2"].shape, lambda i: (0, 0)),
            pl.BlockSpec(prep["b2"].shape, lambda i: (0, 0)),
        ],
        out_specs=pl.BlockSpec((N * H * W, C2), lambda i: (0, 0)),
        out_shape=jax.ShapeDtypeStruct((N * H * W, C2), jnp.bfloat16),
        scratch_shapes=[
            pltpu.VMEM((N, H + 2, W + 2, C0), jnp.float32),
            pltpu.VMEM((N, H + 2, W + 2, C1), jnp.float32),
        ],
        compiler_params=pltpu.CompilerParams(vmem_limit_bytes=32 << 20),
    )(x, prep["w1"], prep["b1"], prep["w2"], prep["b2"])

    # NHWC flatten is a free reshape; the matching permutation lives in ws.
    F = H * W * C2
    x_flat = feat.reshape(N, F)

    HS, _, HID = prep["bs"].shape
    A1 = prep["wh"].shape[2]
    BK = _pick_k_block(F)
    KB = F // BK

    # ---- fc_shared + heads, K tiled & pipelined, hidden split across cores ----
    partial = pl.pallas_call(
        fc_heads_kernel,
        grid=(HS, KB),
        in_specs=[
            pl.BlockSpec((N, BK), lambda c, k: (0, k)),
            pl.BlockSpec((1, BK, HID), lambda c, k: (c, k, 0)),
            pl.BlockSpec((1, 1, HID), lambda c, k: (c, 0, 0)),
            pl.BlockSpec((1, HID, A1), lambda c, k: (c, 0, 0)),
        ],
        out_specs=pl.BlockSpec((1, N, A1), lambda c, k: (c, 0, 0)),
        out_shape=jax.ShapeDtypeStruct((HS, N, A1), jnp.float32),
        scratch_shapes=[pltpu.VMEM((N, HID), jnp.float32)],
        compiler_params=pltpu.CompilerParams(
            dimension_semantics=("parallel", "arbitrary"),
            vmem_limit_bytes=32 << 20),
    )(x_flat, prep["ws"], prep["bs"], prep["wh"])

    head = partial.sum(axis=0) + prep["bh"]                     # (N, A+1) tiny combine
    A = A1 - 1
    return head[:, :A], head[:, A:A1]


# --------------------------- parameter construction ------------------------ #

def init_params(key, input_dims, n_actions):
    C, H, W = input_dims
    flat = 64 * H * W

    def uni(k, shape, fan_in):
        bound = 1.0 / (fan_in ** 0.5)
        return jax.random.uniform(k, shape, jnp.float32, -bound, bound)

    ks = jax.random.split(key, 10)
    return {
        "conv1_w": uni(ks[0], (32, C, 3, 3), C * 9),
        "conv1_b": uni(ks[1], (32,), C * 9),
        "conv2_w": uni(ks[2], (64, 32, 3, 3), 32 * 9),
        "conv2_b": uni(ks[3], (64,), 32 * 9),
        "fc_w":    uni(ks[4], (128, flat), flat),
        "fc_b":    uni(ks[5], (128,), flat),
        "actor_w": uni(ks[6], (n_actions, 128), 128),
        "actor_b": uni(ks[7], (n_actions,), 128),
        "critic_w": uni(ks[8], (1, 128), 128),
        "critic_b": uni(ks[9], (1,), 128),
    }


# ------------------------------ pure-JAX reference ------------------------- #

def reference_forward(state, p):
    def conv(x, w, b):
        y = jax.lax.conv_general_dilated(
            x, w, window_strides=(1, 1), padding="SAME",
            dimension_numbers=("NCHW", "OIHW", "NCHW"))
        return jax.nn.relu(y + b[None, :, None, None])
    x = conv(state, p["conv1_w"], p["conv1_b"])
    x = conv(x, p["conv2_w"], p["conv2_b"])
    x = x.reshape(x.shape[0], -1)
    h = jax.nn.relu(x @ p["fc_w"].T + p["fc_b"])
    return h @ p["actor_w"].T + p["actor_b"], h @ p["critic_w"].T + p["critic_b"]


# ----------------------------------- main ----------------------------------- #

if __name__ == "__main__":
    key = jax.random.PRNGKey(0)
    input_dims = (4, 16, 16)     # (channels, height, width)
    n_actions = 6
    batch = 2

    pkey, skey = jax.random.split(key)
    params = init_params(pkey, input_dims, n_actions)
    state = jax.random.normal(skey, (batch,) + input_dims, jnp.float32)

    prep = prepare_params(params)                # one-time weight re-layout (bf16 fc)
    fwd = jax.jit(actor_critic_forward)

    logits, value = fwd(state, prep)
    jax.block_until_ready((logits, value))

    ref_logits, ref_value = reference_forward(state, params)
    assert logits.shape == (batch, n_actions) and value.shape == (batch, 1)
    # bf16 fc weight / bf16 features -> compare at a correspondingly relaxed tol.
    assert jnp.allclose(logits, ref_logits, atol=1e-2, rtol=1e-2)
    assert jnp.allclose(value, ref_value, atol=1e-2, rtol=1e-2)

    print("KERNEL_OK")
</pallas_src>

<mosaic_0001>
module attributes {stable_mosaic.version = 11 : i64} {
  func.func @fc_heads_kernel(%arg0: i32, %arg1: i32, %arg2: memref<2x8192xbf16, #tpu.memory_space<vmem>>, %arg3: memref<1x8192x64xbf16, #tpu.memory_space<vmem>>, %arg4: memref<1x1x64xf32, #tpu.memory_space<vmem>>, %arg5: memref<1x64x7xf32, #tpu.memory_space<vmem>>, %arg6: memref<1x2x7xf32, #tpu.memory_space<vmem>>, %arg7: memref<2x64xf32, #tpu.memory_space<vmem>>) attributes {dimension_semantics = [#tpu.dimension_semantics<parallel>, #tpu.dimension_semantics<arbitrary>], iteration_bounds = array<i64: 2, 2>, scalar_prefetch = 0 : i64, scratch_operands = 1 : i64, tpu.core_type = #tpu.core_type<tc>, window_params = [{transform_indices = @transform_0, window_bounds = array<i64: 2, 8192>}, {transform_indices = @transform_1, window_bounds = array<i64: 1, 8192, 64>}, {transform_indices = @transform_2, window_bounds = array<i64: 1, 1, 64>}, {transform_indices = @transform_3, window_bounds = array<i64: 1, 64, 7>}, {transform_indices = @transform_4, window_bounds = array<i64: 1, 2, 7>}]} {
    %c0_i32 = arith.constant 0 : i32
    %0 = arith.cmpi eq, %arg1, %c0_i32 : i32
    %1 = arith.extui %0 : i1 to i32
    %c0_i32_0 = arith.constant 0 : i32
    %2 = arith.cmpi ne, %1, %c0_i32_0 : i32
    scf.if %2 {
      %cst_10 = arith.constant 0.000000e+00 : f32
      %13 = vector.broadcast %cst_10 : f32 to vector<2x64xf32>
      %c0_11 = arith.constant 0 : index
      %c0_12 = arith.constant 0 : index
      %14 = vector.load %arg7[%c0_11, %c0_12] : memref<2x64xf32, #tpu.memory_space<vmem>>, vector<2x64xf32>
      tpu.vector_store %arg7[%c0_11, %c0_12], %13 {strides = array<i32>} : memref<2x64xf32, #tpu.memory_space<vmem>>, vector<2x64xf32>,
    } else {
    }
    %c0 = arith.constant 0 : index
    %c0_1 = arith.constant 0 : index
    %3 = vector.load %arg7[%c0, %c0_1] : memref<2x64xf32, #tpu.memory_space<vmem>>, vector<2x64xf32>
    %c0_2 = arith.constant 0 : index
    %c0_3 = arith.constant 0 : index
    %4 = vector.load %arg2[%c0_2, %c0_3] : memref<2x8192xbf16, #tpu.memory_space<vmem>>, vector<2x8192xbf16>
    %c0_4 = arith.constant 0 : index
    %c0_5 = arith.constant 0 : index
    %c0_6 = arith.constant 0 : index
    %5 = vector.load %arg3[%c0_4, %c0_5, %c0_6] : memref<1x8192x64xbf16, #tpu.memory_space<vmem>>, vector<1x8192x64xbf16>
    %6 = vector.shape_cast %5 : vector<1x8192x64xbf16> to vector<8192x64xbf16>
    %cst = arith.constant dense<0.000000e+00> : vector<2x64xf32>
    %7 = tpu.matmul %4, %6, %cst {dimension_numbers = #tpu.dot_dimension_numbers<[1], [0], [0], [1], [0, 0, 1, 1], [], []>} : vector<2x8192xbf16>, vector<8192x64xbf16>, vector<2x64xf32> -> vector<2x64xf32>
    %8 = arith.addf %3, %7 : vector<2x64xf32>
    %c0_7 = arith.constant 0 : index
    %c0_8 = arith.constant 0 : index
    %9 = vector.load %arg7[%c0_7, %c0_8] : memref<2x64xf32, #tpu.memory_space<vmem>>, vector<2x64xf32>
    tpu.vector_store %arg7[%c0_7, %c0_8], %8 {strides = array<i32>} : memref<2x64xf32, #tpu.memory_space<vmem>>, vector<2x64xf32>,
    %c1_i32 = arith.constant 1 : i32
    %10 = arith.cmpi eq, %arg1, %c1_i32 : i32
    %11 = arith.extui %10 : i1 to i32
    %c0_i32_9 = arith.constant 0 : i32
    %12 = arith.cmpi ne, %11, %c0_i32_9 : i32
    scf.if %12 {
      %c0_10 = arith.constant 0 : index
      %c0_11 = arith.constant 0 : index
      %13 = vector.load %arg7[%c0_10, %c0_11] : memref<2x64xf32, #tpu.memory_space<vmem>>, vector<2x64xf32>
      %c0_12 = arith.constant 0 : index
      %c0_13 = arith.constant 0 : index
      %c0_14 = arith.constant 0 : index
      %14 = vector.load %arg4[%c0_12, %c0_13, %c0_14] : memref<1x1x64xf32, #tpu.memory_space<vmem>>, vector<1x1x64xf32>
      %15 = vector.shape_cast %14 : vector<1x1x64xf32> to vector<1x64xf32>
      %16 = vector.broadcast %15 : vector<1x64xf32> to vector<2x64xf32>
      %17 = arith.addf %13, %16 : vector<2x64xf32>
      %cst_15 = arith.constant 0.000000e+00 : f32
      %18 = vector.broadcast %cst_15 : f32 to vector<2x64xf32>
      %19 = arith.maximumf %17, %18 : vector<2x64xf32>
      %c0_16 = arith.constant 0 : index
      %c0_17 = arith.constant 0 : index
      %c0_18 = arith.constant 0 : index
      %20 = vector.load %arg5[%c0_16, %c0_17, %c0_18] : memref<1x64x7xf32, #tpu.memory_space<vmem>>, vector<1x64x7xf32>
      %21 = vector.shape_cast %20 : vector<1x64x7xf32> to vector<64x7xf32>
      %cst_19 = arith.constant dense<0.000000e+00> : vector<2x7xf32>
      %22 = tpu.matmul %19, %21, %cst_19 {dimension_numbers = #tpu.dot_dimension_numbers<[1], [0], [0], [1], [0, 0, 1, 1], [], []>} : vector<2x64xf32>, vector<64x7xf32>, vector<2x7xf32> -> vector<2x7xf32>
      %c0_20 = arith.constant 0 : index
      %c0_21 = arith.constant 0 : index
      %c0_22 = arith.constant 0 : index
      %23 = vector.load %arg6[%c0_20, %c0_21, %c0_22] : memref<1x2x7xf32, #tpu.memory_space<vmem>>, vector<1x2x7xf32>
      %24 = vector.shape_cast %23 : vector<1x2x7xf32> to vector<2x7xf32>
      %25 = vector.shape_cast %22 : vector<2x7xf32> to vector<1x2x7xf32>
      tpu.vector_store %arg6[%c0_20, %c0_21, %c0_22], %25 {strides = array<i32>} : memref<1x2x7xf32, #tpu.memory_space<vmem>>, vector<1x2x7xf32>,
    } else {
    }
    return
  }
  func.func @transform_0(%arg0: i32, %arg1: i32) -> (i32, i32) {
    %c0_i32 = arith.constant 0 : i32
    %c0_i32_0 = arith.constant 0 : i32
    return %c0_i32, %arg1 : i32, i32
  }
  func.func @transform_1(%arg0: i32, %arg1: i32) -> (i32, i32, i32) {
    %c0_i32 = arith.constant 0 : i32
    %c0_i32_0 = arith.constant 0 : i32
    return %arg0, %arg1, %c0_i32 : i32, i32, i32
  }
  func.func @transform_2(%arg0: i32, %arg1: i32) -> (i32, i32, i32) {
    %c0_i32 = arith.constant 0 : i32
    %c0_i32_0 = arith.constant 0 : i32
    %c0_i32_1 = arith.constant 0 : i32
    return %arg0, %c0_i32, %c0_i32_0 : i32, i32, i32
  }
  func.func @transform_3(%arg0: i32, %arg1: i32) -> (i32, i32, i32) {
    %c0_i32 = arith.constant 0 : i32
    %c0_i32_0 = arith.constant 0 : i32
    %c0_i32_1 = arith.constant 0 : i32
    return %arg0, %c0_i32, %c0_i32_0 : i32, i32, i32
  }
  func.func @transform_4(%arg0: i32, %arg1: i32) -> (i32, i32, i32) {
    %c0_i32 = arith.constant 0 : i32
    %c0_i32_0 = arith.constant 0 : i32
    %c0_i32_1 = arith.constant 0 : i32
    return %arg0, %c0_i32, %c0_i32_0 : i32, i32, i32
  }
}

module attributes {stable_mosaic.version = 11 : i64} {
  func.func @conv_tower_kernel(%arg0: i32, %arg1: memref<2x16x16x4xf32, #tpu.memory_space<vmem>>, %arg2: memref<36x32xf32, #tpu.memory_space<vmem>>, %arg3: memref<1x32xf32, #tpu.memory_space<vmem>>, %arg4: memref<288x64xf32, #tpu.memory_space<vmem>>, %arg5: memref<1x64xf32, #tpu.memory_space<vmem>>, %arg6: memref<512x64xbf16, #tpu.memory_space<vmem>>, %arg7: memref<2x18x18x4xf32, #tpu.memory_space<vmem>>, %arg8: memref<2x18x18x32xf32, #tpu.memory_space<vmem>>) attributes {dimension_semantics = [#tpu.dimension_semantics<arbitrary>], iteration_bounds = array<i64: 1>, scalar_prefetch = 0 : i64, scratch_operands = 2 : i64, tpu.core_type = #tpu.core_type<tc>, window_params = [{pipeline_mode = #tpu.pipeline_mode<synchronous>, transform_indices = @transform_0, window_bounds = array<i64: 2, 16, 16, 4>}, {pipeline_mode = #tpu.pipeline_mode<synchronous>, transform_indices = @transform_1, window_bounds = array<i64: 36, 32>}, {pipeline_mode = #tpu.pipeline_mode<synchronous>, transform_indices = @transform_2, window_bounds = array<i64: 1, 32>}, {pipeline_mode = #tpu.pipeline_mode<synchronous>, transform_indices = @transform_3, window_bounds = array<i64: 288, 64>}, {pipeline_mode = #tpu.pipeline_mode<synchronous>, transform_indices = @transform_4, window_bounds = array<i64: 1, 64>}, {pipeline_mode = #tpu.pipeline_mode<synchronous>, transform_indices = @transform_5, window_bounds = array<i64: 512, 64>}]} {
    %cst = arith.constant 0.000000e+00 : f32
    %0 = vector.broadcast %cst : f32 to vector<2x18x18x4xf32>
    %c0 = arith.constant 0 : index
    %c0_0 = arith.constant 0 : index
    %c0_1 = arith.constant 0 : index
    %c0_2 = arith.constant 0 : index
    %1 = vector.load %arg7[%c0, %c0_0, %c0_1, %c0_2] : memref<2x18x18x4xf32, #tpu.memory_space<vmem>>, vector<2x18x18x4xf32>
    tpu.vector_store %arg7[%c0, %c0_0, %c0_1, %c0_2], %0 {strides = array<i32>} : memref<2x18x18x4xf32, #tpu.memory_space<vmem>>, vector<2x18x18x4xf32>,
    %c0_3 = arith.constant 0 : index
    %c0_4 = arith.constant 0 : index
    %c0_5 = arith.constant 0 : index
    %c0_6 = arith.constant 0 : index
    %2 = vector.load %arg1[%c0_3, %c0_4, %c0_5, %c0_6] : memref<2x16x16x4xf32, #tpu.memory_space<vmem>>, vector<2x16x16x4xf32>
    %c0_7 = arith.constant 0 : index
    %c1 = arith.constant 1 : index
    %c1_8 = arith.constant 1 : index
    %c0_9 = arith.constant 0 : index
    %3 = vector.load %arg7[%c0_7, %c1, %c1_8, %c0_9] : memref<2x18x18x4xf32, #tpu.memory_space<vmem>>, vector<2x16x16x4xf32>
    tpu.vector_store %arg7[%c0_7, %c1, %c1_8, %c0_9], %2 {strides = array<i32>} : memref<2x18x18x4xf32, #tpu.memory_space<vmem>>, vector<2x16x16x4xf32>,
    %c0_10 = arith.constant 0 : index
    %c0_11 = arith.constant 0 : index
    %c0_12 = arith.constant 0 : index
    %c0_13 = arith.constant 0 : index
    %4 = vector.load %arg7[%c0_10, %c0_11, %c0_12, %c0_13] : memref<2x18x18x4xf32, #tpu.memory_space<vmem>>, vector<2x18x18x4xf32>
    %5 = vector.extract_strided_slice %4 {offsets = [0, 0, 0, 0], sizes = [2, 16, 16, 4], strides = [1, 1, 1, 1]} : vector<2x18x18x4xf32> to vector<2x16x16x4xf32>
    %6 = vector.shape_cast %5 : vector<2x16x16x4xf32> to vector<512x4xf32>
    %7 = vector.extract_strided_slice %4 {offsets = [0, 0, 1, 0], sizes = [2, 16, 16, 4], strides = [1, 1, 1, 1]} : vector<2x18x18x4xf32> to vector<2x16x16x4xf32>
    %8 = vector.shape_cast %7 : vector<2x16x16x4xf32> to vector<512x4xf32>
    %9 = vector.extract_strided_slice %4 {offsets = [0, 0, 2, 0], sizes = [2, 16, 16, 4], strides = [1, 1, 1, 1]} : vector<2x18x18x4xf32> to vector<2x16x16x4xf32>
    %10 = vector.shape_cast %9 : vector<2x16x16x4xf32> to vector<512x4xf32>
    %11 = vector.extract_strided_slice %4 {offsets = [0, 1, 0, 0], sizes = [2, 16, 16, 4], strides = [1, 1, 1, 1]} : vector<2x18x18x4xf32> to vector<2x16x16x4xf32>
    %12 = vector.shape_cast %11 : vector<2x16x16x4xf32> to vector<512x4xf32>
    %13 = vector.extract_strided_slice %4 {offsets = [0, 1, 1, 0], sizes = [2, 16, 16, 4], strides = [1, 1, 1, 1]} : vector<2x18x18x4xf32> to vector<2x16x16x4xf32>
    %14 = vector.shape_cast %13 : vector<2x16x16x4xf32> to vector<512x4xf32>
    %15 = vector.extract_strided_slice %4 {offsets = [0, 1, 2, 0], sizes = [2, 16, 16, 4], strides = [1, 1, 1, 1]} : vector<2x18x18x4xf32> to vector<2x16x16x4xf32>
    %16 = vector.shape_cast %15 : vector<2x16x16x4xf32> to vector<512x4xf32>
    %17 = vector.extract_strided_slice %4 {offsets = [0, 2, 0, 0], sizes = [2, 16, 16, 4], strides = [1, 1, 1, 1]} : vector<2x18x18x4xf32> to vector<2x16x16x4xf32>
    %18 = vector.shape_cast %17 : vector<2x16x16x4xf32> to vector<512x4xf32>
    %19 = vector.extract_strided_slice %4 {offsets = [0, 2, 1, 0], sizes = [2, 16, 16, 4], strides = [1, 1, 1, 1]} : vector<2x18x18x4xf32> to vector<2x16x16x4xf32>
    %20 = vector.shape_cast %19 : vector<2x16x16x4xf32> to vector<512x4xf32>
    %21 = vector.extract_strided_slice %4 {offsets = [0, 2, 2, 0], sizes = [2, 16, 16, 4], strides = [1, 1, 1, 1]} : vector<2x18x18x4xf32> to vector<2x16x16x4xf32>
    %22 = vector.shape_cast %21 : vector<2x16x16x4xf32> to vector<512x4xf32>
    %23 = tpu.concatenate %6, %8, %10, %12, %14, %16, %18, %20, %22 in 1 : vector<512x4xf32>, vector<512x4xf32>, vector<512x4xf32>, vector<512x4xf32>, vector<512x4xf32>, vector<512x4xf32>, vector<512x4xf32>, vector<512x4xf32>, vector<512x4xf32> -> vector<512x36xf32>
    %c0_14 = arith.constant 0 : index
    %c0_15 = arith.constant 0 : index
    %24 = vector.load %arg2[%c0_14, %c0_15] : memref<36x32xf32, #tpu.memory_space<vmem>>, vector<36x32xf32>
    %cst_16 = arith.constant dense<0.000000e+00> : vector<512x32xf32>
    %25 = tpu.matmul %23, %24, %cst_16 {dimension_numbers = #tpu.dot_dimension_numbers<[1], [0], [0], [1], [0, 0, 1, 1], [], []>} : vector<512x36xf32>, vector<36x32xf32>, vector<512x32xf32> -> vector<512x32xf32>
    %c0_17 = arith.constant 0 : index
    %c0_18 = arith.constant 0 : index
    %26 = vector.load %arg3[%c0_17, %c0_18] : memref<1x32xf32, #tpu.memory_space<vmem>>, vector<1x32xf32>
    %27 = vector.broadcast %26 : vector<1x32xf32> to vector<512x32xf32>
    %28 = arith.addf %25, %27 : vector<512x32xf32>
    %cst_19 = arith.constant 0.000000e+00 : f32
    %29 = vector.broadcast %cst_19 : f32 to vector<512x32xf32>
    %30 = arith.maximumf %28, %29 : vector<512x32xf32>
    %cst_20 = arith.constant 0.000000e+00 : f32
    %31 = vector.broadcast %cst_20 : f32 to vector<2x18x18x32xf32>
    %c0_21 = arith.constant 0 : index
    %c0_22 = arith.constant 0 : index
    %c0_23 = arith.constant 0 : index
    %c0_24 = arith.constant 0 : index
    %32 = vector.load %arg8[%c0_21, %c0_22, %c0_23, %c0_24] : memref<2x18x18x32xf32, #tpu.memory_space<vmem>>, vector<2x18x18x32xf32>
    tpu.vector_store %arg8[%c0_21, %c0_22, %c0_23, %c0_24], %31 {strides = array<i32>} : memref<2x18x18x32xf32, #tpu.memory_space<vmem>>, vector<2x18x18x32xf32>,
    %33 = vector.shape_cast %30 : vector<512x32xf32> to vector<2x16x16x32xf32>
    %c0_25 = arith.constant 0 : index
    %c1_26 = arith.constant 1 : index
    %c1_27 = arith.constant 1 : index
    %c0_28 = arith.constant 0 : index
    %34 = vector.load %arg8[%c0_25, %c1_26, %c1_27, %c0_28] : memref<2x18x18x32xf32, #tpu.memory_space<vmem>>, vector<2x16x16x32xf32>
    tpu.vector_store %arg8[%c0_25, %c1_26, %c1_27, %c0_28], %33 {strides = array<i32>} : memref<2x18x18x32xf32, #tpu.memory_space<vmem>>, vector<2x16x16x32xf32>,
    %c0_29 = arith.constant 0 : index
    %c0_30 = arith.constant 0 : index
    %c0_31 = arith.constant 0 : index
    %c0_32 = arith.constant 0 : index
    %35 = vector.load %arg8[%c0_29, %c0_30, %c0_31, %c0_32] : memref<2x18x18x32xf32, #tpu.memory_space<vmem>>, vector<2x18x18x32xf32>
    %36 = vector.extract_strided_slice %35 {offsets = [0, 0, 0, 0], sizes = [2, 16, 16, 32], strides = [1, 1, 1, 1]} : vector<2x18x18x32xf32> to vector<2x16x16x32xf32>
    %37 = vector.shape_cast %36 : vector<2x16x16x32xf32> to vector<512x32xf32>
    %38 = vector.extract_strided_slice %35 {offsets = [0, 0, 1, 0], sizes = [2, 16, 16, 32], strides = [1, 1, 1, 1]} : vector<2x18x18x32xf32> to vector<2x16x16x32xf32>
    %39 = vector.shape_cast %38 : vector<2x16x16x32xf32> to vector<512x32xf32>
    %40 = vector.extract_strided_slice %35 {offsets = [0, 0, 2, 0], sizes = [2, 16, 16, 32], strides = [1, 1, 1, 1]} : vector<2x18x18x32xf32> to vector<2x16x16x32xf32>
    %41 = vector.shape_cast %40 : vector<2x16x16x32xf32> to vector<512x32xf32>
    %42 = vector.extract_strided_slice %35 {offsets = [0, 1, 0, 0], sizes = [2, 16, 16, 32], strides = [1, 1, 1, 1]} : vector<2x18x18x32xf32> to vector<2x16x16x32xf32>
    %43 = vector.shape_cast %42 : vector<2x16x16x32xf32> to vector<512x32xf32>
    %44 = vector.extract_strided_slice %35 {offsets = [0, 1, 1, 0], sizes = [2, 16, 16, 32], strides = [1, 1, 1, 1]} : vector<2x18x18x32xf32> to vector<2x16x16x32xf32>
    %45 = vector.shape_cast %44 : vector<2x16x16x32xf32> to vector<512x32xf32>
    %46 = vector.extract_strided_slice %35 {offsets = [0, 1, 2, 0], sizes = [2, 16, 16, 32], strides = [1, 1, 1, 1]} : vector<2x18x18x32xf32> to vector<2x16x16x32xf32>
    %47 = vector.shape_cast %46 : vector<2x16x16x32xf32> to vector<512x32xf32>
    %48 = vector.extract_strided_slice %35 {offsets = [0, 2, 0, 0], sizes = [2, 16, 16, 32], strides = [1, 1, 1, 1]} : vector<2x18x18x32xf32> to vector<2x16x16x32xf32>
    %49 = vector.shape_cast %48 : vector<2x16x16x32xf32> to vector<512x32xf32>
    %50 = vector.extract_strided_slice %35 {offsets = [0, 2, 1, 0], sizes = [2, 16, 16, 32], strides = [1, 1, 1, 1]} : vector<2x18x18x32xf32> to vector<2x16x16x32xf32>
    %51 = vector.shape_cast %50 : vector<2x16x16x32xf32> to vector<512x32xf32>
    %52 = vector.extract_strided_slice %35 {offsets = [0, 2, 2, 0], sizes = [2, 16, 16, 32], strides = [1, 1, 1, 1]} : vector<2x18x18x32xf32> to vector<2x16x16x32xf32>
    %53 = vector.shape_cast %52 : vector<2x16x16x32xf32> to vector<512x32xf32>
    %54 = tpu.concatenate %37, %39, %41, %43, %45, %47, %49, %51, %53 in 1 : vector<512x32xf32>, vector<512x32xf32>, vector<512x32xf32>, vector<512x32xf32>, vector<512x32xf32>, vector<512x32xf32>, vector<512x32xf32>, vector<512x32xf32>, vector<512x32xf32> -> vector<512x288xf32>
    %c0_33 = arith.constant 0 : index
    %c0_34 = arith.constant 0 : index
    %55 = vector.load %arg4[%c0_33, %c0_34] : memref<288x64xf32, #tpu.memory_space<vmem>>, vector<288x64xf32>
    %cst_35 = arith.constant dense<0.000000e+00> : vector<512x64xf32>
    %56 = tpu.matmul %54, %55, %cst_35 {dimension_numbers = #tpu.dot_dimension_numbers<[1], [0], [0], [1], [0, 0, 1, 1], [], []>} : vector<512x288xf32>, vector<288x64xf32>, vector<512x64xf32> -> vector<512x64xf32>
    %c0_36 = arith.constant 0 : index
    %c0_37 = arith.constant 0 : index
    %57 = vector.load %arg5[%c0_36, %c0_37] : memref<1x64xf32, #tpu.memory_space<vmem>>, vector<1x64xf32>
    %58 = vector.broadcast %57 : vector<1x64xf32> to vector<512x64xf32>
    %59 = arith.addf %56, %58 : vector<512x64xf32>
    %cst_38 = arith.constant 0.000000e+00 : f32
    %60 = vector.broadcast %cst_38 : f32 to vector<512x64xf32>
    %61 = arith.maximumf %59, %60 : vector<512x64xf32>
    %62 = arith.truncf %61 : vector<512x64xf32> to vector<512x64xbf16>
    %c0_39 = arith.constant 0 : index
    %c0_40 = arith.constant 0 : index
    %63 = vector.load %arg6[%c0_39, %c0_40] : memref<512x64xbf16, #tpu.memory_space<vmem>>, vector<512x64xbf16>
    tpu.vector_store %arg6[%c0_39, %c0_40], %62 {strides = array<i32>} : memref<512x64xbf16, #tpu.memory_space<vmem>>, vector<512x64xbf16>,
    return
  }
  func.func @transform_0(%arg0: i32) -> (i32, i32, i32, i32) {
    %c0_i32 = arith.constant 0 : i32
    %c0_i32_0 = arith.constant 0 : i32
    %c0_i32_1 = arith.constant 0 : i32
    %c0_i32_2 = arith.constant 0 : i32
    %c0_i32_3 = arith.constant 0 : i32
    return %c0_i32, %c0_i32_0, %c0_i32_1, %c0_i32_2 : i32, i32, i32, i32
  }
  func.func @transform_1(%arg0: i32) -> (i32, i32) {
    %c0_i32 = arith.constant 0 : i32
    %c0_i32_0 = arith.constant 0 : i32
    %c0_i32_1 = arith.constant 0 : i32
    return %c0_i32, %c0_i32_0 : i32, i32
  }
  func.func @transform_2(%arg0: i32) -> (i32, i32) {
    %c0_i32 = arith.constant 0 : i32
    %c0_i32_0 = arith.constant 0 : i32
    %c0_i32_1 = arith.constant 0 : i32
    return %c0_i32, %c0_i32_0 : i32, i32
  }
  func.func @transform_3(%arg0: i32) -> (i32, i32) {
    %c0_i32 = arith.constant 0 : i32
    %c0_i32_0 = arith.constant 0 : i32
    %c0_i32_1 = arith.constant 0 : i32
    return %c0_i32, %c0_i32_0 : i32, i32
  }
  func.func @transform_4(%arg0: i32) -> (i32, i32) {
    %c0_i32 = arith.constant 0 : i32
    %c0_i32_0 = arith.constant 0 : i32
    %c0_i32_1 = arith.constant 0 : i32
    return %c0_i32, %c0_i32_0 : i32, i32
  }
  func.func @transform_5(%arg0: i32) -> (i32, i32) {
    %c0_i32 = arith.constant 0 : i32
    %c0_i32_0 = arith.constant 0 : i32
    %c0_i32_1 = arith.constant 0 : i32
    return %c0_i32, %c0_i32_0 : i32, i32
  }
}

</mosaic_0001>

<llo_original>
// kernel: actor_critic_forward.3
$region0: #{actor_critic_forward.3}
  #allocation0 [shape = 'u32[]', space=smem, size = 0x4, offset = 0x4, fixed_abs, tag = 'smem constant byte address 0x4 - core index']
  #allocation1 [shape = 'u32[72,128]{1,0:T(1,128)}', space=vmem, size = 0x9000, scoped, tag = 'internal scratch']
  #allocation2 [shape = 'f32[2,64]{1,0:T(2,128)}', space=vmem, size = 0x400, scoped, tag = 'scratch operand']
  %s0 = inlined_call_operand.vmem [shape: bf16[2,16384], index: 0, kind: input, shape index: {}]
  %s1 = inlined_call_operand.vmem [shape: bf16[2,16384,64], index: 1, kind: input, shape index: {}]
  %s2 = inlined_call_operand.vmem [shape: f32[2,1,64], index: 2, kind: input, shape index: {}]
  %s3 = inlined_call_operand.vmem [shape: f32[2,64,7], index: 3, kind: input, shape index: {}]
  %s4 = inlined_call_operand.vmem [shape: f32[2,2,7], index: 4, kind: output, shape index: {}]
  %s5 = sld [smem:[#allocation0]]
  $region57: #{actor_critic_forward.3} parent=0
    _
  %s7 = ssub.s32 1, %s5
  %s8 = scalar_select 0, %s7, %s5
  loop: start=0, step=1, limit=6
  $region2: #{actor_critic_forward.3} parent=0 // loop_pre_header
    _
  $region3: #{actor_critic_forward.3} parent=0 // loop_header
    %s10 = sphi 0, %s14
    %p11 = scmp.ge.s32.totalorder %s10, 6
    %s17 = sphi 0, %s29
    %s18 = sphi 0, %s25
    %s19 = sphi 0, %s17
    %s20 = sphi 0, %s18
    %s21 = sphi 0, %s19
    %s22 = sphi 0, %s20
    %s32 = sphi 0, %s34
    %s35 = sphi 0, %s32
    %s36 = sphi 0, %s35
    %s52 = sphi 0, %s36
    %s60 = sphi 0, %s62
    %s63 = sphi 0, %s60
    %s64 = sphi 0, %s63
    %s80 = sphi 0, %s64
    %s86 = sphi 0, %s88
    %s89 = sphi 0, %s86
    %s90 = sphi 0, %s89
    %s106 = sphi 0, %s90
    %s112 = sphi 0, %s114
    %s115 = sphi 0, %s112
    %s116 = sphi 0, %s115
    %s132 = sphi 0, %s116
    %s138 = sphi 0, %s140
    %s141 = sphi 0, %s138
    %s142 = sphi 0, %s141
    %s158 = sphi 0, %s142
  $region4: #{actor_critic_forward.3} parent=0 // loop_header_branch
    %13 = sbr.rel (%p11) target = $region8
  $region5: #{actor_critic_forward.3} parent=0 // loop_body
    %s15 = ssub.s32 %s10, 1
    %s16 = ssub.s32 %s10, 2
    %s23 = sadd.s32 1, %s18
    %p24 = scmp.ge.s32.totalorder %s23, 2
    %s25 = scalar_select %p24, 0, %s23
    %s26 = sadd.s32 1, %s17
    %s27 = scalar_select %p24, %s26, %s17
    %p28 = scmp.ge.s32.totalorder %s27, 2
    %s29 = scalar_select %p28, 0, %s27
    %s30 = ssub.s32 %s18, %s25
    %p31 = scmp.eq.s32.totalorder %s30, 0
    %s33 = sadd.s32 %s32, 1
    %s34 = scalar_select %p31, %s32, %s33
    %p37 = pneg %p31
    %p38 = scmp.eq.s32.totalorder %s10, 3
    %p39 = por %p37, %p38
    %p40 = scmp.ne.s32.totalorder %s32, %s35
    %p41 = scmp.eq.s32.totalorder %s10, 0
    %p42 = por %p40, %p41
    %p43 = scmp.ne.s32.totalorder %s32, %s35
    %p44 = scmp.eq.s32.totalorder %s15, 3
    %p45 = por %p43, %p44
    %p46 = scmp.ne.s32.totalorder %s35, %s36
    %p47 = scmp.eq.s32.totalorder %s15, 0
    %p48 = por %p46, %p47
    %p49 = scmp.ne.s32.totalorder %s35, %s36
    %p50 = scmp.eq.s32.totalorder %s16, 3
    %p51 = por %p49, %p50
    %p53 = scmp.ne.s32.totalorder %s36, %s52
    %p54 = scmp.eq.s32.totalorder %s16, 0
    %p55 = por %p53, %p54
    %s56 = ssub.s32 %s17, %s29
    %s57 = ssub.s32 %s18, %s25
    %s58 = sor.u32 %s56, %s57
    %p59 = scmp.eq.s32.totalorder %s58, 0
    %s61 = sadd.s32 %s60, 1
    %s62 = scalar_select %p59, %s60, %s61
    %p65 = pneg %p59
    %p66 = scmp.eq.s32.totalorder %s10, 3
    %p67 = por %p65, %p66
    %p68 = scmp.ne.s32.totalorder %s60, %s63
    %p69 = scmp.eq.s32.totalorder %s10, 0
    %p70 = por %p68, %p69
    %p71 = scmp.ne.s32.totalorder %s60, %s63
    %p72 = scmp.eq.s32.totalorder %s15, 3
    %p73 = por %p71, %p72
    %p74 = scmp.ne.s32.totalorder %s63, %s64
    %p75 = scmp.eq.s32.totalorder %s15, 0
    %p76 = por %p74, %p75
    %p77 = scmp.ne.s32.totalorder %s63, %s64
    %p78 = scmp.eq.s32.totalorder %s16, 3
    %p79 = por %p77, %p78
    %p81 = scmp.ne.s32.totalorder %s64, %s80
    %p82 = scmp.eq.s32.totalorder %s16, 0
    %p83 = por %p81, %p82
    %s84 = ssub.s32 %s17, %s29
    %p85 = scmp.eq.s32.totalorder %s84, 0
    %s87 = sadd.s32 %s86, 1
    %s88 = scalar_select %p85, %s86, %s87
    %p91 = pneg %p85
    %p92 = scmp.eq.s32.totalorder %s10, 3
    %p93 = por %p91, %p92
    %p94 = scmp.ne.s32.totalorder %s86, %s89
    %p95 = scmp.eq.s32.totalorder %s10, 0
    %p96 = por %p94, %p95
    %p97 = scmp.ne.s32.totalorder %s86, %s89
    %p98 = scmp.eq.s32.totalorder %s15, 3
    %p99 = por %p97, %p98
    %p100 = scmp.ne.s32.totalorder %s89, %s90
    %p101 = scmp.eq.s32.totalorder %s15, 0
    %p102 = por %p100, %p101
    %p103 = scmp.ne.s32.totalorder %s89, %s90
    %p104 = scmp.eq.s32.totalorder %s16, 3
    %p105 = por %p103, %p104
    %p107 = scmp.ne.s32.totalorder %s90, %s106
    %p108 = scmp.eq.s32.totalorder %s16, 0
    %p109 = por %p107, %p108
    %s110 = ssub.s32 %s17, %s29
    %p111 = scmp.eq.s32.totalorder %s110, 0
    %s113 = sadd.s32 %s112, 1
    %s114 = scalar_select %p111, %s112, %s113
    %p117 = pneg %p111
    %p118 = scmp.eq.s32.totalorder %s10, 3
    %p119 = por %p117, %p118
    %p120 = scmp.ne.s32.totalorder %s112, %s115
    %p121 = scmp.eq.s32.totalorder %s10, 0
    %p122 = por %p120, %p121
    %p123 = scmp.ne.s32.totalorder %s112, %s115
    %p124 = scmp.eq.s32.totalorder %s15, 3
    %p125 = por %p123, %p124
    %p126 = scmp.ne.s32.totalorder %s115, %s116
    %p127 = scmp.eq.s32.totalorder %s15, 0
    %p128 = por %p126, %p127
    %p129 = scmp.ne.s32.totalorder %s115, %s116
    %p130 = scmp.eq.s32.totalorder %s16, 3
    %p131 = por %p129, %p130
    %p133 = scmp.ne.s32.totalorder %s116, %s132
    %p134 = scmp.eq.s32.totalorder %s16, 0
    %p135 = por %p133, %p134
    %s136 = ssub.s32 %s17, %s29
    %p137 = scmp.eq.s32.totalorder %s136, 0
    %s139 = sadd.s32 %s138, 1
    %s140 = scalar_select %p137, %s138, %s139
    %p143 = pneg %p137
    %p144 = scmp.eq.s32.totalorder %s10, 3
    %p145 = por %p143, %p144
    %p146 = scmp.ne.s32.totalorder %s138, %s141
    %p147 = scmp.eq.s32.totalorder %s10, 0
    %p148 = por %p146, %p147
    %p149 = scmp.ne.s32.totalorder %s138, %s141
    %p150 = scmp.eq.s32.totalorder %s15, 3
    %p151 = por %p149, %p150
    %p152 = scmp.ne.s32.totalorder %s141, %s142
    %p153 = scmp.eq.s32.totalorder %s15, 0
    %p154 = por %p152, %p153
    %p155 = scmp.ne.s32.totalorder %s141, %s142
    %p156 = scmp.eq.s32.totalorder %s16, 3
    %p157 = por %p155, %p156
    %p159 = scmp.ne.s32.totalorder %s142, %s158
    %p160 = scmp.eq.s32.totalorder %s16, 0
    %p161 = por %p159, %p160
    %p162 = scmp.le.s32.totalorder 1, %s10
    %p163 = scmp.lt.s32.totalorder %s10, 5
    %p164 = pnand %p162, %p163
    %p165 = pneg %p164
    // Predicated region
    $region9: #{actor_critic_forward.3} parent=5 // pred_check
      _
    $region10: #{actor_critic_forward.3} parent=5 // pred_check_branch
      %167 = sbr.rel (%p164) target = $region12
    $region11: #{actor_critic_forward.3} parent=5 // pred_region
      %s168 = ssub.s32 %s10, 1
    $region12: #{actor_critic_forward.3} parent=5 // pred_fallthru
      _
    %p169 = scmp.lt.s32.totalorder %s10, 4
    // Predicated region
    $region13: #{actor_critic_forward.3} parent=5 // pred_check
      %p170 = pneg %p169
    $region14: #{actor_critic_forward.3} parent=5 // pred_check_branch
      %172 = sbr.rel (%p170) target = $region16
    $region15: #{actor_critic_forward.3} parent=5 // pred_region
      // Predicated region
      $region17: #{actor_critic_forward.3} parent=15 // pred_check
        %p173 = pneg %p42
      $region18: #{actor_critic_forward.3} parent=15 // pred_check_branch
        %175 = sbr.rel (%p173) target = $region20
      $region19: #{actor_critic_forward.3} parent=15 // pred_region
        %s176 = smul.u32 64, %s18
        %p177 = scmp.lt.s32.totalorder %s176, 127
        %s178 = scalar_select %p177, %s176, 127
        %s179 = scalar_lea.vmem %s0, %s178
        %s180 = smul.u32 64, %s18
      $region20: #{actor_critic_forward.3} parent=15 // pred_fallthru
        _
      // Predicated region
      $region21: #{actor_critic_forward.3} parent=15 // pred_check
        %p181 = pneg %p70
      $region22: #{actor_critic_forward.3} parent=15 // pred_check_branch
        %183 = sbr.rel (%p181) target = $region24
      $region23: #{actor_critic_forward.3} parent=15 // pred_region
        %s184 = smul.u32 1024, %s18
        %p185 = scmp.lt.s32.totalorder %s17, 1
        %s186 = scalar_select %p185, %s17, 1
        %p187 = scmp.lt.s32.totalorder %s184, 2047
        %s188 = scalar_select %p187, %s184, 2047
        %s189 = smul.addr %s186, 2048
        %s190 = sadd.s32 %s188, %s189
        %s191 = smul.addr %s190, 4
        %s192 = scalar_lea.vmem %s1, %s191
        %s193 = smul.u32 1024, %s18
      $region24: #{actor_critic_forward.3} parent=15 // pred_fallthru
        _
      // Predicated region
      $region25: #{actor_critic_forward.3} parent=15 // pred_check
        %p194 = pneg %p96
      $region26: #{actor_critic_forward.3} parent=15 // pred_check_branch
        %196 = sbr.rel (%p194) target = $region28
      $region27: #{actor_critic_forward.3} parent=15 // pred_region
        %p197 = scmp.lt.s32.totalorder %s17, 1
        %s198 = scalar_select %p197, %s17, 1
        %s199 = scalar_lea.vmem %s2, %s198
      $region28: #{actor_critic_forward.3} parent=15 // pred_fallthru
        _
      // Predicated region
      $region29: #{actor_critic_forward.3} parent=15 // pred_check
        %p200 = pneg %p122
      $region30: #{actor_critic_forward.3} parent=15 // pred_check_branch
        %202 = sbr.rel (%p200) target = $region32
      $region31: #{actor_critic_forward.3} parent=15 // pred_region
        %p203 = scmp.lt.s32.totalorder %s17, 1
        %s204 = scalar_select %p203, %s17, 1
        %s205 = smul.addr %s204, 8
        %s206 = smul.addr %s205, 8
        %s207 = scalar_lea.vmem %s3, %s206
      $region32: #{actor_critic_forward.3} parent=15 // pred_fallthru
        _
    $region16: #{actor_critic_forward.3} parent=5 // pred_fallthru
      _
    %p208 = scmp.le.s32.totalorder 1, %s10
    %p209 = scmp.lt.s32.totalorder %s10, 5
    %p210 = pnand %p208, %p209
    %p211 = pneg %p210
    // Predicated region
    $region33: #{actor_critic_forward.3} parent=5 // pred_check
      _
    $region34: #{actor_critic_forward.3} parent=5 // pred_check_branch
      %213 = sbr.rel (%p210) target = $region36
    $region35: #{actor_critic_forward.3} parent=5 // pred_region
      %s214 = ssub.s32 %s10, 1
      %s215 = smul.u32 64, %s20
      %p216 = scmp.lt.s32.totalorder %s215, 127
      %s217 = scalar_select %p216, %s215, 127
      %s218 = scalar_lea.vmem %s0, %s217
      %p219 = pneg %p48
      %p220 = pneg %p45
      %s221 = smul.u32 1024, %s20
      %p222 = scmp.lt.s32.totalorder %s19, 1
      %s223 = scalar_select %p222, %s19, 1
      %p224 = scmp.lt.s32.totalorder %s221, 2047
      %s225 = scalar_select %p224, %s221, 2047
      %s226 = smul.addr %s223, 2048
      %s227 = sadd.s32 %s225, %s226
      %s228 = smul.addr %s227, 4
      %s229 = scalar_lea.vmem %s1, %s228
      %p230 = pneg %p76
      %p231 = pneg %p73
      %p232 = scmp.lt.s32.totalorder %s19, 1
      %s233 = scalar_select %p232, %s19, 1
      %s234 = scalar_lea.vmem %s2, %s233
      %p235 = pneg %p102
      %p236 = pneg %p99
      %p237 = scmp.lt.s32.totalorder %s19, 1
      %s238 = scalar_select %p237, %s19, 1
      %s239 = smul.addr %s238, 8
      %s240 = smul.addr %s239, 8
      %s241 = scalar_lea.vmem %s3, %s240
      %p242 = pneg %p128
      %p243 = pneg %p125
      %p244 = pneg %p154
      %p245 = pneg %p151
      %p246 = scmp.lt.s32.totalorder %s19, 1
      %s247 = scalar_select %p246, %s19, 1
      %s248 = smul.addr %s247, 2
      %s249 = scalar_lea.vmem %s4, %s248
      %s250 = smul.u32 64, %s20
      %p251 = scmp.lt.s32.totalorder %s250, 127
      %s252 = scalar_select %p251, %s250, 127
      %s253 = scalar_lea.vmem %s0, %s252
      %s254 = smul.u32 64, %s20
      %s255 = smul.u32 1024, %s20
      %p256 = scmp.lt.s32.totalorder %s19, 1
      %s257 = scalar_select %p256, %s19, 1
      %p258 = scmp.lt.s32.totalorder %s255, 2047
      %s259 = scalar_select %p258, %s255, 2047
      %s260 = smul.addr %s257, 2048
      %s261 = sadd.s32 %s259, %s260
      %s262 = smul.addr %s261, 4
      %s263 = scalar_lea.vmem %s1, %s262
      %s264 = smul.u32 1024, %s20
      %p265 = scmp.lt.s32.totalorder %s19, 1
      %s266 = scalar_select %p265, %s19, 1
      %s267 = scalar_lea.vmem %s2, %s266
      %p268 = scmp.lt.s32.totalorder %s19, 1
      %s269 = scalar_select %p268, %s19, 1
      %s270 = smul.addr %s269, 8
      %s271 = smul.addr %s270, 8
      %s272 = scalar_lea.vmem %s3, %s271
      %p273 = scmp.lt.s32.totalorder %s19, 1
      %s274 = scalar_select %p273, %s19, 1
      %s275 = smul.addr %s274, 2
      %s276 = scalar_lea.vmem %s4, %s275
      %p277 = scmp.eq.s32.totalorder %s20, 0
      // Predicated region
      $region37: #{actor_critic_forward.3} parent=35 // pred_check
        %p278 = pneg %p277
      $region38: #{actor_critic_forward.3} parent=35 // pred_check_branch
        %280 = sbr.rel (%p278) target = $region40
      $region39: #{actor_critic_forward.3} parent=35 // pred_region
        %vm281 = vcmask 517120
        %282 = vst.msk [vmem:[#allocation2] sm:$0x3] %vm281, 0.0
      $region40: #{actor_critic_forward.3} parent=35 // pred_fallthru
        _
      %v283 = vld [vmem:[#allocation2] sm:$0x3]
      %v284 = vld [vmem:[%s253] sm:$0xff]
      %v285 = vld [vmem:[%s253 + $0x8] sm:$0xff]
      %v286 = vld [vmem:[%s253 + $0x10] sm:$0xff]
      %v287 = vld [vmem:[%s253 + $0x18] sm:$0xff]
      %v288 = vld [vmem:[%s253 + $0x20] sm:$0xff]
      %v289 = vld [vmem:[%s253 + $0x28] sm:$0xff]
      %v290 = vld [vmem:[%s253 + $0x30] sm:$0xff]
      %v291 = vld [vmem:[%s253 + $0x38] sm:$0xff]
      %v292 = vld [vmem:[%s263] sm:$0xf]
      %v293 = vld [vmem:[%s263 + $0x4] sm:$0xf]
      %v294 = vld [vmem:[%s263 + $0x8] sm:$0xf]
      %v295 = vld [vmem:[%s263 + $0xc] sm:$0xf]
      %v296 = vld [vmem:[%s263 + $0x10] sm:$0xf]
      %v297 = vld [vmem:[%s263 + $0x14] sm:$0xf]
      %v298 = vld [vmem:[%s263 + $0x18] sm:$0xf]
      %v299 = vld [vmem:[%s263 + $0x1c] sm:$0xf]
      %v300 = vld [vmem:[%s263 + $0x20] sm:$0xf]
      %v301 = vld [vmem:[%s263 + $0x24] sm:$0xf]
      %v302 = vld [vmem:[%s263 + $0x28] sm:$0xf]
      %v303 = vld [vmem:[%s263 + $0x2c] sm:$0xf]
      %v304 = vld [vmem:[%s263 + $0x30] sm:$0xf]
      %v305 = vld [vmem:[%s263 + $0x34] sm:$0xf]
      %v306 = vld [vmem:[%s263 + $0x38] sm:$0xf]
      %v307 = vld [vmem:[%s263 + $0x3c] sm:$0xf]
      %v308 = vld [vmem:[%s263 + $0x40] sm:$0xf]
      %v309 = vld [vmem:[%s263 + $0x44] sm:$0xf]
      %v310 = vld [vmem:[%s263 + $0x48] sm:$0xf]
      %v311 = vld [vmem:[%s263 + $0x4c] sm:$0xf]
      %v312 = vld [vmem:[%s263 + $0x50] sm:$0xf]
      %v313 = vld [vmem:[%s263 + $0x54] sm:$0xf]
      %v314 = vld [vmem:[%s263 + $0x58] sm:$0xf]
      %v315 = vld [vmem:[%s263 + $0x5c] sm:$0xf]
      %v316 = vld [vmem:[%s263 + $0x60] sm:$0xf]
      %v317 = vld [vmem:[%s263 + $0x64] sm:$0xf]
      %v318 = vld [vmem:[%s263 + $0x68] sm:$0xf]
      %v319 = vld [vmem:[%s263 + $0x6c] sm:$0xf]
      %v320 = vld [vmem:[%s263 + $0x70] sm:$0xf]
      %v321 = vld [vmem:[%s263 + $0x74] sm:$0xf]
      %v322 = vld [vmem:[%s263 + $0x78] sm:$0xf]
      %v323 = vld [vmem:[%s263 + $0x7c] sm:$0xf]
      %v324 = vld [vmem:[%s263 + $0x80] sm:$0xf]
      %v325 = vld [vmem:[%s263 + $0x84] sm:$0xf]
      %v326 = vld [vmem:[%s263 + $0x88] sm:$0xf]
      %v327 = vld [vmem:[%s263 + $0x8c] sm:$0xf]
      %v328 = vld [vmem:[%s263 + $0x90] sm:$0xf]
      %v329 = vld [vmem:[%s263 + $0x94] sm:$0xf]
      %v330 = vld [vmem:[%s263 + $0x98] sm:$0xf]
      %v331 = vld [vmem:[%s263 + $0x9c] sm:$0xf]
      %v332 = vld [vmem:[%s263 + $0xa0] sm:$0xf]
      %v333 = vld [vmem:[%s263 + $0xa4] sm:$0xf]
      %v334 = vld [vmem:[%s263 + $0xa8] sm:$0xf]
      %v335 = vld [vmem:[%s263 + $0xac] sm:$0xf]
      %v336 = vld [vmem:[%s263 + $0xb0] sm:$0xf]
      %v337 = vld [vmem:[%s263 + $0xb4] sm:$0xf]
      %v338 = vld [vmem:[%s263 + $0xb8] sm:$0xf]
      %v339 = vld [vmem:[%s263 + $0xbc] sm:$0xf]
      %v340 = vld [vmem:[%s263 + $0xc0] sm:$0xf]
      %v341 = vld [vmem:[%s263 + $0xc4] sm:$0xf]
      %v342 = vld [vmem:[%s263 + $0xc8] sm:$0xf]
      %v343 = vld [vmem:[%s263 + $0xcc] sm:$0xf]
      %v344 = vld [vmem:[%s263 + $0xd0] sm:$0xf]
      %v345 = vld [vmem:[%s263 + $0xd4] sm:$0xf]
      %v346 = vld [vmem:[%s263 + $0xd8] sm:$0xf]
      %v347 = vld [vmem:[%s263 + $0xdc] sm:$0xf]
      %v348 = vld [vmem:[%s263 + $0xe0] sm:$0xf]
      %v349 = vld [vmem:[%s263 + $0xe4] sm:$0xf]
      %v350 = vld [vmem:[%s263 + $0xe8] sm:$0xf]
      %v351 = vld [vmem:[%s263 + $0xec] sm:$0xf]
      %v352 = vld [vmem:[%s263 + $0xf0] sm:$0xf]
      %v353 = vld [vmem:[%s263 + $0xf4] sm:$0xf]
      %v354 = vld [vmem:[%s263 + $0xf8] sm:$0xf]
      %v355 = vld [vmem:[%s263 + $0xfc] sm:$0xf]
      %v356 = vld [vmem:[%s263 + $0x100] sm:$0xf]
      %v357 = vld [vmem:[%s263 + $0x104] sm:$0xf]
      %v358 = vld [vmem:[%s263 + $0x108] sm:$0xf]
      %v359 = vld [vmem:[%s263 + $0x10c] sm:$0xf]
      %v360 = vld [vmem:[%s263 + $0x110] sm:$0xf]
      %v361 = vld [vmem:[%s263 + $0x114] sm:$0xf]
      %v362 = vld [vmem:[%s263 + $0x118] sm:$0xf]
      %v363 = vld [vmem:[%s263 + $0x11c] sm:$0xf]
      %v364 = vld [vmem:[%s263 + $0x120] sm:$0xf]
      %v365 = vld [vmem:[%s263 + $0x124] sm:$0xf]
      %v366 = vld [vmem:[%s263 + $0x128] sm:$0xf]
      %v367 = vld [vmem:[%s263 + $0x12c] sm:$0xf]
      %v368 = vld [vmem:[%s263 + $0x130] sm:$0xf]
      %v369 = vld [vmem:[%s263 + $0x134] sm:$0xf]
      %v370 = vld [vmem:[%s263 + $0x138] sm:$0xf]
      %v371 = vld [vmem:[%s263 + $0x13c] sm:$0xf]
      %v372 = vld [vmem:[%s263 + $0x140] sm:$0xf]
      %v373 = vld [vmem:[%s263 + $0x144] sm:$0xf]
      %v374 = vld [vmem:[%s263 + $0x148] sm:$0xf]
      %v375 = vld [vmem:[%s263 + $0x14c] sm:$0xf]
      %v376 = vld [vmem:[%s263 + $0x150] sm:$0xf]
      %v377 = vld [vmem:[%s263 + $0x154] sm:$0xf]
      %v378 = vld [vmem:[%s263 + $0x158] sm:$0xf]
      %v379 = vld [vmem:[%s263 + $0x15c] sm:$0xf]
      %v380 = vld [vmem:[%s263 + $0x160] sm:$0xf]
      %v381 = vld [vmem:[%s263 + $0x164] sm:$0xf]
      %v382 = vld [vmem:[%s263 + $0x168] sm:$0xf]
      %v383 = vld [vmem:[%s263 + $0x16c] sm:$0xf]
      %v384 = vld [vmem:[%s263 + $0x170] sm:$0xf]
      %v385 = vld [vmem:[%s263 + $0x174] sm:$0xf]
      %v386 = vld [vmem:[%s263 + $0x178] sm:$0xf]
      %v387 = vld [vmem:[%s263 + $0x17c] sm:$0xf]
      %v388 = vld [vmem:[%s263 + $0x180] sm:$0xf]
      %v389 = vld [vmem:[%s263 + $0x184] sm:$0xf]
      %v390 = vld [vmem:[%s263 + $0x188] sm:$0xf]
      %v391 = vld [vmem:[%s263 + $0x18c] sm:$0xf]
      %v392 = vld [vmem:[%s263 + $0x190] sm:$0xf]
      %v393 = vld [vmem:[%s263 + $0x194] sm:$0xf]
      %v394 = vld [vmem:[%s263 + $0x198] sm:$0xf]
      %v395 = vld [vmem:[%s263 + $0x19c] sm:$0xf]
      %v396 = vld [vmem:[%s263 + $0x1a0] sm:$0xf]
      %v397 = vld [vmem:[%s263 + $0x1a4] sm:$0xf]
      %v398 = vld [vmem:[%s263 + $0x1a8] sm:$0xf]
      %v399 = vld [vmem:[%s263 + $0x1ac] sm:$0xf]
      %v400 = vld [vmem:[%s263 + $0x1b0] sm:$0xf]
      %v401 = vld [vmem:[%s263 + $0x1b4] sm:$0xf]
      %v402 = vld [vmem:[%s263 + $0x1b8] sm:$0xf]
      %v403 = vld [vmem:[%s263 + $0x1bc] sm:$0xf]
      %v404 = vld [vmem:[%s263 + $0x1c0] sm:$0xf]
      %v405 = vld [vmem:[%s263 + $0x1c4] sm:$0xf]
      %v406 = vld [vmem:[%s263 + $0x1c8] sm:$0xf]
      %v407 = vld [vmem:[%s263 + $0x1cc] sm:$0xf]
      %v408 = vld [vmem:[%s263 + $0x1d0] sm:$0xf]
      %v409 = vld [vmem:[%s263 + $0x1d4] sm:$0xf]
      %v410 = vld [vmem:[%s263 + $0x1d8] sm:$0xf]
      %v411 = vld [vmem:[%s263 + $0x1dc] sm:$0xf]
      %v412 = vld [vmem:[%s263 + $0x1e0] sm:$0xf]
      %v413 = vld [vmem:[%s263 + $0x1e4] sm:$0xf]
      %v414 = vld [vmem:[%s263 + $0x1e8] sm:$0xf]
      %v415 = vld [vmem:[%s263 + $0x1ec] sm:$0xf]
      %v416 = vld [vmem:[%s263 + $0x1f0] sm:$0xf]
      %v417 = vld [vmem:[%s263 + $0x1f4] sm:$0xf]
      %v418 = vld [vmem:[%s263 + $0x1f8] sm:$0xf]
      %v419 = vld [vmem:[%s263 + $0x1fc] sm:$0xf]
      %v420 = vld [vmem:[%s263 + $0x200] sm:$0xf]
      %v421 = vld [vmem:[%s263 + $0x204] sm:$0xf]
      %v422 = vld [vmem:[%s263 + $0x208] sm:$0xf]
      %v423 = vld [vmem:[%s263 + $0x20c] sm:$0xf]
      %v424 = vld [vmem:[%s263 + $0x210] sm:$0xf]
      %v425 = vld [vmem:[%s263 + $0x214] sm:$0xf]
      %v426 = vld [vmem:[%s263 + $0x218] sm:$0xf]
      %v427 = vld [vmem:[%s263 + $0x21c] sm:$0xf]
      %v428 = vld [vmem:[%s263 + $0x220] sm:$0xf]
      %v429 = vld [vmem:[%s263 + $0x224] sm:$0xf]
      %v430 = vld [vmem:[%s263 + $0x228] sm:$0xf]
      %v431 = vld [vmem:[%s263 + $0x22c] sm:$0xf]
      %v432 = vld [vmem:[%s263 + $0x230] sm:$0xf]
      %v433 = vld [vmem:[%s263 + $0x234] sm:$0xf]
      %v434 = vld [vmem:[%s263 + $0x238] sm:$0xf]
      %v435 = vld [vmem:[%s263 + $0x23c] sm:$0xf]
      %v436 = vld [vmem:[%s263 + $0x240] sm:$0xf]
      %v437 = vld [vmem:[%s263 + $0x244] sm:$0xf]
      %v438 = vld [vmem:[%s263 + $0x248] sm:$0xf]
      %v439 = vld [vmem:[%s263 + $0x24c] sm:$0xf]
      %v440 = vld [vmem:[%s263 + $0x250] sm:$0xf]
      %v441 = vld [vmem:[%s263 + $0x254] sm:$0xf]
      %v442 = vld [vmem:[%s263 + $0x258] sm:$0xf]
      %v443 = vld [vmem:[%s263 + $0x25c] sm:$0xf]
      %v444 = vld [vmem:[%s263 + $0x260] sm:$0xf]
      %v445 = vld [vmem:[%s263 + $0x264] sm:$0xf]
      %v446 = vld [vmem:[%s263 + $0x268] sm:$0xf]
      %v447 = vld [vmem:[%s263 + $0x26c] sm:$0xf]
      %v448 = vld [vmem:[%s263 + $0x270] sm:$0xf]
      %v449 = vld [vmem:[%s263 + $0x274] sm:$0xf]
      %v450 = vld [vmem:[%s263 + $0x278] sm:$0xf]
      %v451 = vld [vmem:[%s263 + $0x27c] sm:$0xf]
      %v452 = vld [vmem:[%s263 + $0x280] sm:$0xf]
      %v453 = vld [vmem:[%s263 + $0x284] sm:$0xf]
      %v454 = vld [vmem:[%s263 + $0x288] sm:$0xf]
      %v455 = vld [vmem:[%s263 + $0x28c] sm:$0xf]
      %v456 = vld [vmem:[%s263 + $0x290] sm:$0xf]
      %v457 = vld [vmem:[%s263 + $0x294] sm:$0xf]
      %v458 = vld [vmem:[%s263 + $0x298] sm:$0xf]
      %v459 = vld [vmem:[%s263 + $0x29c] sm:$0xf]
      %v460 = vld [vmem:[%s263 + $0x2a0] sm:$0xf]
      %v461 = vld [vmem:[%s263 + $0x2a4] sm:$0xf]
      %v462 = vld [vmem:[%s263 + $0x2a8] sm:$0xf]
      %v463 = vld [vmem:[%s263 + $0x2ac] sm:$0xf]
      %v464 = vld [vmem:[%s263 + $0x2b0] sm:$0xf]
      %v465 = vld [vmem:[%s263 + $0x2b4] sm:$0xf]
      %v466 = vld [vmem:[%s263 + $0x2b8] sm:$0xf]
      %v467 = vld [vmem:[%s263 + $0x2bc] sm:$0xf]
      %v468 = vld [vmem:[%s263 + $0x2c0] sm:$0xf]
      %v469 = vld [vmem:[%s263 + $0x2c4] sm:$0xf]
      %v470 = vld [vmem:[%s263 + $0x2c8] sm:$0xf]
      %v471 = vld [vmem:[%s263 + $0x2cc] sm:$0xf]
      %v472 = vld [vmem:[%s263 + $0x2d0] sm:$0xf]
      %v473 = vld [vmem:[%s263 + $0x2d4] sm:$0xf]
      %v474 = vld [vmem:[%s263 + $0x2d8] sm:$0xf]
      %v475 = vld [vmem:[%s263 + $0x2dc] sm:$0xf]
      %v476 = vld [vmem:[%s263 + $0x2e0] sm:$0xf]
      %v477 = vld [vmem:[%s263 + $0x2e4] sm:$0xf]
      %v478 = vld [vmem:[%s263 + $0x2e8] sm:$0xf]
      %v479 = vld [vmem:[%s263 + $0x2ec] sm:$0xf]
      %v480 = vld [vmem:[%s263 + $0x2f0] sm:$0xf]
      %v481 = vld [vmem:[%s263 + $0x2f4] sm:$0xf]
      %v482 = vld [vmem:[%s263 + $0x2f8] sm:$0xf]
      %v483 = vld [vmem:[%s263 + $0x2fc] sm:$0xf]
      %v484 = vld [vmem:[%s263 + $0x300] sm:$0xf]
      %v485 = vld [vmem:[%s263 + $0x304] sm:$0xf]
      %v486 = vld [vmem:[%s263 + $0x308] sm:$0xf]
      %v487 = vld [vmem:[%s263 + $0x30c] sm:$0xf]
      %v488 = vld [vmem:[%s263 + $0x310] sm:$0xf]
      %v489 = vld [vmem:[%s263 + $0x314] sm:$0xf]
      %v490 = vld [vmem:[%s263 + $0x318] sm:$0xf]
      %v491 = vld [vmem:[%s263 + $0x31c] sm:$0xf]
      %v492 = vld [vmem:[%s263 + $0x320] sm:$0xf]
      %v493 = vld [vmem:[%s263 + $0x324] sm:$0xf]
      %v494 = vld [vmem:[%s263 + $0x328] sm:$0xf]
      %v495 = vld [vmem:[%s263 + $0x32c] sm:$0xf]
      %v496 = vld [vmem:[%s263 + $0x330] sm:$0xf]
      %v497 = vld [vmem:[%s263 + $0x334] sm:$0xf]
      %v498 = vld [vmem:[%s263 + $0x338] sm:$0xf]
      %v499 = vld [vmem:[%s263 + $0x33c] sm:$0xf]
      %v500 = vld [vmem:[%s263 + $0x340] sm:$0xf]
      %v501 = vld [vmem:[%s263 + $0x344] sm:$0xf]
      %v502 = vld [vmem:[%s263 + $0x348] sm:$0xf]
      %v503 = vld [vmem:[%s263 + $0x34c] sm:$0xf]
      %v504 = vld [vmem:[%s263 + $0x350] sm:$0xf]
      %v505 = vld [vmem:[%s263 + $0x354] sm:$0xf]
      %v506 = vld [vmem:[%s263 + $0x358] sm:$0xf]
      %v507 = vld [vmem:[%s263 + $0x35c] sm:$0xf]
      %v508 = vld [vmem:[%s263 + $0x360] sm:$0xf]
      %v509 = vld [vmem:[%s263 + $0x364] sm:$0xf]
      %v510 = vld [vmem:[%s263 + $0x368] sm:$0xf]
      %v511 = vld [vmem:[%s263 + $0x36c] sm:$0xf]
      %v512 = vld [vmem:[%s263 + $0x370] sm:$0xf]
      %v513 = vld [vmem:[%s263 + $0x374] sm:$0xf]
      %v514 = vld [vmem:[%s263 + $0x378] sm:$0xf]
      %v515 = vld [vmem:[%s263 + $0x37c] sm:$0xf]
      %v516 = vld [vmem:[%s263 + $0x380] sm:$0xf]
      %v517 = vld [vmem:[%s263 + $0x384] sm:$0xf]
      %v518 = vld [vmem:[%s263 + $0x388] sm:$0xf]
      %v519 = vld [vmem:[%s263 + $0x38c] sm:$0xf]
      %v520 = vld [vmem:[%s263 + $0x390] sm:$0xf]
      %v521 = vld [vmem:[%s263 + $0x394] sm:$0xf]
      %v522 = vld [vmem:[%s263 + $0x398] sm:$0xf]
      %v523 = vld [vmem:[%s263 + $0x39c] sm:$0xf]
      %v524 = vld [vmem:[%s263 + $0x3a0] sm:$0xf]
      %v525 = vld [vmem:[%s263 + $0x3a4] sm:$0xf]
      %v526 = vld [vmem:[%s263 + $0x3a8] sm:$0xf]
      %v527 = vld [vmem:[%s263 + $0x3ac] sm:$0xf]
      %v528 = vld [vmem:[%s263 + $0x3b0] sm:$0xf]
      %v529 = vld [vmem:[%s263 + $0x3b4] sm:$0xf]
      %v530 = vld [vmem:[%s263 + $0x3b8] sm:$0xf]
      %v531 = vld [vmem:[%s263 + $0x3bc] sm:$0xf]
      %v532 = vld [vmem:[%s263 + $0x3c0] sm:$0xf]
      %v533 = vld [vmem:[%s263 + $0x3c4] sm:$0xf]
      %v534 = vld [vmem:[%s263 + $0x3c8] sm:$0xf]
      %v535 = vld [vmem:[%s263 + $0x3cc] sm:$0xf]
      %v536 = vld [vmem:[%s263 + $0x3d0] sm:$0xf]
      %v537 = vld [vmem:[%s263 + $0x3d4] sm:$0xf]
      %v538 = vld [vmem:[%s263 + $0x3d8] sm:$0xf]
      %v539 = vld [vmem:[%s263 + $0x3dc] sm:$0xf]
      %v540 = vld [vmem:[%s263 + $0x3e0] sm:$0xf]
      %v541 = vld [vmem:[%s263 + $0x3e4] sm:$0xf]
      %v542 = vld [vmem:[%s263 + $0x3e8] sm:$0xf]
      %v543 = vld [vmem:[%s263 + $0x3ec] sm:$0xf]
      %v544 = vld [vmem:[%s263 + $0x3f0] sm:$0xf]
      %v545 = vld [vmem:[%s263 + $0x3f4] sm:$0xf]
      %v546 = vld [vmem:[%s263 + $0x3f8] sm:$0xf]
      %v547 = vld [vmem:[%s263 + $0x3fc] sm:$0xf]
      %v548 = vld [vmem:[%s263 + $0x400] sm:$0xf]
      %v549 = vld [vmem:[%s263 + $0x404] sm:$0xf]
      %v550 = vld [vmem:[%s263 + $0x408] sm:$0xf]
      %v551 = vld [vmem:[%s263 + $0x40c] sm:$0xf]
      %v552 = vld [vmem:[%s263 + $0x410] sm:$0xf]
      %v553 = vld [vmem:[%s263 + $0x414] sm:$0xf]
      %v554 = vld [vmem:[%s263 + $0x418] sm:$0xf]
      %v555 = vld [vmem:[%s263 + $0x41c] sm:$0xf]
      %v556 = vld [vmem:[%s263 + $0x420] sm:$0xf]
      %v557 = vld [vmem:[%s263 + $0x424] sm:$0xf]
      %v558 = vld [vmem:[%s263 + $0x428] sm:$0xf]
      %v559 = vld [vmem:[%s263 + $0x42c] sm:$0xf]
      %v560 = vld [vmem:[%s263 + $0x430] sm:$0xf]
      %v561 = vld [vmem:[%s263 + $0x434] sm:$0xf]
      %v562 = vld [vmem:[%s263 + $0x438] sm:$0xf]
      %v563 = vld [vmem:[%s263 + $0x43c] sm:$0xf]
      %v564 = vld [vmem:[%s263 + $0x440] sm:$0xf]
      %v565 = vld [vmem:[%s263 + $0x444] sm:$0xf]
      %v566 = vld [vmem:[%s263 + $0x448] sm:$0xf]
      %v567 = vld [vmem:[%s263 + $0x44c] sm:$0xf]
      %v568 = vld [vmem:[%s263 + $0x450] sm:$0xf]
      %v569 = vld [vmem:[%s263 + $0x454] sm:$0xf]
      %v570 = vld [vmem:[%s263 + $0x458] sm:$0xf]
      %v571 = vld [vmem:[%s263 + $0x45c] sm:$0xf]
      %v572 = vld [vmem:[%s263 + $0x460] sm:$0xf]
      %v573 = vld [vmem:[%s263 + $0x464] sm:$0xf]
      %v574 = vld [vmem:[%s263 + $0x468] sm:$0xf]
      %v575 = vld [vmem:[%s263 + $0x46c] sm:$0xf]
      %v576 = vld [vmem:[%s263 + $0x470] sm:$0xf]
      %v577 = vld [vmem:[%s263 + $0x474] sm:$0xf]
      %v578 = vld [vmem:[%s263 + $0x478] sm:$0xf]
      %v579 = vld [vmem:[%s263 + $0x47c] sm:$0xf]
      %v580 = vld [vmem:[%s263 + $0x480] sm:$0xf]
      %v581 = vld [vmem:[%s263 + $0x484] sm:$0xf]
      %v582 = vld [vmem:[%s263 + $0x488] sm:$0xf]
      %v583 = vld [vmem:[%s263 + $0x48c] sm:$0xf]
      %v584 = vld [vmem:[%s263 + $0x490] sm:$0xf]
      %v585 = vld [vmem:[%s263 + $0x494] sm:$0xf]
      %v586 = vld [vmem:[%s263 + $0x498] sm:$0xf]
      %v587 = vld [vmem:[%s263 + $0x49c] sm:$0xf]
      %v588 = vld [vmem:[%s263 + $0x4a0] sm:$0xf]
      %v589 = vld [vmem:[%s263 + $0x4a4] sm:$0xf]
      %v590 = vld [vmem:[%s263 + $0x4a8] sm:$0xf]
      %v591 = vld [vmem:[%s263 + $0x4ac] sm:$0xf]
      %v592 = vld [vmem:[%s263 + $0x4b0] sm:$0xf]
      %v593 = vld [vmem:[%s263 + $0x4b4] sm:$0xf]
      %v594 = vld [vmem:[%s263 + $0x4b8] sm:$0xf]
      %v595 = vld [vmem:[%s263 + $0x4bc] sm:$0xf]
      %v596 = vld [vmem:[%s263 + $0x4c0] sm:$0xf]
      %v597 = vld [vmem:[%s263 + $0x4c4] sm:$0xf]
      %v598 = vld [vmem:[%s263 + $0x4c8] sm:$0xf]
      %v599 = vld [vmem:[%s263 + $0x4cc] sm:$0xf]
      %v600 = vld [vmem:[%s263 + $0x4d0] sm:$0xf]
      %v601 = vld [vmem:[%s263 + $0x4d4] sm:$0xf]
      %v602 = vld [vmem:[%s263 + $0x4d8] sm:$0xf]
      %v603 = vld [vmem:[%s263 + $0x4dc] sm:$0xf]
      %v604 = vld [vmem:[%s263 + $0x4e0] sm:$0xf]
      %v605 = vld [vmem:[%s263 + $0x4e4] sm:$0xf]
      %v606 = vld [vmem:[%s263 + $0x4e8] sm:$0xf]
      %v607 = vld [vmem:[%s263 + $0x4ec] sm:$0xf]
      %v608 = vld [vmem:[%s263 + $0x4f0] sm:$0xf]
      %v609 = vld [vmem:[%s263 + $0x4f4] sm:$0xf]
      %v610 = vld [vmem:[%s263 + $0x4f8] sm:$0xf]
      %v611 = vld [vmem:[%s263 + $0x4fc] sm:$0xf]
      %v612 = vld [vmem:[%s263 + $0x500] sm:$0xf]
      %v613 = vld [vmem:[%s263 + $0x504] sm:$0xf]
      %v614 = vld [vmem:[%s263 + $0x508] sm:$0xf]
      %v615 = vld [vmem:[%s263 + $0x50c] sm:$0xf]
      %v616 = vld [vmem:[%s263 + $0x510] sm:$0xf]
      %v617 = vld [vmem:[%s263 + $0x514] sm:$0xf]
      %v618 = vld [vmem:[%s263 + $0x518] sm:$0xf]
      %v619 = vld [vmem:[%s263 + $0x51c] sm:$0xf]
      %v620 = vld [vmem:[%s263 + $0x520] sm:$0xf]
      %v621 = vld [vmem:[%s263 + $0x524] sm:$0xf]
      %v622 = vld [vmem:[%s263 + $0x528] sm:$0xf]
      %v623 = vld [vmem:[%s263 + $0x52c] sm:$0xf]
      %v624 = vld [vmem:[%s263 + $0x530] sm:$0xf]
      %v625 = vld [vmem:[%s263 + $0x534] sm:$0xf]
      %v626 = vld [vmem:[%s263 + $0x538] sm:$0xf]
      %v627 = vld [vmem:[%s263 + $0x53c] sm:$0xf]
      %v628 = vld [vmem:[%s263 + $0x540] sm:$0xf]
      %v629 = vld [vmem:[%s263 + $0x544] sm:$0xf]
      %v630 = vld [vmem:[%s263 + $0x548] sm:$0xf]
      %v631 = vld [vmem:[%s263 + $0x54c] sm:$0xf]
      %v632 = vld [vmem:[%s263 + $0x550] sm:$0xf]
      %v633 = vld [vmem:[%s263 + $0x554] sm:$0xf]
      %v634 = vld [vmem:[%s263 + $0x558] sm:$0xf]
      %v635 = vld [vmem:[%s263 + $0x55c] sm:$0xf]
      %v636 = vld [vmem:[%s263 + $0x560] sm:$0xf]
      %v637 = vld [vmem:[%s263 + $0x564] sm:$0xf]
      %v638 = vld [vmem:[%s263 + $0x568] sm:$0xf]
      %v639 = vld [vmem:[%s263 + $0x56c] sm:$0xf]
      %v640 = vld [vmem:[%s263 + $0x570] sm:$0xf]
      %v641 = vld [vmem:[%s263 + $0x574] sm:$0xf]
      %v642 = vld [vmem:[%s263 + $0x578] sm:$0xf]
      %v643 = vld [vmem:[%s263 + $0x57c] sm:$0xf]
      %v644 = vld [vmem:[%s263 + $0x580] sm:$0xf]
      %v645 = vld [vmem:[%s263 + $0x584] sm:$0xf]
      %v646 = vld [vmem:[%s263 + $0x588] sm:$0xf]
      %v647 = vld [vmem:[%s263 + $0x58c] sm:$0xf]
      %v648 = vld [vmem:[%s263 + $0x590] sm:$0xf]
      %v649 = vld [vmem:[%s263 + $0x594] sm:$0xf]
      %v650 = vld [vmem:[%s263 + $0x598] sm:$0xf]
      %v651 = vld [vmem:[%s263 + $0x59c] sm:$0xf]
      %v652 = vld [vmem:[%s263 + $0x5a0] sm:$0xf]
      %v653 = vld [vmem:[%s263 + $0x5a4] sm:$0xf]
      %v654 = vld [vmem:[%s263 + $0x5a8] sm:$0xf]
      %v655 = vld [vmem:[%s263 + $0x5ac] sm:$0xf]
      %v656 = vld [vmem:[%s263 + $0x5b0] sm:$0xf]
      %v657 = vld [vmem:[%s263 + $0x5b4] sm:$0xf]
      %v658 = vld [vmem:[%s263 + $0x5b8] sm:$0xf]
      %v659 = vld [vmem:[%s263 + $0x5bc] sm:$0xf]
      %v660 = vld [vmem:[%s263 + $0x5c0] sm:$0xf]
      %v661 = vld [vmem:[%s263 + $0x5c4] sm:$0xf]
      %v662 = vld [vmem:[%s263 + $0x5c8] sm:$0xf]
      %v663 = vld [vmem:[%s263 + $0x5cc] sm:$0xf]
      %v664 = vld [vmem:[%s263 + $0x5d0] sm:$0xf]
      %v665 = vld [vmem:[%s263 + $0x5d4] sm:$0xf]
      %v666 = vld [vmem:[%s263 + $0x5d8] sm:$0xf]
      %v667 = vld [vmem:[%s263 + $0x5dc] sm:$0xf]
      %v668 = vld [vmem:[%s263 + $0x5e0] sm:$0xf]
      %v669 = vld [vmem:[%s263 + $0x5e4] sm:$0xf]
      %v670 = vld [vmem:[%s263 + $0x5e8] sm:$0xf]
      %v671 = vld [vmem:[%s263 + $0x5ec] sm:$0xf]
      %v672 = vld [vmem:[%s263 + $0x5f0] sm:$0xf]
      %v673 = vld [vmem:[%s263 + $0x5f4] sm:$0xf]
      %v674 = vld [vmem:[%s263 + $0x5f8] sm:$0xf]
      %v675 = vld [vmem:[%s263 + $0x5fc] sm:$0xf]
      %v676 = vld [vmem:[%s263 + $0x600] sm:$0xf]
      %v677 = vld [vmem:[%s263 + $0x604] sm:$0xf]
      %v678 = vld [vmem:[%s263 + $0x608] sm:$0xf]
      %v679 = vld [vmem:[%s263 + $0x60c] sm:$0xf]
      %v680 = vld [vmem:[%s263 + $0x610] sm:$0xf]
      %v681 = vld [vmem:[%s263 + $0x614] sm:$0xf]
      %v682 = vld [vmem:[%s263 + $0x618] sm:$0xf]
      %v683 = vld [vmem:[%s263 + $0x61c] sm:$0xf]
      %v684 = vld [vmem:[%s263 + $0x620] sm:$0xf]
      %v685 = vld [vmem:[%s263 + $0x624] sm:$0xf]
      %v686 = vld [vmem:[%s263 + $0x628] sm:$0xf]
      %v687 = vld [vmem:[%s263 + $0x62c] sm:$0xf]
      %v688 = vld [vmem:[%s263 + $0x630] sm:$0xf]
      %v689 = vld [vmem:[%s263 + $0x634] sm:$0xf]
      %v690 = vld [vmem:[%s263 + $0x638] sm:$0xf]
      %v691 = vld [vmem:[%s263 + $0x63c] sm:$0xf]
      %v692 = vld [vmem:[%s263 + $0x640] sm:$0xf]
      %v693 = vld [vmem:[%s263 + $0x644] sm:$0xf]
      %v694 = vld [vmem:[%s263 + $0x648] sm:$0xf]
      %v695 = vld [vmem:[%s263 + $0x64c] sm:$0xf]
      %v696 = vld [vmem:[%s263 + $0x650] sm:$0xf]
      %v697 = vld [vmem:[%s263 + $0x654] sm:$0xf]
      %v698 = vld [vmem:[%s263 + $0x658] sm:$0xf]
      %v699 = vld [vmem:[%s263 + $0x65c] sm:$0xf]
      %v700 = vld [vmem:[%s263 + $0x660] sm:$0xf]
      %v701 = vld [vmem:[%s263 + $0x664] sm:$0xf]
      %v702 = vld [vmem:[%s263 + $0x668] sm:$0xf]
      %v703 = vld [vmem:[%s263 + $0x66c] sm:$0xf]
      %v704 = vld [vmem:[%s263 + $0x670] sm:$0xf]
      %v705 = vld [vmem:[%s263 + $0x674] sm:$0xf]
      %v706 = vld [vmem:[%s263 + $0x678] sm:$0xf]
      %v707 = vld [vmem:[%s263 + $0x67c] sm:$0xf]
      %v708 = vld [vmem:[%s263 + $0x680] sm:$0xf]
      %v709 = vld [vmem:[%s263 + $0x684] sm:$0xf]
      %v710 = vld [vmem:[%s263 + $0x688] sm:$0xf]
      %v711 = vld [vmem:[%s263 + $0x68c] sm:$0xf]
      %v712 = vld [vmem:[%s263 + $0x690] sm:$0xf]
      %v713 = vld [vmem:[%s263 + $0x694] sm:$0xf]
      %v714 = vld [vmem:[%s263 + $0x698] sm:$0xf]
      %v715 = vld [vmem:[%s263 + $0x69c] sm:$0xf]
      %v716 = vld [vmem:[%s263 + $0x6a0] sm:$0xf]
      %v717 = vld [vmem:[%s263 + $0x6a4] sm:$0xf]
      %v718 = vld [vmem:[%s263 + $0x6a8] sm:$0xf]
      %v719 = vld [vmem:[%s263 + $0x6ac] sm:$0xf]
      %v720 = vld [vmem:[%s263 + $0x6b0] sm:$0xf]
      %v721 = vld [vmem:[%s263 + $0x6b4] sm:$0xf]
      %v722 = vld [vmem:[%s263 + $0x6b8] sm:$0xf]
      %v723 = vld [vmem:[%s263 + $0x6bc] sm:$0xf]
      %v724 = vld [vmem:[%s263 + $0x6c0] sm:$0xf]
      %v725 = vld [vmem:[%s263 + $0x6c4] sm:$0xf]
      %v726 = vld [vmem:[%s263 + $0x6c8] sm:$0xf]
      %v727 = vld [vmem:[%s263 + $0x6cc] sm:$0xf]
      %v728 = vld [vmem:[%s263 + $0x6d0] sm:$0xf]
      %v729 = vld [vmem:[%s263 + $0x6d4] sm:$0xf]
      %v730 = vld [vmem:[%s263 + $0x6d8] sm:$0xf]
      %v731 = vld [vmem:[%s263 + $0x6dc] sm:$0xf]
      %v732 = vld [vmem:[%s263 + $0x6e0] sm:$0xf]
      %v733 = vld [vmem:[%s263 + $0x6e4] sm:$0xf]
      %v734 = vld [vmem:[%s263 + $0x6e8] sm:$0xf]
      %v735 = vld [vmem:[%s263 + $0x6ec] sm:$0xf]
      %v736 = vld [vmem:[%s263 + $0x6f0] sm:$0xf]
      %v737 = vld [vmem:[%s263 + $0x6f4] sm:$0xf]
      %v738 = vld [vmem:[%s263 + $0x6f8] sm:$0xf]
      %v739 = vld [vmem:[%s263 + $0x6fc] sm:$0xf]
      %v740 = vld [vmem:[%s263 + $0x700] sm:$0xf]
      %v741 = vld [vmem:[%s263 + $0x704] sm:$0xf]
      %v742 = vld [vmem:[%s263 + $0x708] sm:$0xf]
      %v743 = vld [vmem:[%s263 + $0x70c] sm:$0xf]
      %v744 = vld [vmem:[%s263 + $0x710] sm:$0xf]
      %v745 = vld [vmem:[%s263 + $0x714] sm:$0xf]
      %v746 = vld [vmem:[%s263 + $0x718] sm:$0xf]
      %v747 = vld [vmem:[%s263 + $0x71c] sm:$0xf]
      %v748 = vld [vmem:[%s263 + $0x720] sm:$0xf]
      %v749 = vld [vmem:[%s263 + $0x724] sm:$0xf]
      %v750 = vld [vmem:[%s263 + $0x728] sm:$0xf]
      %v751 = vld [vmem:[%s263 + $0x72c] sm:$0xf]
      %v752 = vld [vmem:[%s263 + $0x730] sm:$0xf]
      %v753 = vld [vmem:[%s263 + $0x734] sm:$0xf]
      %v754 = vld [vmem:[%s263 + $0x738] sm:$0xf]
      %v755 = vld [vmem:[%s263 + $0x73c] sm:$0xf]
      %v756 = vld [vmem:[%s263 + $0x740] sm:$0xf]
      %v757 = vld [vmem:[%s263 + $0x744] sm:$0xf]
      %v758 = vld [vmem:[%s263 + $0x748] sm:$0xf]
      %v759 = vld [vmem:[%s263 + $0x74c] sm:$0xf]
      %v760 = vld [vmem:[%s263 + $0x750] sm:$0xf]
      %v761 = vld [vmem:[%s263 + $0x754] sm:$0xf]
      %v762 = vld [vmem:[%s263 + $0x758] sm:$0xf]
      %v763 = vld [vmem:[%s263 + $0x75c] sm:$0xf]
      %v764 = vld [vmem:[%s263 + $0x760] sm:$0xf]
      %v765 = vld [vmem:[%s263 + $0x764] sm:$0xf]
      %v766 = vld [vmem:[%s263 + $0x768] sm:$0xf]
      %v767 = vld [vmem:[%s263 + $0x76c] sm:$0xf]
      %v768 = vld [vmem:[%s263 + $0x770] sm:$0xf]
      %v769 = vld [vmem:[%s263 + $0x774] sm:$0xf]
      %v770 = vld [vmem:[%s263 + $0x778] sm:$0xf]
      %v771 = vld [vmem:[%s263 + $0x77c] sm:$0xf]
      %v772 = vld [vmem:[%s263 + $0x780] sm:$0xf]
      %v773 = vld [vmem:[%s263 + $0x784] sm:$0xf]
      %v774 = vld [vmem:[%s263 + $0x788] sm:$0xf]
      %v775 = vld [vmem:[%s263 + $0x78c] sm:$0xf]
      %v776 = vld [vmem:[%s263 + $0x790] sm:$0xf]
      %v777 = vld [vmem:[%s263 + $0x794] sm:$0xf]
      %v778 = vld [vmem:[%s263 + $0x798] sm:$0xf]
      %v779 = vld [vmem:[%s263 + $0x79c] sm:$0xf]
      %v780 = vld [vmem:[%s263 + $0x7a0] sm:$0xf]
      %v781 = vld [vmem:[%s263 + $0x7a4] sm:$0xf]
      %v782 = vld [vmem:[%s263 + $0x7a8] sm:$0xf]
      %v783 = vld [vmem:[%s263 + $0x7ac] sm:$0xf]
      %v784 = vld [vmem:[%s263 + $0x7b0] sm:$0xf]
      %v785 = vld [vmem:[%s263 + $0x7b4] sm:$0xf]
      %v786 = vld [vmem:[%s263 + $0x7b8] sm:$0xf]
      %v787 = vld [vmem:[%s263 + $0x7bc] sm:$0xf]
      %v788 = vld [vmem:[%s263 + $0x7c0] sm:$0xf]
      %v789 = vld [vmem:[%s263 + $0x7c4] sm:$0xf]
      %v790 = vld [vmem:[%s263 + $0x7c8] sm:$0xf]
      %v791 = vld [vmem:[%s263 + $0x7cc] sm:$0xf]
      %v792 = vld [vmem:[%s263 + $0x7d0] sm:$0xf]
      %v793 = vld [vmem:[%s263 + $0x7d4] sm:$0xf]
      %v794 = vld [vmem:[%s263 + $0x7d8] sm:$0xf]
      %v795 = vld [vmem:[%s263 + $0x7dc] sm:$0xf]
      %v796 = vld [vmem:[%s263 + $0x7e0] sm:$0xf]
      %v797 = vld [vmem:[%s263 + $0x7e4] sm:$0xf]
      %v798 = vld [vmem:[%s263 + $0x7e8] sm:$0xf]
      %v799 = vld [vmem:[%s263 + $0x7ec] sm:$0xf]
      %v800 = vld [vmem:[%s263 + $0x7f0] sm:$0xf]
      %v801 = vld [vmem:[%s263 + $0x7f4] sm:$0xf]
      %v802 = vld [vmem:[%s263 + $0x7f8] sm:$0xf]
      %v803 = vld [vmem:[%s263 + $0x7fc] sm:$0xf]
      %v804 = vld [vmem:[%s263 + $0x800] sm:$0xf]
      %v805 = vld [vmem:[%s263 + $0x804] sm:$0xf]
      %v806 = vld [vmem:[%s263 + $0x808] sm:$0xf]
      %v807 = vld [vmem:[%s263 + $0x80c] sm:$0xf]
      %v808 = vld [vmem:[%s263 + $0x810] sm:$0xf]
      %v809 = vld [vmem:[%s263 + $0x814] sm:$0xf]
      %v810 = vld [vmem:[%s263 + $0x818] sm:$0xf]
      %v811 = vld [vmem:[%s263 + $0x81c] sm:$0xf]
      %v812 = vld [vmem:[%s263 + $0x820] sm:$0xf]
      %v813 = vld [vmem:[%s263 + $0x824] sm:$0xf]
      %v814 = vld [vmem:[%s263 + $0x828] sm:$0xf]
      %v815 = vld [vmem:[%s263 + $0x82c] sm:$0xf]
      %v816 = vld [vmem:[%s263 + $0x830] sm:$0xf]
      %v817 = vld [vmem:[%s263 + $0x834] sm:$0xf]
      %v818 = vld [vmem:[%s263 + $0x838] sm:$0xf]
      %v819 = vld [vmem:[%s263 + $0x83c] sm:$0xf]
      %v820 = vld [vmem:[%s263 + $0x840] sm:$0xf]
      %v821 = vld [vmem:[%s263 + $0x844] sm:$0xf]
      %v822 = vld [vmem:[%s263 + $0x848] sm:$0xf]
      %v823 = vld [vmem:[%s263 + $0x84c] sm:$0xf]
      %v824 = vld [vmem:[%s263 + $0x850] sm:$0xf]
      %v825 = vld [vmem:[%s263 + $0x854] sm:$0xf]
      %v826 = vld [vmem:[%s263 + $0x858] sm:$0xf]
      %v827 = vld [vmem:[%s263 + $0x85c] sm:$0xf]
      %v828 = vld [vmem:[%s263 + $0x860] sm:$0xf]
      %v829 = vld [vmem:[%s263 + $0x864] sm:$0xf]
      %v830 = vld [vmem:[%s263 + $0x868] sm:$0xf]
      %v831 = vld [vmem:[%s263 + $0x86c] sm:$0xf]
      %v832 = vld [vmem:[%s263 + $0x870] sm:$0xf]
      %v833 = vld [vmem:[%s263 + $0x874] sm:$0xf]
      %v834 = vld [vmem:[%s263 + $0x878] sm:$0xf]
      %v835 = vld [vmem:[%s263 + $0x87c] sm:$0xf]
      %v836 = vld [vmem:[%s263 + $0x880] sm:$0xf]
      %v837 = vld [vmem:[%s263 + $0x884] sm:$0xf]
      %v838 = vld [vmem:[%s263 + $0x888] sm:$0xf]
      %v839 = vld [vmem:[%s263 + $0x88c] sm:$0xf]
      %v840 = vld [vmem:[%s263 + $0x890] sm:$0xf]
      %v841 = vld [vmem:[%s263 + $0x894] sm:$0xf]
      %v842 = vld [vmem:[%s263 + $0x898] sm:$0xf]
      %v843 = vld [vmem:[%s263 + $0x89c] sm:$0xf]
      %v844 = vld [vmem:[%s263 + $0x8a0] sm:$0xf]
      %v845 = vld [vmem:[%s263 + $0x8a4] sm:$0xf]
      %v846 = vld [vmem:[%s263 + $0x8a8] sm:$0xf]
      %v847 = vld [vmem:[%s263 + $0x8ac] sm:$0xf]
      %v848 = vld [vmem:[%s263 + $0x8b0] sm:$0xf]
      %v849 = vld [vmem:[%s263 + $0x8b4] sm:$0xf]
      %v850 = vld [vmem:[%s263 + $0x8b8] sm:$0xf]
      %v851 = vld [vmem:[%s263 + $0x8bc] sm:$0xf]
      %v852 = vld [vmem:[%s263 + $0x8c0] sm:$0xf]
      %v853 = vld [vmem:[%s263 + $0x8c4] sm:$0xf]
      %v854 = vld [vmem:[%s263 + $0x8c8] sm:$0xf]
      %v855 = vld [vmem:[%s263 + $0x8cc] sm:$0xf]
      %v856 = vld [vmem:[%s263 + $0x8d0] sm:$0xf]
      %v857 = vld [vmem:[%s263 + $0x8d4] sm:$0xf]
      %v858 = vld [vmem:[%s263 + $0x8d8] sm:$0xf]
      %v859 = vld [vmem:[%s263 + $0x8dc] sm:$0xf]
      %v860 = vld [vmem:[%s263 + $0x8e0] sm:$0xf]
      %v861 = vld [vmem:[%s263 + $0x8e4] sm:$0xf]
      %v862 = vld [vmem:[%s263 + $0x8e8] sm:$0xf]
      %v863 = vld [vmem:[%s263 + $0x8ec] sm:$0xf]
      %v864 = vld [vmem:[%s263 + $0x8f0] sm:$0xf]
      %v865 = vld [vmem:[%s263 + $0x8f4] sm:$0xf]
      %v866 = vld [vmem:[%s263 + $0x8f8] sm:$0xf]
      %v867 = vld [vmem:[%s263 + $0x8fc] sm:$0xf]
      %v868 = vld [vmem:[%s263 + $0x900] sm:$0xf]
      %v869 = vld [vmem:[%s263 + $0x904] sm:$0xf]
      %v870 = vld [vmem:[%s263 + $0x908] sm:$0xf]
      %v871 = vld [vmem:[%s263 + $0x90c] sm:$0xf]
      %v872 = vld [vmem:[%s263 + $0x910] sm:$0xf]
      %v873 = vld [vmem:[%s263 + $0x914] sm:$0xf]
      %v874 = vld [vmem:[%s263 + $0x918] sm:$0xf]
      %v875 = vld [vmem:[%s263 + $0x91c] sm:$0xf]
      %v876 = vld [vmem:[%s263 + $0x920] sm:$0xf]
      %v877 = vld [vmem:[%s263 + $0x924] sm:$0xf]
      %v878 = vld [vmem:[%s263 + $0x928] sm:$0xf]
      %v879 = vld [vmem:[%s263 + $0x92c] sm:$0xf]
      %v880 = vld [vmem:[%s263 + $0x930] sm:$0xf]
      %v881 = vld [vmem:[%s263 + $0x934] sm:$0xf]
      %v882 = vld [vmem:[%s263 + $0x938] sm:$0xf]
      %v883 = vld [vmem:[%s263 + $0x93c] sm:$0xf]
      %v884 = vld [vmem:[%s263 + $0x940] sm:$0xf]
      %v885 = vld [vmem:[%s263 + $0x944] sm:$0xf]
      %v886 = vld [vmem:[%s263 + $0x948] sm:$0xf]
      %v887 = vld [vmem:[%s263 + $0x94c] sm:$0xf]
      %v888 = vld [vmem:[%s263 + $0x950] sm:$0xf]
      %v889 = vld [vmem:[%s263 + $0x954] sm:$0xf]
      %v890 = vld [vmem:[%s263 + $0x958] sm:$0xf]
      %v891 = vld [vmem:[%s263 + $0x95c] sm:$0xf]
      %v892 = vld [vmem:[%s263 + $0x960] sm:$0xf]
      %v893 = vld [vmem:[%s263 + $0x964] sm:$0xf]
      %v894 = vld [vmem:[%s263 + $0x968] sm:$0xf]
      %v895 = vld [vmem:[%s263 + $0x96c] sm:$0xf]
      %v896 = vld [vmem:[%s263 + $0x970] sm:$0xf]
      %v897 = vld [vmem:[%s263 + $0x974] sm:$0xf]
      %v898 = vld [vmem:[%s263 + $0x978] sm:$0xf]
      %v899 = vld [vmem:[%s263 + $0x97c] sm:$0xf]
      %v900 = vld [vmem:[%s263 + $0x980] sm:$0xf]
      %v901 = vld [vmem:[%s263 + $0x984] sm:$0xf]
      %v902 = vld [vmem:[%s263 + $0x988] sm:$0xf]
      %v903 = vld [vmem:[%s263 + $0x98c] sm:$0xf]
      %v904 = vld [vmem:[%s263 + $0x990] sm:$0xf]
      %v905 = vld [vmem:[%s263 + $0x994] sm:$0xf]
      %v906 = vld [vmem:[%s263 + $0x998] sm:$0xf]
      %v907 = vld [vmem:[%s263 + $0x99c] sm:$0xf]
      %v908 = vld [vmem:[%s263 + $0x9a0] sm:$0xf]
      %v909 = vld [vmem:[%s263 + $0x9a4] sm:$0xf]
      %v910 = vld [vmem:[%s263 + $0x9a8] sm:$0xf]
      %v911 = vld [vmem:[%s263 + $0x9ac] sm:$0xf]
      %v912 = vld [vmem:[%s263 + $0x9b0] sm:$0xf]
      %v913 = vld [vmem:[%s263 + $0x9b4] sm:$0xf]
      %v914 = vld [vmem:[%s263 + $0x9b8] sm:$0xf]
      %v915 = vld [vmem:[%s263 + $0x9bc] sm:$0xf]
      %v916 = vld [vmem:[%s263 + $0x9c0] sm:$0xf]
      %v917 = vld [vmem:[%s263 + $0x9c4] sm:$0xf]
      %v918 = vld [vmem:[%s263 + $0x9c8] sm:$0xf]
      %v919 = vld [vmem:[%s263 + $0x9cc] sm:$0xf]
      %v920 = vld [vmem:[%s263 + $0x9d0] sm:$0xf]
      %v921 = vld [vmem:[%s263 + $0x9d4] sm:$0xf]
      %v922 = vld [vmem:[%s263 + $0x9d8] sm:$0xf]
      %v923 = vld [vmem:[%s263 + $0x9dc] sm:$0xf]
      %v924 = vld [vmem:[%s263 + $0x9e0] sm:$0xf]
      %v925 = vld [vmem:[%s263 + $0x9e4] sm:$0xf]
      %v926 = vld [vmem:[%s263 + $0x9e8] sm:$0xf]
      %v927 = vld [vmem:[%s263 + $0x9ec] sm:$0xf]
      %v928 = vld [vmem:[%s263 + $0x9f0] sm:$0xf]
      %v929 = vld [vmem:[%s263 + $0x9f4] sm:$0xf]
      %v930 = vld [vmem:[%s263 + $0x9f8] sm:$0xf]
      %v931 = vld [vmem:[%s263 + $0x9fc] sm:$0xf]
      %v932 = vld [vmem:[%s263 + $0xa00] sm:$0xf]
      %v933 = vld [vmem:[%s263 + $0xa04] sm:$0xf]
      %v934 = vld [vmem:[%s263 + $0xa08] sm:$0xf]
      %v935 = vld [vmem:[%s263 + $0xa0c] sm:$0xf]
      %v936 = vld [vmem:[%s263 + $0xa10] sm:$0xf]
      %v937 = vld [vmem:[%s263 + $0xa14] sm:$0xf]
      %v938 = vld [vmem:[%s263 + $0xa18] sm:$0xf]
      %v939 = vld [vmem:[%s263 + $0xa1c] sm:$0xf]
      %v940 = vld [vmem:[%s263 + $0xa20] sm:$0xf]
      %v941 = vld [vmem:[%s263 + $0xa24] sm:$0xf]
      %v942 = vld [vmem:[%s263 + $0xa28] sm:$0xf]
      %v943 = vld [vmem:[%s263 + $0xa2c] sm:$0xf]
      %v944 = vld [vmem:[%s263 + $0xa30] sm:$0xf]
      %v945 = vld [vmem:[%s263 + $0xa34] sm:$0xf]
      %v946 = vld [vmem:[%s263 + $0xa38] sm:$0xf]
      %v947 = vld [vmem:[%s263 + $0xa3c] sm:$0xf]
      %v948 = vld [vmem:[%s263 + $0xa40] sm:$0xf]
      %v949 = vld [vmem:[%s263 + $0xa44] sm:$0xf]
      %v950 = vld [vmem:[%s263 + $0xa48] sm:$0xf]
      %v951 = vld [vmem:[%s263 + $0xa4c] sm:$0xf]
      %v952 = vld [vmem:[%s263 + $0xa50] sm:$0xf]
      %v953 = vld [vmem:[%s263 + $0xa54] sm:$0xf]
      %v954 = vld [vmem:[%s263 + $0xa58] sm:$0xf]
      %v955 = vld [vmem:[%s263 + $0xa5c] sm:$0xf]
      %v956 = vld [vmem:[%s263 + $0xa60] sm:$0xf]
      %v957 = vld [vmem:[%s263 + $0xa64] sm:$0xf]
      %v958 = vld [vmem:[%s263 + $0xa68] sm:$0xf]
      %v959 = vld [vmem:[%s263 + $0xa6c] sm:$0xf]
      %v960 = vld [vmem:[%s263 + $0xa70] sm:$0xf]
      %v961 = vld [vmem:[%s263 + $0xa74] sm:$0xf]
      %v962 = vld [vmem:[%s263 + $0xa78] sm:$0xf]
      %v963 = vld [vmem:[%s263 + $0xa7c] sm:$0xf]
      %v964 = vld [vmem:[%s263 + $0xa80] sm:$0xf]
      %v965 = vld [vmem:[%s263 + $0xa84] sm:$0xf]
      %v966 = vld [vmem:[%s263 + $0xa88] sm:$0xf]
      %v967 = vld [vmem:[%s263 + $0xa8c] sm:$0xf]
      %v968 = vld [vmem:[%s263 + $0xa90] sm:$0xf]
      %v969 = vld [vmem:[%s263 + $0xa94] sm:$0xf]
      %v970 = vld [vmem:[%s263 + $0xa98] sm:$0xf]
      %v971 = vld [vmem:[%s263 + $0xa9c] sm:$0xf]
      %v972 = vld [vmem:[%s263 + $0xaa0] sm:$0xf]
      %v973 = vld [vmem:[%s263 + $0xaa4] sm:$0xf]
      %v974 = vld [vmem:[%s263 + $0xaa8] sm:$0xf]
      %v975 = vld [vmem:[%s263 + $0xaac] sm:$0xf]
      %v976 = vld [vmem:[%s263 + $0xab0] sm:$0xf]
      %v977 = vld [vmem:[%s263 + $0xab4] sm:$0xf]
      %v978 = vld [vmem:[%s263 + $0xab8] sm:$0xf]
      %v979 = vld [vmem:[%s263 + $0xabc] sm:$0xf]
      %v980 = vld [vmem:[%s263 + $0xac0] sm:$0xf]
      %v981 = vld [vmem:[%s263 + $0xac4] sm:$0xf]
      %v982 = vld [vmem:[%s263 + $0xac8] sm:$0xf]
      %v983 = vld [vmem:[%s263 + $0xacc] sm:$0xf]
      %v984 = vld [vmem:[%s263 + $0xad0] sm:$0xf]
      %v985 = vld [vmem:[%s263 + $0xad4] sm:$0xf]
      %v986 = vld [vmem:[%s263 + $0xad8] sm:$0xf]
      %v987 = vld [vmem:[%s263 + $0xadc] sm:$0xf]
      %v988 = vld [vmem:[%s263 + $0xae0] sm:$0xf]
      %v989 = vld [vmem:[%s263 + $0xae4] sm:$0xf]
      %v990 = vld [vmem:[%s263 + $0xae8] sm:$0xf]
      %v991 = vld [vmem:[%s263 + $0xaec] sm:$0xf]
      %v992 = vld [vmem:[%s263 + $0xaf0] sm:$0xf]
      %v993 = vld [vmem:[%s263 + $0xaf4] sm:$0xf]
      %v994 = vld [vmem:[%s263 + $0xaf8] sm:$0xf]
      %v995 = vld [vmem:[%s263 + $0xafc] sm:$0xf]
      %v996 = vld [vmem:[%s263 + $0xb00] sm:$0xf]
      %v997 = vld [vmem:[%s263 + $0xb04] sm:$0xf]
      %v998 = vld [vmem:[%s263 + $0xb08] sm:$0xf]
      %v999 = vld [vmem:[%s263 + $0xb0c] sm:$0xf]
      %v1000 = vld [vmem:[%s263 + $0xb10] sm:$0xf]
      %v1001 = vld [vmem:[%s263 + $0xb14] sm:$0xf]
      %v1002 = vld [vmem:[%s263 + $0xb18] sm:$0xf]
      %v1003 = vld [vmem:[%s263 + $0xb1c] sm:$0xf]
      %v1004 = vld [vmem:[%s263 + $0xb20] sm:$0xf]
      %v1005 = vld [vmem:[%s263 + $0xb24] sm:$0xf]
      %v1006 = vld [vmem:[%s263 + $0xb28] sm:$0xf]
      %v1007 = vld [vmem:[%s263 + $0xb2c] sm:$0xf]
      %v1008 = vld [vmem:[%s263 + $0xb30] sm:$0xf]
      %v1009 = vld [vmem:[%s263 + $0xb34] sm:$0xf]
      %v1010 = vld [vmem:[%s263 + $0xb38] sm:$0xf]
      %v1011 = vld [vmem:[%s263 + $0xb3c] sm:$0xf]
      %v1012 = vld [vmem:[%s263 + $0xb40] sm:$0xf]
      %v1013 = vld [vmem:[%s263 + $0xb44] sm:$0xf]
      %v1014 = vld [vmem:[%s263 + $0xb48] sm:$0xf]
      %v1015 = vld [vmem:[%s263 + $0xb4c] sm:$0xf]
      %v1016 = vld [vmem:[%s263 + $0xb50] sm:$0xf]
      %v1017 = vld [vmem:[%s263 + $0xb54] sm:$0xf]
      %v1018 = vld [vmem:[%s263 + $0xb58] sm:$0xf]
      %v1019 = vld [vmem:[%s263 + $0xb5c] sm:$0xf]
      %v1020 = vld [vmem:[%s263 + $0xb60] sm:$0xf]
      %v1021 = vld [vmem:[%s263 + $0xb64] sm:$0xf]
      %v1022 = vld [vmem:[%s263 + $0xb68] sm:$0xf]
      %v1023 = vld [vmem:[%s263 + $0xb6c] sm:$0xf]
      %v1024 = vld [vmem:[%s263 + $0xb70] sm:$0xf]
      %v1025 = vld [vmem:[%s263 + $0xb74] sm:$0xf]
      %v1026 = vld [vmem:[%s263 + $0xb78] sm:$0xf]
      %v1027 = vld [vmem:[%s263 + $0xb7c] sm:$0xf]
      %v1028 = vld [vmem:[%s263 + $0xb80] sm:$0xf]
      %v1029 = vld [vmem:[%s263 + $0xb84] sm:$0xf]
      %v1030 = vld [vmem:[%s263 + $0xb88] sm:$0xf]
      %v1031 = vld [vmem:[%s263 + $0xb8c] sm:$0xf]
      %v1032 = vld [vmem:[%s263 + $0xb90] sm:$0xf]
      %v1033 = vld [vmem:[%s263 + $0xb94] sm:$0xf]
      %v1034 = vld [vmem:[%s263 + $0xb98] sm:$0xf]
      %v1035 = vld [vmem:[%s263 + $0xb9c] sm:$0xf]
      %v1036 = vld [vmem:[%s263 + $0xba0] sm:$0xf]
      %v1037 = vld [vmem:[%s263 + $0xba4] sm:$0xf]
      %v1038 = vld [vmem:[%s263 + $0xba8] sm:$0xf]
      %v1039 = vld [vmem:[%s263 + $0xbac] sm:$0xf]
      %v1040 = vld [vmem:[%s263 + $0xbb0] sm:$0xf]
      %v1041 = vld [vmem:[%s263 + $0xbb4] sm:$0xf]
      %v1042 = vld [vmem:[%s263 + $0xbb8] sm:$0xf]
      %v1043 = vld [vmem:[%s263 + $0xbbc] sm:$0xf]
      %v1044 = vld [vmem:[%s263 + $0xbc0] sm:$0xf]
      %v1045 = vld [vmem:[%s263 + $0xbc4] sm:$0xf]
      %v1046 = vld [vmem:[%s263 + $0xbc8] sm:$0xf]
      %v1047 = vld [vmem:[%s263 + $0xbcc] sm:$0xf]
      %v1048 = vld [vmem:[%s263 + $0xbd0] sm:$0xf]
      %v1049 = vld [vmem:[%s263 + $0xbd4] sm:$0xf]
      %v1050 = vld [vmem:[%s263 + $0xbd8] sm:$0xf]
      %v1051 = vld [vmem:[%s263 + $0xbdc] sm:$0xf]
      %v1052 = vld [vmem:[%s263 + $0xbe0] sm:$0xf]
      %v1053 = vld [vmem:[%s263 + $0xbe4] sm:$0xf]
      %v1054 = vld [vmem:[%s263 + $0xbe8] sm:$0xf]
      %v1055 = vld [vmem:[%s263 + $0xbec] sm:$0xf]
      %v1056 = vld [vmem:[%s263 + $0xbf0] sm:$0xf]
      %v1057 = vld [vmem:[%s263 + $0xbf4] sm:$0xf]
      %v1058 = vld [vmem:[%s263 + $0xbf8] sm:$0xf]
      %v1059 = vld [vmem:[%s263 + $0xbfc] sm:$0xf]
      %v1060 = vld [vmem:[%s263 + $0xc00] sm:$0xf]
      %v1061 = vld [vmem:[%s263 + $0xc04] sm:$0xf]
      %v1062 = vld [vmem:[%s263 + $0xc08] sm:$0xf]
      %v1063 = vld [vmem:[%s263 + $0xc0c] sm:$0xf]
      %v1064 = vld [vmem:[%s263 + $0xc10] sm:$0xf]
      %v1065 = vld [vmem:[%s263 + $0xc14] sm:$0xf]
      %v1066 = vld [vmem:[%s263 + $0xc18] sm:$0xf]
      %v1067 = vld [vmem:[%s263 + $0xc1c] sm:$0xf]
      %v1068 = vld [vmem:[%s263 + $0xc20] sm:$0xf]
      %v1069 = vld [vmem:[%s263 + $0xc24] sm:$0xf]
      %v1070 = vld [vmem:[%s263 + $0xc28] sm:$0xf]
      %v1071 = vld [vmem:[%s263 + $0xc2c] sm:$0xf]
      %v1072 = vld [vmem:[%s263 + $0xc30] sm:$0xf]
      %v1073 = vld [vmem:[%s263 + $0xc34] sm:$0xf]
      %v1074 = vld [vmem:[%s263 + $0xc38] sm:$0xf]
      %v1075 = vld [vmem:[%s263 + $0xc3c] sm:$0xf]
      %v1076 = vld [vmem:[%s263 + $0xc40] sm:$0xf]
      %v1077 = vld [vmem:[%s263 + $0xc44] sm:$0xf]
      %v1078 = vld [vmem:[%s263 + $0xc48] sm:$0xf]
      %v1079 = vld [vmem:[%s263 + $0xc4c] sm:$0xf]
      %v1080 = vld [vmem:[%s263 + $0xc50] sm:$0xf]
      %v1081 = vld [vmem:[%s263 + $0xc54] sm:$0xf]
      %v1082 = vld [vmem:[%s263 + $0xc58] sm:$0xf]
      %v1083 = vld [vmem:[%s263 + $0xc5c] sm:$0xf]
      %v1084 = vld [vmem:[%s263 + $0xc60] sm:$0xf]
      %v1085 = vld [vmem:[%s263 + $0xc64] sm:$0xf]
      %v1086 = vld [vmem:[%s263 + $0xc68] sm:$0xf]
      %v1087 = vld [vmem:[%s263 + $0xc6c] sm:$0xf]
      %v1088 = vld [vmem:[%s263 + $0xc70] sm:$0xf]
      %v1089 = vld [vmem:[%s263 + $0xc74] sm:$0xf]
      %v1090 = vld [vmem:[%s263 + $0xc78] sm:$0xf]
      %v1091 = vld [vmem:[%s263 + $0xc7c] sm:$0xf]
      %v1092 = vld [vmem:[%s263 + $0xc80] sm:$0xf]
      %v1093 = vld [vmem:[%s263 + $0xc84] sm:$0xf]
      %v1094 = vld [vmem:[%s263 + $0xc88] sm:$0xf]
      %v1095 = vld [vmem:[%s263 + $0xc8c] sm:$0xf]
      %v1096 = vld [vmem:[%s263 + $0xc90] sm:$0xf]
      %v1097 = vld [vmem:[%s263 + $0xc94] sm:$0xf]
      %v1098 = vld [vmem:[%s263 + $0xc98] sm:$0xf]
      %v1099 = vld [vmem:[%s263 + $0xc9c] sm:$0xf]
      %v1100 = vld [vmem:[%s263 + $0xca0] sm:$0xf]
      %v1101 = vld [vmem:[%s263 + $0xca4] sm:$0xf]
      %v1102 = vld [vmem:[%s263 + $0xca8] sm:$0xf]
      %v1103 = vld [vmem:[%s263 + $0xcac] sm:$0xf]
      %v1104 = vld [vmem:[%s263 + $0xcb0] sm:$0xf]
      %v1105 = vld [vmem:[%s263 + $0xcb4] sm:$0xf]
      %v1106 = vld [vmem:[%s263 + $0xcb8] sm:$0xf]
      %v1107 = vld [vmem:[%s263 + $0xcbc] sm:$0xf]
      %v1108 = vld [vmem:[%s263 + $0xcc0] sm:$0xf]
      %v1109 = vld [vmem:[%s263 + $0xcc4] sm:$0xf]
      %v1110 = vld [vmem:[%s263 + $0xcc8] sm:$0xf]
      %v1111 = vld [vmem:[%s263 + $0xccc] sm:$0xf]
      %v1112 = vld [vmem:[%s263 + $0xcd0] sm:$0xf]
      %v1113 = vld [vmem:[%s263 + $0xcd4] sm:$0xf]
      %v1114 = vld [vmem:[%s263 + $0xcd8] sm:$0xf]
      %v1115 = vld [vmem:[%s263 + $0xcdc] sm:$0xf]
      %v1116 = vld [vmem:[%s263 + $0xce0] sm:$0xf]
      %v1117 = vld [vmem:[%s263 + $0xce4] sm:$0xf]
      %v1118 = vld [vmem:[%s263 + $0xce8] sm:$0xf]
      %v1119 = vld [vmem:[%s263 + $0xcec] sm:$0xf]
      %v1120 = vld [vmem:[%s263 + $0xcf0] sm:$0xf]
      %v1121 = vld [vmem:[%s263 + $0xcf4] sm:$0xf]
      %v1122 = vld [vmem:[%s263 + $0xcf8] sm:$0xf]
      %v1123 = vld [vmem:[%s263 + $0xcfc] sm:$0xf]
      %v1124 = vld [vmem:[%s263 + $0xd00] sm:$0xf]
      %v1125 = vld [vmem:[%s263 + $0xd04] sm:$0xf]
      %v1126 = vld [vmem:[%s263 + $0xd08] sm:$0xf]
      %v1127 = vld [vmem:[%s263 + $0xd0c] sm:$0xf]
      %v1128 = vld [vmem:[%s263 + $0xd10] sm:$0xf]
      %v1129 = vld [vmem:[%s263 + $0xd14] sm:$0xf]
      %v1130 = vld [vmem:[%s263 + $0xd18] sm:$0xf]
      %v1131 = vld [vmem:[%s263 + $0xd1c] sm:$0xf]
      %v1132 = vld [vmem:[%s263 + $0xd20] sm:$0xf]
      %v1133 = vld [vmem:[%s263 + $0xd24] sm:$0xf]
      %v1134 = vld [vmem:[%s263 + $0xd28] sm:$0xf]
      %v1135 = vld [vmem:[%s263 + $0xd2c] sm:$0xf]
      %v1136 = vld [vmem:[%s263 + $0xd30] sm:$0xf]
      %v1137 = vld [vmem:[%s263 + $0xd34] sm:$0xf]
      %v1138 = vld [vmem:[%s263 + $0xd38] sm:$0xf]
      %v1139 = vld [vmem:[%s263 + $0xd3c] sm:$0xf]
      %v1140 = vld [vmem:[%s263 + $0xd40] sm:$0xf]
      %v1141 = vld [vmem:[%s263 + $0xd44] sm:$0xf]
      %v1142 = vld [vmem:[%s263 + $0xd48] sm:$0xf]
      %v1143 = vld [vmem:[%s263 + $0xd4c] sm:$0xf]
      %v1144 = vld [vmem:[%s263 + $0xd50] sm:$0xf]
      %v1145 = vld [vmem:[%s263 + $0xd54] sm:$0xf]
      %v1146 = vld [vmem:[%s263 + $0xd58] sm:$0xf]
      %v1147 = vld [vmem:[%s263 + $0xd5c] sm:$0xf]
      %v1148 = vld [vmem:[%s263 + $0xd60] sm:$0xf]
      %v1149 = vld [vmem:[%s263 + $0xd64] sm:$0xf]
      %v1150 = vld [vmem:[%s263 + $0xd68] sm:$0xf]
      %v1151 = vld [vmem:[%s263 + $0xd6c] sm:$0xf]
      %v1152 = vld [vmem:[%s263 + $0xd70] sm:$0xf]
      %v1153 = vld [vmem:[%s263 + $0xd74] sm:$0xf]
      %v1154 = vld [vmem:[%s263 + $0xd78] sm:$0xf]
      %v1155 = vld [vmem:[%s263 + $0xd7c] sm:$0xf]
      %v1156 = vld [vmem:[%s263 + $0xd80] sm:$0xf]
      %v1157 = vld [vmem:[%s263 + $0xd84] sm:$0xf]
      %v1158 = vld [vmem:[%s263 + $0xd88] sm:$0xf]
      %v1159 = vld [vmem:[%s263 + $0xd8c] sm:$0xf]
      %v1160 = vld [vmem:[%s263 + $0xd90] sm:$0xf]
      %v1161 = vld [vmem:[%s263 + $0xd94] sm:$0xf]
      %v1162 = vld [vmem:[%s263 + $0xd98] sm:$0xf]
      %v1163 = vld [vmem:[%s263 + $0xd9c] sm:$0xf]
      %v1164 = vld [vmem:[%s263 + $0xda0] sm:$0xf]
      %v1165 = vld [vmem:[%s263 + $0xda4] sm:$0xf]
      %v1166 = vld [vmem:[%s263 + $0xda8] sm:$0xf]
      %v1167 = vld [vmem:[%s263 + $0xdac] sm:$0xf]
      %v1168 = vld [vmem:[%s263 + $0xdb0] sm:$0xf]
      %v1169 = vld [vmem:[%s263 + $0xdb4] sm:$0xf]
      %v1170 = vld [vmem:[%s263 + $0xdb8] sm:$0xf]
      %v1171 = vld [vmem:[%s263 + $0xdbc] sm:$0xf]
      %v1172 = vld [vmem:[%s263 + $0xdc0] sm:$0xf]
      %v1173 = vld [vmem:[%s263 + $0xdc4] sm:$0xf]
      %v1174 = vld [vmem:[%s263 + $0xdc8] sm:$0xf]
      %v1175 = vld [vmem:[%s263 + $0xdcc] sm:$0xf]
      %v1176 = vld [vmem:[%s263 + $0xdd0] sm:$0xf]
      %v1177 = vld [vmem:[%s263 + $0xdd4] sm:$0xf]
      %v1178 = vld [vmem:[%s263 + $0xdd8] sm:$0xf]
      %v1179 = vld [vmem:[%s263 + $0xddc] sm:$0xf]
      %v1180 = vld [vmem:[%s263 + $0xde0] sm:$0xf]
      %v1181 = vld [vmem:[%s263 + $0xde4] sm:$0xf]
      %v1182 = vld [vmem:[%s263 + $0xde8] sm:$0xf]
      %v1183 = vld [vmem:[%s263 + $0xdec] sm:$0xf]
      %v1184 = vld [vmem:[%s263 + $0xdf0] sm:$0xf]
      %v1185 = vld [vmem:[%s263 + $0xdf4] sm:$0xf]
      %v1186 = vld [vmem:[%s263 + $0xdf8] sm:$0xf]
      %v1187 = vld [vmem:[%s263 + $0xdfc] sm:$0xf]
      %v1188 = vld [vmem:[%s263 + $0xe00] sm:$0xf]
      %v1189 = vld [vmem:[%s263 + $0xe04] sm:$0xf]
      %v1190 = vld [vmem:[%s263 + $0xe08] sm:$0xf]
      %v1191 = vld [vmem:[%s263 + $0xe0c] sm:$0xf]
      %v1192 = vld [vmem:[%s263 + $0xe10] sm:$0xf]
      %v1193 = vld [vmem:[%s263 + $0xe14] sm:$0xf]
      %v1194 = vld [vmem:[%s263 + $0xe18] sm:$0xf]
      %v1195 = vld [vmem:[%s263 + $0xe1c] sm:$0xf]
      %v1196 = vld [vmem:[%s263 + $0xe20] sm:$0xf]
      %v1197 = vld [vmem:[%s263 + $0xe24] sm:$0xf]
      %v1198 = vld [vmem:[%s263 + $0xe28] sm:$0xf]
      %v1199 = vld [vmem:[%s263 + $0xe2c] sm:$0xf]
      %v1200 = vld [vmem:[%s263 + $0xe30] sm:$0xf]
      %v1201 = vld [vmem:[%s263 + $0xe34] sm:$0xf]
      %v1202 = vld [vmem:[%s263 + $0xe38] sm:$0xf]
      %v1203 = vld [vmem:[%s263 + $0xe3c] sm:$0xf]
      %v1204 = vld [vmem:[%s263 + $0xe40] sm:$0xf]
      %v1205 = vld [vmem:[%s263 + $0xe44] sm:$0xf]
      %v1206 = vld [vmem:[%s263 + $0xe48] sm:$0xf]
      %v1207 = vld [vmem:[%s263 + $0xe4c] sm:$0xf]
      %v1208 = vld [vmem:[%s263 + $0xe50] sm:$0xf]
      %v1209 = vld [vmem:[%s263 + $0xe54] sm:$0xf]
      %v1210 = vld [vmem:[%s263 + $0xe58] sm:$0xf]
      %v1211 = vld [vmem:[%s263 + $0xe5c] sm:$0xf]
      %v1212 = vld [vmem:[%s263 + $0xe60] sm:$0xf]
      %v1213 = vld [vmem:[%s263 + $0xe64] sm:$0xf]
      %v1214 = vld [vmem:[%s263 + $0xe68] sm:$0xf]
      %v1215 = vld [vmem:[%s263 + $0xe6c] sm:$0xf]
      %v1216 = vld [vmem:[%s263 + $0xe70] sm:$0xf]
      %v1217 = vld [vmem:[%s263 + $0xe74] sm:$0xf]
      %v1218 = vld [vmem:[%s263 + $0xe78] sm:$0xf]
      %v1219 = vld [vmem:[%s263 + $0xe7c] sm:$0xf]
      %v1220 = vld [vmem:[%s263 + $0xe80] sm:$0xf]
      %v1221 = vld [vmem:[%s263 + $0xe84] sm:$0xf]
      %v1222 = vld [vmem:[%s263 + $0xe88] sm:$0xf]
      %v1223 = vld [vmem:[%s263 + $0xe8c] sm:$0xf]
      %v1224 = vld [vmem:[%s263 + $0xe90] sm:$0xf]
      %v1225 = vld [vmem:[%s263 + $0xe94] sm:$0xf]
      %v1226 = vld [vmem:[%s263 + $0xe98] sm:$0xf]
      %v1227 = vld [vmem:[%s263 + $0xe9c] sm:$0xf]
      %v1228 = vld [vmem:[%s263 + $0xea0] sm:$0xf]
      %v1229 = vld [vmem:[%s263 + $0xea4] sm:$0xf]
      %v1230 = vld [vmem:[%s263 + $0xea8] sm:$0xf]
      %v1231 = vld [vmem:[%s263 + $0xeac] sm:$0xf]
      %v1232 = vld [vmem:[%s263 + $0xeb0] sm:$0xf]
      %v1233 = vld [vmem:[%s263 + $0xeb4] sm:$0xf]
      %v1234 = vld [vmem:[%s263 + $0xeb8] sm:$0xf]
      %v1235 = vld [vmem:[%s263 + $0xebc] sm:$0xf]
      %v1236 = vld [vmem:[%s263 + $0xec0] sm:$0xf]
      %v1237 = vld [vmem:[%s263 + $0xec4] sm:$0xf]
      %v1238 = vld [vmem:[%s263 + $0xec8] sm:$0xf]
      %v1239 = vld [vmem:[%s263 + $0xecc] sm:$0xf]
      %v1240 = vld [vmem:[%s263 + $0xed0] sm:$0xf]
      %v1241 = vld [vmem:[%s263 + $0xed4] sm:$0xf]
      %v1242 = vld [vmem:[%s263 + $0xed8] sm:$0xf]
      %v1243 = vld [vmem:[%s263 + $0xedc] sm:$0xf]
      %v1244 = vld [vmem:[%s263 + $0xee0] sm:$0xf]
      %v1245 = vld [vmem:[%s263 + $0xee4] sm:$0xf]
      %v1246 = vld [vmem:[%s263 + $0xee8] sm:$0xf]
      %v1247 = vld [vmem:[%s263 + $0xeec] sm:$0xf]
      %v1248 = vld [vmem:[%s263 + $0xef0] sm:$0xf]
      %v1249 = vld [vmem:[%s263 + $0xef4] sm:$0xf]
      %v1250 = vld [vmem:[%s263 + $0xef8] sm:$0xf]
      %v1251 = vld [vmem:[%s263 + $0xefc] sm:$0xf]
      %v1252 = vld [vmem:[%s263 + $0xf00] sm:$0xf]
      %v1253 = vld [vmem:[%s263 + $0xf04] sm:$0xf]
      %v1254 = vld [vmem:[%s263 + $0xf08] sm:$0xf]
      %v1255 = vld [vmem:[%s263 + $0xf0c] sm:$0xf]
      %v1256 = vld [vmem:[%s263 + $0xf10] sm:$0xf]
      %v1257 = vld [vmem:[%s263 + $0xf14] sm:$0xf]
      %v1258 = vld [vmem:[%s263 + $0xf18] sm:$0xf]
      %v1259 = vld [vmem:[%s263 + $0xf1c] sm:$0xf]
      %v1260 = vld [vmem:[%s263 + $0xf20] sm:$0xf]
      %v1261 = vld [vmem:[%s263 + $0xf24] sm:$0xf]
      %v1262 = vld [vmem:[%s263 + $0xf28] sm:$0xf]
      %v1263 = vld [vmem:[%s263 + $0xf2c] sm:$0xf]
      %v1264 = vld [vmem:[%s263 + $0xf30] sm:$0xf]
      %v1265 = vld [vmem:[%s263 + $0xf34] sm:$0xf]
      %v1266 = vld [vmem:[%s263 + $0xf38] sm:$0xf]
      %v1267 = vld [vmem:[%s263 + $0xf3c] sm:$0xf]
      %v1268 = vld [vmem:[%s263 + $0xf40] sm:$0xf]
      %v1269 = vld [vmem:[%s263 + $0xf44] sm:$0xf]
      %v1270 = vld [vmem:[%s263 + $0xf48] sm:$0xf]
      %v1271 = vld [vmem:[%s263 + $0xf4c] sm:$0xf]
      %v1272 = vld [vmem:[%s263 + $0xf50] sm:$0xf]
      %v1273 = vld [vmem:[%s263 + $0xf54] sm:$0xf]
      %v1274 = vld [vmem:[%s263 + $0xf58] sm:$0xf]
      %v1275 = vld [vmem:[%s263 + $0xf5c] sm:$0xf]
      %v1276 = vld [vmem:[%s263 + $0xf60] sm:$0xf]
      %v1277 = vld [vmem:[%s263 + $0xf64] sm:$0xf]
      %v1278 = vld [vmem:[%s263 + $0xf68] sm:$0xf]
      %v1279 = vld [vmem:[%s263 + $0xf6c] sm:$0xf]
      %v1280 = vld [vmem:[%s263 + $0xf70] sm:$0xf]
      %v1281 = vld [vmem:[%s263 + $0xf74] sm:$0xf]
      %v1282 = vld [vmem:[%s263 + $0xf78] sm:$0xf]
      %v1283 = vld [vmem:[%s263 + $0xf7c] sm:$0xf]
      %v1284 = vld [vmem:[%s263 + $0xf80] sm:$0xf]
      %v1285 = vld [vmem:[%s263 + $0xf84] sm:$0xf]
      %v1286 = vld [vmem:[%s263 + $0xf88] sm:$0xf]
      %v1287 = vld [vmem:[%s263 + $0xf8c] sm:$0xf]
      %v1288 = vld [vmem:[%s263 + $0xf90] sm:$0xf]
      %v1289 = vld [vmem:[%s263 + $0xf94] sm:$0xf]
      %v1290 = vld [vmem:[%s263 + $0xf98] sm:$0xf]
      %v1291 = vld [vmem:[%s263 + $0xf9c] sm:$0xf]
      %v1292 = vld [vmem:[%s263 + $0xfa0] sm:$0xf]
      %v1293 = vld [vmem:[%s263 + $0xfa4] sm:$0xf]
      %v1294 = vld [vmem:[%s263 + $0xfa8] sm:$0xf]
      %v1295 = vld [vmem:[%s263 + $0xfac] sm:$0xf]
      %v1296 = vld [vmem:[%s263 + $0xfb0] sm:$0xf]
      %v1297 = vld [vmem:[%s263 + $0xfb4] sm:$0xf]
      %v1298 = vld [vmem:[%s263 + $0xfb8] sm:$0xf]
      %v1299 = vld [vmem:[%s263 + $0xfbc] sm:$0xf]
      %v1300 = vld [vmem:[%s263 + $0xfc0] sm:$0xf]
      %v1301 = vld [vmem:[%s263 + $0xfc4] sm:$0xf]
      %v1302 = vld [vmem:[%s263 + $0xfc8] sm:$0xf]
      %v1303 = vld [vmem:[%s263 + $0xfcc] sm:$0xf]
      %v1304 = vld [vmem:[%s263 + $0xfd0] sm:$0xf]
      %v1305 = vld [vmem:[%s263 + $0xfd4] sm:$0xf]
      %v1306 = vld [vmem:[%s263 + $0xfd8] sm:$0xf]
      %v1307 = vld [vmem:[%s263 + $0xfdc] sm:$0xf]
      %v1308 = vld [vmem:[%s263 + $0xfe0] sm:$0xf]
      %v1309 = vld [vmem:[%s263 + $0xfe4] sm:$0xf]
      %v1310 = vld [vmem:[%s263 + $0xfe8] sm:$0xf]
      %v1311 = vld [vmem:[%s263 + $0xfec] sm:$0xf]
      %v1312 = vld [vmem:[%s263 + $0xff0] sm:$0xf]
      %v1313 = vld [vmem:[%s263 + $0xff4] sm:$0xf]
      %v1314 = vld [vmem:[%s263 + $0xff8] sm:$0xf]
      %v1315 = vld [vmem:[%s263 + $0xffc] sm:$0xf]
      %1317 = vst [vmem:[#allocation1] ss:$9 sm:$0xff] %v284
      %v1318 = vld [vmem:[#allocation1] sm:$0xff]
      %v1319 = vld [vmem:[#allocation1 + $0x9] sm:$0xff]
      %v1320 = vld [vmem:[#allocation1 + $0x12] sm:$0xff]
      %v1321 = vld [vmem:[#allocation1 + $0x1b] sm:$0xff]
      %v1322 = vld [vmem:[#allocation1 + $0x24] sm:$0xff]
      %v1323 = vld [vmem:[#allocation1 + $0x2d] sm:$0xff]
      %v1324 = vld [vmem:[#allocation1 + $0x36] sm:$0xff]
      %v1325 = vld [vmem:[#allocation1 + $0x3f] sm:$0xff]
      %1327 = vst [vmem:[#allocation1] ss:$9 sm:$0xff] %v285
      %v1328 = vld [vmem:[#allocation1] sm:$0xff]
      %v1329 = vld [vmem:[#allocation1 + $0x9] sm:$0xff]
      %v1330 = vld [vmem:[#allocation1 + $0x12] sm:$0xff]
      %v1331 = vld [vmem:[#allocation1 + $0x1b] sm:$0xff]
      %v1332 = vld [vmem:[#allocation1 + $0x24] sm:$0xff]
      %v1333 = vld [vmem:[#allocation1 + $0x2d] sm:$0xff]
      %v1334 = vld [vmem:[#allocation1 + $0x36] sm:$0xff]
      %v1335 = vld [vmem:[#allocation1 + $0x3f] sm:$0xff]
      %1337 = vst [vmem:[#allocation1] ss:$9 sm:$0xff] %v286
      %v1338 = vld [vmem:[#allocation1] sm:$0xff]
      %v1339 = vld [vmem:[#allocation1 + $0x9] sm:$0xff]
      %v1340 = vld [vmem:[#allocation1 + $0x12] sm:$0xff]
      %v1341 = vld [vmem:[#allocation1 + $0x1b] sm:$0xff]
      %v1342 = vld [vmem:[#allocation1 + $0x24] sm:$0xff]
      %v1343 = vld [vmem:[#allocation1 + $0x2d] sm:$0xff]
      %v1344 = vld [vmem:[#allocation1 + $0x36] sm:$0xff]
      %v1345 = vld [vmem:[#allocation1 + $0x3f] sm:$0xff]
      %1347 = vst [vmem:[#allocation1] ss:$9 sm:$0xff] %v287
      %v1348 = vld [vmem:[#allocation1] sm:$0xff]
      %v1349 = vld [vmem:[#allocation1 + $0x9] sm:$0xff]
      %v1350 = vld [vmem:[#allocation1 + $0x12] sm:$0xff]
      %v1351 = vld [vmem:[#allocation1 + $0x1b] sm:$0xff]
      %v1352 = vld [vmem:[#allocation1 + $0x24] sm:$0xff]
      %v1353 = vld [vmem:[#allocation1 + $0x2d] sm:$0xff]
      %v1354 = vld [vmem:[#allocation1 + $0x36] sm:$0xff]
      %v1355 = vld [vmem:[#allocation1 + $0x3f] sm:$0xff]
      %1357 = vst [vmem:[#allocation1] ss:$9 sm:$0xff] %v288
      %v1358 = vld [vmem:[#allocation1] sm:$0xff]
      %v1359 = vld [vmem:[#allocation1 + $0x9] sm:$0xff]
      %v1360 = vld [vmem:[#allocation1 + $0x12] sm:$0xff]
      %v1361 = vld [vmem:[#allocation1 + $0x1b] sm:$0xff]
      %v1362 = vld [vmem:[#allocation1 + $0x24] sm:$0xff]
      %v1363 = vld [vmem:[#allocation1 + $0x2d] sm:$0xff]
      %v1364 = vld [vmem:[#allocation1 + $0x36] sm:$0xff]
      %v1365 = vld [vmem:[#allocation1 + $0x3f] sm:$0xff]
      %1367 = vst [vmem:[#allocation1] ss:$9 sm:$0xff] %v289
      %v1368 = vld [vmem:[#allocation1] sm:$0xff]
      %v1369 = vld [vmem:[#allocation1 + $0x9] sm:$0xff]
      %v1370 = vld [vmem:[#allocation1 + $0x12] sm:$0xff]
      %v1371 = vld [vmem:[#allocation1 + $0x1b] sm:$0xff]
      %v1372 = vld [vmem:[#allocation1 + $0x24] sm:$0xff]
      %v1373 = vld [vmem:[#allocation1 + $0x2d] sm:$0xff]
      %v1374 = vld [vmem:[#allocation1 + $0x36] sm:$0xff]
      %v1375 = vld [vmem:[#allocation1 + $0x3f] sm:$0xff]
      %1377 = vst [vmem:[#allocation1] ss:$9 sm:$0xff] %v290
      %v1378 = vld [vmem:[#allocation1] sm:$0xff]
      %v1379 = vld [vmem:[#allocation1 + $0x9] sm:$0xff]
      %v1380 = vld [vmem:[#allocation1 + $0x12] sm:$0xff]
      %v1381 = vld [vmem:[#allocation1 + $0x1b] sm:$0xff]
      %v1382 = vld [vmem:[#allocation1 + $0x24] sm:$0xff]
      %v1383 = vld [vmem:[#allocation1 + $0x2d] sm:$0xff]
      %v1384 = vld [vmem:[#allocation1 + $0x36] sm:$0xff]
      %v1385 = vld [vmem:[#allocation1 + $0x3f] sm:$0xff]
      %1387 = vst [vmem:[#allocation1] ss:$9 sm:$0xff] %v291
      %v1388 = vld [vmem:[#allocation1] sm:$0xff]
      %v1389 = vld [vmem:[#allocation1 + $0x9] sm:$0xff]
      %v1390 = vld [vmem:[#allocation1 + $0x12] sm:$0xff]
      %v1391 = vld [vmem:[#allocation1 + $0x1b] sm:$0xff]
      %v1392 = vld [vmem:[#allocation1 + $0x24] sm:$0xff]
      %v1393 = vld [vmem:[#allocation1 + $0x2d] sm:$0xff]
      %v1394 = vld [vmem:[#allocation1 + $0x36] sm:$0xff]
      %v1395 = vld [vmem:[#allocation1 + $0x3f] sm:$0xff]
      %v2484 = vunpack.c.l.b16 %v292
      %v2485 = vunpack.c.l.b16 %v293
      %v2486 = vunpack.c.l.b16 %v294
      %v2487 = vunpack.c.l.b16 %v295
      %v2488 = vunpack.c.l.b16 %v296
      %v2489 = vunpack.c.l.b16 %v297
      %v2490 = vunpack.c.l.b16 %v298
      %v2491 = vunpack.c.l.b16 %v299
      %v2492 = vunpack.c.l.b16 %v300
      %v2493 = vunpack.c.l.b16 %v301
      %v2494 = vunpack.c.l.b16 %v302
      %v2495 = vunpack.c.l.b16 %v303
      %v2496 = vunpack.c.l.b16 %v304
      %v2497 = vunpack.c.l.b16 %v305
      %v2498 = vunpack.c.l.b16 %v306
      %v2499 = vunpack.c.l.b16 %v307
      %v2500 = vunpack.c.l.b16 %v308
      %v2501 = vunpack.c.l.b16 %v309
      %v2502 = vunpack.c.l.b16 %v310
      %v2503 = vunpack.c.l.b16 %v311
      %v2504 = vunpack.c.l.b16 %v312
      %v2505 = vunpack.c.l.b16 %v313
      %v2506 = vunpack.c.l.b16 %v314
      %v2507 = vunpack.c.l.b16 %v315
      %v2508 = vunpack.c.l.b16 %v316
      %v2509 = vunpack.c.l.b16 %v317
      %v2510 = vunpack.c.l.b16 %v318
      %v2511 = vunpack.c.l.b16 %v319
      %v2512 = vunpack.c.l.b16 %v320
      %v2513 = vunpack.c.l.b16 %v321
      %v2514 = vunpack.c.l.b16 %v322
      %v2515 = vunpack.c.l.b16 %v323
      %v2516 = vunpack.c.l.b16 %v324
      %v2517 = vunpack.c.l.b16 %v325
      %v2518 = vunpack.c.l.b16 %v326
      %v2519 = vunpack.c.l.b16 %v327
      %v2520 = vunpack.c.l.b16 %v328
      %v2521 = vunpack.c.l.b16 %v329
      %v2522 = vunpack.c.l.b16 %v330
      %v2523 = vunpack.c.l.b16 %v331
      %v2524 = vunpack.c.l.b16 %v332
      %v2525 = vunpack.c.l.b16 %v333
      %v2526 = vunpack.c.l.b16 %v334
      %v2527 = vunpack.c.l.b16 %v335
      %v2528 = vunpack.c.l.b16 %v336
      %v2529 = vunpack.c.l.b16 %v337
      %v2530 = vunpack.c.l.b16 %v338
      %v2531 = vunpack.c.l.b16 %v339
      %v2532 = vunpack.c.l.b16 %v340
      %v2533 = vunpack.c.l.b16 %v341
      %v2534 = vunpack.c.l.b16 %v342
      %v2535 = vunpack.c.l.b16 %v343
      %v2536 = vunpack.c.l.b16 %v344
      %v2537 = vunpack.c.l.b16 %v345
      %v2538 = vunpack.c.l.b16 %v346
      %v2539 = vunpack.c.l.b16 %v347
      %v2540 = vunpack.c.l.b16 %v348
      %v2541 = vunpack.c.l.b16 %v349
      %v2542 = vunpack.c.l.b16 %v350
      %v2543 = vunpack.c.l.b16 %v351
      %v2544 = vunpack.c.l.b16 %v352
      %v2545 = vunpack.c.l.b16 %v353
      %v2546 = vunpack.c.l.b16 %v354
      %v2547 = vunpack.c.l.b16 %v355
      %v2548 = vunpack.c.l.b16 %v356
      %v2549 = vunpack.c.l.b16 %v357
      %v2550 = vunpack.c.l.b16 %v358
      %v2551 = vunpack.c.l.b16 %v359
      %v2552 = vunpack.c.l.b16 %v360
      %v2553 = vunpack.c.l.b16 %v361
      %v2554 = vunpack.c.l.b16 %v362
      %v2555 = vunpack.c.l.b16 %v363
      %v2556 = vunpack.c.l.b16 %v364
      %v2557 = vunpack.c.l.b16 %v365
      %v2558 = vunpack.c.l.b16 %v366
      %v2559 = vunpack.c.l.b16 %v367
      %v2560 = vunpack.c.l.b16 %v368
      %v2561 = vunpack.c.l.b16 %v369
      %v2562 = vunpack.c.l.b16 %v370
      %v2563 = vunpack.c.l.b16 %v371
      %v2564 = vunpack.c.l.b16 %v372
      %v2565 = vunpack.c.l.b16 %v373
      %v2566 = vunpack.c.l.b16 %v374
      %v2567 = vunpack.c.l.b16 %v375
      %v2568 = vunpack.c.l.b16 %v376
      %v2569 = vunpack.c.l.b16 %v377
      %v2570 = vunpack.c.l.b16 %v378
      %v2571 = vunpack.c.l.b16 %v379
      %v2572 = vunpack.c.l.b16 %v380
      %v2573 = vunpack.c.l.b16 %v381
      %v2574 = vunpack.c.l.b16 %v382
      %v2575 = vunpack.c.l.b16 %v383
      %v2576 = vunpack.c.l.b16 %v384
      %v2577 = vunpack.c.l.b16 %v385
      %v2578 = vunpack.c.l.b16 %v386
      %v2579 = vunpack.c.l.b16 %v387
      %v2580 = vunpack.c.l.b16 %v388
      %v2581 = vunpack.c.l.b16 %v389
      %v2582 = vunpack.c.l.b16 %v390
      %v2583 = vunpack.c.l.b16 %v391
      %v2584 = vunpack.c.l.b16 %v392
      %v2585 = vunpack.c.l.b16 %v393
      %v2586 = vunpack.c.l.b16 %v394
      %v2587 = vunpack.c.l.b16 %v395
      %v2588 = vunpack.c.l.b16 %v396
      %v2589 = vunpack.c.l.b16 %v397
      %v2590 = vunpack.c.l.b16 %v398
      %v2591 = vunpack.c.l.b16 %v399
      %v2592 = vunpack.c.l.b16 %v400
      %v2593 = vunpack.c.l.b16 %v401
      %v2594 = vunpack.c.l.b16 %v402
      %v2595 = vunpack.c.l.b16 %v403
      %v2596 = vunpack.c.l.b16 %v404
      %v2597 = vunpack.c.l.b16 %v405
      %v2598 = vunpack.c.l.b16 %v406
      %v2599 = vunpack.c.l.b16 %v407
      %v2600 = vunpack.c.l.b16 %v408
      %v2601 = vunpack.c.l.b16 %v409
      %v2602 = vunpack.c.l.b16 %v410
      %v2603 = vunpack.c.l.b16 %v411
      %v2604 = vunpack.c.l.b16 %v412
      %v2605 = vunpack.c.l.b16 %v413
      %v2606 = vunpack.c.l.b16 %v414
      %v2607 = vunpack.c.l.b16 %v415
      %v2608 = vunpack.c.l.b16 %v416
      %v2609 = vunpack.c.l.b16 %v417
      %v2610 = vunpack.c.l.b16 %v418
      %v2611 = vunpack.c.l.b16 %v419
      %v2612 = vunpack.c.l.b16 %v420
      %v2613 = vunpack.c.l.b16 %v421
      %v2614 = vunpack.c.l.b16 %v422
      %v2615 = vunpack.c.l.b16 %v423
      %v2616 = vunpack.c.l.b16 %v424
      %v2617 = vunpack.c.l.b16 %v425
      %v2618 = vunpack.c.l.b16 %v426
      %v2619 = vunpack.c.l.b16 %v427
      %v2620 = vunpack.c.l.b16 %v428
      %v2621 = vunpack.c.l.b16 %v429
      %v2622 = vunpack.c.l.b16 %v430
      %v2623 = vunpack.c.l.b16 %v431
      %v2624 = vunpack.c.l.b16 %v432
      %v2625 = vunpack.c.l.b16 %v433
      %v2626 = vunpack.c.l.b16 %v434
      %v2627 = vunpack.c.l.b16 %v435
      %v2628 = vunpack.c.l.b16 %v436
      %v2629 = vunpack.c.l.b16 %v437
      %v2630 = vunpack.c.l.b16 %v438
      %v2631 = vunpack.c.l.b16 %v439
      %v2632 = vunpack.c.l.b16 %v440
      %v2633 = vunpack.c.l.b16 %v441
      %v2634 = vunpack.c.l.b16 %v442
      %v2635 = vunpack.c.l.b16 %v443
      %v2636 = vunpack.c.l.b16 %v444
      %v2637 = vunpack.c.l.b16 %v445
      %v2638 = vunpack.c.l.b16 %v446
      %v2639 = vunpack.c.l.b16 %v447
      %v2640 = vunpack.c.l.b16 %v448
      %v2641 = vunpack.c.l.b16 %v449
      %v2642 = vunpack.c.l.b16 %v450
      %v2643 = vunpack.c.l.b16 %v451
      %v2644 = vunpack.c.l.b16 %v452
      %v2645 = vunpack.c.l.b16 %v453
      %v2646 = vunpack.c.l.b16 %v454
      %v2647 = vunpack.c.l.b16 %v455
      %v2648 = vunpack.c.l.b16 %v456
      %v2649 = vunpack.c.l.b16 %v457
      %v2650 = vunpack.c.l.b16 %v458
      %v2651 = vunpack.c.l.b16 %v459
      %v2652 = vunpack.c.l.b16 %v460
      %v2653 = vunpack.c.l.b16 %v461
      %v2654 = vunpack.c.l.b16 %v462
      %v2655 = vunpack.c.l.b16 %v463
      %v2656 = vunpack.c.l.b16 %v464
      %v2657 = vunpack.c.l.b16 %v465
      %v2658 = vunpack.c.l.b16 %v466
      %v2659 = vunpack.c.l.b16 %v467
      %v2660 = vunpack.c.l.b16 %v468
      %v2661 = vunpack.c.l.b16 %v469
      %v2662 = vunpack.c.l.b16 %v470
      %v2663 = vunpack.c.l.b16 %v471
      %v2664 = vunpack.c.l.b16 %v472
      %v2665 = vunpack.c.l.b16 %v473
      %v2666 = vunpack.c.l.b16 %v474
      %v2667 = vunpack.c.l.b16 %v475
      %v2668 = vunpack.c.l.b16 %v476
      %v2669 = vunpack.c.l.b16 %v477
      %v2670 = vunpack.c.l.b16 %v478
      %v2671 = vunpack.c.l.b16 %v479
      %v2672 = vunpack.c.l.b16 %v480
      %v2673 = vunpack.c.l.b16 %v481
      %v2674 = vunpack.c.l.b16 %v482
      %v2675 = vunpack.c.l.b16 %v483
      %v2676 = vunpack.c.l.b16 %v484
      %v2677 = vunpack.c.l.b16 %v485
      %v2678 = vunpack.c.l.b16 %v486
      %v2679 = vunpack.c.l.b16 %v487
      %v2680 = vunpack.c.l.b16 %v488
      %v2681 = vunpack.c.l.b16 %v489
      %v2682 = vunpack.c.l.b16 %v490
      %v2683 = vunpack.c.l.b16 %v491
      %v2684 = vunpack.c.l.b16 %v492
      %v2685 = vunpack.c.l.b16 %v493
      %v2686 = vunpack.c.l.b16 %v494
      %v2687 = vunpack.c.l.b16 %v495
      %v2688 = vunpack.c.l.b16 %v496
      %v2689 = vunpack.c.l.b16 %v497
      %v2690 = vunpack.c.l.b16 %v498
      %v2691 = vunpack.c.l.b16 %v499
      %v2692 = vunpack.c.l.b16 %v500
      %v2693 = vunpack.c.l.b16 %v501
      %v2694 = vunpack.c.l.b16 %v502
      %v2695 = vunpack.c.l.b16 %v503
      %v2696 = vunpack.c.l.b16 %v504
      %v2697 = vunpack.c.l.b16 %v505
      %v2698 = vunpack.c.l.b16 %v506
      %v2699 = vunpack.c.l.b16 %v507
      %v2700 = vunpack.c.l.b16 %v508
      %v2701 = vunpack.c.l.b16 %v509
      %v2702 = vunpack.c.l.b16 %v510
      %v2703 = vunpack.c.l.b16 %v511
      %v2704 = vunpack.c.l.b16 %v512
      %v2705 = vunpack.c.l.b16 %v513
      %v2706 = vunpack.c.l.b16 %v514
      %v2707 = vunpack.c.l.b16 %v515
      %v2708 = vunpack.c.l.b16 %v516
      %v2709 = vunpack.c.l.b16 %v517
      %v2710 = vunpack.c.l.b16 %v518
      %v2711 = vunpack.c.l.b16 %v519
      %v2712 = vunpack.c.l.b16 %v520
      %v2713 = vunpack.c.l.b16 %v521
      %v2714 = vunpack.c.l.b16 %v522
      %v2715 = vunpack.c.l.b16 %v523
      %v2716 = vunpack.c.l.b16 %v524
      %v2717 = vunpack.c.l.b16 %v525
      %v2718 = vunpack.c.l.b16 %v526
      %v2719 = vunpack.c.l.b16 %v527
      %v2720 = vunpack.c.l.b16 %v528
      %v2721 = vunpack.c.l.b16 %v529
      %v2722 = vunpack.c.l.b16 %v530
      %v2723 = vunpack.c.l.b16 %v531
      %v2724 = vunpack.c.l.b16 %v532
      %v2725 = vunpack.c.l.b16 %v533
      %v2726 = vunpack.c.l.b16 %v534
      %v2727 = vunpack.c.l.b16 %v535
      %v2728 = vunpack.c.l.b16 %v536
      %v2729 = vunpack.c.l.b16 %v537
      %v2730 = vunpack.c.l.b16 %v538
      %v2731 = vunpack.c.l.b16 %v539
      %v2732 = vunpack.c.l.b16 %v540
      %v2733 = vunpack.c.l.b16 %v541
      %v2734 = vunpack.c.l.b16 %v542
      %v2735 = vunpack.c.l.b16 %v543
      %v2736 = vunpack.c.l.b16 %v544
      %v2737 = vunpack.c.l.b16 %v545
      %v2738 = vunpack.c.l.b16 %v546
      %v2739 = vunpack.c.l.b16 %v547
      %v2740 = vunpack.c.l.b16 %v548
      %v2741 = vunpack.c.l.b16 %v549
      %v2742 = vunpack.c.l.b16 %v550
      %v2743 = vunpack.c.l.b16 %v551
      %v2744 = vunpack.c.l.b16 %v552
      %v2745 = vunpack.c.l.b16 %v553
      %v2746 = vunpack.c.l.b16 %v554
      %v2747 = vunpack.c.l.b16 %v555
      %v2748 = vunpack.c.l.b16 %v556
      %v2749 = vunpack.c.l.b16 %v557
      %v2750 = vunpack.c.l.b16 %v558
      %v2751 = vunpack.c.l.b16 %v559
      %v2752 = vunpack.c.l.b16 %v560
      %v2753 = vunpack.c.l.b16 %v561
      %v2754 = vunpack.c.l.b16 %v562
      %v2755 = vunpack.c.l.b16 %v563
      %v2756 = vunpack.c.l.b16 %v564
      %v2757 = vunpack.c.l.b16 %v565
      %v2758 = vunpack.c.l.b16 %v566
      %v2759 = vunpack.c.l.b16 %v567
      %v2760 = vunpack.c.l.b16 %v568
      %v2761 = vunpack.c.l.b16 %v569
      %v2762 = vunpack.c.l.b16 %v570
      %v2763 = vunpack.c.l.b16 %v571
      %v2764 = vunpack.c.l.b16 %v572
      %v2765 = vunpack.c.l.b16 %v573
      %v2766 = vunpack.c.l.b16 %v574
      %v2767 = vunpack.c.l.b16 %v575
      %v2768 = vunpack.c.l.b16 %v576
      %v2769 = vunpack.c.l.b16 %v577
      %v2770 = vunpack.c.l.b16 %v578
      %v2771 = vunpack.c.l.b16 %v579
      %v2772 = vunpack.c.l.b16 %v580
      %v2773 = vunpack.c.l.b16 %v581
      %v2774 = vunpack.c.l.b16 %v582
      %v2775 = vunpack.c.l.b16 %v583
      %v2776 = vunpack.c.l.b16 %v584
      %v2777 = vunpack.c.l.b16 %v585
      %v2778 = vunpack.c.l.b16 %v586
      %v2779 = vunpack.c.l.b16 %v587
      %v2780 = vunpack.c.l.b16 %v588
      %v2781 = vunpack.c.l.b16 %v589
      %v2782 = vunpack.c.l.b16 %v590
      %v2783 = vunpack.c.l.b16 %v591
      %v2784 = vunpack.c.l.b16 %v592
      %v2785 = vunpack.c.l.b16 %v593
      %v2786 = vunpack.c.l.b16 %v594
      %v2787 = vunpack.c.l.b16 %v595
      %v2788 = vunpack.c.l.b16 %v596
      %v2789 = vunpack.c.l.b16 %v597
      %v2790 = vunpack.c.l.b16 %v598
      %v2791 = vunpack.c.l.b16 %v599
      %v2792 = vunpack.c.l.b16 %v600
      %v2793 = vunpack.c.l.b16 %v601
      %v2794 = vunpack.c.l.b16 %v602
      %v2795 = vunpack.c.l.b16 %v603
      %v2796 = vunpack.c.l.b16 %v604
      %v2797 = vunpack.c.l.b16 %v605
      %v2798 = vunpack.c.l.b16 %v606
      %v2799 = vunpack.c.l.b16 %v607
      %v2800 = vunpack.c.l.b16 %v608
      %v2801 = vunpack.c.l.b16 %v609
      %v2802 = vunpack.c.l.b16 %v610
      %v2803 = vunpack.c.l.b16 %v611
      %v2804 = vunpack.c.l.b16 %v612
      %v2805 = vunpack.c.l.b16 %v613
      %v2806 = vunpack.c.l.b16 %v614
      %v2807 = vunpack.c.l.b16 %v615
      %v2808 = vunpack.c.l.b16 %v616
      %v2809 = vunpack.c.l.b16 %v617
      %v2810 = vunpack.c.l.b16 %v618
      %v2811 = vunpack.c.l.b16 %v619
      %v2812 = vunpack.c.l.b16 %v620
      %v2813 = vunpack.c.l.b16 %v621
      %v2814 = vunpack.c.l.b16 %v622
      %v2815 = vunpack.c.l.b16 %v623
      %v2816 = vunpack.c.l.b16 %v624
      %v2817 = vunpack.c.l.b16 %v625
      %v2818 = vunpack.c.l.b16 %v626
      %v2819 = vunpack.c.l.b16 %v627
      %v2820 = vunpack.c.l.b16 %v628
      %v2821 = vunpack.c.l.b16 %v629
      %v2822 = vunpack.c.l.b16 %v630
      %v2823 = vunpack.c.l.b16 %v631
      %v2824 = vunpack.c.l.b16 %v632
      %v2825 = vunpack.c.l.b16 %v633
      %v2826 = vunpack.c.l.b16 %v634
      %v2827 = vunpack.c.l.b16 %v635
      %v2828 = vunpack.c.l.b16 %v636
      %v2829 = vunpack.c.l.b16 %v637
      %v2830 = vunpack.c.l.b16 %v638
      %v2831 = vunpack.c.l.b16 %v639
      %v2832 = vunpack.c.l.b16 %v640
      %v2833 = vunpack.c.l.b16 %v641
      %v2834 = vunpack.c.l.b16 %v642
      %v2835 = vunpack.c.l.b16 %v643
      %v2836 = vunpack.c.l.b16 %v644
      %v2837 = vunpack.c.l.b16 %v645
      %v2838 = vunpack.c.l.b16 %v646
      %v2839 = vunpack.c.l.b16 %v647
      %v2840 = vunpack.c.l.b16 %v648
      %v2841 = vunpack.c.l.b16 %v649
      %v2842 = vunpack.c.l.b16 %v650
      %v2843 = vunpack.c.l.b16 %v651
      %v2844 = vunpack.c.l.b16 %v652
      %v2845 = vunpack.c.l.b16 %v653
      %v2846 = vunpack.c.l.b16 %v654
      %v2847 = vunpack.c.l.b16 %v655
      %v2848 = vunpack.c.l.b16 %v656
      %v2849 = vunpack.c.l.b16 %v657
      %v2850 = vunpack.c.l.b16 %v658
      %v2851 = vunpack.c.l.b16 %v659
      %v2852 = vunpack.c.l.b16 %v660
      %v2853 = vunpack.c.l.b16 %v661
      %v2854 = vunpack.c.l.b16 %v662
      %v2855 = vunpack.c.l.b16 %v663
      %v2856 = vunpack.c.l.b16 %v664
      %v2857 = vunpack.c.l.b16 %v665
      %v2858 = vunpack.c.l.b16 %v666
      %v2859 = vunpack.c.l.b16 %v667
      %v2860 = vunpack.c.l.b16 %v668
      %v2861 = vunpack.c.l.b16 %v669
      %v2862 = vunpack.c.l.b16 %v670
      %v2863 = vunpack.c.l.b16 %v671
      %v2864 = vunpack.c.l.b16 %v672
      %v2865 = vunpack.c.l.b16 %v673
      %v2866 = vunpack.c.l.b16 %v674
      %v2867 = vunpack.c.l.b16 %v675
      %v2868 = vunpack.c.l.b16 %v676
      %v2869 = vunpack.c.l.b16 %v677
      %v2870 = vunpack.c.l.b16 %v678
      %v2871 = vunpack.c.l.b16 %v679
      %v2872 = vunpack.c.l.b16 %v680
      %v2873 = vunpack.c.l.b16 %v681
      %v2874 = vunpack.c.l.b16 %v682
      %v2875 = vunpack.c.l.b16 %v683
      %v2876 = vunpack.c.l.b16 %v684
      %v2877 = vunpack.c.l.b16 %v685
      %v2878 = vunpack.c.l.b16 %v686
      %v2879 = vunpack.c.l.b16 %v687
      %v2880 = vunpack.c.l.b16 %v688
      %v2881 = vunpack.c.l.b16 %v689
      %v2882 = vunpack.c.l.b16 %v690
      %v2883 = vunpack.c.l.b16 %v691
      %v2884 = vunpack.c.l.b16 %v692
      %v2885 = vunpack.c.l.b16 %v693
      %v2886 = vunpack.c.l.b16 %v694
      %v2887 = vunpack.c.l.b16 %v695
      %v2888 = vunpack.c.l.b16 %v696
      %v2889 = vunpack.c.l.b16 %v697
      %v2890 = vunpack.c.l.b16 %v698
      %v2891 = vunpack.c.l.b16 %v699
      %v2892 = vunpack.c.l.b16 %v700
      %v2893 = vunpack.c.l.b16 %v701
      %v2894 = vunpack.c.l.b16 %v702
      %v2895 = vunpack.c.l.b16 %v703
      %v2896 = vunpack.c.l.b16 %v704
      %v2897 = vunpack.c.l.b16 %v705
      %v2898 = vunpack.c.l.b16 %v706
      %v2899 = vunpack.c.l.b16 %v707
      %v2900 = vunpack.c.l.b16 %v708
      %v2901 = vunpack.c.l.b16 %v709
      %v2902 = vunpack.c.l.b16 %v710
      %v2903 = vunpack.c.l.b16 %v711
      %v2904 = vunpack.c.l.b16 %v712
      %v2905 = vunpack.c.l.b16 %v713
      %v2906 = vunpack.c.l.b16 %v714
      %v2907 = vunpack.c.l.b16 %v715
      %v2908 = vunpack.c.l.b16 %v716
      %v2909 = vunpack.c.l.b16 %v717
      %v2910 = vunpack.c.l.b16 %v718
      %v2911 = vunpack.c.l.b16 %v719
      %v2912 = vunpack.c.l.b16 %v720
      %v2913 = vunpack.c.l.b16 %v721
      %v2914 = vunpack.c.l.b16 %v722
      %v2915 = vunpack.c.l.b16 %v723
      %v2916 = vunpack.c.l.b16 %v724
      %v2917 = vunpack.c.l.b16 %v725
      %v2918 = vunpack.c.l.b16 %v726
      %v2919 = vunpack.c.l.b16 %v727
      %v2920 = vunpack.c.l.b16 %v728
      %v2921 = vunpack.c.l.b16 %v729
      %v2922 = vunpack.c.l.b16 %v730
      %v2923 = vunpack.c.l.b16 %v731
      %v2924 = vunpack.c.l.b16 %v732
      %v2925 = vunpack.c.l.b16 %v733
      %v2926 = vunpack.c.l.b16 %v734
      %v2927 = vunpack.c.l.b16 %v735
      %v2928 = vunpack.c.l.b16 %v736
      %v2929 = vunpack.c.l.b16 %v737
      %v2930 = vunpack.c.l.b16 %v738
      %v2931 = vunpack.c.l.b16 %v739
      %v2932 = vunpack.c.l.b16 %v740
      %v2933 = vunpack.c.l.b16 %v741
      %v2934 = vunpack.c.l.b16 %v742
      %v2935 = vunpack.c.l.b16 %v743
      %v2936 = vunpack.c.l.b16 %v744
      %v2937 = vunpack.c.l.b16 %v745
      %v2938 = vunpack.c.l.b16 %v746
      %v2939 = vunpack.c.l.b16 %v747
      %v2940 = vunpack.c.l.b16 %v748
      %v2941 = vunpack.c.l.b16 %v749
      %v2942 = vunpack.c.l.b16 %v750
      %v2943 = vunpack.c.l.b16 %v751
      %v2944 = vunpack.c.l.b16 %v752
      %v2945 = vunpack.c.l.b16 %v753
      %v2946 = vunpack.c.l.b16 %v754
      %v2947 = vunpack.c.l.b16 %v755
      %v2948 = vunpack.c.l.b16 %v756
      %v2949 = vunpack.c.l.b16 %v757
      %v2950 = vunpack.c.l.b16 %v758
      %v2951 = vunpack.c.l.b16 %v759
      %v2952 = vunpack.c.l.b16 %v760
      %v2953 = vunpack.c.l.b16 %v761
      %v2954 = vunpack.c.l.b16 %v762
      %v2955 = vunpack.c.l.b16 %v763
      %v2956 = vunpack.c.l.b16 %v764
      %v2957 = vunpack.c.l.b16 %v765
      %v2958 = vunpack.c.l.b16 %v766
      %v2959 = vunpack.c.l.b16 %v767
      %v2960 = vunpack.c.l.b16 %v768
      %v2961 = vunpack.c.l.b16 %v769
      %v2962 = vunpack.c.l.b16 %v770
      %v2963 = vunpack.c.l.b16 %v771
      %v2964 = vunpack.c.l.b16 %v772
      %v2965 = vunpack.c.l.b16 %v773
      %v2966 = vunpack.c.l.b16 %v774
      %v2967 = vunpack.c.l.b16 %v775
      %v2968 = vunpack.c.l.b16 %v776
      %v2969 = vunpack.c.l.b16 %v777
      %v2970 = vunpack.c.l.b16 %v778
      %v2971 = vunpack.c.l.b16 %v779
      %v2972 = vunpack.c.l.b16 %v780
      %v2973 = vunpack.c.l.b16 %v781
      %v2974 = vunpack.c.l.b16 %v782
      %v2975 = vunpack.c.l.b16 %v783
      %v2976 = vunpack.c.l.b16 %v784
      %v2977 = vunpack.c.l.b16 %v785
      %v2978 = vunpack.c.l.b16 %v786
      %v2979 = vunpack.c.l.b16 %v787
      %v2980 = vunpack.c.l.b16 %v788
      %v2981 = vunpack.c.l.b16 %v789
      %v2982 = vunpack.c.l.b16 %v790
      %v2983 = vunpack.c.l.b16 %v791
      %v2984 = vunpack.c.l.b16 %v792
      %v2985 = vunpack.c.l.b16 %v793
      %v2986 = vunpack.c.l.b16 %v794
      %v2987 = vunpack.c.l.b16 %v795
      %v2988 = vunpack.c.l.b16 %v796
      %v2989 = vunpack.c.l.b16 %v797
      %v2990 = vunpack.c.l.b16 %v798
      %v2991 = vunpack.c.l.b16 %v799
      %v2992 = vunpack.c.l.b16 %v800
      %v2993 = vunpack.c.l.b16 %v801
      %v2994 = vunpack.c.l.b16 %v802
      %v2995 = vunpack.c.l.b16 %v803
      %v2996 = vunpack.c.l.b16 %v804
      %v2997 = vunpack.c.l.b16 %v805
      %v2998 = vunpack.c.l.b16 %v806
      %v2999 = vunpack.c.l.b16 %v807
      %v3000 = vunpack.c.l.b16 %v808
      %v3001 = vunpack.c.l.b16 %v809
      %v3002 = vunpack.c.l.b16 %v810
      %v3003 = vunpack.c.l.b16 %v811
      %v3004 = vunpack.c.l.b16 %v812
      %v3005 = vunpack.c.l.b16 %v813
      %v3006 = vunpack.c.l.b16 %v814
      %v3007 = vunpack.c.l.b16 %v815
      %v3008 = vunpack.c.l.b16 %v816
      %v3009 = vunpack.c.l.b16 %v817
      %v3010 = vunpack.c.l.b16 %v818
      %v3011 = vunpack.c.l.b16 %v819
      %v3012 = vunpack.c.l.b16 %v820
      %v3013 = vunpack.c.l.b16 %v821
      %v3014 = vunpack.c.l.b16 %v822
      %v3015 = vunpack.c.l.b16 %v823
      %v3016 = vunpack.c.l.b16 %v824
      %v3017 = vunpack.c.l.b16 %v825
      %v3018 = vunpack.c.l.b16 %v826
      %v3019 = vunpack.c.l.b16 %v827
      %v3020 = vunpack.c.l.b16 %v828
      %v3021 = vunpack.c.l.b16 %v829
      %v3022 = vunpack.c.l.b16 %v830
      %v3023 = vunpack.c.l.b16 %v831
      %v3024 = vunpack.c.l.b16 %v832
      %v3025 = vunpack.c.l.b16 %v833
      %v3026 = vunpack.c.l.b16 %v834
      %v3027 = vunpack.c.l.b16 %v835
      %v3028 = vunpack.c.l.b16 %v836
      %v3029 = vunpack.c.l.b16 %v837
      %v3030 = vunpack.c.l.b16 %v838
      %v3031 = vunpack.c.l.b16 %v839
      %v3032 = vunpack.c.l.b16 %v840
      %v3033 = vunpack.c.l.b16 %v841
      %v3034 = vunpack.c.l.b16 %v842
      %v3035 = vunpack.c.l.b16 %v843
      %v3036 = vunpack.c.l.b16 %v844
      %v3037 = vunpack.c.l.b16 %v845
      %v3038 = vunpack.c.l.b16 %v846
      %v3039 = vunpack.c.l.b16 %v847
      %v3040 = vunpack.c.l.b16 %v848
      %v3041 = vunpack.c.l.b16 %v849
      %v3042 = vunpack.c.l.b16 %v850
      %v3043 = vunpack.c.l.b16 %v851
      %v3044 = vunpack.c.l.b16 %v852
      %v3045 = vunpack.c.l.b16 %v853
      %v3046 = vunpack.c.l.b16 %v854
      %v3047 = vunpack.c.l.b16 %v855
      %v3048 = vunpack.c.l.b16 %v856
      %v3049 = vunpack.c.l.b16 %v857
      %v3050 = vunpack.c.l.b16 %v858
      %v3051 = vunpack.c.l.b16 %v859
      %v3052 = vunpack.c.l.b16 %v860
      %v3053 = vunpack.c.l.b16 %v861
      %v3054 = vunpack.c.l.b16 %v862
      %v3055 = vunpack.c.l.b16 %v863
      %v3056 = vunpack.c.l.b16 %v864
      %v3057 = vunpack.c.l.b16 %v865
      %v3058 = vunpack.c.l.b16 %v866
      %v3059 = vunpack.c.l.b16 %v867
      %v3060 = vunpack.c.l.b16 %v868
      %v3061 = vunpack.c.l.b16 %v869
      %v3062 = vunpack.c.l.b16 %v870
      %v3063 = vunpack.c.l.b16 %v871
      %v3064 = vunpack.c.l.b16 %v872
      %v3065 = vunpack.c.l.b16 %v873
      %v3066 = vunpack.c.l.b16 %v874
      %v3067 = vunpack.c.l.b16 %v875
      %v3068 = vunpack.c.l.b16 %v876
      %v3069 = vunpack.c.l.b16 %v877
      %v3070 = vunpack.c.l.b16 %v878
      %v3071 = vunpack.c.l.b16 %v879
      %v3072 = vunpack.c.l.b16 %v880
      %v3073 = vunpack.c.l.b16 %v881
      %v3074 = vunpack.c.l.b16 %v882
      %v3075 = vunpack.c.l.b16 %v883
      %v3076 = vunpack.c.l.b16 %v884
      %v3077 = vunpack.c.l.b16 %v885
      %v3078 = vunpack.c.l.b16 %v886
      %v3079 = vunpack.c.l.b16 %v887
      %v3080 = vunpack.c.l.b16 %v888
      %v3081 = vunpack.c.l.b16 %v889
      %v3082 = vunpack.c.l.b16 %v890
      %v3083 = vunpack.c.l.b16 %v891
      %v3084 = vunpack.c.l.b16 %v892
      %v3085 = vunpack.c.l.b16 %v893
      %v3086 = vunpack.c.l.b16 %v894
      %v3087 = vunpack.c.l.b16 %v895
      %v3088 = vunpack.c.l.b16 %v896
      %v3089 = vunpack.c.l.b16 %v897
      %v3090 = vunpack.c.l.b16 %v898
      %v3091 = vunpack.c.l.b16 %v899
      %v3092 = vunpack.c.l.b16 %v900
      %v3093 = vunpack.c.l.b16 %v901
      %v3094 = vunpack.c.l.b16 %v902
      %v3095 = vunpack.c.l.b16 %v903
      %v3096 = vunpack.c.l.b16 %v904
      %v3097 = vunpack.c.l.b16 %v905
      %v3098 = vunpack.c.l.b16 %v906
      %v3099 = vunpack.c.l.b16 %v907
      %v3100 = vunpack.c.l.b16 %v908
      %v3101 = vunpack.c.l.b16 %v909
      %v3102 = vunpack.c.l.b16 %v910
      %v3103 = vunpack.c.l.b16 %v911
      %v3104 = vunpack.c.l.b16 %v912
      %v3105 = vunpack.c.l.b16 %v913
      %v3106 = vunpack.c.l.b16 %v914
      %v3107 = vunpack.c.l.b16 %v915
      %v3108 = vunpack.c.l.b16 %v916
      %v3109 = vunpack.c.l.b16 %v917
      %v3110 = vunpack.c.l.b16 %v918
      %v3111 = vunpack.c.l.b16 %v919
      %v3112 = vunpack.c.l.b16 %v920
      %v3113 = vunpack.c.l.b16 %v921
      %v3114 = vunpack.c.l.b16 %v922
      %v3115 = vunpack.c.l.b16 %v923
      %v3116 = vunpack.c.l.b16 %v924
      %v3117 = vunpack.c.l.b16 %v925
      %v3118 = vunpack.c.l.b16 %v926
      %v3119 = vunpack.c.l.b16 %v927
      %v3120 = vunpack.c.l.b16 %v928
      %v3121 = vunpack.c.l.b16 %v929
      %v3122 = vunpack.c.l.b16 %v930
      %v3123 = vunpack.c.l.b16 %v931
      %v3124 = vunpack.c.l.b16 %v932
      %v3125 = vunpack.c.l.b16 %v933
      %v3126 = vunpack.c.l.b16 %v934
      %v3127 = vunpack.c.l.b16 %v935
      %v3128 = vunpack.c.l.b16 %v936
      %v3129 = vunpack.c.l.b16 %v937
      %v3130 = vunpack.c.l.b16 %v938
      %v3131 = vunpack.c.l.b16 %v939
      %v3132 = vunpack.c.l.b16 %v940
      %v3133 = vunpack.c.l.b16 %v941
      %v3134 = vunpack.c.l.b16 %v942
      %v3135 = vunpack.c.l.b16 %v943
      %v3136 = vunpack.c.l.b16 %v944
      %v3137 = vunpack.c.l.b16 %v945
      %v3138 = vunpack.c.l.b16 %v946
      %v3139 = vunpack.c.l.b16 %v947
      %v3140 = vunpack.c.l.b16 %v948
      %v3141 = vunpack.c.l.b16 %v949
      %v3142 = vunpack.c.l.b16 %v950
      %v3143 = vunpack.c.l.b16 %v951
      %v3144 = vunpack.c.l.b16 %v952
      %v3145 = vunpack.c.l.b16 %v953
      %v3146 = vunpack.c.l.b16 %v954
      %v3147 = vunpack.c.l.b16 %v955
      %v3148 = vunpack.c.l.b16 %v956
      %v3149 = vunpack.c.l.b16 %v957
      %v3150 = vunpack.c.l.b16 %v958
      %v3151 = vunpack.c.l.b16 %v959
      %v3152 = vunpack.c.l.b16 %v960
      %v3153 = vunpack.c.l.b16 %v961
      %v3154 = vunpack.c.l.b16 %v962
      %v3155 = vunpack.c.l.b16 %v963
      %v3156 = vunpack.c.l.b16 %v964
      %v3157 = vunpack.c.l.b16 %v965
      %v3158 = vunpack.c.l.b16 %v966
      %v3159 = vunpack.c.l.b16 %v967
      %v3160 = vunpack.c.l.b16 %v968
      %v3161 = vunpack.c.l.b16 %v969
      %v3162 = vunpack.c.l.b16 %v970
      %v3163 = vunpack.c.l.b16 %v971
      %v3164 = vunpack.c.l.b16 %v972
      %v3165 = vunpack.c.l.b16 %v973
      %v3166 = vunpack.c.l.b16 %v974
      %v3167 = vunpack.c.l.b16 %v975
      %v3168 = vunpack.c.l.b16 %v976
      %v3169 = vunpack.c.l.b16 %v977
      %v3170 = vunpack.c.l.b16 %v978
      %v3171 = vunpack.c.l.b16 %v979
      %v3172 = vunpack.c.l.b16 %v980
      %v3173 = vunpack.c.l.b16 %v981
      %v3174 = vunpack.c.l.b16 %v982
      %v3175 = vunpack.c.l.b16 %v983
      %v3176 = vunpack.c.l.b16 %v984
      %v3177 = vunpack.c.l.b16 %v985
      %v3178 = vunpack.c.l.b16 %v986
      %v3179 = vunpack.c.l.b16 %v987
      %v3180 = vunpack.c.l.b16 %v988
      %v3181 = vunpack.c.l.b16 %v989
      %v3182 = vunpack.c.l.b16 %v990
      %v3183 = vunpack.c.l.b16 %v991
      %v3184 = vunpack.c.l.b16 %v992
      %v3185 = vunpack.c.l.b16 %v993
      %v3186 = vunpack.c.l.b16 %v994
      %v3187 = vunpack.c.l.b16 %v995
      %v3188 = vunpack.c.l.b16 %v996
      %v3189 = vunpack.c.l.b16 %v997
      %v3190 = vunpack.c.l.b16 %v998
      %v3191 = vunpack.c.l.b16 %v999
      %v3192 = vunpack.c.l.b16 %v1000
      %v3193 = vunpack.c.l.b16 %v1001
      %v3194 = vunpack.c.l.b16 %v1002
      %v3195 = vunpack.c.l.b16 %v1003
      %v3196 = vunpack.c.l.b16 %v1004
      %v3197 = vunpack.c.l.b16 %v1005
      %v3198 = vunpack.c.l.b16 %v1006
      %v3199 = vunpack.c.l.b16 %v1007
      %v3200 = vunpack.c.l.b16 %v1008
      %v3201 = vunpack.c.l.b16 %v1009
      %v3202 = vunpack.c.l.b16 %v1010
      %v3203 = vunpack.c.l.b16 %v1011
      %v3204 = vunpack.c.l.b16 %v1012
      %v3205 = vunpack.c.l.b16 %v1013
      %v3206 = vunpack.c.l.b16 %v1014
      %v3207 = vunpack.c.l.b16 %v1015
      %v3208 = vunpack.c.l.b16 %v1016
      %v3209 = vunpack.c.l.b16 %v1017
      %v3210 = vunpack.c.l.b16 %v1018
      %v3211 = vunpack.c.l.b16 %v1019
      %v3212 = vunpack.c.l.b16 %v1020
      %v3213 = vunpack.c.l.b16 %v1021
      %v3214 = vunpack.c.l.b16 %v1022
      %v3215 = vunpack.c.l.b16 %v1023
      %v3216 = vunpack.c.l.b16 %v1024
      %v3217 = vunpack.c.l.b16 %v1025
      %v3218 = vunpack.c.l.b16 %v1026
      %v3219 = vunpack.c.l.b16 %v1027
      %v3220 = vunpack.c.l.b16 %v1028
      %v3221 = vunpack.c.l.b16 %v1029
      %v3222 = vunpack.c.l.b16 %v1030
      %v3223 = vunpack.c.l.b16 %v1031
      %v3224 = vunpack.c.l.b16 %v1032
      %v3225 = vunpack.c.l.b16 %v1033
      %v3226 = vunpack.c.l.b16 %v1034
      %v3227 = vunpack.c.l.b16 %v1035
      %v3228 = vunpack.c.l.b16 %v1036
      %v3229 = vunpack.c.l.b16 %v1037
      %v3230 = vunpack.c.l.b16 %v1038
      %v3231 = vunpack.c.l.b16 %v1039
      %v3232 = vunpack.c.l.b16 %v1040
      %v3233 = vunpack.c.l.b16 %v1041
      %v3234 = vunpack.c.l.b16 %v1042
      %v3235 = vunpack.c.l.b16 %v1043
      %v3236 = vunpack.c.l.b16 %v1044
      %v3237 = vunpack.c.l.b16 %v1045
      %v3238 = vunpack.c.l.b16 %v1046
      %v3239 = vunpack.c.l.b16 %v1047
      %v3240 = vunpack.c.l.b16 %v1048
      %v3241 = vunpack.c.l.b16 %v1049
      %v3242 = vunpack.c.l.b16 %v1050
      %v3243 = vunpack.c.l.b16 %v1051
      %v3244 = vunpack.c.l.b16 %v1052
      %v3245 = vunpack.c.l.b16 %v1053
      %v3246 = vunpack.c.l.b16 %v1054
      %v3247 = vunpack.c.l.b16 %v1055
      %v3248 = vunpack.c.l.b16 %v1056
      %v3249 = vunpack.c.l.b16 %v1057
      %v3250 = vunpack.c.l.b16 %v1058
      %v3251 = vunpack.c.l.b16 %v1059
      %v3252 = vunpack.c.l.b16 %v1060
      %v3253 = vunpack.c.l.b16 %v1061
      %v3254 = vunpack.c.l.b16 %v1062
      %v3255 = vunpack.c.l.b16 %v1063
      %v3256 = vunpack.c.l.b16 %v1064
      %v3257 = vunpack.c.l.b16 %v1065
      %v3258 = vunpack.c.l.b16 %v1066
      %v3259 = vunpack.c.l.b16 %v1067
      %v3260 = vunpack.c.l.b16 %v1068
      %v3261 = vunpack.c.l.b16 %v1069
      %v3262 = vunpack.c.l.b16 %v1070
      %v3263 = vunpack.c.l.b16 %v1071
      %v3264 = vunpack.c.l.b16 %v1072
      %v3265 = vunpack.c.l.b16 %v1073
      %v3266 = vunpack.c.l.b16 %v1074
      %v3267 = vunpack.c.l.b16 %v1075
      %v3268 = vunpack.c.l.b16 %v1076
      %v3269 = vunpack.c.l.b16 %v1077
      %v3270 = vunpack.c.l.b16 %v1078
      %v3271 = vunpack.c.l.b16 %v1079
      %v3272 = vunpack.c.l.b16 %v1080
      %v3273 = vunpack.c.l.b16 %v1081
      %v3274 = vunpack.c.l.b16 %v1082
      %v3275 = vunpack.c.l.b16 %v1083
      %v3276 = vunpack.c.l.b16 %v1084
      %v3277 = vunpack.c.l.b16 %v1085
      %v3278 = vunpack.c.l.b16 %v1086
      %v3279 = vunpack.c.l.b16 %v1087
      %v3280 = vunpack.c.l.b16 %v1088
      %v3281 = vunpack.c.l.b16 %v1089
      %v3282 = vunpack.c.l.b16 %v1090
      %v3283 = vunpack.c.l.b16 %v1091
      %v3284 = vunpack.c.l.b16 %v1092
      %v3285 = vunpack.c.l.b16 %v1093
      %v3286 = vunpack.c.l.b16 %v1094
      %v3287 = vunpack.c.l.b16 %v1095
      %v3288 = vunpack.c.l.b16 %v1096
      %v3289 = vunpack.c.l.b16 %v1097
      %v3290 = vunpack.c.l.b16 %v1098
      %v3291 = vunpack.c.l.b16 %v1099
      %v3292 = vunpack.c.l.b16 %v1100
      %v3293 = vunpack.c.l.b16 %v1101
      %v3294 = vunpack.c.l.b16 %v1102
      %v3295 = vunpack.c.l.b16 %v1103
      %v3296 = vunpack.c.l.b16 %v1104
      %v3297 = vunpack.c.l.b16 %v1105
      %v3298 = vunpack.c.l.b16 %v1106
      %v3299 = vunpack.c.l.b16 %v1107
      %v3300 = vunpack.c.l.b16 %v1108
      %v3301 = vunpack.c.l.b16 %v1109
      %v3302 = vunpack.c.l.b16 %v1110
      %v3303 = vunpack.c.l.b16 %v1111
      %v3304 = vunpack.c.l.b16 %v1112
      %v3305 = vunpack.c.l.b16 %v1113
      %v3306 = vunpack.c.l.b16 %v1114
      %v3307 = vunpack.c.l.b16 %v1115
      %v3308 = vunpack.c.l.b16 %v1116
      %v3309 = vunpack.c.l.b16 %v1117
      %v3310 = vunpack.c.l.b16 %v1118
      %v3311 = vunpack.c.l.b16 %v1119
      %v3312 = vunpack.c.l.b16 %v1120
      %v3313 = vunpack.c.l.b16 %v1121
      %v3314 = vunpack.c.l.b16 %v1122
      %v3315 = vunpack.c.l.b16 %v1123
      %v3316 = vunpack.c.l.b16 %v1124
      %v3317 = vunpack.c.l.b16 %v1125
      %v3318 = vunpack.c.l.b16 %v1126
      %v3319 = vunpack.c.l.b16 %v1127
      %v3320 = vunpack.c.l.b16 %v1128
      %v3321 = vunpack.c.l.b16 %v1129
      %v3322 = vunpack.c.l.b16 %v1130
      %v3323 = vunpack.c.l.b16 %v1131
      %v3324 = vunpack.c.l.b16 %v1132
      %v3325 = vunpack.c.l.b16 %v1133
      %v3326 = vunpack.c.l.b16 %v1134
      %v3327 = vunpack.c.l.b16 %v1135
      %v3328 = vunpack.c.l.b16 %v1136
      %v3329 = vunpack.c.l.b16 %v1137
      %v3330 = vunpack.c.l.b16 %v1138
      %v3331 = vunpack.c.l.b16 %v1139
      %v3332 = vunpack.c.l.b16 %v1140
      %v3333 = vunpack.c.l.b16 %v1141
      %v3334 = vunpack.c.l.b16 %v1142
      %v3335 = vunpack.c.l.b16 %v1143
      %v3336 = vunpack.c.l.b16 %v1144
      %v3337 = vunpack.c.l.b16 %v1145
      %v3338 = vunpack.c.l.b16 %v1146
      %v3339 = vunpack.c.l.b16 %v1147
      %v3340 = vunpack.c.l.b16 %v1148
      %v3341 = vunpack.c.l.b16 %v1149
      %v3342 = vunpack.c.l.b16 %v1150
      %v3343 = vunpack.c.l.b16 %v1151
      %v3344 = vunpack.c.l.b16 %v1152
      %v3345 = vunpack.c.l.b16 %v1153
      %v3346 = vunpack.c.l.b16 %v1154
      %v3347 = vunpack.c.l.b16 %v1155
      %v3348 = vunpack.c.l.b16 %v1156
      %v3349 = vunpack.c.l.b16 %v1157
      %v3350 = vunpack.c.l.b16 %v1158
      %v3351 = vunpack.c.l.b16 %v1159
      %v3352 = vunpack.c.l.b16 %v1160
      %v3353 = vunpack.c.l.b16 %v1161
      %v3354 = vunpack.c.l.b16 %v1162
      %v3355 = vunpack.c.l.b16 %v1163
      %v3356 = vunpack.c.l.b16 %v1164
      %v3357 = vunpack.c.l.b16 %v1165
      %v3358 = vunpack.c.l.b16 %v1166
      %v3359 = vunpack.c.l.b16 %v1167
      %v3360 = vunpack.c.l.b16 %v1168
      %v3361 = vunpack.c.l.b16 %v1169
      %v3362 = vunpack.c.l.b16 %v1170
      %v3363 = vunpack.c.l.b16 %v1171
      %v3364 = vunpack.c.l.b16 %v1172
      %v3365 = vunpack.c.l.b16 %v1173
      %v3366 = vunpack.c.l.b16 %v1174
      %v3367 = vunpack.c.l.b16 %v1175
      %v3368 = vunpack.c.l.b16 %v1176
      %v3369 = vunpack.c.l.b16 %v1177
      %v3370 = vunpack.c.l.b16 %v1178
      %v3371 = vunpack.c.l.b16 %v1179
      %v3372 = vunpack.c.l.b16 %v1180
      %v3373 = vunpack.c.l.b16 %v1181
      %v3374 = vunpack.c.l.b16 %v1182
      %v3375 = vunpack.c.l.b16 %v1183
      %v3376 = vunpack.c.l.b16 %v1184
      %v3377 = vunpack.c.l.b16 %v1185
      %v3378 = vunpack.c.l.b16 %v1186
      %v3379 = vunpack.c.l.b16 %v1187
      %v3380 = vunpack.c.l.b16 %v1188
      %v3381 = vunpack.c.l.b16 %v1189
      %v3382 = vunpack.c.l.b16 %v1190
      %v3383 = vunpack.c.l.b16 %v1191
      %v3384 = vunpack.c.l.b16 %v1192
      %v3385 = vunpack.c.l.b16 %v1193
      %v3386 = vunpack.c.l.b16 %v1194
      %v3387 = vunpack.c.l.b16 %v1195
      %v3388 = vunpack.c.l.b16 %v1196
      %v3389 = vunpack.c.l.b16 %v1197
      %v3390 = vunpack.c.l.b16 %v1198
      %v3391 = vunpack.c.l.b16 %v1199
      %v3392 = vunpack.c.l.b16 %v1200
      %v3393 = vunpack.c.l.b16 %v1201
      %v3394 = vunpack.c.l.b16 %v1202
      %v3395 = vunpack.c.l.b16 %v1203
      %v3396 = vunpack.c.l.b16 %v1204
      %v3397 = vunpack.c.l.b16 %v1205
      %v3398 = vunpack.c.l.b16 %v1206
      %v3399 = vunpack.c.l.b16 %v1207
      %v3400 = vunpack.c.l.b16 %v1208
      %v3401 = vunpack.c.l.b16 %v1209
      %v3402 = vunpack.c.l.b16 %v1210
      %v3403 = vunpack.c.l.b16 %v1211
      %v3404 = vunpack.c.l.b16 %v1212
      %v3405 = vunpack.c.l.b16 %v1213
      %v3406 = vunpack.c.l.b16 %v1214
      %v3407 = vunpack.c.l.b16 %v1215
      %v3408 = vunpack.c.l.b16 %v1216
      %v3409 = vunpack.c.l.b16 %v1217
      %v3410 = vunpack.c.l.b16 %v1218
      %v3411 = vunpack.c.l.b16 %v1219
      %v3412 = vunpack.c.l.b16 %v1220
      %v3413 = vunpack.c.l.b16 %v1221
      %v3414 = vunpack.c.l.b16 %v1222
      %v3415 = vunpack.c.l.b16 %v1223
      %v3416 = vunpack.c.l.b16 %v1224
      %v3417 = vunpack.c.l.b16 %v1225
      %v3418 = vunpack.c.l.b16 %v1226
      %v3419 = vunpack.c.l.b16 %v1227
      %v3420 = vunpack.c.l.b16 %v1228
      %v3421 = vunpack.c.l.b16 %v1229
      %v3422 = vunpack.c.l.b16 %v1230
      %v3423 = vunpack.c.l.b16 %v1231
      %v3424 = vunpack.c.l.b16 %v1232
      %v3425 = vunpack.c.l.b16 %v1233
      %v3426 = vunpack.c.l.b16 %v1234
      %v3427 = vunpack.c.l.b16 %v1235
      %v3428 = vunpack.c.l.b16 %v1236
      %v3429 = vunpack.c.l.b16 %v1237
      %v3430 = vunpack.c.l.b16 %v1238
      %v3431 = vunpack.c.l.b16 %v1239
      %v3432 = vunpack.c.l.b16 %v1240
      %v3433 = vunpack.c.l.b16 %v1241
      %v3434 = vunpack.c.l.b16 %v1242
      %v3435 = vunpack.c.l.b16 %v1243
      %v3436 = vunpack.c.l.b16 %v1244
      %v3437 = vunpack.c.l.b16 %v1245
      %v3438 = vunpack.c.l.b16 %v1246
      %v3439 = vunpack.c.l.b16 %v1247
      %v3440 = vunpack.c.l.b16 %v1248
      %v3441 = vunpack.c.l.b16 %v1249
      %v3442 = vunpack.c.l.b16 %v1250
      %v3443 = vunpack.c.l.b16 %v1251
      %v3444 = vunpack.c.l.b16 %v1252
      %v3445 = vunpack.c.l.b16 %v1253
      %v3446 = vunpack.c.l.b16 %v1254
      %v3447 = vunpack.c.l.b16 %v1255
      %v3448 = vunpack.c.l.b16 %v1256
      %v3449 = vunpack.c.l.b16 %v1257
      %v3450 = vunpack.c.l.b16 %v1258
      %v3451 = vunpack.c.l.b16 %v1259
      %v3452 = vunpack.c.l.b16 %v1260
      %v3453 = vunpack.c.l.b16 %v1261
      %v3454 = vunpack.c.l.b16 %v1262
      %v3455 = vunpack.c.l.b16 %v1263
      %v3456 = vunpack.c.l.b16 %v1264
      %v3457 = vunpack.c.l.b16 %v1265
      %v3458 = vunpack.c.l.b16 %v1266
      %v3459 = vunpack.c.l.b16 %v1267
      %v3460 = vunpack.c.l.b16 %v1268
      %v3461 = vunpack.c.l.b16 %v1269
      %v3462 = vunpack.c.l.b16 %v1270
      %v3463 = vunpack.c.l.b16 %v1271
      %v3464 = vunpack.c.l.b16 %v1272
      %v3465 = vunpack.c.l.b16 %v1273
      %v3466 = vunpack.c.l.b16 %v1274
      %v3467 = vunpack.c.l.b16 %v1275
      %v3468 = vunpack.c.l.b16 %v1276
      %v3469 = vunpack.c.l.b16 %v1277
      %v3470 = vunpack.c.l.b16 %v1278
      %v3471 = vunpack.c.l.b16 %v1279
      %v3472 = vunpack.c.l.b16 %v1280
      %v3473 = vunpack.c.l.b16 %v1281
      %v3474 = vunpack.c.l.b16 %v1282
      %v3475 = vunpack.c.l.b16 %v1283
      %v3476 = vunpack.c.l.b16 %v1284
      %v3477 = vunpack.c.l.b16 %v1285
      %v3478 = vunpack.c.l.b16 %v1286
      %v3479 = vunpack.c.l.b16 %v1287
      %v3480 = vunpack.c.l.b16 %v1288
      %v3481 = vunpack.c.l.b16 %v1289
      %v3482 = vunpack.c.l.b16 %v1290
      %v3483 = vunpack.c.l.b16 %v1291
      %v3484 = vunpack.c.l.b16 %v1292
      %v3485 = vunpack.c.l.b16 %v1293
      %v3486 = vunpack.c.l.b16 %v1294
      %v3487 = vunpack.c.l.b16 %v1295
      %v3488 = vunpack.c.l.b16 %v1296
      %v3489 = vunpack.c.l.b16 %v1297
      %v3490 = vunpack.c.l.b16 %v1298
      %v3491 = vunpack.c.l.b16 %v1299
      %v3492 = vunpack.c.l.b16 %v1300
      %v3493 = vunpack.c.l.b16 %v1301
      %v3494 = vunpack.c.l.b16 %v1302
      %v3495 = vunpack.c.l.b16 %v1303
      %v3496 = vunpack.c.l.b16 %v1304
      %v3497 = vunpack.c.l.b16 %v1305
      %v3498 = vunpack.c.l.b16 %v1306
      %v3499 = vunpack.c.l.b16 %v1307
      %v3500 = vunpack.c.l.b16 %v1308
      %v3501 = vunpack.c.l.b16 %v1309
      %v3502 = vunpack.c.l.b16 %v1310
      %v3503 = vunpack.c.l.b16 %v1311
      %v3504 = vunpack.c.l.b16 %v1312
      %v3505 = vunpack.c.l.b16 %v1313
      %v3506 = vunpack.c.l.b16 %v1314
      %v3507 = vunpack.c.l.b16 %v1315
      %v3508 = vpack.c.b16 %v2485, %v2484
      %v3509 = vpack.c.b16 %v2487, %v2486
      %v3510 = vpack.c.b16 %v2489, %v2488
      %v3511 = vpack.c.b16 %v2491, %v2490
      %v3512 = vpack.c.b16 %v2493, %v2492
      %v3513 = vpack.c.b16 %v2495, %v2494
      %v3514 = vpack.c.b16 %v2497, %v2496
      %v3515 = vpack.c.b16 %v2499, %v2498
      %v3516 = vpack.c.b16 %v2501, %v2500
      %v3517 = vpack.c.b16 %v2503, %v2502
      %v3518 = vpack.c.b16 %v2505, %v2504
      %v3519 = vpack.c.b16 %v2507, %v2506
      %v3520 = vpack.c.b16 %v2509, %v2508
      %v3521 = vpack.c.b16 %v2511, %v2510
      %v3522 = vpack.c.b16 %v2513, %v2512
      %v3523 = vpack.c.b16 %v2515, %v2514
      %v3524 = vpack.c.b16 %v2517, %v2516
      %v3525 = vpack.c.b16 %v2519, %v2518
      %v3526 = vpack.c.b16 %v2521, %v2520
      %v3527 = vpack.c.b16 %v2523, %v2522
      %v3528 = vpack.c.b16 %v2525, %v2524
      %v3529 = vpack.c.b16 %v2527, %v2526
      %v3530 = vpack.c.b16 %v2529, %v2528
      %v3531 = vpack.c.b16 %v2531, %v2530
      %v3532 = vpack.c.b16 %v2533, %v2532
      %v3533 = vpack.c.b16 %v2535, %v2534
      %v3534 = vpack.c.b16 %v2537, %v2536
      %v3535 = vpack.c.b16 %v2539, %v2538
      %v3536 = vpack.c.b16 %v2541, %v2540
      %v3537 = vpack.c.b16 %v2543, %v2542
      %v3538 = vpack.c.b16 %v2545, %v2544
      %v3539 = vpack.c.b16 %v2547, %v2546
      %v3540 = vpack.c.b16 %v2549, %v2548
      %v3541 = vpack.c.b16 %v2551, %v2550
      %v3542 = vpack.c.b16 %v2553, %v2552
      %v3543 = vpack.c.b16 %v2555, %v2554
      %v3544 = vpack.c.b16 %v2557, %v2556
      %v3545 = vpack.c.b16 %v2559, %v2558
      %v3546 = vpack.c.b16 %v2561, %v2560
      %v3547 = vpack.c.b16 %v2563, %v2562
      %v3548 = vpack.c.b16 %v2565, %v2564
      %v3549 = vpack.c.b16 %v2567, %v2566
      %v3550 = vpack.c.b16 %v2569, %v2568
      %v3551 = vpack.c.b16 %v2571, %v2570
      %v3552 = vpack.c.b16 %v2573, %v2572
      %v3553 = vpack.c.b16 %v2575, %v2574
      %v3554 = vpack.c.b16 %v2577, %v2576
      %v3555 = vpack.c.b16 %v2579, %v2578
      %v3556 = vpack.c.b16 %v2581, %v2580
      %v3557 = vpack.c.b16 %v2583, %v2582
      %v3558 = vpack.c.b16 %v2585, %v2584
      %v3559 = vpack.c.b16 %v2587, %v2586
      %v3560 = vpack.c.b16 %v2589, %v2588
      %v3561 = vpack.c.b16 %v2591, %v2590
      %v3562 = vpack.c.b16 %v2593, %v2592
      %v3563 = vpack.c.b16 %v2595, %v2594
      %v3564 = vpack.c.b16 %v2597, %v2596
      %v3565 = vpack.c.b16 %v2599, %v2598
      %v3566 = vpack.c.b16 %v2601, %v2600
      %v3567 = vpack.c.b16 %v2603, %v2602
      %v3568 = vpack.c.b16 %v2605, %v2604
      %v3569 = vpack.c.b16 %v2607, %v2606
      %v3570 = vpack.c.b16 %v2609, %v2608
      %v3571 = vpack.c.b16 %v2611, %v2610
      %v3572 = vpack.c.b16 %v2613, %v2612
      %v3573 = vpack.c.b16 %v2615, %v2614
      %v3574 = vpack.c.b16 %v2617, %v2616
      %v3575 = vpack.c.b16 %v2619, %v2618
      %v3576 = vpack.c.b16 %v2621, %v2620
      %v3577 = vpack.c.b16 %v2623, %v2622
      %v3578 = vpack.c.b16 %v2625, %v2624
      %v3579 = vpack.c.b16 %v2627, %v2626
      %v3580 = vpack.c.b16 %v2629, %v2628
      %v3581 = vpack.c.b16 %v2631, %v2630
      %v3582 = vpack.c.b16 %v2633, %v2632
      %v3583 = vpack.c.b16 %v2635, %v2634
      %v3584 = vpack.c.b16 %v2637, %v2636
      %v3585 = vpack.c.b16 %v2639, %v2638
      %v3586 = vpack.c.b16 %v2641, %v2640
      %v3587 = vpack.c.b16 %v2643, %v2642
      %v3588 = vpack.c.b16 %v2645, %v2644
      %v3589 = vpack.c.b16 %v2647, %v2646
      %v3590 = vpack.c.b16 %v2649, %v2648
      %v3591 = vpack.c.b16 %v2651, %v2650
      %v3592 = vpack.c.b16 %v2653, %v2652
      %v3593 = vpack.c.b16 %v2655, %v2654
      %v3594 = vpack.c.b16 %v2657, %v2656
      %v3595 = vpack.c.b16 %v2659, %v2658
      %v3596 = vpack.c.b16 %v2661, %v2660
      %v3597 = vpack.c.b16 %v2663, %v2662
      %v3598 = vpack.c.b16 %v2665, %v2664
      %v3599 = vpack.c.b16 %v2667, %v2666
      %v3600 = vpack.c.b16 %v2669, %v2668
      %v3601 = vpack.c.b16 %v2671, %v2670
      %v3602 = vpack.c.b16 %v2673, %v2672
      %v3603 = vpack.c.b16 %v2675, %v2674
      %v3604 = vpack.c.b16 %v2677, %v2676
      %v3605 = vpack.c.b16 %v2679, %v2678
      %v3606 = vpack.c.b16 %v2681, %v2680
      %v3607 = vpack.c.b16 %v2683, %v2682
      %v3608 = vpack.c.b16 %v2685, %v2684
      %v3609 = vpack.c.b16 %v2687, %v2686
      %v3610 = vpack.c.b16 %v2689, %v2688
      %v3611 = vpack.c.b16 %v2691, %v2690
      %v3612 = vpack.c.b16 %v2693, %v2692
      %v3613 = vpack.c.b16 %v2695, %v2694
      %v3614 = vpack.c.b16 %v2697, %v2696
      %v3615 = vpack.c.b16 %v2699, %v2698
      %v3616 = vpack.c.b16 %v2701, %v2700
      %v3617 = vpack.c.b16 %v2703, %v2702
      %v3618 = vpack.c.b16 %v2705, %v2704
      %v3619 = vpack.c.b16 %v2707, %v2706
      %v3620 = vpack.c.b16 %v2709, %v2708
      %v3621 = vpack.c.b16 %v2711, %v2710
      %v3622 = vpack.c.b16 %v2713, %v2712
      %v3623 = vpack.c.b16 %v2715, %v2714
      %v3624 = vpack.c.b16 %v2717, %v2716
      %v3625 = vpack.c.b16 %v2719, %v2718
      %v3626 = vpack.c.b16 %v2721, %v2720
      %v3627 = vpack.c.b16 %v2723, %v2722
      %v3628 = vpack.c.b16 %v2725, %v2724
      %v3629 = vpack.c.b16 %v2727, %v2726
      %v3630 = vpack.c.b16 %v2729, %v2728
      %v3631 = vpack.c.b16 %v2731, %v2730
      %v3632 = vpack.c.b16 %v2733, %v2732
      %v3633 = vpack.c.b16 %v2735, %v2734
      %v3634 = vpack.c.b16 %v2737, %v2736
      %v3635 = vpack.c.b16 %v2739, %v2738
      %v3636 = vpack.c.b16 %v2741, %v2740
      %v3637 = vpack.c.b16 %v2743, %v2742
      %v3638 = vpack.c.b16 %v2745, %v2744
      %v3639 = vpack.c.b16 %v2747, %v2746
      %v3640 = vpack.c.b16 %v2749, %v2748
      %v3641 = vpack.c.b16 %v2751, %v2750
      %v3642 = vpack.c.b16 %v2753, %v2752
      %v3643 = vpack.c.b16 %v2755, %v2754
      %v3644 = vpack.c.b16 %v2757, %v2756
      %v3645 = vpack.c.b16 %v2759, %v2758
      %v3646 = vpack.c.b16 %v2761, %v2760
      %v3647 = vpack.c.b16 %v2763, %v2762
      %v3648 = vpack.c.b16 %v2765, %v2764
      %v3649 = vpack.c.b16 %v2767, %v2766
      %v3650 = vpack.c.b16 %v2769, %v2768
      %v3651 = vpack.c.b16 %v2771, %v2770
      %v3652 = vpack.c.b16 %v2773, %v2772
      %v3653 = vpack.c.b16 %v2775, %v2774
      %v3654 = vpack.c.b16 %v2777, %v2776
      %v3655 = vpack.c.b16 %v2779, %v2778
      %v3656 = vpack.c.b16 %v2781, %v2780
      %v3657 = vpack.c.b16 %v2783, %v2782
      %v3658 = vpack.c.b16 %v2785, %v2784
      %v3659 = vpack.c.b16 %v2787, %v2786
      %v3660 = vpack.c.b16 %v2789, %v2788
      %v3661 = vpack.c.b16 %v2791, %v2790
      %v3662 = vpack.c.b16 %v2793, %v2792
      %v3663 = vpack.c.b16 %v2795, %v2794
      %v3664 = vpack.c.b16 %v2797, %v2796
      %v3665 = vpack.c.b16 %v2799, %v2798
      %v3666 = vpack.c.b16 %v2801, %v2800
      %v3667 = vpack.c.b16 %v2803, %v2802
      %v3668 = vpack.c.b16 %v2805, %v2804
      %v3669 = vpack.c.b16 %v2807, %v2806
      %v3670 = vpack.c.b16 %v2809, %v2808
      %v3671 = vpack.c.b16 %v2811, %v2810
      %v3672 = vpack.c.b16 %v2813, %v2812
      %v3673 = vpack.c.b16 %v2815, %v2814
      %v3674 = vpack.c.b16 %v2817, %v2816
      %v3675 = vpack.c.b16 %v2819, %v2818
      %v3676 = vpack.c.b16 %v2821, %v2820
      %v3677 = vpack.c.b16 %v2823, %v2822
      %v3678 = vpack.c.b16 %v2825, %v2824
      %v3679 = vpack.c.b16 %v2827, %v2826
      %v3680 = vpack.c.b16 %v2829, %v2828
      %v3681 = vpack.c.b16 %v2831, %v2830
      %v3682 = vpack.c.b16 %v2833, %v2832
      %v3683 = vpack.c.b16 %v2835, %v2834
      %v3684 = vpack.c.b16 %v2837, %v2836
      %v3685 = vpack.c.b16 %v2839, %v2838
      %v3686 = vpack.c.b16 %v2841, %v2840
      %v3687 = vpack.c.b16 %v2843, %v2842
      %v3688 = vpack.c.b16 %v2845, %v2844
      %v3689 = vpack.c.b16 %v2847, %v2846
      %v3690 = vpack.c.b16 %v2849, %v2848
      %v3691 = vpack.c.b16 %v2851, %v2850
      %v3692 = vpack.c.b16 %v2853, %v2852
      %v3693 = vpack.c.b16 %v2855, %v2854
      %v3694 = vpack.c.b16 %v2857, %v2856
      %v3695 = vpack.c.b16 %v2859, %v2858
      %v3696 = vpack.c.b16 %v2861, %v2860
      %v3697 = vpack.c.b16 %v2863, %v2862
      %v3698 = vpack.c.b16 %v2865, %v2864
      %v3699 = vpack.c.b16 %v2867, %v2866
      %v3700 = vpack.c.b16 %v2869, %v2868
      %v3701 = vpack.c.b16 %v2871, %v2870
      %v3702 = vpack.c.b16 %v2873, %v2872
      %v3703 = vpack.c.b16 %v2875, %v2874
      %v3704 = vpack.c.b16 %v2877, %v2876
      %v3705 = vpack.c.b16 %v2879, %v2878
      %v3706 = vpack.c.b16 %v2881, %v2880
      %v3707 = vpack.c.b16 %v2883, %v2882
      %v3708 = vpack.c.b16 %v2885, %v2884
      %v3709 = vpack.c.b16 %v2887, %v2886
      %v3710 = vpack.c.b16 %v2889, %v2888
      %v3711 = vpack.c.b16 %v2891, %v2890
      %v3712 = vpack.c.b16 %v2893, %v2892
      %v3713 = vpack.c.b16 %v2895, %v2894
      %v3714 = vpack.c.b16 %v2897, %v2896
      %v3715 = vpack.c.b16 %v2899, %v2898
      %v3716 = vpack.c.b16 %v2901, %v2900
      %v3717 = vpack.c.b16 %v2903, %v2902
      %v3718 = vpack.c.b16 %v2905, %v2904
      %v3719 = vpack.c.b16 %v2907, %v2906
      %v3720 = vpack.c.b16 %v2909, %v2908
      %v3721 = vpack.c.b16 %v2911, %v2910
      %v3722 = vpack.c.b16 %v2913, %v2912
      %v3723 = vpack.c.b16 %v2915, %v2914
      %v3724 = vpack.c.b16 %v2917, %v2916
      %v3725 = vpack.c.b16 %v2919, %v2918
      %v3726 = vpack.c.b16 %v2921, %v2920
      %v3727 = vpack.c.b16 %v2923, %v2922
      %v3728 = vpack.c.b16 %v2925, %v2924
      %v3729 = vpack.c.b16 %v2927, %v2926
      %v3730 = vpack.c.b16 %v2929, %v2928
      %v3731 = vpack.c.b16 %v2931, %v2930
      %v3732 = vpack.c.b16 %v2933, %v2932
      %v3733 = vpack.c.b16 %v2935, %v2934
      %v3734 = vpack.c.b16 %v2937, %v2936
      %v3735 = vpack.c.b16 %v2939, %v2938
      %v3736 = vpack.c.b16 %v2941, %v2940
      %v3737 = vpack.c.b16 %v2943, %v2942
      %v3738 = vpack.c.b16 %v2945, %v2944
      %v3739 = vpack.c.b16 %v2947, %v2946
      %v3740 = vpack.c.b16 %v2949, %v2948
      %v3741 = vpack.c.b16 %v2951, %v2950
      %v3742 = vpack.c.b16 %v2953, %v2952
      %v3743 = vpack.c.b16 %v2955, %v2954
      %v3744 = vpack.c.b16 %v2957, %v2956
      %v3745 = vpack.c.b16 %v2959, %v2958
      %v3746 = vpack.c.b16 %v2961, %v2960
      %v3747 = vpack.c.b16 %v2963, %v2962
      %v3748 = vpack.c.b16 %v2965, %v2964
      %v3749 = vpack.c.b16 %v2967, %v2966
      %v3750 = vpack.c.b16 %v2969, %v2968
      %v3751 = vpack.c.b16 %v2971, %v2970
      %v3752 = vpack.c.b16 %v2973, %v2972
      %v3753 = vpack.c.b16 %v2975, %v2974
      %v3754 = vpack.c.b16 %v2977, %v2976
      %v3755 = vpack.c.b16 %v2979, %v2978
      %v3756 = vpack.c.b16 %v2981, %v2980
      %v3757 = vpack.c.b16 %v2983, %v2982
      %v3758 = vpack.c.b16 %v2985, %v2984
      %v3759 = vpack.c.b16 %v2987, %v2986
      %v3760 = vpack.c.b16 %v2989, %v2988
      %v3761 = vpack.c.b16 %v2991, %v2990
      %v3762 = vpack.c.b16 %v2993, %v2992
      %v3763 = vpack.c.b16 %v2995, %v2994
      %v3764 = vpack.c.b16 %v2997, %v2996
      %v3765 = vpack.c.b16 %v2999, %v2998
      %v3766 = vpack.c.b16 %v3001, %v3000
      %v3767 = vpack.c.b16 %v3003, %v3002
      %v3768 = vpack.c.b16 %v3005, %v3004
      %v3769 = vpack.c.b16 %v3007, %v3006
      %v3770 = vpack.c.b16 %v3009, %v3008
      %v3771 = vpack.c.b16 %v3011, %v3010
      %v3772 = vpack.c.b16 %v3013, %v3012
      %v3773 = vpack.c.b16 %v3015, %v3014
      %v3774 = vpack.c.b16 %v3017, %v3016
      %v3775 = vpack.c.b16 %v3019, %v3018
      %v3776 = vpack.c.b16 %v3021, %v3020
      %v3777 = vpack.c.b16 %v3023, %v3022
      %v3778 = vpack.c.b16 %v3025, %v3024
      %v3779 = vpack.c.b16 %v3027, %v3026
      %v3780 = vpack.c.b16 %v3029, %v3028
      %v3781 = vpack.c.b16 %v3031, %v3030
      %v3782 = vpack.c.b16 %v3033, %v3032
      %v3783 = vpack.c.b16 %v3035, %v3034
      %v3784 = vpack.c.b16 %v3037, %v3036
      %v3785 = vpack.c.b16 %v3039, %v3038
      %v3786 = vpack.c.b16 %v3041, %v3040
      %v3787 = vpack.c.b16 %v3043, %v3042
      %v3788 = vpack.c.b16 %v3045, %v3044
      %v3789 = vpack.c.b16 %v3047, %v3046
      %v3790 = vpack.c.b16 %v3049, %v3048
      %v3791 = vpack.c.b16 %v3051, %v3050
      %v3792 = vpack.c.b16 %v3053, %v3052
      %v3793 = vpack.c.b16 %v3055, %v3054
      %v3794 = vpack.c.b16 %v3057, %v3056
      %v3795 = vpack.c.b16 %v3059, %v3058
      %v3796 = vpack.c.b16 %v3061, %v3060
      %v3797 = vpack.c.b16 %v3063, %v3062
      %v3798 = vpack.c.b16 %v3065, %v3064
      %v3799 = vpack.c.b16 %v3067, %v3066
      %v3800 = vpack.c.b16 %v3069, %v3068
      %v3801 = vpack.c.b16 %v3071, %v3070
      %v3802 = vpack.c.b16 %v3073, %v3072
      %v3803 = vpack.c.b16 %v3075, %v3074
      %v3804 = vpack.c.b16 %v3077, %v3076
      %v3805 = vpack.c.b16 %v3079, %v3078
      %v3806 = vpack.c.b16 %v3081, %v3080
      %v3807 = vpack.c.b16 %v3083, %v3082
      %v3808 = vpack.c.b16 %v3085, %v3084
      %v3809 = vpack.c.b16 %v3087, %v3086
      %v3810 = vpack.c.b16 %v3089, %v3088
      %v3811 = vpack.c.b16 %v3091, %v3090
      %v3812 = vpack.c.b16 %v3093, %v3092
      %v3813 = vpack.c.b16 %v3095, %v3094
      %v3814 = vpack.c.b16 %v3097, %v3096
      %v3815 = vpack.c.b16 %v3099, %v3098
      %v3816 = vpack.c.b16 %v3101, %v3100
      %v3817 = vpack.c.b16 %v3103, %v3102
      %v3818 = vpack.c.b16 %v3105, %v3104
      %v3819 = vpack.c.b16 %v3107, %v3106
      %v3820 = vpack.c.b16 %v3109, %v3108
      %v3821 = vpack.c.b16 %v3111, %v3110
      %v3822 = vpack.c.b16 %v3113, %v3112
      %v3823 = vpack.c.b16 %v3115, %v3114
      %v3824 = vpack.c.b16 %v3117, %v3116
      %v3825 = vpack.c.b16 %v3119, %v3118
      %v3826 = vpack.c.b16 %v3121, %v3120
      %v3827 = vpack.c.b16 %v3123, %v3122
      %v3828 = vpack.c.b16 %v3125, %v3124
      %v3829 = vpack.c.b16 %v3127, %v3126
      %v3830 = vpack.c.b16 %v3129, %v3128
      %v3831 = vpack.c.b16 %v3131, %v3130
      %v3832 = vpack.c.b16 %v3133, %v3132
      %v3833 = vpack.c.b16 %v3135, %v3134
      %v3834 = vpack.c.b16 %v3137, %v3136
      %v3835 = vpack.c.b16 %v3139, %v3138
      %v3836 = vpack.c.b16 %v3141, %v3140
      %v3837 = vpack.c.b16 %v3143, %v3142
      %v3838 = vpack.c.b16 %v3145, %v3144
      %v3839 = vpack.c.b16 %v3147, %v3146
      %v3840 = vpack.c.b16 %v3149, %v3148
      %v3841 = vpack.c.b16 %v3151, %v3150
      %v3842 = vpack.c.b16 %v3153, %v3152
      %v3843 = vpack.c.b16 %v3155, %v3154
      %v3844 = vpack.c.b16 %v3157, %v3156
      %v3845 = vpack.c.b16 %v3159, %v3158
      %v3846 = vpack.c.b16 %v3161, %v3160
      %v3847 = vpack.c.b16 %v3163, %v3162
      %v3848 = vpack.c.b16 %v3165, %v3164
      %v3849 = vpack.c.b16 %v3167, %v3166
      %v3850 = vpack.c.b16 %v3169, %v3168
      %v3851 = vpack.c.b16 %v3171, %v3170
      %v3852 = vpack.c.b16 %v3173, %v3172
      %v3853 = vpack.c.b16 %v3175, %v3174
      %v3854 = vpack.c.b16 %v3177, %v3176
      %v3855 = vpack.c.b16 %v3179, %v3178
      %v3856 = vpack.c.b16 %v3181, %v3180
      %v3857 = vpack.c.b16 %v3183, %v3182
      %v3858 = vpack.c.b16 %v3185, %v3184
      %v3859 = vpack.c.b16 %v3187, %v3186
      %v3860 = vpack.c.b16 %v3189, %v3188
      %v3861 = vpack.c.b16 %v3191, %v3190
      %v3862 = vpack.c.b16 %v3193, %v3192
      %v3863 = vpack.c.b16 %v3195, %v3194
      %v3864 = vpack.c.b16 %v3197, %v3196
      %v3865 = vpack.c.b16 %v3199, %v3198
      %v3866 = vpack.c.b16 %v3201, %v3200
      %v3867 = vpack.c.b16 %v3203, %v3202
      %v3868 = vpack.c.b16 %v3205, %v3204
      %v3869 = vpack.c.b16 %v3207, %v3206
      %v3870 = vpack.c.b16 %v3209, %v3208
      %v3871 = vpack.c.b16 %v3211, %v3210
      %v3872 = vpack.c.b16 %v3213, %v3212
      %v3873 = vpack.c.b16 %v3215, %v3214
      %v3874 = vpack.c.b16 %v3217, %v3216
      %v3875 = vpack.c.b16 %v3219, %v3218
      %v3876 = vpack.c.b16 %v3221, %v3220
      %v3877 = vpack.c.b16 %v3223, %v3222
      %v3878 = vpack.c.b16 %v3225, %v3224
      %v3879 = vpack.c.b16 %v3227, %v3226
      %v3880 = vpack.c.b16 %v3229, %v3228
      %v3881 = vpack.c.b16 %v3231, %v3230
      %v3882 = vpack.c.b16 %v3233, %v3232
      %v3883 = vpack.c.b16 %v3235, %v3234
      %v3884 = vpack.c.b16 %v3237, %v3236
      %v3885 = vpack.c.b16 %v3239, %v3238
      %v3886 = vpack.c.b16 %v3241, %v3240
      %v3887 = vpack.c.b16 %v3243, %v3242
      %v3888 = vpack.c.b16 %v3245, %v3244
      %v3889 = vpack.c.b16 %v3247, %v3246
      %v3890 = vpack.c.b16 %v3249, %v3248
      %v3891 = vpack.c.b16 %v3251, %v3250
      %v3892 = vpack.c.b16 %v3253, %v3252
      %v3893 = vpack.c.b16 %v3255, %v3254
      %v3894 = vpack.c.b16 %v3257, %v3256
      %v3895 = vpack.c.b16 %v3259, %v3258
      %v3896 = vpack.c.b16 %v3261, %v3260
      %v3897 = vpack.c.b16 %v3263, %v3262
      %v3898 = vpack.c.b16 %v3265, %v3264
      %v3899 = vpack.c.b16 %v3267, %v3266
      %v3900 = vpack.c.b16 %v3269, %v3268
      %v3901 = vpack.c.b16 %v3271, %v3270
      %v3902 = vpack.c.b16 %v3273, %v3272
      %v3903 = vpack.c.b16 %v3275, %v3274
      %v3904 = vpack.c.b16 %v3277, %v3276
      %v3905 = vpack.c.b16 %v3279, %v3278
      %v3906 = vpack.c.b16 %v3281, %v3280
      %v3907 = vpack.c.b16 %v3283, %v3282
      %v3908 = vpack.c.b16 %v3285, %v3284
      %v3909 = vpack.c.b16 %v3287, %v3286
      %v3910 = vpack.c.b16 %v3289, %v3288
      %v3911 = vpack.c.b16 %v3291, %v3290
      %v3912 = vpack.c.b16 %v3293, %v3292
      %v3913 = vpack.c.b16 %v3295, %v3294
      %v3914 = vpack.c.b16 %v3297, %v3296
      %v3915 = vpack.c.b16 %v3299, %v3298
      %v3916 = vpack.c.b16 %v3301, %v3300
      %v3917 = vpack.c.b16 %v3303, %v3302
      %v3918 = vpack.c.b16 %v3305, %v3304
      %v3919 = vpack.c.b16 %v3307, %v3306
      %v3920 = vpack.c.b16 %v3309, %v3308
      %v3921 = vpack.c.b16 %v3311, %v3310
      %v3922 = vpack.c.b16 %v3313, %v3312
      %v3923 = vpack.c.b16 %v3315, %v3314
      %v3924 = vpack.c.b16 %v3317, %v3316
      %v3925 = vpack.c.b16 %v3319, %v3318
      %v3926 = vpack.c.b16 %v3321, %v3320
      %v3927 = vpack.c.b16 %v3323, %v3322
      %v3928 = vpack.c.b16 %v3325, %v3324
      %v3929 = vpack.c.b16 %v3327, %v3326
      %v3930 = vpack.c.b16 %v3329, %v3328
      %v3931 = vpack.c.b16 %v3331, %v3330
      %v3932 = vpack.c.b16 %v3333, %v3332
      %v3933 = vpack.c.b16 %v3335, %v3334
      %v3934 = vpack.c.b16 %v3337, %v3336
      %v3935 = vpack.c.b16 %v3339, %v3338
      %v3936 = vpack.c.b16 %v3341, %v3340
      %v3937 = vpack.c.b16 %v3343, %v3342
      %v3938 = vpack.c.b16 %v3345, %v3344
      %v3939 = vpack.c.b16 %v3347, %v3346
      %v3940 = vpack.c.b16 %v3349, %v3348
      %v3941 = vpack.c.b16 %v3351, %v3350
      %v3942 = vpack.c.b16 %v3353, %v3352
      %v3943 = vpack.c.b16 %v3355, %v3354
      %v3944 = vpack.c.b16 %v3357, %v3356
      %v3945 = vpack.c.b16 %v3359, %v3358
      %v3946 = vpack.c.b16 %v3361, %v3360
      %v3947 = vpack.c.b16 %v3363, %v3362
      %v3948 = vpack.c.b16 %v3365, %v3364
      %v3949 = vpack.c.b16 %v3367, %v3366
      %v3950 = vpack.c.b16 %v3369, %v3368
      %v3951 = vpack.c.b16 %v3371, %v3370
      %v3952 = vpack.c.b16 %v3373, %v3372
      %v3953 = vpack.c.b16 %v3375, %v3374
      %v3954 = vpack.c.b16 %v3377, %v3376
      %v3955 = vpack.c.b16 %v3379, %v3378
      %v3956 = vpack.c.b16 %v3381, %v3380
      %v3957 = vpack.c.b16 %v3383, %v3382
      %v3958 = vpack.c.b16 %v3385, %v3384
      %v3959 = vpack.c.b16 %v3387, %v3386
      %v3960 = vpack.c.b16 %v3389, %v3388
      %v3961 = vpack.c.b16 %v3391, %v3390
      %v3962 = vpack.c.b16 %v3393, %v3392
      %v3963 = vpack.c.b16 %v3395, %v3394
      %v3964 = vpack.c.b16 %v3397, %v3396
      %v3965 = vpack.c.b16 %v3399, %v3398
      %v3966 = vpack.c.b16 %v3401, %v3400
      %v3967 = vpack.c.b16 %v3403, %v3402
      %v3968 = vpack.c.b16 %v3405, %v3404
      %v3969 = vpack.c.b16 %v3407, %v3406
      %v3970 = vpack.c.b16 %v3409, %v3408
      %v3971 = vpack.c.b16 %v3411, %v3410
      %v3972 = vpack.c.b16 %v3413, %v3412
      %v3973 = vpack.c.b16 %v3415, %v3414
      %v3974 = vpack.c.b16 %v3417, %v3416
      %v3975 = vpack.c.b16 %v3419, %v3418
      %v3976 = vpack.c.b16 %v3421, %v3420
      %v3977 = vpack.c.b16 %v3423, %v3422
      %v3978 = vpack.c.b16 %v3425, %v3424
      %v3979 = vpack.c.b16 %v3427, %v3426
      %v3980 = vpack.c.b16 %v3429, %v3428
      %v3981 = vpack.c.b16 %v3431, %v3430
      %v3982 = vpack.c.b16 %v3433, %v3432
      %v3983 = vpack.c.b16 %v3435, %v3434
      %v3984 = vpack.c.b16 %v3437, %v3436
      %v3985 = vpack.c.b16 %v3439, %v3438
      %v3986 = vpack.c.b16 %v3441, %v3440
      %v3987 = vpack.c.b16 %v3443, %v3442
      %v3988 = vpack.c.b16 %v3445, %v3444
      %v3989 = vpack.c.b16 %v3447, %v3446
      %v3990 = vpack.c.b16 %v3449, %v3448
      %v3991 = vpack.c.b16 %v3451, %v3450
      %v3992 = vpack.c.b16 %v3453, %v3452
      %v3993 = vpack.c.b16 %v3455, %v3454
      %v3994 = vpack.c.b16 %v3457, %v3456
      %v3995 = vpack.c.b16 %v3459, %v3458
      %v3996 = vpack.c.b16 %v3461, %v3460
      %v3997 = vpack.c.b16 %v3463, %v3462
      %v3998 = vpack.c.b16 %v3465, %v3464
      %v3999 = vpack.c.b16 %v3467, %v3466
      %v4000 = vpack.c.b16 %v3469, %v3468
      %v4001 = vpack.c.b16 %v3471, %v3470
      %v4002 = vpack.c.b16 %v3473, %v3472
      %v4003 = vpack.c.b16 %v3475, %v3474
      %v4004 = vpack.c.b16 %v3477, %v3476
      %v4005 = vpack.c.b16 %v3479, %v3478
      %v4006 = vpack.c.b16 %v3481, %v3480
      %v4007 = vpack.c.b16 %v3483, %v3482
      %v4008 = vpack.c.b16 %v3485, %v3484
      %v4009 = vpack.c.b16 %v3487, %v3486
      %v4010 = vpack.c.b16 %v3489, %v3488
      %v4011 = vpack.c.b16 %v3491, %v3490
      %v4012 = vpack.c.b16 %v3493, %v3492
      %v4013 = vpack.c.b16 %v3495, %v3494
      %v4014 = vpack.c.b16 %v3497, %v3496
      %v4015 = vpack.c.b16 %v3499, %v3498
      %v4016 = vpack.c.b16 %v3501, %v3500
      %v4017 = vpack.c.b16 %v3503, %v3502
      %v4018 = vpack.c.b16 %v3505, %v3504
      %v4019 = vpack.c.b16 %v3507, %v3506
      %4532 = vmatpush.bf16.msra.mxu0 %v3515
      %4533 = vmatpush.bf16.msra.mxu0 %v3514
      %4534 = vmatpush.bf16.msra.mxu0 %v3513
      %4535 = vmatpush.bf16.msra.mxu0 %v3512
      %4536 = vmatpush.bf16.msra.mxu0 %v3511
      %4537 = vmatpush.bf16.msra.mxu0 %v3510
      %4538 = vmatpush.bf16.msra.mxu0 %v3509
      %4539 = vmatpush.bf16.msra.mxu0 %v3508
      %4540 = vmatmul.bf16.gmra.mxu0 %v1318
      %v4541 = vpop.f32.mrf.mxu0
      %v4542 = vadd.f32 0.0, %v4541
      %v4543 = vpop.f32.mrf.mxu0
      %4544 = vdwg.mxu0
      %4545 = vmatpush.bf16.msra.mxu0 %v3523
      %4546 = vmatpush.bf16.msra.mxu0 %v3522
      %4547 = vmatpush.bf16.msra.mxu0 %v3521
      %4548 = vmatpush.bf16.msra.mxu0 %v3520
      %4549 = vmatpush.bf16.msra.mxu0 %v3519
      %4550 = vmatpush.bf16.msra.mxu0 %v3518
      %4551 = vmatpush.bf16.msra.mxu0 %v3517
      %4552 = vmatpush.bf16.msra.mxu0 %v3516
      %4553 = vmatmul.bf16.gmra.mxu0 %v1319
      %v4554 = vpop.f32.mrf.mxu0
      %v4555 = vadd.f32 %v4542, %v4554
      %v4556 = vpop.f32.mrf.mxu0
      %4557 = vdwg.mxu0
      %4558 = vmatpush.bf16.msra.mxu0 %v3531
      %4559 = vmatpush.bf16.msra.mxu0 %v3530
      %4560 = vmatpush.bf16.msra.mxu0 %v3529
      %4561 = vmatpush.bf16.msra.mxu0 %v3528
      %4562 = vmatpush.bf16.msra.mxu0 %v3527
      %4563 = vmatpush.bf16.msra.mxu0 %v3526
      %4564 = vmatpush.bf16.msra.mxu0 %v3525
      %4565 = vmatpush.bf16.msra.mxu0 %v3524
      %4566 = vmatmul.bf16.gmra.mxu0 %v1320
      %v4567 = vpop.f32.mrf.mxu0
      %v4568 = vadd.f32 %v4555, %v4567
      %v4569 = vpop.f32.mrf.mxu0
      %4570 = vdwg.mxu0
      %4571 = vmatpush.bf16.msra.mxu0 %v3539
      %4572 = vmatpush.bf16.msra.mxu0 %v3538
      %4573 = vmatpush.bf16.msra.mxu0 %v3537
      %4574 = vmatpush.bf16.msra.mxu0 %v3536
      %4575 = vmatpush.bf16.msra.mxu0 %v3535
      %4576 = vmatpush.bf16.msra.mxu0 %v3534
      %4577 = vmatpush.bf16.msra.mxu0 %v3533
      %4578 = vmatpush.bf16.msra.mxu0 %v3532
      %4579 = vmatmul.bf16.gmra.mxu0 %v1321
      %v4580 = vpop.f32.mrf.mxu0
      %v4581 = vadd.f32 %v4568, %v4580
      %v4582 = vpop.f32.mrf.mxu0
      %4583 = vdwg.mxu0
      %4584 = vmatpush.bf16.msra.mxu0 %v3547
      %4585 = vmatpush.bf16.msra.mxu0 %v3546
      %4586 = vmatpush.bf16.msra.mxu0 %v3545
      %4587 = vmatpush.bf16.msra.mxu0 %v3544
      %4588 = vmatpush.bf16.msra.mxu0 %v3543
      %4589 = vmatpush.bf16.msra.mxu0 %v3542
      %4590 = vmatpush.bf16.msra.mxu0 %v3541
      %4591 = vmatpush.bf16.msra.mxu0 %v3540
      %4592 = vmatmul.bf16.gmra.mxu0 %v1322
      %v4593 = vpop.f32.mrf.mxu0
      %v4594 = vadd.f32 %v4581, %v4593
      %v4595 = vpop.f32.mrf.mxu0
      %4596 = vdwg.mxu0
      %4597 = vmatpush.bf16.msra.mxu0 %v3555
      %4598 = vmatpush.bf16.msra.mxu0 %v3554
      %4599 = vmatpush.bf16.msra.mxu0 %v3553
      %4600 = vmatpush.bf16.msra.mxu0 %v3552
      %4601 = vmatpush.bf16.msra.mxu0 %v3551
      %4602 = vmatpush.bf16.msra.mxu0 %v3550
      %4603 = vmatpush.bf16.msra.mxu0 %v3549
      %4604 = vmatpush.bf16.msra.mxu0 %v3548
      %4605 = vmatmul.bf16.gmra.mxu0 %v1323
      %v4606 = vpop.f32.mrf.mxu0
      %v4607 = vadd.f32 %v4594, %v4606
      %v4608 = vpop.f32.mrf.mxu0
      %4609 = vdwg.mxu0
      %4610 = vmatpush.bf16.msra.mxu0 %v3563
      %4611 = vmatpush.bf16.msra.mxu0 %v3562
      %4612 = vmatpush.bf16.msra.mxu0 %v3561
      %4613 = vmatpush.bf16.msra.mxu0 %v3560
      %4614 = vmatpush.bf16.msra.mxu0 %v3559
      %4615 = vmatpush.bf16.msra.mxu0 %v3558
      %4616 = vmatpush.bf16.msra.mxu0 %v3557
      %4617 = vmatpush.bf16.msra.mxu0 %v3556
      %4618 = vmatmul.bf16.gmra.mxu0 %v1324
      %v4619 = vpop.f32.mrf.mxu0
      %v4620 = vadd.f32 %v4607, %v4619
      %v4621 = vpop.f32.mrf.mxu0
      %4622 = vdwg.mxu0
      %4623 = vmatpush.bf16.msra.mxu0 %v3571
      %4624 = vmatpush.bf16.msra.mxu0 %v3570
      %4625 = vmatpush.bf16.msra.mxu0 %v3569
      %4626 = vmatpush.bf16.msra.mxu0 %v3568
      %4627 = vmatpush.bf16.msra.mxu0 %v3567
      %4628 = vmatpush.bf16.msra.mxu0 %v3566
      %4629 = vmatpush.bf16.msra.mxu0 %v3565
      %4630 = vmatpush.bf16.msra.mxu0 %v3564
      %4631 = vmatmul.bf16.gmra.mxu0 %v1325
      %v4632 = vpop.f32.mrf.mxu0
      %v4633 = vadd.f32 %v4620, %v4632
      %v4634 = vpop.f32.mrf.mxu0
      %4635 = vdwg.mxu0
      %4636 = vmatpush.bf16.msra.mxu0 %v3579
      %4637 = vmatpush.bf16.msra.mxu0 %v3578
      %4638 = vmatpush.bf16.msra.mxu0 %v3577
      %4639 = vmatpush.bf16.msra.mxu0 %v3576
      %4640 = vmatpush.bf16.msra.mxu0 %v3575
      %4641 = vmatpush.bf16.msra.mxu0 %v3574
      %4642 = vmatpush.bf16.msra.mxu0 %v3573
      %4643 = vmatpush.bf16.msra.mxu0 %v3572
      %4644 = vmatmul.bf16.gmra.mxu0 %v1328
      %v4645 = vpop.f32.mrf.mxu0
      %v4646 = vadd.f32 %v4633, %v4645
      %v4647 = vpop.f32.mrf.mxu0
      %4648 = vdwg.mxu0
      %4649 = vmatpush.bf16.msra.mxu0 %v3587
      %4650 = vmatpush.bf16.msra.mxu0 %v3586
      %4651 = vmatpush.bf16.msra.mxu0 %v3585
      %4652 = vmatpush.bf16.msra.mxu0 %v3584
      %4653 = vmatpush.bf16.msra.mxu0 %v3583
      %4654 = vmatpush.bf16.msra.mxu0 %v3582
      %4655 = vmatpush.bf16.msra.mxu0 %v3581
      %4656 = vmatpush.bf16.msra.mxu0 %v3580
      %4657 = vmatmul.bf16.gmra.mxu0 %v1329
      %v4658 = vpop.f32.mrf.mxu0
      %v4659 = vadd.f32 %v4646, %v4658
      %v4660 = vpop.f32.mrf.mxu0
      %4661 = vdwg.mxu0
      %4662 = vmatpush.bf16.msra.mxu0 %v3595
      %4663 = vmatpush.bf16.msra.mxu0 %v3594
      %4664 = vmatpush.bf16.msra.mxu0 %v3593
      %4665 = vmatpush.bf16.msra.mxu0 %v3592
      %4666 = vmatpush.bf16.msra.mxu0 %v3591
      %4667 = vmatpush.bf16.msra.mxu0 %v3590
      %4668 = vmatpush.bf16.msra.mxu0 %v3589
      %4669 = vmatpush.bf16.msra.mxu0 %v3588
      %4670 = vmatmul.bf16.gmra.mxu0 %v1330
      %v4671 = vpop.f32.mrf.mxu0
      %v4672 = vadd.f32 %v4659, %v4671
      %v4673 = vpop.f32.mrf.mxu0
      %4674 = vdwg.mxu0
      %4675 = vmatpush.bf16.msra.mxu0 %v3603
      %4676 = vmatpush.bf16.msra.mxu0 %v3602
      %4677 = vmatpush.bf16.msra.mxu0 %v3601
      %4678 = vmatpush.bf16.msra.mxu0 %v3600
      %4679 = vmatpush.bf16.msra.mxu0 %v3599
      %4680 = vmatpush.bf16.msra.mxu0 %v3598
      %4681 = vmatpush.bf16.msra.mxu0 %v3597
      %4682 = vmatpush.bf16.msra.mxu0 %v3596
      %4683 = vmatmul.bf16.gmra.mxu0 %v1331
      %v4684 = vpop.f32.mrf.mxu0
      %v4685 = vadd.f32 %v4672, %v4684
      %v4686 = vpop.f32.mrf.mxu0
      %4687 = vdwg.mxu0
      %4688 = vmatpush.bf16.msra.mxu0 %v3611
      %4689 = vmatpush.bf16.msra.mxu0 %v3610
      %4690 = vmatpush.bf16.msra.mxu0 %v3609
      %4691 = vmatpush.bf16.msra.mxu0 %v3608
      %4692 = vmatpush.bf16.msra.mxu0 %v3607
      %4693 = vmatpush.bf16.msra.mxu0 %v3606
      %4694 = vmatpush.bf16.msra.mxu0 %v3605
      %4695 = vmatpush.bf16.msra.mxu0 %v3604
      %4696 = vmatmul.bf16.gmra.mxu0 %v1332
      %v4697 = vpop.f32.mrf.mxu0
      %v4698 = vadd.f32 %v4685, %v4697
      %v4699 = vpop.f32.mrf.mxu0
      %4700 = vdwg.mxu0
      %4701 = vmatpush.bf16.msra.mxu0 %v3619
      %4702 = vmatpush.bf16.msra.mxu0 %v3618
      %4703 = vmatpush.bf16.msra.mxu0 %v3617
      %4704 = vmatpush.bf16.msra.mxu0 %v3616
      %4705 = vmatpush.bf16.msra.mxu0 %v3615
      %4706 = vmatpush.bf16.msra.mxu0 %v3614
      %4707 = vmatpush.bf16.msra.mxu0 %v3613
      %4708 = vmatpush.bf16.msra.mxu0 %v3612
      %4709 = vmatmul.bf16.gmra.mxu0 %v1333
      %v4710 = vpop.f32.mrf.mxu0
      %v4711 = vadd.f32 %v4698, %v4710
      %v4712 = vpop.f32.mrf.mxu0
      %4713 = vdwg.mxu0
      %4714 = vmatpush.bf16.msra.mxu0 %v3627
      %4715 = vmatpush.bf16.msra.mxu0 %v3626
      %4716 = vmatpush.bf16.msra.mxu0 %v3625
      %4717 = vmatpush.bf16.msra.mxu0 %v3624
      %4718 = vmatpush.bf16.msra.mxu0 %v3623
      %4719 = vmatpush.bf16.msra.mxu0 %v3622
      %4720 = vmatpush.bf16.msra.mxu0 %v3621
      %4721 = vmatpush.bf16.msra.mxu0 %v3620
      %4722 = vmatmul.bf16.gmra.mxu0 %v1334
      %v4723 = vpop.f32.mrf.mxu0
      %v4724 = vadd.f32 %v4711, %v4723
      %v4725 = vpop.f32.mrf.mxu0
      %4726 = vdwg.mxu0
      %4727 = vmatpush.bf16.msra.mxu0 %v3635
      %4728 = vmatpush.bf16.msra.mxu0 %v3634
      %4729 = vmatpush.bf16.msra.mxu0 %v3633
      %4730 = vmatpush.bf16.msra.mxu0 %v3632
      %4731 = vmatpush.bf16.msra.mxu0 %v3631
      %4732 = vmatpush.bf16.msra.mxu0 %v3630
      %4733 = vmatpush.bf16.msra.mxu0 %v3629
      %4734 = vmatpush.bf16.msra.mxu0 %v3628
      %4735 = vmatmul.bf16.gmra.mxu0 %v1335
      %v4736 = vpop.f32.mrf.mxu0
      %v4737 = vadd.f32 %v4724, %v4736
      %v4738 = vpop.f32.mrf.mxu0
      %4739 = vdwg.mxu0
      %4740 = vmatpush.bf16.msra.mxu0 %v3643
      %4741 = vmatpush.bf16.msra.mxu0 %v3642
      %4742 = vmatpush.bf16.msra.mxu0 %v3641
      %4743 = vmatpush.bf16.msra.mxu0 %v3640
      %4744 = vmatpush.bf16.msra.mxu0 %v3639
      %4745 = vmatpush.bf16.msra.mxu0 %v3638
      %4746 = vmatpush.bf16.msra.mxu0 %v3637
      %4747 = vmatpush.bf16.msra.mxu0 %v3636
      %4748 = vmatmul.bf16.gmra.mxu0 %v1338
      %v4749 = vpop.f32.mrf.mxu0
      %v4750 = vadd.f32 %v4737, %v4749
      %v4751 = vpop.f32.mrf.mxu0
      %4752 = vdwg.mxu0
      %4753 = vmatpush.bf16.msra.mxu0 %v3651
      %4754 = vmatpush.bf16.msra.mxu0 %v3650
      %4755 = vmatpush.bf16.msra.mxu0 %v3649
      %4756 = vmatpush.bf16.msra.mxu0 %v3648
      %4757 = vmatpush.bf16.msra.mxu0 %v3647
      %4758 = vmatpush.bf16.msra.mxu0 %v3646
      %4759 = vmatpush.bf16.msra.mxu0 %v3645
      %4760 = vmatpush.bf16.msra.mxu0 %v3644
      %4761 = vmatmul.bf16.gmra.mxu0 %v1339
      %v4762 = vpop.f32.mrf.mxu0
      %v4763 = vadd.f32 %v4750, %v4762
      %v4764 = vpop.f32.mrf.mxu0
      %4765 = vdwg.mxu0
      %4766 = vmatpush.bf16.msra.mxu0 %v3659
      %4767 = vmatpush.bf16.msra.mxu0 %v3658
      %4768 = vmatpush.bf16.msra.mxu0 %v3657
      %4769 = vmatpush.bf16.msra.mxu0 %v3656
      %4770 = vmatpush.bf16.msra.mxu0 %v3655
      %4771 = vmatpush.bf16.msra.mxu0 %v3654
      %4772 = vmatpush.bf16.msra.mxu0 %v3653
      %4773 = vmatpush.bf16.msra.mxu0 %v3652
      %4774 = vmatmul.bf16.gmra.mxu0 %v1340
      %v4775 = vpop.f32.mrf.mxu0
      %v4776 = vadd.f32 %v4763, %v4775
      %v4777 = vpop.f32.mrf.mxu0
      %4778 = vdwg.mxu0
      %4779 = vmatpush.bf16.msra.mxu0 %v3667
      %4780 = vmatpush.bf16.msra.mxu0 %v3666
      %4781 = vmatpush.bf16.msra.mxu0 %v3665
      %4782 = vmatpush.bf16.msra.mxu0 %v3664
      %4783 = vmatpush.bf16.msra.mxu0 %v3663
      %4784 = vmatpush.bf16.msra.mxu0 %v3662
      %4785 = vmatpush.bf16.msra.mxu0 %v3661
      %4786 = vmatpush.bf16.msra.mxu0 %v3660
      %4787 = vmatmul.bf16.gmra.mxu0 %v1341
      %v4788 = vpop.f32.mrf.mxu0
      %v4789 = vadd.f32 %v4776, %v4788
      %v4790 = vpop.f32.mrf.mxu0
      %4791 = vdwg.mxu0
      %4792 = vmatpush.bf16.msra.mxu0 %v3675
      %4793 = vmatpush.bf16.msra.mxu0 %v3674
      %4794 = vmatpush.bf16.msra.mxu0 %v3673
      %4795 = vmatpush.bf16.msra.mxu0 %v3672
      %4796 = vmatpush.bf16.msra.mxu0 %v3671
      %4797 = vmatpush.bf16.msra.mxu0 %v3670
      %4798 = vmatpush.bf16.msra.mxu0 %v3669
      %4799 = vmatpush.bf16.msra.mxu0 %v3668
      %4800 = vmatmul.bf16.gmra.mxu0 %v1342
      %v4801 = vpop.f32.mrf.mxu0
      %v4802 = vadd.f32 %v4789, %v4801
      %v4803 = vpop.f32.mrf.mxu0
      %4804 = vdwg.mxu0
      %4805 = vmatpush.bf16.msra.mxu0 %v3683
      %4806 = vmatpush.bf16.msra.mxu0 %v3682
      %4807 = vmatpush.bf16.msra.mxu0 %v3681
      %4808 = vmatpush.bf16.msra.mxu0 %v3680
      %4809 = vmatpush.bf16.msra.mxu0 %v3679
      %4810 = vmatpush.bf16.msra.mxu0 %v3678
      %4811 = vmatpush.bf16.msra.mxu0 %v3677
      %4812 = vmatpush.bf16.msra.mxu0 %v3676
      %4813 = vmatmul.bf16.gmra.mxu0 %v1343
      %v4814 = vpop.f32.mrf.mxu0
      %v4815 = vadd.f32 %v4802, %v4814
      %v4816 = vpop.f32.mrf.mxu0
      %4817 = vdwg.mxu0
      %4818 = vmatpush.bf16.msra.mxu0 %v3691
      %4819 = vmatpush.bf16.msra.mxu0 %v3690
      %4820 = vmatpush.bf16.msra.mxu0 %v3689
      %4821 = vmatpush.bf16.msra.mxu0 %v3688
      %4822 = vmatpush.bf16.msra.mxu0 %v3687
      %4823 = vmatpush.bf16.msra.mxu0 %v3686
      %4824 = vmatpush.bf16.msra.mxu0 %v3685
      %4825 = vmatpush.bf16.msra.mxu0 %v3684
      %4826 = vmatmul.bf16.gmra.mxu0 %v1344
      %v4827 = vpop.f32.mrf.mxu0
      %v4828 = vadd.f32 %v4815, %v4827
      %v4829 = vpop.f32.mrf.mxu0
      %4830 = vdwg.mxu0
      %4831 = vmatpush.bf16.msra.mxu0 %v3699
      %4832 = vmatpush.bf16.msra.mxu0 %v3698
      %4833 = vmatpush.bf16.msra.mxu0 %v3697
      %4834 = vmatpush.bf16.msra.mxu0 %v3696
      %4835 = vmatpush.bf16.msra.mxu0 %v3695
      %4836 = vmatpush.bf16.msra.mxu0 %v3694
      %4837 = vmatpush.bf16.msra.mxu0 %v3693
      %4838 = vmatpush.bf16.msra.mxu0 %v3692
      %4839 = vmatmul.bf16.gmra.mxu0 %v1345
      %v4840 = vpop.f32.mrf.mxu0
      %v4841 = vadd.f32 %v4828, %v4840
      %v4842 = vpop.f32.mrf.mxu0
      %4843 = vdwg.mxu0
      %4844 = vmatpush.bf16.msra.mxu0 %v3707
      %4845 = vmatpush.bf16.msra.mxu0 %v3706
      %4846 = vmatpush.bf16.msra.mxu0 %v3705
      %4847 = vmatpush.bf16.msra.mxu0 %v3704
      %4848 = vmatpush.bf16.msra.mxu0 %v3703
      %4849 = vmatpush.bf16.msra.mxu0 %v3702
      %4850 = vmatpush.bf16.msra.mxu0 %v3701
      %4851 = vmatpush.bf16.msra.mxu0 %v3700
      %4852 = vmatmul.bf16.gmra.mxu0 %v1348
      %v4853 = vpop.f32.mrf.mxu0
      %v4854 = vadd.f32 %v4841, %v4853
      %v4855 = vpop.f32.mrf.mxu0
      %4856 = vdwg.mxu0
      %4857 = vmatpush.bf16.msra.mxu0 %v3715
      %4858 = vmatpush.bf16.msra.mxu0 %v3714
      %4859 = vmatpush.bf16.msra.mxu0 %v3713
      %4860 = vmatpush.bf16.msra.mxu0 %v3712
      %4861 = vmatpush.bf16.msra.mxu0 %v3711
      %4862 = vmatpush.bf16.msra.mxu0 %v3710
      %4863 = vmatpush.bf16.msra.mxu0 %v3709
      %4864 = vmatpush.bf16.msra.mxu0 %v3708
      %4865 = vmatmul.bf16.gmra.mxu0 %v1349
      %v4866 = vpop.f32.mrf.mxu0
      %v4867 = vadd.f32 %v4854, %v4866
      %v4868 = vpop.f32.mrf.mxu0
      %4869 = vdwg.mxu0
      %4870 = vmatpush.bf16.msra.mxu0 %v3723
      %4871 = vmatpush.bf16.msra.mxu0 %v3722
      %4872 = vmatpush.bf16.msra.mxu0 %v3721
      %4873 = vmatpush.bf16.msra.mxu0 %v3720
      %4874 = vmatpush.bf16.msra.mxu0 %v3719
      %4875 = vmatpush.bf16.msra.mxu0 %v3718
      %4876 = vmatpush.bf16.msra.mxu0 %v3717
      %4877 = vmatpush.bf16.msra.mxu0 %v3716
      %4878 = vmatmul.bf16.gmra.mxu0 %v1350
      %v4879 = vpop.f32.mrf.mxu0
      %v4880 = vadd.f32 %v4867, %v4879
      %v4881 = vpop.f32.mrf.mxu0
      %4882 = vdwg.mxu0
      %4883 = vmatpush.bf16.msra.mxu0 %v3731
      %4884 = vmatpush.bf16.msra.mxu0 %v3730
      %4885 = vmatpush.bf16.msra.mxu0 %v3729
      %4886 = vmatpush.bf16.msra.mxu0 %v3728
      %4887 = vmatpush.bf16.msra.mxu0 %v3727
      %4888 = vmatpush.bf16.msra.mxu0 %v3726
      %4889 = vmatpush.bf16.msra.mxu0 %v3725
      %4890 = vmatpush.bf16.msra.mxu0 %v3724
      %4891 = vmatmul.bf16.gmra.mxu0 %v1351
      %v4892 = vpop.f32.mrf.mxu0
      %v4893 = vadd.f32 %v4880, %v4892
      %v4894 = vpop.f32.mrf.mxu0
      %4895 = vdwg.mxu0
      %4896 = vmatpush.bf16.msra.mxu0 %v3739
      %4897 = vmatpush.bf16.msra.mxu0 %v3738
      %4898 = vmatpush.bf16.msra.mxu0 %v3737
      %4899 = vmatpush.bf16.msra.mxu0 %v3736
      %4900 = vmatpush.bf16.msra.mxu0 %v3735
      %4901 = vmatpush.bf16.msra.mxu0 %v3734
      %4902 = vmatpush.bf16.msra.mxu0 %v3733
      %4903 = vmatpush.bf16.msra.mxu0 %v3732
      %4904 = vmatmul.bf16.gmra.mxu0 %v1352
      %v4905 = vpop.f32.mrf.mxu0
      %v4906 = vadd.f32 %v4893, %v4905
      %v4907 = vpop.f32.mrf.mxu0
      %4908 = vdwg.mxu0
      %4909 = vmatpush.bf16.msra.mxu0 %v3747
      %4910 = vmatpush.bf16.msra.mxu0 %v3746
      %4911 = vmatpush.bf16.msra.mxu0 %v3745
      %4912 = vmatpush.bf16.msra.mxu0 %v3744
      %4913 = vmatpush.bf16.msra.mxu0 %v3743
      %4914 = vmatpush.bf16.msra.mxu0 %v3742
      %4915 = vmatpush.bf16.msra.mxu0 %v3741
      %4916 = vmatpush.bf16.msra.mxu0 %v3740
      %4917 = vmatmul.bf16.gmra.mxu0 %v1353
      %v4918 = vpop.f32.mrf.mxu0
      %v4919 = vadd.f32 %v4906, %v4918
      %v4920 = vpop.f32.mrf.mxu0
      %4921 = vdwg.mxu0
      %4922 = vmatpush.bf16.msra.mxu0 %v3755
      %4923 = vmatpush.bf16.msra.mxu0 %v3754
      %4924 = vmatpush.bf16.msra.mxu0 %v3753
      %4925 = vmatpush.bf16.msra.mxu0 %v3752
      %4926 = vmatpush.bf16.msra.mxu0 %v3751
      %4927 = vmatpush.bf16.msra.mxu0 %v3750
      %4928 = vmatpush.bf16.msra.mxu0 %v3749
      %4929 = vmatpush.bf16.msra.mxu0 %v3748
      %4930 = vmatmul.bf16.gmra.mxu0 %v1354
      %v4931 = vpop.f32.mrf.mxu0
      %v4932 = vadd.f32 %v4919, %v4931
      %v4933 = vpop.f32.mrf.mxu0
      %4934 = vdwg.mxu0
      %4935 = vmatpush.bf16.msra.mxu0 %v3763
      %4936 = vmatpush.bf16.msra.mxu0 %v3762
      %4937 = vmatpush.bf16.msra.mxu0 %v3761
      %4938 = vmatpush.bf16.msra.mxu0 %v3760
      %4939 = vmatpush.bf16.msra.mxu0 %v3759
      %4940 = vmatpush.bf16.msra.mxu0 %v3758
      %4941 = vmatpush.bf16.msra.mxu0 %v3757
      %4942 = vmatpush.bf16.msra.mxu0 %v3756
      %4943 = vmatmul.bf16.gmra.mxu0 %v1355
      %v4944 = vpop.f32.mrf.mxu0
      %v4945 = vadd.f32 %v4932, %v4944
      %v4946 = vpop.f32.mrf.mxu0
      %4947 = vdwg.mxu0
      %4948 = vmatpush.bf16.msra.mxu0 %v3771
      %4949 = vmatpush.bf16.msra.mxu0 %v3770
      %4950 = vmatpush.bf16.msra.mxu0 %v3769
      %4951 = vmatpush.bf16.msra.mxu0 %v3768
      %4952 = vmatpush.bf16.msra.mxu0 %v3767
      %4953 = vmatpush.bf16.msra.mxu0 %v3766
      %4954 = vmatpush.bf16.msra.mxu0 %v3765
      %4955 = vmatpush.bf16.msra.mxu0 %v3764
      %4956 = vmatmul.bf16.gmra.mxu0 %v1358
      %v4957 = vpop.f32.mrf.mxu0
      %v4958 = vadd.f32 %v4945, %v4957
      %v4959 = vpop.f32.mrf.mxu0
      %4960 = vdwg.mxu0
      %4961 = vmatpush.bf16.msra.mxu0 %v3779
      %4962 = vmatpush.bf16.msra.mxu0 %v3778
      %4963 = vmatpush.bf16.msra.mxu0 %v3777
      %4964 = vmatpush.bf16.msra.mxu0 %v3776
      %4965 = vmatpush.bf16.msra.mxu0 %v3775
      %4966 = vmatpush.bf16.msra.mxu0 %v3774
      %4967 = vmatpush.bf16.msra.mxu0 %v3773
      %4968 = vmatpush.bf16.msra.mxu0 %v3772
      %4969 = vmatmul.bf16.gmra.mxu0 %v1359
      %v4970 = vpop.f32.mrf.mxu0
      %v4971 = vadd.f32 %v4958, %v4970
      %v4972 = vpop.f32.mrf.mxu0
      %4973 = vdwg.mxu0
      %4974 = vmatpush.bf16.msra.mxu0 %v3787
      %4975 = vmatpush.bf16.msra.mxu0 %v3786
      %4976 = vmatpush.bf16.msra.mxu0 %v3785
      %4977 = vmatpush.bf16.msra.mxu0 %v3784
      %4978 = vmatpush.bf16.msra.mxu0 %v3783
      %4979 = vmatpush.bf16.msra.mxu0 %v3782
      %4980 = vmatpush.bf16.msra.mxu0 %v3781
      %4981 = vmatpush.bf16.msra.mxu0 %v3780
      %4982 = vmatmul.bf16.gmra.mxu0 %v1360
      %v4983 = vpop.f32.mrf.mxu0
      %v4984 = vadd.f32 %v4971, %v4983
      %v4985 = vpop.f32.mrf.mxu0
      %4986 = vdwg.mxu0
      %4987 = vmatpush.bf16.msra.mxu0 %v3795
      %4988 = vmatpush.bf16.msra.mxu0 %v3794
      %4989 = vmatpush.bf16.msra.mxu0 %v3793
      %4990 = vmatpush.bf16.msra.mxu0 %v3792
      %4991 = vmatpush.bf16.msra.mxu0 %v3791
      %4992 = vmatpush.bf16.msra.mxu0 %v3790
      %4993 = vmatpush.bf16.msra.mxu0 %v3789
      %4994 = vmatpush.bf16.msra.mxu0 %v3788
      %4995 = vmatmul.bf16.gmra.mxu0 %v1361
      %v4996 = vpop.f32.mrf.mxu0
      %v4997 = vadd.f32 %v4984, %v4996
      %v4998 = vpop.f32.mrf.mxu0
      %4999 = vdwg.mxu0
      %5000 = vmatpush.bf16.msra.mxu0 %v3803
      %5001 = vmatpush.bf16.msra.mxu0 %v3802
      %5002 = vmatpush.bf16.msra.mxu0 %v3801
      %5003 = vmatpush.bf16.msra.mxu0 %v3800
      %5004 = vmatpush.bf16.msra.mxu0 %v3799
      %5005 = vmatpush.bf16.msra.mxu0 %v3798
      %5006 = vmatpush.bf16.msra.mxu0 %v3797
      %5007 = vmatpush.bf16.msra.mxu0 %v3796
      %5008 = vmatmul.bf16.gmra.mxu0 %v1362
      %v5009 = vpop.f32.mrf.mxu0
      %v5010 = vadd.f32 %v4997, %v5009
      %v5011 = vpop.f32.mrf.mxu0
      %5012 = vdwg.mxu0
      %5013 = vmatpush.bf16.msra.mxu0 %v3811
      %5014 = vmatpush.bf16.msra.mxu0 %v3810
      %5015 = vmatpush.bf16.msra.mxu0 %v3809
      %5016 = vmatpush.bf16.msra.mxu0 %v3808
      %5017 = vmatpush.bf16.msra.mxu0 %v3807
      %5018 = vmatpush.bf16.msra.mxu0 %v3806
      %5019 = vmatpush.bf16.msra.mxu0 %v3805
      %5020 = vmatpush.bf16.msra.mxu0 %v3804
      %5021 = vmatmul.bf16.gmra.mxu0 %v1363
      %v5022 = vpop.f32.mrf.mxu0
      %v5023 = vadd.f32 %v5010, %v5022
      %v5024 = vpop.f32.mrf.mxu0
      %5025 = vdwg.mxu0
      %5026 = vmatpush.bf16.msra.mxu0 %v3819
      %5027 = vmatpush.bf16.msra.mxu0 %v3818
      %5028 = vmatpush.bf16.msra.mxu0 %v3817
      %5029 = vmatpush.bf16.msra.mxu0 %v3816
      %5030 = vmatpush.bf16.msra.mxu0 %v3815
      %5031 = vmatpush.bf16.msra.mxu0 %v3814
      %5032 = vmatpush.bf16.msra.mxu0 %v3813
      %5033 = vmatpush.bf16.msra.mxu0 %v3812
      %5034 = vmatmul.bf16.gmra.mxu0 %v1364
      %v5035 = vpop.f32.mrf.mxu0
      %v5036 = vadd.f32 %v5023, %v5035
      %v5037 = vpop.f32.mrf.mxu0
      %5038 = vdwg.mxu0
      %5039 = vmatpush.bf16.msra.mxu0 %v3827
      %5040 = vmatpush.bf16.msra.mxu0 %v3826
      %5041 = vmatpush.bf16.msra.mxu0 %v3825
      %5042 = vmatpush.bf16.msra.mxu0 %v3824
      %5043 = vmatpush.bf16.msra.mxu0 %v3823
      %5044 = vmatpush.bf16.msra.mxu0 %v3822
      %5045 = vmatpush.bf16.msra.mxu0 %v3821
      %5046 = vmatpush.bf16.msra.mxu0 %v3820
      %5047 = vmatmul.bf16.gmra.mxu0 %v1365
      %v5048 = vpop.f32.mrf.mxu0
      %v5049 = vadd.f32 %v5036, %v5048
      %v5050 = vpop.f32.mrf.mxu0
      %5051 = vdwg.mxu0
      %5052 = vmatpush.bf16.msra.mxu0 %v3835
      %5053 = vmatpush.bf16.msra.mxu0 %v3834
      %5054 = vmatpush.bf16.msra.mxu0 %v3833
      %5055 = vmatpush.bf16.msra.mxu0 %v3832
      %5056 = vmatpush.bf16.msra.mxu0 %v3831
      %5057 = vmatpush.bf16.msra.mxu0 %v3830
      %5058 = vmatpush.bf16.msra.mxu0 %v3829
      %5059 = vmatpush.bf16.msra.mxu0 %v3828
      %5060 = vmatmul.bf16.gmra.mxu0 %v1368
      %v5061 = vpop.f32.mrf.mxu0
      %v5062 = vadd.f32 %v5049, %v5061
      %v5063 = vpop.f32.mrf.mxu0
      %5064 = vdwg.mxu0
      %5065 = vmatpush.bf16.msra.mxu0 %v3843
      %5066 = vmatpush.bf16.msra.mxu0 %v3842
      %5067 = vmatpush.bf16.msra.mxu0 %v3841
      %5068 = vmatpush.bf16.msra.mxu0 %v3840
      %5069 = vmatpush.bf16.msra.mxu0 %v3839
      %5070 = vmatpush.bf16.msra.mxu0 %v3838
      %5071 = vmatpush.bf16.msra.mxu0 %v3837
      %5072 = vmatpush.bf16.msra.mxu0 %v3836
      %5073 = vmatmul.bf16.gmra.mxu0 %v1369
      %v5074 = vpop.f32.mrf.mxu0
      %v5075 = vadd.f32 %v5062, %v5074
      %v5076 = vpop.f32.mrf.mxu0
      %5077 = vdwg.mxu0
      %5078 = vmatpush.bf16.msra.mxu0 %v3851
      %5079 = vmatpush.bf16.msra.mxu0 %v3850
      %5080 = vmatpush.bf16.msra.mxu0 %v3849
      %5081 = vmatpush.bf16.msra.mxu0 %v3848
      %5082 = vmatpush.bf16.msra.mxu0 %v3847
      %5083 = vmatpush.bf16.msra.mxu0 %v3846
      %5084 = vmatpush.bf16.msra.mxu0 %v3845
      %5085 = vmatpush.bf16.msra.mxu0 %v3844
      %5086 = vmatmul.bf16.gmra.mxu0 %v1370
      %v5087 = vpop.f32.mrf.mxu0
      %v5088 = vadd.f32 %v5075, %v5087
      %v5089 = vpop.f32.mrf.mxu0
      %5090 = vdwg.mxu0
      %5091 = vmatpush.bf16.msra.mxu0 %v3859
      %5092 = vmatpush.bf16.msra.mxu0 %v3858
      %5093 = vmatpush.bf16.msra.mxu0 %v3857
      %5094 = vmatpush.bf16.msra.mxu0 %v3856
      %5095 = vmatpush.bf16.msra.mxu0 %v3855
      %5096 = vmatpush.bf16.msra.mxu0 %v3854
      %5097 = vmatpush.bf16.msra.mxu0 %v3853
      %5098 = vmatpush.bf16.msra.mxu0 %v3852
      %5099 = vmatmul.bf16.gmra.mxu0 %v1371
      %v5100 = vpop.f32.mrf.mxu0
      %v5101 = vadd.f32 %v5088, %v5100
      %v5102 = vpop.f32.mrf.mxu0
      %5103 = vdwg.mxu0
      %5104 = vmatpush.bf16.msra.mxu0 %v3867
      %5105 = vmatpush.bf16.msra.mxu0 %v3866
      %5106 = vmatpush.bf16.msra.mxu0 %v3865
      %5107 = vmatpush.bf16.msra.mxu0 %v3864
      %5108 = vmatpush.bf16.msra.mxu0 %v3863
      %5109 = vmatpush.bf16.msra.mxu0 %v3862
      %5110 = vmatpush.bf16.msra.mxu0 %v3861
      %5111 = vmatpush.bf16.msra.mxu0 %v3860
      %5112 = vmatmul.bf16.gmra.mxu0 %v1372
      %v5113 = vpop.f32.mrf.mxu0
      %v5114 = vadd.f32 %v5101, %v5113
      %v5115 = vpop.f32.mrf.mxu0
      %5116 = vdwg.mxu0
      %5117 = vmatpush.bf16.msra.mxu0 %v3875
      %5118 = vmatpush.bf16.msra.mxu0 %v3874
      %5119 = vmatpush.bf16.msra.mxu0 %v3873
      %5120 = vmatpush.bf16.msra.mxu0 %v3872
      %5121 = vmatpush.bf16.msra.mxu0 %v3871
      %5122 = vmatpush.bf16.msra.mxu0 %v3870
      %5123 = vmatpush.bf16.msra.mxu0 %v3869
      %5124 = vmatpush.bf16.msra.mxu0 %v3868
      %5125 = vmatmul.bf16.gmra.mxu0 %v1373
      %v5126 = vpop.f32.mrf.mxu0
      %v5127 = vadd.f32 %v5114, %v5126
      %v5128 = vpop.f32.mrf.mxu0
      %5129 = vdwg.mxu0
      %5130 = vmatpush.bf16.msra.mxu0 %v3883
      %5131 = vmatpush.bf16.msra.mxu0 %v3882
      %5132 = vmatpush.bf16.msra.mxu0 %v3881
      %5133 = vmatpush.bf16.msra.mxu0 %v3880
      %5134 = vmatpush.bf16.msra.mxu0 %v3879
      %5135 = vmatpush.bf16.msra.mxu0 %v3878
      %5136 = vmatpush.bf16.msra.mxu0 %v3877
      %5137 = vmatpush.bf16.msra.mxu0 %v3876
      %5138 = vmatmul.bf16.gmra.mxu0 %v1374
      %v5139 = vpop.f32.mrf.mxu0
      %v5140 = vadd.f32 %v5127, %v5139
      %v5141 = vpop.f32.mrf.mxu0
      %5142 = vdwg.mxu0
      %5143 = vmatpush.bf16.msra.mxu0 %v3891
      %5144 = vmatpush.bf16.msra.mxu0 %v3890
      %5145 = vmatpush.bf16.msra.mxu0 %v3889
      %5146 = vmatpush.bf16.msra.mxu0 %v3888
      %5147 = vmatpush.bf16.msra.mxu0 %v3887
      %5148 = vmatpush.bf16.msra.mxu0 %v3886
      %5149 = vmatpush.bf16.msra.mxu0 %v3885
      %5150 = vmatpush.bf16.msra.mxu0 %v3884
      %5151 = vmatmul.bf16.gmra.mxu0 %v1375
      %v5152 = vpop.f32.mrf.mxu0
      %v5153 = vadd.f32 %v5140, %v5152
      %v5154 = vpop.f32.mrf.mxu0
      %5155 = vdwg.mxu0
      %5156 = vmatpush.bf16.msra.mxu0 %v3899
      %5157 = vmatpush.bf16.msra.mxu0 %v3898
      %5158 = vmatpush.bf16.msra.mxu0 %v3897
      %5159 = vmatpush.bf16.msra.mxu0 %v3896
      %5160 = vmatpush.bf16.msra.mxu0 %v3895
      %5161 = vmatpush.bf16.msra.mxu0 %v3894
      %5162 = vmatpush.bf16.msra.mxu0 %v3893
      %5163 = vmatpush.bf16.msra.mxu0 %v3892
      %5164 = vmatmul.bf16.gmra.mxu0 %v1378
      %v5165 = vpop.f32.mrf.mxu0
      %v5166 = vadd.f32 %v5153, %v5165
      %v5167 = vpop.f32.mrf.mxu0
      %5168 = vdwg.mxu0
      %5169 = vmatpush.bf16.msra.mxu0 %v3907
      %5170 = vmatpush.bf16.msra.mxu0 %v3906
      %5171 = vmatpush.bf16.msra.mxu0 %v3905
      %5172 = vmatpush.bf16.msra.mxu0 %v3904
      %5173 = vmatpush.bf16.msra.mxu0 %v3903
      %5174 = vmatpush.bf16.msra.mxu0 %v3902
      %5175 = vmatpush.bf16.msra.mxu0 %v3901
      %5176 = vmatpush.bf16.msra.mxu0 %v3900
      %5177 = vmatmul.bf16.gmra.mxu0 %v1379
      %v5178 = vpop.f32.mrf.mxu0
      %v5179 = vadd.f32 %v5166, %v5178
      %v5180 = vpop.f32.mrf.mxu0
      %5181 = vdwg.mxu0
      %5182 = vmatpush.bf16.msra.mxu0 %v3915
      %5183 = vmatpush.bf16.msra.mxu0 %v3914
      %5184 = vmatpush.bf16.msra.mxu0 %v3913
      %5185 = vmatpush.bf16.msra.mxu0 %v3912
      %5186 = vmatpush.bf16.msra.mxu0 %v3911
      %5187 = vmatpush.bf16.msra.mxu0 %v3910
      %5188 = vmatpush.bf16.msra.mxu0 %v3909
      %5189 = vmatpush.bf16.msra.mxu0 %v3908
      %5190 = vmatmul.bf16.gmra.mxu0 %v1380
      %v5191 = vpop.f32.mrf.mxu0
      %v5192 = vadd.f32 %v5179, %v5191
      %v5193 = vpop.f32.mrf.mxu0
      %5194 = vdwg.mxu0
      %5195 = vmatpush.bf16.msra.mxu0 %v3923
      %5196 = vmatpush.bf16.msra.mxu0 %v3922
      %5197 = vmatpush.bf16.msra.mxu0 %v3921
      %5198 = vmatpush.bf16.msra.mxu0 %v3920
      %5199 = vmatpush.bf16.msra.mxu0 %v3919
      %5200 = vmatpush.bf16.msra.mxu0 %v3918
      %5201 = vmatpush.bf16.msra.mxu0 %v3917
      %5202 = vmatpush.bf16.msra.mxu0 %v3916
      %5203 = vmatmul.bf16.gmra.mxu0 %v1381
      %v5204 = vpop.f32.mrf.mxu0
      %v5205 = vadd.f32 %v5192, %v5204
      %v5206 = vpop.f32.mrf.mxu0
      %5207 = vdwg.mxu0
      %5208 = vmatpush.bf16.msra.mxu0 %v3931
      %5209 = vmatpush.bf16.msra.mxu0 %v3930
      %5210 = vmatpush.bf16.msra.mxu0 %v3929
      %5211 = vmatpush.bf16.msra.mxu0 %v3928
      %5212 = vmatpush.bf16.msra.mxu0 %v3927
      %5213 = vmatpush.bf16.msra.mxu0 %v3926
      %5214 = vmatpush.bf16.msra.mxu0 %v3925
      %5215 = vmatpush.bf16.msra.mxu0 %v3924
      %5216 = vmatmul.bf16.gmra.mxu0 %v1382
      %v5217 = vpop.f32.mrf.mxu0
      %v5218 = vadd.f32 %v5205, %v5217
      %v5219 = vpop.f32.mrf.mxu0
      %5220 = vdwg.mxu0
      %5221 = vmatpush.bf16.msra.mxu0 %v3939
      %5222 = vmatpush.bf16.msra.mxu0 %v3938
      %5223 = vmatpush.bf16.msra.mxu0 %v3937
      %5224 = vmatpush.bf16.msra.mxu0 %v3936
      %5225 = vmatpush.bf16.msra.mxu0 %v3935
      %5226 = vmatpush.bf16.msra.mxu0 %v3934
      %5227 = vmatpush.bf16.msra.mxu0 %v3933
      %5228 = vmatpush.bf16.msra.mxu0 %v3932
      %5229 = vmatmul.bf16.gmra.mxu0 %v1383
      %v5230 = vpop.f32.mrf.mxu0
      %v5231 = vadd.f32 %v5218, %v5230
      %v5232 = vpop.f32.mrf.mxu0
      %5233 = vdwg.mxu0
      %5234 = vmatpush.bf16.msra.mxu0 %v3947
      %5235 = vmatpush.bf16.msra.mxu0 %v3946
      %5236 = vmatpush.bf16.msra.mxu0 %v3945
      %5237 = vmatpush.bf16.msra.mxu0 %v3944
      %5238 = vmatpush.bf16.msra.mxu0 %v3943
      %5239 = vmatpush.bf16.msra.mxu0 %v3942
      %5240 = vmatpush.bf16.msra.mxu0 %v3941
      %5241 = vmatpush.bf16.msra.mxu0 %v3940
      %5242 = vmatmul.bf16.gmra.mxu0 %v1384
      %v5243 = vpop.f32.mrf.mxu0
      %v5244 = vadd.f32 %v5231, %v5243
      %v5245 = vpop.f32.mrf.mxu0
      %5246 = vdwg.mxu0
      %5247 = vmatpush.bf16.msra.mxu0 %v3955
      %5248 = vmatpush.bf16.msra.mxu0 %v3954
      %5249 = vmatpush.bf16.msra.mxu0 %v3953
      %5250 = vmatpush.bf16.msra.mxu0 %v3952
      %5251 = vmatpush.bf16.msra.mxu0 %v3951
      %5252 = vmatpush.bf16.msra.mxu0 %v3950
      %5253 = vmatpush.bf16.msra.mxu0 %v3949
      %5254 = vmatpush.bf16.msra.mxu0 %v3948
      %5255 = vmatmul.bf16.gmra.mxu0 %v1385
      %v5256 = vpop.f32.mrf.mxu0
      %v5257 = vadd.f32 %v5244, %v5256
      %v5258 = vpop.f32.mrf.mxu0
      %5259 = vdwg.mxu0
      %5260 = vmatpush.bf16.msra.mxu0 %v3963
      %5261 = vmatpush.bf16.msra.mxu0 %v3962
      %5262 = vmatpush.bf16.msra.mxu0 %v3961
      %5263 = vmatpush.bf16.msra.mxu0 %v3960
      %5264 = vmatpush.bf16.msra.mxu0 %v3959
      %5265 = vmatpush.bf16.msra.mxu0 %v3958
      %5266 = vmatpush.bf16.msra.mxu0 %v3957
      %5267 = vmatpush.bf16.msra.mxu0 %v3956
      %5268 = vmatmul.bf16.gmra.mxu0 %v1388
      %v5269 = vpop.f32.mrf.mxu0
      %v5270 = vadd.f32 %v5257, %v5269
      %v5271 = vpop.f32.mrf.mxu0
      %5272 = vdwg.mxu0
      %5273 = vmatpush.bf16.msra.mxu0 %v3971
      %5274 = vmatpush.bf16.msra.mxu0 %v3970
      %5275 = vmatpush.bf16.msra.mxu0 %v3969
      %5276 = vmatpush.bf16.msra.mxu0 %v3968
      %5277 = vmatpush.bf16.msra.mxu0 %v3967
      %5278 = vmatpush.bf16.msra.mxu0 %v3966
      %5279 = vmatpush.bf16.msra.mxu0 %v3965
      %5280 = vmatpush.bf16.msra.mxu0 %v3964
      %5281 = vmatmul.bf16.gmra.mxu0 %v1389
      %v5282 = vpop.f32.mrf.mxu0
      %v5283 = vadd.f32 %v5270, %v5282
      %v5284 = vpop.f32.mrf.mxu0
      %5285 = vdwg.mxu0
      %5286 = vmatpush.bf16.msra.mxu0 %v3979
      %5287 = vmatpush.bf16.msra.mxu0 %v3978
      %5288 = vmatpush.bf16.msra.mxu0 %v3977
      %5289 = vmatpush.bf16.msra.mxu0 %v3976
      %5290 = vmatpush.bf16.msra.mxu0 %v3975
      %5291 = vmatpush.bf16.msra.mxu0 %v3974
      %5292 = vmatpush.bf16.msra.mxu0 %v3973
      %5293 = vmatpush.bf16.msra.mxu0 %v3972
      %5294 = vmatmul.bf16.gmra.mxu0 %v1390
      %v5295 = vpop.f32.mrf.mxu0
      %v5296 = vadd.f32 %v5283, %v5295
      %v5297 = vpop.f32.mrf.mxu0
      %5298 = vdwg.mxu0
      %5299 = vmatpush.bf16.msra.mxu0 %v3987
      %5300 = vmatpush.bf16.msra.mxu0 %v3986
      %5301 = vmatpush.bf16.msra.mxu0 %v3985
      %5302 = vmatpush.bf16.msra.mxu0 %v3984
      %5303 = vmatpush.bf16.msra.mxu0 %v3983
      %5304 = vmatpush.bf16.msra.mxu0 %v3982
      %5305 = vmatpush.bf16.msra.mxu0 %v3981
      %5306 = vmatpush.bf16.msra.mxu0 %v3980
      %5307 = vmatmul.bf16.gmra.mxu0 %v1391
      %v5308 = vpop.f32.mrf.mxu0
      %v5309 = vadd.f32 %v5296, %v5308
      %v5310 = vpop.f32.mrf.mxu0
      %5311 = vdwg.mxu0
      %5312 = vmatpush.bf16.msra.mxu0 %v3995
      %5313 = vmatpush.bf16.msra.mxu0 %v3994
      %5314 = vmatpush.bf16.msra.mxu0 %v3993
      %5315 = vmatpush.bf16.msra.mxu0 %v3992
      %5316 = vmatpush.bf16.msra.mxu0 %v3991
      %5317 = vmatpush.bf16.msra.mxu0 %v3990
      %5318 = vmatpush.bf16.msra.mxu0 %v3989
      %5319 = vmatpush.bf16.msra.mxu0 %v3988
      %5320 = vmatmul.bf16.gmra.mxu0 %v1392
      %v5321 = vpop.f32.mrf.mxu0
      %v5322 = vadd.f32 %v5309, %v5321
      %v5323 = vpop.f32.mrf.mxu0
      %5324 = vdwg.mxu0
      %5325 = vmatpush.bf16.msra.mxu0 %v4003
      %5326 = vmatpush.bf16.msra.mxu0 %v4002
      %5327 = vmatpush.bf16.msra.mxu0 %v4001
      %5328 = vmatpush.bf16.msra.mxu0 %v4000
      %5329 = vmatpush.bf16.msra.mxu0 %v3999
      %5330 = vmatpush.bf16.msra.mxu0 %v3998
      %5331 = vmatpush.bf16.msra.mxu0 %v3997
      %5332 = vmatpush.bf16.msra.mxu0 %v3996
      %5333 = vmatmul.bf16.gmra.mxu0 %v1393
      %v5334 = vpop.f32.mrf.mxu0
      %v5335 = vadd.f32 %v5322, %v5334
      %v5336 = vpop.f32.mrf.mxu0
      %5337 = vdwg.mxu0
      %5338 = vmatpush.bf16.msra.mxu0 %v4011
      %5339 = vmatpush.bf16.msra.mxu0 %v4010
      %5340 = vmatpush.bf16.msra.mxu0 %v4009
      %5341 = vmatpush.bf16.msra.mxu0 %v4008
      %5342 = vmatpush.bf16.msra.mxu0 %v4007
      %5343 = vmatpush.bf16.msra.mxu0 %v4006
      %5344 = vmatpush.bf16.msra.mxu0 %v4005
      %5345 = vmatpush.bf16.msra.mxu0 %v4004
      %5346 = vmatmul.bf16.gmra.mxu0 %v1394
      %v5347 = vpop.f32.mrf.mxu0
      %v5348 = vadd.f32 %v5335, %v5347
      %v5349 = vpop.f32.mrf.mxu0
      %5350 = vdwg.mxu0
      %5351 = vmatpush.bf16.msra.mxu0 %v4019
      %5352 = vmatpush.bf16.msra.mxu0 %v4018
      %5353 = vmatpush.bf16.msra.mxu0 %v4017
      %5354 = vmatpush.bf16.msra.mxu0 %v4016
      %5355 = vmatpush.bf16.msra.mxu0 %v4015
      %5356 = vmatpush.bf16.msra.mxu0 %v4014
      %5357 = vmatpush.bf16.msra.mxu0 %v4013
      %5358 = vmatpush.bf16.msra.mxu0 %v4012
      %5359 = vmatmul.bf16.gmra.mxu0 %v1395
      %v5360 = vpop.f32.mrf.mxu0
      %v5361 = vadd.f32 %v5348, %v5360
      %v5362 = vpop.f32.mrf.mxu0
      %5363 = vdwg.mxu0
      %v5364 = vadd.f32 %v283, %v5361
      %vm5365 = vcmask 517120
      %5366 = vst.msk [vmem:[#allocation2] sm:$0x3] %vm5365, %v5364
      %p5367 = scmp.eq.s32.totalorder %s20, 1
      // Predicated region
      $region41: #{actor_critic_forward.3} parent=35 // pred_check
        %p5368 = pneg %p5367
      $region42: #{actor_critic_forward.3} parent=35 // pred_check_branch
        %5370 = sbr.rel (%p5368) target = $region44
      $region43: #{actor_critic_forward.3} parent=35 // pred_region
        %v5371 = vld [vmem:[#allocation2] sm:$0x3]
        %v5372 = vld [vmem:[%s267] sm:$0x1]
        %v5374 = vperm.slane %v5372, 0
        %v5376 = vadd.f32 %v5371, %v5374
        %v5377 = vmax.f32 %v5376, 0.0
        %v5378 = vld [vmem:[%s272] sm:$0xff]
        %v5379 = vld [vmem:[%s272 + $0x8] sm:$0xff]
        %v5380 = vld [vmem:[%s272 + $0x10] sm:$0xff]
        %v5381 = vld [vmem:[%s272 + $0x18] sm:$0xff]
        %v5382 = vld [vmem:[%s272 + $0x20] sm:$0xff]
        %v5383 = vld [vmem:[%s272 + $0x28] sm:$0xff]
        %v5384 = vld [vmem:[%s272 + $0x30] sm:$0xff]
        %v5385 = vld [vmem:[%s272 + $0x38] sm:$0xff]
        %vm5386 = vcmask 523264
        %v5388 = vsel %vm5386, %v5377, 0
        %5390 = vmatpush.msra.mxu0 0.0
        %5391 = vmatpush.msra.mxu0 0.0
        %5392 = vmatpush.msra.mxu0 0.0
        %5393 = vmatpush.msra.mxu0 0.0
        %5394 = vmatpush.msra.mxu0 0.0
        %5395 = vmatpush.msra.mxu0 0.0
        %5396 = vmatpush.msra.mxu0 0.0
        %5397 = vmatpush.msra.mxu0 0.0
        %5398 = vmatpush.msra.mxu0 %v5385
        %5399 = vmatpush.msra.mxu0 %v5384
        %5400 = vmatpush.msra.mxu0 %v5383
        %5401 = vmatpush.msra.mxu0 %v5382
        %5402 = vmatpush.msra.mxu0 %v5381
        %5403 = vmatpush.msra.mxu0 %v5380
        %5404 = vmatpush.msra.mxu0 %v5379
        %5405 = vmatpush.msra.mxu0 %v5378
        %5406 = vmatmul.f32.gmra.mxu0 %v5388
        %v5407 = vpop.f32.mrf.mxu0
        %v5408 = vadd.f32 0.0, %v5407
        %5409 = vdwg.mxu0
        %vm5410 = vcmask 50176
        %5411 = vst.msk [vmem:[%s276] sm:$0x3] %vm5410, %v5408
      $region44: #{actor_critic_forward.3} parent=35 // pred_fallthru
        _
      %p5412 = scmp.lt.s32.totalorder %s19, 1
      %s5413 = scalar_select %p5412, %s19, 1
      %s5414 = smul.addr %s5413, 2
      %s5415 = scalar_lea.vmem %s4, %s5414
      // Predicated region
      $region45: #{actor_critic_forward.3} parent=35 // pred_check
        %p5416 = pneg %p151
      $region46: #{actor_critic_forward.3} parent=35 // pred_check_branch
        %5418 = sbr.rel (%p5416) target = $region48
      $region47: #{actor_critic_forward.3} parent=35 // pred_region
        _
      $region48: #{actor_critic_forward.3} parent=35 // pred_fallthru
        _
    $region36: #{actor_critic_forward.3} parent=5 // pred_fallthru
      _
    %p5419 = scmp.le.s32.totalorder 2, %s10
    // Predicated region
    $region49: #{actor_critic_forward.3} parent=5 // pred_check
      %p5420 = pneg %p5419
    $region50: #{actor_critic_forward.3} parent=5 // pred_check_branch
      %5422 = sbr.rel (%p5420) target = $region52
    $region51: #{actor_critic_forward.3} parent=5 // pred_region
      %s5423 = ssub.s32 %s10, 2
      // Predicated region
      $region53: #{actor_critic_forward.3} parent=51 // pred_check
        %p5424 = pneg %p157
      $region54: #{actor_critic_forward.3} parent=51 // pred_check_branch
        %5426 = sbr.rel (%p5424) target = $region56
      $region55: #{actor_critic_forward.3} parent=51 // pred_region
        %p5427 = scmp.lt.s32.totalorder %s21, 1
        %s5428 = scalar_select %p5427, %s21, 1
        %s5429 = smul.addr %s5428, 2
        %s5430 = scalar_lea.vmem %s4, %s5429
      $region56: #{actor_critic_forward.3} parent=51 // pred_fallthru
        _
    $region52: #{actor_critic_forward.3} parent=5 // pred_fallthru
      _
  $region6: #{actor_critic_forward.3} parent=0 // loop_footer
    %s14 = sadd.s32 1, %s10
  $region7: #{actor_critic_forward.3} parent=0 // loop_footer_branch
    %9 = sbr.rel target = $region3
  $region8: #{actor_critic_forward.3} parent=0 // loop_exit
    _

// kernel: actor_critic_forward.2
$region0: #{actor_critic_forward.2}
  #allocation0 [shape = 'u32[]', space=smem, size = 0x4, offset = 0x4, fixed_abs, tag = 'smem constant byte address 0x4 - core index']
  #allocation1 [shape = 'u32[72,128]{1,0:T(1,128)}', space=vmem, size = 0x9000, scoped, tag = 'internal scratch']
  #allocation2 [shape = 'f32[2,18,18,4]{3,2,1,0:T(8,128)}', space=vmem, size = 0x6c000, scoped, tag = 'scratch operand']
  #allocation3 [shape = 'f32[2,18,18,32]{3,2,1,0:T(8,128)}', space=vmem, size = 0x6c000, scoped, tag = 'scratch operand']
  %s0 = inlined_call_operand.vmem [shape: f32[2,16,16,4], index: 0, kind: input, shape index: {}]
  %s1 = inlined_call_operand.vmem [shape: f32[36,32], index: 1, kind: input, shape index: {}]
  %s2 = inlined_call_operand.hbm [shape: f32[1,32], index: 2, kind: input, shape index: {}]
  %s3 = inlined_call_operand.vmem [shape: f32[288,64], index: 3, kind: input, shape index: {}]
  %s4 = inlined_call_operand.hbm [shape: f32[1,64], index: 4, kind: input, shape index: {}]
  %s5 = inlined_call_operand.vmem [shape: bf16[512,64], index: 5, kind: output, shape index: {}]
  %s6 = sld [smem:[#allocation0]]
  $region38: #{actor_critic_forward.2} parent=0
    _
  %s8 = ssub.s32 1, %s6
  %s9 = scalar_select 0, %s8, %s6
  $region1: #{actor_critic_forward.2} parent=0
    #allocation4 [shape = 'u8[512]{0}', space=vmem, size = 0x400, scoped, tag = 'input window, operand 2, single buffered']
    #allocation5 [shape = 's32[1]{0}', space=sflag, size = 0x4, scoped, tag = 'scoped memory for actor_critic_forward.2']
    #allocation6 [shape = 'u8[512]{0}', space=vmem, size = 0x400, scoped, tag = 'input window, operand 4, single buffered']
    #allocation7 [shape = 's32[1]{0}', space=sflag, size = 0x4, scoped, tag = 'scoped memory for actor_critic_forward.2']
    %10 = vsyncpa [#allocation5], 0
    %11 = vsyncpa [#allocation7], 0
    // Predicated region
    $region2: #{actor_critic_forward.2} parent=1 // pred_check
      _
    $region3: #{actor_critic_forward.2} parent=1 // pred_check_branch
      %13 = sbr.rel (0) target = $region5
    $region4: #{actor_critic_forward.2} parent=1 // pred_region
      _
    $region5: #{actor_critic_forward.2} parent=1 // pred_fallthru
      _
    // Predicated region
    $region6: #{actor_critic_forward.2} parent=1 // pred_check
      _
    $region7: #{actor_critic_forward.2} parent=1 // pred_check_branch
      %15 = sbr.rel (0) target = $region9
    $region8: #{actor_critic_forward.2} parent=1 // pred_region
      _
    $region9: #{actor_critic_forward.2} parent=1 // pred_fallthru
      _
    // Predicated region
    $region10: #{actor_critic_forward.2} parent=1 // pred_check
      _
    $region11: #{actor_critic_forward.2} parent=1 // pred_check_branch
      %17 = sbr.rel (0) target = $region13
    $region12: #{actor_critic_forward.2} parent=1 // pred_region
      %19 = vsyncadd [#allocation5], 0
      %s21 = sshll.u32 %s2, 4
      %s22 = int_to_ptr.hbm [resolvable:$true] %s21
      %s23 = sshll.u32 [#allocation4], 4
      %s24 = int_to_ptr.vmem [resolvable:$true] %s23
      %26 = dma.hbm_to_vmem [thread:$0]  %s22, 16, %s24, [#allocation5]
    $region13: #{actor_critic_forward.2} parent=1 // pred_fallthru
      _
    // Predicated region
    $region14: #{actor_critic_forward.2} parent=1 // pred_check
      _
    $region15: #{actor_critic_forward.2} parent=1 // pred_check_branch
      %28 = sbr.rel (0) target = $region17
    $region16: #{actor_critic_forward.2} parent=1 // pred_region
      _
    $region17: #{actor_critic_forward.2} parent=1 // pred_fallthru
      _
    // Predicated region
    $region18: #{actor_critic_forward.2} parent=1 // pred_check
      _
    $region19: #{actor_critic_forward.2} parent=1 // pred_check_branch
      %30 = sbr.rel (0) target = $region21
    $region20: #{actor_critic_forward.2} parent=1 // pred_region
      %32 = vsyncadd [#allocation7], 0
      %s34 = sshll.u32 %s4, 4
      %s35 = int_to_ptr.hbm [resolvable:$true] %s34
      %s36 = sshll.u32 [#allocation6], 4
      %s37 = int_to_ptr.vmem [resolvable:$true] %s36
      %39 = dma.hbm_to_vmem [thread:$0]  %s35, 16, %s37, [#allocation7]
    $region21: #{actor_critic_forward.2} parent=1 // pred_fallthru
      _
    // Predicated region
    $region22: #{actor_critic_forward.2} parent=1 // pred_check
      _
    $region23: #{actor_critic_forward.2} parent=1 // pred_check_branch
      %41 = sbr.rel (0) target = $region25
    $region24: #{actor_critic_forward.2} parent=1 // pred_region
      %43 = dma.done [#allocation5], 16
    $region25: #{actor_critic_forward.2} parent=1 // pred_fallthru
      _
    // Predicated region
    $region26: #{actor_critic_forward.2} parent=1 // pred_check
      _
    $region27: #{actor_critic_forward.2} parent=1 // pred_check_branch
      %45 = sbr.rel (0) target = $region29
    $region28: #{actor_critic_forward.2} parent=1 // pred_region
      %47 = dma.done [#allocation7], 16
    $region29: #{actor_critic_forward.2} parent=1 // pred_fallthru
      _
    %vm48 = vcmask 31744
    %49 = vst.msk [vmem:[#allocation2] sm:$0xff] %vm48, 0.0
    %50 = vst.msk [vmem:[#allocation2 + $0x8] sm:$0xff] %vm48, 0.0
    %vm51 = vcmask 25600
    %52 = vst.msk [vmem:[#allocation2 + $0x10] sm:$0x3] %vm51, 0.0
    %53 = vst.msk [vmem:[#allocation2 + $0x18] sm:$0xff] %vm48, 0.0
    %54 = vst.msk [vmem:[#allocation2 + $0x20] sm:$0xff] %vm48, 0.0
    %55 = vst.msk [vmem:[#allocation2 + $0x28] sm:$0x3] %vm51, 0.0
    %56 = vst.msk [vmem:[#allocation2 + $0x30] sm:$0xff] %vm48, 0.0
    %57 = vst.msk [vmem:[#allocation2 + $0x38] sm:$0xff] %vm48, 0.0
    %58 = vst.msk [vmem:[#allocation2 + $0x40] sm:$0x3] %vm51, 0.0
    %59 = vst.msk [vmem:[#allocation2 + $0x48] sm:$0xff] %vm48, 0.0
    %60 = vst.msk [vmem:[#allocation2 + $0x50] sm:$0xff] %vm48, 0.0
    %61 = vst.msk [vmem:[#allocation2 + $0x58] sm:$0x3] %vm51, 0.0
    %62 = vst.msk [vmem:[#allocation2 + $0x60] sm:$0xff] %vm48, 0.0
    %63 = vst.msk [vmem:[#allocation2 + $0x68] sm:$0xff] %vm48, 0.0
    %64 = vst.msk [vmem:[#allocation2 + $0x70] sm:$0x3] %vm51, 0.0
    %65 = vst.msk [vmem:[#allocation2 + $0x78] sm:$0xff] %vm48, 0.0
    %66 = vst.msk [vmem:[#allocation2 + $0x80] sm:$0xff] %vm48, 0.0
    %67 = vst.msk [vmem:[#allocation2 + $0x88] sm:$0x3] %vm51, 0.0
    %68 = vst.msk [vmem:[#allocation2 + $0x90] sm:$0xff] %vm48, 0.0
    %69 = vst.msk [vmem:[#allocation2 + $0x98] sm:$0xff] %vm48, 0.0
    %70 = vst.msk [vmem:[#allocation2 + $0xa0] sm:$0x3] %vm51, 0.0
    %71 = vst.msk [vmem:[#allocation2 + $0xa8] sm:$0xff] %vm48, 0.0
    %72 = vst.msk [vmem:[#allocation2 + $0xb0] sm:$0xff] %vm48, 0.0
    %73 = vst.msk [vmem:[#allocation2 + $0xb8] sm:$0x3] %vm51, 0.0
    %74 = vst.msk [vmem:[#allocation2 + $0xc0] sm:$0xff] %vm48, 0.0
    %75 = vst.msk [vmem:[#allocation2 + $0xc8] sm:$0xff] %vm48, 0.0
    %76 = vst.msk [vmem:[#allocation2 + $0xd0] sm:$0x3] %vm51, 0.0
    %77 = vst.msk [vmem:[#allocation2 + $0xd8] sm:$0xff] %vm48, 0.0
    %78 = vst.msk [vmem:[#allocation2 + $0xe0] sm:$0xff] %vm48, 0.0
    %79 = vst.msk [vmem:[#allocation2 + $0xe8] sm:$0x3] %vm51, 0.0
    %80 = vst.msk [vmem:[#allocation2 + $0xf0] sm:$0xff] %vm48, 0.0
    %81 = vst.msk [vmem:[#allocation2 + $0xf8] sm:$0xff] %vm48, 0.0
    %82 = vst.msk [vmem:[#allocation2 + $0x100] sm:$0x3] %vm51, 0.0
    %83 = vst.msk [vmem:[#allocation2 + $0x108] sm:$0xff] %vm48, 0.0
    %84 = vst.msk [vmem:[#allocation2 + $0x110] sm:$0xff] %vm48, 0.0
    %85 = vst.msk [vmem:[#allocation2 + $0x118] sm:$0x3] %vm51, 0.0
    %86 = vst.msk [vmem:[#allocation2 + $0x120] sm:$0xff] %vm48, 0.0
    %87 = vst.msk [vmem:[#allocation2 + $0x128] sm:$0xff] %vm48, 0.0
    %88 = vst.msk [vmem:[#allocation2 + $0x130] sm:$0x3] %vm51, 0.0
    %89 = vst.msk [vmem:[#allocation2 + $0x138] sm:$0xff] %vm48, 0.0
    %90 = vst.msk [vmem:[#allocation2 + $0x140] sm:$0xff] %vm48, 0.0
    %91 = vst.msk [vmem:[#allocation2 + $0x148] sm:$0x3] %vm51, 0.0
    %92 = vst.msk [vmem:[#allocation2 + $0x150] sm:$0xff] %vm48, 0.0
    %93 = vst.msk [vmem:[#allocation2 + $0x158] sm:$0xff] %vm48, 0.0
    %94 = vst.msk [vmem:[#allocation2 + $0x160] sm:$0x3] %vm51, 0.0
    %95 = vst.msk [vmem:[#allocation2 + $0x168] sm:$0xff] %vm48, 0.0
    %96 = vst.msk [vmem:[#allocation2 + $0x170] sm:$0xff] %vm48, 0.0
    %97 = vst.msk [vmem:[#allocation2 + $0x178] sm:$0x3] %vm51, 0.0
    %98 = vst.msk [vmem:[#allocation2 + $0x180] sm:$0xff] %vm48, 0.0
    %99 = vst.msk [vmem:[#allocation2 + $0x188] sm:$0xff] %vm48, 0.0
    %100 = vst.msk [vmem:[#allocation2 + $0x190] sm:$0x3] %vm51, 0.0
    %101 = vst.msk [vmem:[#allocation2 + $0x198] sm:$0xff] %vm48, 0.0
    %102 = vst.msk [vmem:[#allocation2 + $0x1a0] sm:$0xff] %vm48, 0.0
    %103 = vst.msk [vmem:[#allocation2 + $0x1a8] sm:$0x3] %vm51, 0.0
    %104 = vst.msk [vmem:[#allocation2 + $0x1b0] sm:$0xff] %vm48, 0.0
    %105 = vst.msk [vmem:[#allocation2 + $0x1b8] sm:$0xff] %vm48, 0.0
    %106 = vst.msk [vmem:[#allocation2 + $0x1c0] sm:$0x3] %vm51, 0.0
    %107 = vst.msk [vmem:[#allocation2 + $0x1c8] sm:$0xff] %vm48, 0.0
    %108 = vst.msk [vmem:[#allocation2 + $0x1d0] sm:$0xff] %vm48, 0.0
    %109 = vst.msk [vmem:[#allocation2 + $0x1d8] sm:$0x3] %vm51, 0.0
    %110 = vst.msk [vmem:[#allocation2 + $0x1e0] sm:$0xff] %vm48, 0.0
    %111 = vst.msk [vmem:[#allocation2 + $0x1e8] sm:$0xff] %vm48, 0.0
    %112 = vst.msk [vmem:[#allocation2 + $0x1f0] sm:$0x3] %vm51, 0.0
    %113 = vst.msk [vmem:[#allocation2 + $0x1f8] sm:$0xff] %vm48, 0.0
    %114 = vst.msk [vmem:[#allocation2 + $0x200] sm:$0xff] %vm48, 0.0
    %115 = vst.msk [vmem:[#allocation2 + $0x208] sm:$0x3] %vm51, 0.0
    %116 = vst.msk [vmem:[#allocation2 + $0x210] sm:$0xff] %vm48, 0.0
    %117 = vst.msk [vmem:[#allocation2 + $0x218] sm:$0xff] %vm48, 0.0
    %118 = vst.msk [vmem:[#allocation2 + $0x220] sm:$0x3] %vm51, 0.0
    %119 = vst.msk [vmem:[#allocation2 + $0x228] sm:$0xff] %vm48, 0.0
    %120 = vst.msk [vmem:[#allocation2 + $0x230] sm:$0xff] %vm48, 0.0
    %121 = vst.msk [vmem:[#allocation2 + $0x238] sm:$0x3] %vm51, 0.0
    %122 = vst.msk [vmem:[#allocation2 + $0x240] sm:$0xff] %vm48, 0.0
    %123 = vst.msk [vmem:[#allocation2 + $0x248] sm:$0xff] %vm48, 0.0
    %124 = vst.msk [vmem:[#allocation2 + $0x250] sm:$0x3] %vm51, 0.0
    %125 = vst.msk [vmem:[#allocation2 + $0x258] sm:$0xff] %vm48, 0.0
    %126 = vst.msk [vmem:[#allocation2 + $0x260] sm:$0xff] %vm48, 0.0
    %127 = vst.msk [vmem:[#allocation2 + $0x268] sm:$0x3] %vm51, 0.0
    %128 = vst.msk [vmem:[#allocation2 + $0x270] sm:$0xff] %vm48, 0.0
    %129 = vst.msk [vmem:[#allocation2 + $0x278] sm:$0xff] %vm48, 0.0
    %130 = vst.msk [vmem:[#allocation2 + $0x280] sm:$0x3] %vm51, 0.0
    %131 = vst.msk [vmem:[#allocation2 + $0x288] sm:$0xff] %vm48, 0.0
    %132 = vst.msk [vmem:[#allocation2 + $0x290] sm:$0xff] %vm48, 0.0
    %133 = vst.msk [vmem:[#allocation2 + $0x298] sm:$0x3] %vm51, 0.0
    %134 = vst.msk [vmem:[#allocation2 + $0x2a0] sm:$0xff] %vm48, 0.0
    %135 = vst.msk [vmem:[#allocation2 + $0x2a8] sm:$0xff] %vm48, 0.0
    %136 = vst.msk [vmem:[#allocation2 + $0x2b0] sm:$0x3] %vm51, 0.0
    %137 = vst.msk [vmem:[#allocation2 + $0x2b8] sm:$0xff] %vm48, 0.0
    %138 = vst.msk [vmem:[#allocation2 + $0x2c0] sm:$0xff] %vm48, 0.0
    %139 = vst.msk [vmem:[#allocation2 + $0x2c8] sm:$0x3] %vm51, 0.0
    %140 = vst.msk [vmem:[#allocation2 + $0x2d0] sm:$0xff] %vm48, 0.0
    %141 = vst.msk [vmem:[#allocation2 + $0x2d8] sm:$0xff] %vm48, 0.0
    %142 = vst.msk [vmem:[#allocation2 + $0x2e0] sm:$0x3] %vm51, 0.0
    %143 = vst.msk [vmem:[#allocation2 + $0x2e8] sm:$0xff] %vm48, 0.0
    %144 = vst.msk [vmem:[#allocation2 + $0x2f0] sm:$0xff] %vm48, 0.0
    %145 = vst.msk [vmem:[#allocation2 + $0x2f8] sm:$0x3] %vm51, 0.0
    %146 = vst.msk [vmem:[#allocation2 + $0x300] sm:$0xff] %vm48, 0.0
    %147 = vst.msk [vmem:[#allocation2 + $0x308] sm:$0xff] %vm48, 0.0
    %148 = vst.msk [vmem:[#allocation2 + $0x310] sm:$0x3] %vm51, 0.0
    %149 = vst.msk [vmem:[#allocation2 + $0x318] sm:$0xff] %vm48, 0.0
    %150 = vst.msk [vmem:[#allocation2 + $0x320] sm:$0xff] %vm48, 0.0
    %151 = vst.msk [vmem:[#allocation2 + $0x328] sm:$0x3] %vm51, 0.0
    %152 = vst.msk [vmem:[#allocation2 + $0x330] sm:$0xff] %vm48, 0.0
    %153 = vst.msk [vmem:[#allocation2 + $0x338] sm:$0xff] %vm48, 0.0
    %154 = vst.msk [vmem:[#allocation2 + $0x340] sm:$0x3] %vm51, 0.0
    %155 = vst.msk [vmem:[#allocation2 + $0x348] sm:$0xff] %vm48, 0.0
    %156 = vst.msk [vmem:[#allocation2 + $0x350] sm:$0xff] %vm48, 0.0
    %157 = vst.msk [vmem:[#allocation2 + $0x358] sm:$0x3] %vm51, 0.0
    %v158 = vld [vmem:[%s0] sm:$0xff]
    %v159 = vld [vmem:[%s0 + $0x8] sm:$0xff]
    %v160 = vld [vmem:[%s0 + $0x10] sm:$0xff]
    %v161 = vld [vmem:[%s0 + $0x18] sm:$0xff]
    %v162 = vld [vmem:[%s0 + $0x20] sm:$0xff]
    %v163 = vld [vmem:[%s0 + $0x28] sm:$0xff]
    %v164 = vld [vmem:[%s0 + $0x30] sm:$0xff]
    %v165 = vld [vmem:[%s0 + $0x38] sm:$0xff]
    %v166 = vld [vmem:[%s0 + $0x40] sm:$0xff]
    %v167 = vld [vmem:[%s0 + $0x48] sm:$0xff]
    %v168 = vld [vmem:[%s0 + $0x50] sm:$0xff]
    %v169 = vld [vmem:[%s0 + $0x58] sm:$0xff]
    %v170 = vld [vmem:[%s0 + $0x60] sm:$0xff]
    %v171 = vld [vmem:[%s0 + $0x68] sm:$0xff]
    %v172 = vld [vmem:[%s0 + $0x70] sm:$0xff]
    %v173 = vld [vmem:[%s0 + $0x78] sm:$0xff]
    %v174 = vld [vmem:[%s0 + $0x80] sm:$0xff]
    %v175 = vld [vmem:[%s0 + $0x88] sm:$0xff]
    %v176 = vld [vmem:[%s0 + $0x90] sm:$0xff]
    %v177 = vld [vmem:[%s0 + $0x98] sm:$0xff]
    %v178 = vld [vmem:[%s0 + $0xa0] sm:$0xff]
    %v179 = vld [vmem:[%s0 + $0xa8] sm:$0xff]
    %v180 = vld [vmem:[%s0 + $0xb0] sm:$0xff]
    %v181 = vld [vmem:[%s0 + $0xb8] sm:$0xff]
    %v182 = vld [vmem:[%s0 + $0xc0] sm:$0xff]
    %v183 = vld [vmem:[%s0 + $0xc8] sm:$0xff]
    %v184 = vld [vmem:[%s0 + $0xd0] sm:$0xff]
    %v185 = vld [vmem:[%s0 + $0xd8] sm:$0xff]
    %v186 = vld [vmem:[%s0 + $0xe0] sm:$0xff]
    %v187 = vld [vmem:[%s0 + $0xe8] sm:$0xff]
    %v188 = vld [vmem:[%s0 + $0xf0] sm:$0xff]
    %v189 = vld [vmem:[%s0 + $0xf8] sm:$0xff]
    %v190 = vld [vmem:[%s0 + $0x100] sm:$0xff]
    %v191 = vld [vmem:[%s0 + $0x108] sm:$0xff]
    %v192 = vld [vmem:[%s0 + $0x110] sm:$0xff]
    %v193 = vld [vmem:[%s0 + $0x118] sm:$0xff]
    %v194 = vld [vmem:[%s0 + $0x120] sm:$0xff]
    %v195 = vld [vmem:[%s0 + $0x128] sm:$0xff]
    %v196 = vld [vmem:[%s0 + $0x130] sm:$0xff]
    %v197 = vld [vmem:[%s0 + $0x138] sm:$0xff]
    %v198 = vld [vmem:[%s0 + $0x140] sm:$0xff]
    %v199 = vld [vmem:[%s0 + $0x148] sm:$0xff]
    %v200 = vld [vmem:[%s0 + $0x150] sm:$0xff]
    %v201 = vld [vmem:[%s0 + $0x158] sm:$0xff]
    %v202 = vld [vmem:[%s0 + $0x160] sm:$0xff]
    %v203 = vld [vmem:[%s0 + $0x168] sm:$0xff]
    %v204 = vld [vmem:[%s0 + $0x170] sm:$0xff]
    %v205 = vld [vmem:[%s0 + $0x178] sm:$0xff]
    %v206 = vld [vmem:[%s0 + $0x180] sm:$0xff]
    %v207 = vld [vmem:[%s0 + $0x188] sm:$0xff]
    %v208 = vld [vmem:[%s0 + $0x190] sm:$0xff]
    %v209 = vld [vmem:[%s0 + $0x198] sm:$0xff]
    %v210 = vld [vmem:[%s0 + $0x1a0] sm:$0xff]
    %v211 = vld [vmem:[%s0 + $0x1a8] sm:$0xff]
    %v212 = vld [vmem:[%s0 + $0x1b0] sm:$0xff]
    %v213 = vld [vmem:[%s0 + $0x1b8] sm:$0xff]
    %v214 = vld [vmem:[%s0 + $0x1c0] sm:$0xff]
    %v215 = vld [vmem:[%s0 + $0x1c8] sm:$0xff]
    %v216 = vld [vmem:[%s0 + $0x1d0] sm:$0xff]
    %v217 = vld [vmem:[%s0 + $0x1d8] sm:$0xff]
    %v218 = vld [vmem:[%s0 + $0x1e0] sm:$0xff]
    %v219 = vld [vmem:[%s0 + $0x1e8] sm:$0xff]
    %v220 = vld [vmem:[%s0 + $0x1f0] sm:$0xff]
    %v221 = vld [vmem:[%s0 + $0x1f8] sm:$0xff]
    %s222 = scalar_lea.vmem [#allocation2], 24
    %223 = vst.msk [vmem:[%s222 + $0x1] sm:$0xff] %vm48, %v158
    %224 = vst.msk [vmem:[%s222 + $0x9] sm:$0xff] %vm48, %v159
    %225 = vst.msk [vmem:[%s222 + $0x19] sm:$0xff] %vm48, %v160
    %226 = vst.msk [vmem:[%s222 + $0x21] sm:$0xff] %vm48, %v161
    %227 = vst.msk [vmem:[%s222 + $0x31] sm:$0xff] %vm48, %v162
    %228 = vst.msk [vmem:[%s222 + $0x39] sm:$0xff] %vm48, %v163
    %229 = vst.msk [vmem:[%s222 + $0x49] sm:$0xff] %vm48, %v164
    %230 = vst.msk [vmem:[%s222 + $0x51] sm:$0xff] %vm48, %v165
    %231 = vst.msk [vmem:[%s222 + $0x61] sm:$0xff] %vm48, %v166
    %232 = vst.msk [vmem:[%s222 + $0x69] sm:$0xff] %vm48, %v167
    %233 = vst.msk [vmem:[%s222 + $0x79] sm:$0xff] %vm48, %v168
    %234 = vst.msk [vmem:[%s222 + $0x81] sm:$0xff] %vm48, %v169
    %235 = vst.msk [vmem:[%s222 + $0x91] sm:$0xff] %vm48, %v170
    %236 = vst.msk [vmem:[%s222 + $0x99] sm:$0xff] %vm48, %v171
    %237 = vst.msk [vmem:[%s222 + $0xa9] sm:$0xff] %vm48, %v172
    %238 = vst.msk [vmem:[%s222 + $0xb1] sm:$0xff] %vm48, %v173
    %239 = vst.msk [vmem:[%s222 + $0xc1] sm:$0xff] %vm48, %v174
    %240 = vst.msk [vmem:[%s222 + $0xc9] sm:$0xff] %vm48, %v175
    %241 = vst.msk [vmem:[%s222 + $0xd9] sm:$0xff] %vm48, %v176
    %242 = vst.msk [vmem:[%s222 + $0xe1] sm:$0xff] %vm48, %v177
    %243 = vst.msk [vmem:[%s222 + $0xf1] sm:$0xff] %vm48, %v178
    %244 = vst.msk [vmem:[%s222 + $0xf9] sm:$0xff] %vm48, %v179
    %245 = vst.msk [vmem:[%s222 + $0x109] sm:$0xff] %vm48, %v180
    %246 = vst.msk [vmem:[%s222 + $0x111] sm:$0xff] %vm48, %v181
    %247 = vst.msk [vmem:[%s222 + $0x121] sm:$0xff] %vm48, %v182
    %248 = vst.msk [vmem:[%s222 + $0x129] sm:$0xff] %vm48, %v183
    %249 = vst.msk [vmem:[%s222 + $0x139] sm:$0xff] %vm48, %v184
    %250 = vst.msk [vmem:[%s222 + $0x141] sm:$0xff] %vm48, %v185
    %251 = vst.msk [vmem:[%s222 + $0x151] sm:$0xff] %vm48, %v186
    %252 = vst.msk [vmem:[%s222 + $0x159] sm:$0xff] %vm48, %v187
    %253 = vst.msk [vmem:[%s222 + $0x169] sm:$0xff] %vm48, %v188
    %254 = vst.msk [vmem:[%s222 + $0x171] sm:$0xff] %vm48, %v189
    %255 = vst.msk [vmem:[%s222 + $0x1b1] sm:$0xff] %vm48, %v190
    %256 = vst.msk [vmem:[%s222 + $0x1b9] sm:$0xff] %vm48, %v191
    %257 = vst.msk [vmem:[%s222 + $0x1c9] sm:$0xff] %vm48, %v192
    %258 = vst.msk [vmem:[%s222 + $0x1d1] sm:$0xff] %vm48, %v193
    %259 = vst.msk [vmem:[%s222 + $0x1e1] sm:$0xff] %vm48, %v194
    %260 = vst.msk [vmem:[%s222 + $0x1e9] sm:$0xff] %vm48, %v195
    %261 = vst.msk [vmem:[%s222 + $0x1f9] sm:$0xff] %vm48, %v196
    %262 = vst.msk [vmem:[%s222 + $0x201] sm:$0xff] %vm48, %v197
    %263 = vst.msk [vmem:[%s222 + $0x211] sm:$0xff] %vm48, %v198
    %264 = vst.msk [vmem:[%s222 + $0x219] sm:$0xff] %vm48, %v199
    %265 = vst.msk [vmem:[%s222 + $0x229] sm:$0xff] %vm48, %v200
    %266 = vst.msk [vmem:[%s222 + $0x231] sm:$0xff] %vm48, %v201
    %267 = vst.msk [vmem:[%s222 + $0x241] sm:$0xff] %vm48, %v202
    %268 = vst.msk [vmem:[%s222 + $0x249] sm:$0xff] %vm48, %v203
    %269 = vst.msk [vmem:[%s222 + $0x259] sm:$0xff] %vm48, %v204
    %270 = vst.msk [vmem:[%s222 + $0x261] sm:$0xff] %vm48, %v205
    %271 = vst.msk [vmem:[%s222 + $0x271] sm:$0xff] %vm48, %v206
    %272 = vst.msk [vmem:[%s222 + $0x279] sm:$0xff] %vm48, %v207
    %273 = vst.msk [vmem:[%s222 + $0x289] sm:$0xff] %vm48, %v208
    %274 = vst.msk [vmem:[%s222 + $0x291] sm:$0xff] %vm48, %v209
    %275 = vst.msk [vmem:[%s222 + $0x2a1] sm:$0xff] %vm48, %v210
    %276 = vst.msk [vmem:[%s222 + $0x2a9] sm:$0xff] %vm48, %v211
    %277 = vst.msk [vmem:[%s222 + $0x2b9] sm:$0xff] %vm48, %v212
    %278 = vst.msk [vmem:[%s222 + $0x2c1] sm:$0xff] %vm48, %v213
    %279 = vst.msk [vmem:[%s222 + $0x2d1] sm:$0xff] %vm48, %v214
    %280 = vst.msk [vmem:[%s222 + $0x2d9] sm:$0xff] %vm48, %v215
    %281 = vst.msk [vmem:[%s222 + $0x2e9] sm:$0xff] %vm48, %v216
    %282 = vst.msk [vmem:[%s222 + $0x2f1] sm:$0xff] %vm48, %v217
    %283 = vst.msk [vmem:[%s222 + $0x301] sm:$0xff] %vm48, %v218
    %284 = vst.msk [vmem:[%s222 + $0x309] sm:$0xff] %vm48, %v219
    %285 = vst.msk [vmem:[%s222 + $0x319] sm:$0xff] %vm48, %v220
    %286 = vst.msk [vmem:[%s222 + $0x321] sm:$0xff] %vm48, %v221
    %v287 = vld [vmem:[#allocation2] sm:$0xff]
    %v288 = vld [vmem:[#allocation2 + $0x8] sm:$0xff]
    %v289 = vld [vmem:[#allocation2 + $0x10] sm:$0x3]
    %v290 = vld [vmem:[#allocation2 + $0x18] sm:$0xff]
    %v291 = vld [vmem:[#allocation2 + $0x20] sm:$0xff]
    %v292 = vld [vmem:[#allocation2 + $0x28] sm:$0x3]
    %v293 = vld [vmem:[#allocation2 + $0x30] sm:$0xff]
    %v294 = vld [vmem:[#allocation2 + $0x38] sm:$0xff]
    %v295 = vld [vmem:[#allocation2 + $0x40] sm:$0x3]
    %v296 = vld [vmem:[#allocation2 + $0x48] sm:$0xff]
    %v297 = vld [vmem:[#allocation2 + $0x50] sm:$0xff]
    %v298 = vld [vmem:[#allocation2 + $0x58] sm:$0x3]
    %v299 = vld [vmem:[#allocation2 + $0x60] sm:$0xff]
    %v300 = vld [vmem:[#allocation2 + $0x68] sm:$0xff]
    %v301 = vld [vmem:[#allocation2 + $0x70] sm:$0x3]
    %v302 = vld [vmem:[#allocation2 + $0x78] sm:$0xff]
    %v303 = vld [vmem:[#allocation2 + $0x80] sm:$0xff]
    %v304 = vld [vmem:[#allocation2 + $0x88] sm:$0x3]
    %v305 = vld [vmem:[#allocation2 + $0x90] sm:$0xff]
    %v306 = vld [vmem:[#allocation2 + $0x98] sm:$0xff]
    %v307 = vld [vmem:[#allocation2 + $0xa0] sm:$0x3]
    %v308 = vld [vmem:[#allocation2 + $0xa8] sm:$0xff]
    %v309 = vld [vmem:[#allocation2 + $0xb0] sm:$0xff]
    %v310 = vld [vmem:[#allocation2 + $0xb8] sm:$0x3]
    %v311 = vld [vmem:[#allocation2 + $0xc0] sm:$0xff]
    %v312 = vld [vmem:[#allocation2 + $0xc8] sm:$0xff]
    %v313 = vld [vmem:[#allocation2 + $0xd0] sm:$0x3]
    %v314 = vld [vmem:[#allocation2 + $0xd8] sm:$0xff]
    %v315 = vld [vmem:[#allocation2 + $0xe0] sm:$0xff]
    %v316 = vld [vmem:[#allocation2 + $0xe8] sm:$0x3]
    %v317 = vld [vmem:[#allocation2 + $0xf0] sm:$0xff]
    %v318 = vld [vmem:[#allocation2 + $0xf8] sm:$0xff]
    %v319 = vld [vmem:[#allocation2 + $0x100] sm:$0x3]
    %v320 = vld [vmem:[#allocation2 + $0x108] sm:$0xff]
    %v321 = vld [vmem:[#allocation2 + $0x110] sm:$0xff]
    %v322 = vld [vmem:[#allocation2 + $0x118] sm:$0x3]
    %v323 = vld [vmem:[#allocation2 + $0x120] sm:$0xff]
    %v324 = vld [vmem:[#allocation2 + $0x128] sm:$0xff]
    %v325 = vld [vmem:[#allocation2 + $0x130] sm:$0x3]
    %v326 = vld [vmem:[#allocation2 + $0x138] sm:$0xff]
    %v327 = vld [vmem:[#allocation2 + $0x140] sm:$0xff]
    %v328 = vld [vmem:[#allocation2 + $0x148] sm:$0x3]
    %v329 = vld [vmem:[#allocation2 + $0x150] sm:$0xff]
    %v330 = vld [vmem:[#allocation2 + $0x158] sm:$0xff]
    %v331 = vld [vmem:[#allocation2 + $0x160] sm:$0x3]
    %v332 = vld [vmem:[#allocation2 + $0x168] sm:$0xff]
    %v333 = vld [vmem:[#allocation2 + $0x170] sm:$0xff]
    %v334 = vld [vmem:[#allocation2 + $0x178] sm:$0x3]
    %v335 = vld [vmem:[#allocation2 + $0x180] sm:$0xff]
    %v336 = vld [vmem:[#allocation2 + $0x188] sm:$0xff]
    %v337 = vld [vmem:[#allocation2 + $0x190] sm:$0x3]
    %v338 = vld [vmem:[#allocation2 + $0x198] sm:$0xff]
    %v339 = vld [vmem:[#allocation2 + $0x1a0] sm:$0xff]
    %v340 = vld [vmem:[#allocation2 + $0x1a8] sm:$0x3]
    %v341 = vld [vmem:[#allocation2 + $0x1b0] sm:$0xff]
    %v342 = vld [vmem:[#allocation2 + $0x1b8] sm:$0xff]
    %v343 = vld [vmem:[#allocation2 + $0x1c0] sm:$0x3]
    %v344 = vld [vmem:[#allocation2 + $0x1c8] sm:$0xff]
    %v345 = vld [vmem:[#allocation2 + $0x1d0] sm:$0xff]
    %v346 = vld [vmem:[#allocation2 + $0x1d8] sm:$0x3]
    %v347 = vld [vmem:[#allocation2 + $0x1e0] sm:$0xff]
    %v348 = vld [vmem:[#allocation2 + $0x1e8] sm:$0xff]
    %v349 = vld [vmem:[#allocation2 + $0x1f0] sm:$0x3]
    %v350 = vld [vmem:[#allocation2 + $0x1f8] sm:$0xff]
    %v351 = vld [vmem:[#allocation2 + $0x200] sm:$0xff]
    %v352 = vld [vmem:[#allocation2 + $0x208] sm:$0x3]
    %v353 = vld [vmem:[#allocation2 + $0x210] sm:$0xff]
    %v354 = vld [vmem:[#allocation2 + $0x218] sm:$0xff]
    %v355 = vld [vmem:[#allocation2 + $0x220] sm:$0x3]
    %v356 = vld [vmem:[#allocation2 + $0x228] sm:$0xff]
    %v357 = vld [vmem:[#allocation2 + $0x230] sm:$0xff]
    %v358 = vld [vmem:[#allocation2 + $0x238] sm:$0x3]
    %v359 = vld [vmem:[#allocation2 + $0x240] sm:$0xff]
    %v360 = vld [vmem:[#allocation2 + $0x248] sm:$0xff]
    %v361 = vld [vmem:[#allocation2 + $0x250] sm:$0x3]
    %v362 = vld [vmem:[#allocation2 + $0x258] sm:$0xff]
    %v363 = vld [vmem:[#allocation2 + $0x260] sm:$0xff]
    %v364 = vld [vmem:[#allocation2 + $0x268] sm:$0x3]
    %v365 = vld [vmem:[#allocation2 + $0x270] sm:$0xff]
    %v366 = vld [vmem:[#allocation2 + $0x278] sm:$0xff]
    %v367 = vld [vmem:[#allocation2 + $0x280] sm:$0x3]
    %v368 = vld [vmem:[#allocation2 + $0x288] sm:$0xff]
    %v369 = vld [vmem:[#allocation2 + $0x290] sm:$0xff]
    %v370 = vld [vmem:[#allocation2 + $0x298] sm:$0x3]
    %v371 = vld [vmem:[#allocation2 + $0x2a0] sm:$0xff]
    %v372 = vld [vmem:[#allocation2 + $0x2a8] sm:$0xff]
    %v373 = vld [vmem:[#allocation2 + $0x2b0] sm:$0x3]
    %v374 = vld [vmem:[#allocation2 + $0x2b8] sm:$0xff]
    %v375 = vld [vmem:[#allocation2 + $0x2c0] sm:$0xff]
    %v376 = vld [vmem:[#allocation2 + $0x2c8] sm:$0x3]
    %v377 = vld [vmem:[#allocation2 + $0x2d0] sm:$0xff]
    %v378 = vld [vmem:[#allocation2 + $0x2d8] sm:$0xff]
    %v379 = vld [vmem:[#allocation2 + $0x2e0] sm:$0x3]
    %v380 = vld [vmem:[#allocation2 + $0x2e8] sm:$0xff]
    %v381 = vld [vmem:[#allocation2 + $0x2f0] sm:$0xff]
    %v382 = vld [vmem:[#allocation2 + $0x2f8] sm:$0x3]
    %v383 = vld [vmem:[#allocation2 + $0x300] sm:$0xff]
    %v384 = vld [vmem:[#allocation2 + $0x308] sm:$0xff]
    %v385 = vld [vmem:[#allocation2 + $0x310] sm:$0x3]
    %v386 = vld [vmem:[#allocation2 + $0x318] sm:$0xff]
    %v387 = vld [vmem:[#allocation2 + $0x320] sm:$0xff]
    %v388 = vld [vmem:[#allocation2 + $0x328] sm:$0x3]
    %v389 = vld [vmem:[#allocation2 + $0x330] sm:$0xff]
    %v390 = vld [vmem:[#allocation2 + $0x338] sm:$0xff]
    %v391 = vld [vmem:[#allocation2 + $0x340] sm:$0x3]
    %v392 = vld [vmem:[#allocation2 + $0x348] sm:$0xff]
    %v393 = vld [vmem:[#allocation2 + $0x350] sm:$0xff]
    %v394 = vld [vmem:[#allocation2 + $0x358] sm:$0x3]
    %vm491 = vcmask 1046528
    %v492 = vrot.slane %v287, 1
    %v493 = vrot.slane %v288, 1
    %v494 = vsel %vm491, %v492, %v493
    %v495 = vrot.slane %v289, 1
    %v496 = vsel %vm491, %v493, %v495
    %v497 = vrot.slane %v290, 1
    %v498 = vrot.slane %v291, 1
    %v499 = vsel %vm491, %v497, %v498
    %v500 = vrot.slane %v292, 1
    %v501 = vsel %vm491, %v498, %v500
    %v502 = vrot.slane %v293, 1
    %v503 = vrot.slane %v294, 1
    %v504 = vsel %vm491, %v502, %v503
    %v505 = vrot.slane %v295, 1
    %v506 = vsel %vm491, %v503, %v505
    %v507 = vrot.slane %v296, 1
    %v508 = vrot.slane %v297, 1
    %v509 = vsel %vm491, %v507, %v508
    %v510 = vrot.slane %v298, 1
    %v511 = vsel %vm491, %v508, %v510
    %v512 = vrot.slane %v299, 1
    %v513 = vrot.slane %v300, 1
    %v514 = vsel %vm491, %v512, %v513
    %v515 = vrot.slane %v301, 1
    %v516 = vsel %vm491, %v513, %v515
    %v517 = vrot.slane %v302, 1
    %v518 = vrot.slane %v303, 1
    %v519 = vsel %vm491, %v517, %v518
    %v520 = vrot.slane %v304, 1
    %v521 = vsel %vm491, %v518, %v520
    %v522 = vrot.slane %v305, 1
    %v523 = vrot.slane %v306, 1
    %v524 = vsel %vm491, %v522, %v523
    %v525 = vrot.slane %v307, 1
    %v526 = vsel %vm491, %v523, %v525
    %v527 = vrot.slane %v308, 1
    %v528 = vrot.slane %v309, 1
    %v529 = vsel %vm491, %v527, %v528
    %v530 = vrot.slane %v310, 1
    %v531 = vsel %vm491, %v528, %v530
    %v532 = vrot.slane %v311, 1
    %v533 = vrot.slane %v312, 1
    %v534 = vsel %vm491, %v532, %v533
    %v535 = vrot.slane %v313, 1
    %v536 = vsel %vm491, %v533, %v535
    %v537 = vrot.slane %v314, 1
    %v538 = vrot.slane %v315, 1
    %v539 = vsel %vm491, %v537, %v538
    %v540 = vrot.slane %v316, 1
    %v541 = vsel %vm491, %v538, %v540
    %v542 = vrot.slane %v317, 1
    %v543 = vrot.slane %v318, 1
    %v544 = vsel %vm491, %v542, %v543
    %v545 = vrot.slane %v319, 1
    %v546 = vsel %vm491, %v543, %v545
    %v547 = vrot.slane %v320, 1
    %v548 = vrot.slane %v321, 1
    %v549 = vsel %vm491, %v547, %v548
    %v550 = vrot.slane %v322, 1
    %v551 = vsel %vm491, %v548, %v550
    %v552 = vrot.slane %v323, 1
    %v553 = vrot.slane %v324, 1
    %v554 = vsel %vm491, %v552, %v553
    %v555 = vrot.slane %v325, 1
    %v556 = vsel %vm491, %v553, %v555
    %v557 = vrot.slane %v326, 1
    %v558 = vrot.slane %v327, 1
    %v559 = vsel %vm491, %v557, %v558
    %v560 = vrot.slane %v328, 1
    %v561 = vsel %vm491, %v558, %v560
    %v562 = vrot.slane %v329, 1
    %v563 = vrot.slane %v330, 1
    %v564 = vsel %vm491, %v562, %v563
    %v565 = vrot.slane %v331, 1
    %v566 = vsel %vm491, %v563, %v565
    %v567 = vrot.slane %v332, 1
    %v568 = vrot.slane %v333, 1
    %v569 = vsel %vm491, %v567, %v568
    %v570 = vrot.slane %v334, 1
    %v571 = vsel %vm491, %v568, %v570
    %v572 = vrot.slane %v341, 1
    %v573 = vrot.slane %v342, 1
    %v574 = vsel %vm491, %v572, %v573
    %v575 = vrot.slane %v343, 1
    %v576 = vsel %vm491, %v573, %v575
    %v577 = vrot.slane %v344, 1
    %v578 = vrot.slane %v345, 1
    %v579 = vsel %vm491, %v577, %v578
    %v580 = vrot.slane %v346, 1
    %v581 = vsel %vm491, %v578, %v580
    %v582 = vrot.slane %v347, 1
    %v583 = vrot.slane %v348, 1
    %v584 = vsel %vm491, %v582, %v583
    %v585 = vrot.slane %v349, 1
    %v586 = vsel %vm491, %v583, %v585
    %v587 = vrot.slane %v350, 1
    %v588 = vrot.slane %v351, 1
    %v589 = vsel %vm491, %v587, %v588
    %v590 = vrot.slane %v352, 1
    %v591 = vsel %vm491, %v588, %v590
    %v592 = vrot.slane %v353, 1
    %v593 = vrot.slane %v354, 1
    %v594 = vsel %vm491, %v592, %v593
    %v595 = vrot.slane %v355, 1
    %v596 = vsel %vm491, %v593, %v595
    %v597 = vrot.slane %v356, 1
    %v598 = vrot.slane %v357, 1
    %v599 = vsel %vm491, %v597, %v598
    %v600 = vrot.slane %v358, 1
    %v601 = vsel %vm491, %v598, %v600
    %v602 = vrot.slane %v359, 1
    %v603 = vrot.slane %v360, 1
    %v604 = vsel %vm491, %v602, %v603
    %v605 = vrot.slane %v361, 1
    %v606 = vsel %vm491, %v603, %v605
    %v607 = vrot.slane %v362, 1
    %v608 = vrot.slane %v363, 1
    %v609 = vsel %vm491, %v607, %v608
    %v610 = vrot.slane %v364, 1
    %v611 = vsel %vm491, %v608, %v610
    %v612 = vrot.slane %v365, 1
    %v613 = vrot.slane %v366, 1
    %v614 = vsel %vm491, %v612, %v613
    %v615 = vrot.slane %v367, 1
    %v616 = vsel %vm491, %v613, %v615
    %v617 = vrot.slane %v368, 1
    %v618 = vrot.slane %v369, 1
    %v619 = vsel %vm491, %v617, %v618
    %v620 = vrot.slane %v370, 1
    %v621 = vsel %vm491, %v618, %v620
    %v622 = vrot.slane %v371, 1
    %v623 = vrot.slane %v372, 1
    %v624 = vsel %vm491, %v622, %v623
    %v625 = vrot.slane %v373, 1
    %v626 = vsel %vm491, %v623, %v625
    %v627 = vrot.slane %v374, 1
    %v628 = vrot.slane %v375, 1
    %v629 = vsel %vm491, %v627, %v628
    %v630 = vrot.slane %v376, 1
    %v631 = vsel %vm491, %v628, %v630
    %v632 = vrot.slane %v377, 1
    %v633 = vrot.slane %v378, 1
    %v634 = vsel %vm491, %v632, %v633
    %v635 = vrot.slane %v379, 1
    %v636 = vsel %vm491, %v633, %v635
    %v637 = vrot.slane %v380, 1
    %v638 = vrot.slane %v381, 1
    %v639 = vsel %vm491, %v637, %v638
    %v640 = vrot.slane %v382, 1
    %v641 = vsel %vm491, %v638, %v640
    %v642 = vrot.slane %v383, 1
    %v643 = vrot.slane %v384, 1
    %v644 = vsel %vm491, %v642, %v643
    %v645 = vrot.slane %v385, 1
    %v646 = vsel %vm491, %v643, %v645
    %v647 = vrot.slane %v386, 1
    %v648 = vrot.slane %v387, 1
    %v649 = vsel %vm491, %v647, %v648
    %v650 = vrot.slane %v388, 1
    %v651 = vsel %vm491, %v648, %v650
    %vm652 = vcmask 1045504
    %v653 = vrot.slane %v287, 2
    %v654 = vrot.slane %v288, 2
    %v655 = vsel %vm652, %v653, %v654
    %v656 = vrot.slane %v289, 2
    %v657 = vsel %vm652, %v654, %v656
    %v658 = vrot.slane %v290, 2
    %v659 = vrot.slane %v291, 2
    %v660 = vsel %vm652, %v658, %v659
    %v661 = vrot.slane %v292, 2
    %v662 = vsel %vm652, %v659, %v661
    %v663 = vrot.slane %v293, 2
    %v664 = vrot.slane %v294, 2
    %v665 = vsel %vm652, %v663, %v664
    %v666 = vrot.slane %v295, 2
    %v667 = vsel %vm652, %v664, %v666
    %v668 = vrot.slane %v296, 2
    %v669 = vrot.slane %v297, 2
    %v670 = vsel %vm652, %v668, %v669
    %v671 = vrot.slane %v298, 2
    %v672 = vsel %vm652, %v669, %v671
    %v673 = vrot.slane %v299, 2
    %v674 = vrot.slane %v300, 2
    %v675 = vsel %vm652, %v673, %v674
    %v676 = vrot.slane %v301, 2
    %v677 = vsel %vm652, %v674, %v676
    %v678 = vrot.slane %v302, 2
    %v679 = vrot.slane %v303, 2
    %v680 = vsel %vm652, %v678, %v679
    %v681 = vrot.slane %v304, 2
    %v682 = vsel %vm652, %v679, %v681
    %v683 = vrot.slane %v305, 2
    %v684 = vrot.slane %v306, 2
    %v685 = vsel %vm652, %v683, %v684
    %v686 = vrot.slane %v307, 2
    %v687 = vsel %vm652, %v684, %v686
    %v688 = vrot.slane %v308, 2
    %v689 = vrot.slane %v309, 2
    %v690 = vsel %vm652, %v688, %v689
    %v691 = vrot.slane %v310, 2
    %v692 = vsel %vm652, %v689, %v691
    %v693 = vrot.slane %v311, 2
    %v694 = vrot.slane %v312, 2
    %v695 = vsel %vm652, %v693, %v694
    %v696 = vrot.slane %v313, 2
    %v697 = vsel %vm652, %v694, %v696
    %v698 = vrot.slane %v314, 2
    %v699 = vrot.slane %v315, 2
    %v700 = vsel %vm652, %v698, %v699
    %v701 = vrot.slane %v316, 2
    %v702 = vsel %vm652, %v699, %v701
    %v703 = vrot.slane %v317, 2
    %v704 = vrot.slane %v318, 2
    %v705 = vsel %vm652, %v703, %v704
    %v706 = vrot.slane %v319, 2
    %v707 = vsel %vm652, %v704, %v706
    %v708 = vrot.slane %v320, 2
    %v709 = vrot.slane %v321, 2
    %v710 = vsel %vm652, %v708, %v709
    %v711 = vrot.slane %v322, 2
    %v712 = vsel %vm652, %v709, %v711
    %v713 = vrot.slane %v323, 2
    %v714 = vrot.slane %v324, 2
    %v715 = vsel %vm652, %v713, %v714
    %v716 = vrot.slane %v325, 2
    %v717 = vsel %vm652, %v714, %v716
    %v718 = vrot.slane %v326, 2
    %v719 = vrot.slane %v327, 2
    %v720 = vsel %vm652, %v718, %v719
    %v721 = vrot.slane %v328, 2
    %v722 = vsel %vm652, %v719, %v721
    %v723 = vrot.slane %v329, 2
    %v724 = vrot.slane %v330, 2
    %v725 = vsel %vm652, %v723, %v724
    %v726 = vrot.slane %v331, 2
    %v727 = vsel %vm652, %v724, %v726
    %v728 = vrot.slane %v332, 2
    %v729 = vrot.slane %v333, 2
    %v730 = vsel %vm652, %v728, %v729
    %v731 = vrot.slane %v334, 2
    %v732 = vsel %vm652, %v729, %v731
    %v733 = vrot.slane %v341, 2
    %v734 = vrot.slane %v342, 2
    %v735 = vsel %vm652, %v733, %v734
    %v736 = vrot.slane %v343, 2
    %v737 = vsel %vm652, %v734, %v736
    %v738 = vrot.slane %v344, 2
    %v739 = vrot.slane %v345, 2
    %v740 = vsel %vm652, %v738, %v739
    %v741 = vrot.slane %v346, 2
    %v742 = vsel %vm652, %v739, %v741
    %v743 = vrot.slane %v347, 2
    %v744 = vrot.slane %v348, 2
    %v745 = vsel %vm652, %v743, %v744
    %v746 = vrot.slane %v349, 2
    %v747 = vsel %vm652, %v744, %v746
    %v748 = vrot.slane %v350, 2
    %v749 = vrot.slane %v351, 2
    %v750 = vsel %vm652, %v748, %v749
    %v751 = vrot.slane %v352, 2
    %v752 = vsel %vm652, %v749, %v751
    %v753 = vrot.slane %v353, 2
    %v754 = vrot.slane %v354, 2
    %v755 = vsel %vm652, %v753, %v754
    %v756 = vrot.slane %v355, 2
    %v757 = vsel %vm652, %v754, %v756
    %v758 = vrot.slane %v356, 2
    %v759 = vrot.slane %v357, 2
    %v760 = vsel %vm652, %v758, %v759
    %v761 = vrot.slane %v358, 2
    %v762 = vsel %vm652, %v759, %v761
    %v763 = vrot.slane %v359, 2
    %v764 = vrot.slane %v360, 2
    %v765 = vsel %vm652, %v763, %v764
    %v766 = vrot.slane %v361, 2
    %v767 = vsel %vm652, %v764, %v766
    %v768 = vrot.slane %v362, 2
    %v769 = vrot.slane %v363, 2
    %v770 = vsel %vm652, %v768, %v769
    %v771 = vrot.slane %v364, 2
    %v772 = vsel %vm652, %v769, %v771
    %v773 = vrot.slane %v365, 2
    %v774 = vrot.slane %v366, 2
    %v775 = vsel %vm652, %v773, %v774
    %v776 = vrot.slane %v367, 2
    %v777 = vsel %vm652, %v774, %v776
    %v778 = vrot.slane %v368, 2
    %v779 = vrot.slane %v369, 2
    %v780 = vsel %vm652, %v778, %v779
    %v781 = vrot.slane %v370, 2
    %v782 = vsel %vm652, %v779, %v781
    %v783 = vrot.slane %v371, 2
    %v784 = vrot.slane %v372, 2
    %v785 = vsel %vm652, %v783, %v784
    %v786 = vrot.slane %v373, 2
    %v787 = vsel %vm652, %v784, %v786
    %v788 = vrot.slane %v374, 2
    %v789 = vrot.slane %v375, 2
    %v790 = vsel %vm652, %v788, %v789
    %v791 = vrot.slane %v376, 2
    %v792 = vsel %vm652, %v789, %v791
    %v793 = vrot.slane %v377, 2
    %v794 = vrot.slane %v378, 2
    %v795 = vsel %vm652, %v793, %v794
    %v796 = vrot.slane %v379, 2
    %v797 = vsel %vm652, %v794, %v796
    %v798 = vrot.slane %v380, 2
    %v799 = vrot.slane %v381, 2
    %v800 = vsel %vm652, %v798, %v799
    %v801 = vrot.slane %v382, 2
    %v802 = vsel %vm652, %v799, %v801
    %v803 = vrot.slane %v383, 2
    %v804 = vrot.slane %v384, 2
    %v805 = vsel %vm652, %v803, %v804
    %v806 = vrot.slane %v385, 2
    %v807 = vsel %vm652, %v804, %v806
    %v808 = vrot.slane %v386, 2
    %v809 = vrot.slane %v387, 2
    %v810 = vsel %vm652, %v808, %v809
    %v811 = vrot.slane %v388, 2
    %v812 = vsel %vm652, %v809, %v811
    %v819 = vrot.slane %v335, 1
    %v820 = vrot.slane %v336, 1
    %v821 = vsel %vm491, %v819, %v820
    %v822 = vrot.slane %v337, 1
    %v823 = vsel %vm491, %v820, %v822
    %v824 = vrot.slane %v389, 1
    %v825 = vrot.slane %v390, 1
    %v826 = vsel %vm491, %v824, %v825
    %v827 = vrot.slane %v391, 1
    %v828 = vsel %vm491, %v825, %v827
    %v829 = vrot.slane %v335, 2
    %v830 = vrot.slane %v336, 2
    %v831 = vsel %vm652, %v829, %v830
    %v832 = vrot.slane %v337, 2
    %v833 = vsel %vm652, %v830, %v832
    %v834 = vrot.slane %v389, 2
    %v835 = vrot.slane %v390, 2
    %v836 = vsel %vm652, %v834, %v835
    %v837 = vrot.slane %v391, 2
    %v838 = vsel %vm652, %v835, %v837
    %v845 = vrot.slane %v338, 1
    %v846 = vrot.slane %v339, 1
    %v847 = vsel %vm491, %v845, %v846
    %v848 = vrot.slane %v340, 1
    %v849 = vsel %vm491, %v846, %v848
    %v850 = vrot.slane %v392, 1
    %v851 = vrot.slane %v393, 1
    %v852 = vsel %vm491, %v850, %v851
    %v853 = vrot.slane %v394, 1
    %v854 = vsel %vm491, %v851, %v853
    %v855 = vrot.slane %v338, 2
    %v856 = vrot.slane %v339, 2
    %v857 = vsel %vm652, %v855, %v856
    %v858 = vrot.slane %v340, 2
    %v859 = vsel %vm652, %v856, %v858
    %v860 = vrot.slane %v392, 2
    %v861 = vrot.slane %v393, 2
    %v862 = vsel %vm652, %v860, %v861
    %v863 = vrot.slane %v394, 2
    %v864 = vsel %vm652, %v861, %v863
    %865 = vrot.lane.b32.xlu0 %v494, 4
    %v866 = vpop.permute.xlu0 %865
    %867 = vrot.lane.b32.xlu0 %v496, 4
    %v868 = vpop.permute.xlu0 %867
    %869 = vrot.lane.b32.xlu0 %v499, 4
    %v870 = vpop.permute.xlu0 %869
    %871 = vrot.lane.b32.xlu0 %v501, 4
    %v872 = vpop.permute.xlu0 %871
    %873 = vrot.lane.b32.xlu0 %v504, 4
    %v874 = vpop.permute.xlu0 %873
    %875 = vrot.lane.b32.xlu0 %v506, 4
    %v876 = vpop.permute.xlu0 %875
    %877 = vrot.lane.b32.xlu0 %v509, 4
    %v878 = vpop.permute.xlu0 %877
    %879 = vrot.lane.b32.xlu0 %v511, 4
    %v880 = vpop.permute.xlu0 %879
    %881 = vrot.lane.b32.xlu0 %v514, 4
    %v882 = vpop.permute.xlu0 %881
    %883 = vrot.lane.b32.xlu0 %v516, 4
    %v884 = vpop.permute.xlu0 %883
    %885 = vrot.lane.b32.xlu0 %v519, 4
    %v886 = vpop.permute.xlu0 %885
    %887 = vrot.lane.b32.xlu0 %v521, 4
    %v888 = vpop.permute.xlu0 %887
    %889 = vrot.lane.b32.xlu0 %v524, 4
    %v890 = vpop.permute.xlu0 %889
    %891 = vrot.lane.b32.xlu0 %v526, 4
    %v892 = vpop.permute.xlu0 %891
    %893 = vrot.lane.b32.xlu0 %v529, 4
    %v894 = vpop.permute.xlu0 %893
    %895 = vrot.lane.b32.xlu0 %v531, 4
    %v896 = vpop.permute.xlu0 %895
    %897 = vrot.lane.b32.xlu0 %v534, 4
    %v898 = vpop.permute.xlu0 %897
    %899 = vrot.lane.b32.xlu0 %v536, 4
    %v900 = vpop.permute.xlu0 %899
    %901 = vrot.lane.b32.xlu0 %v539, 4
    %v902 = vpop.permute.xlu0 %901
    %903 = vrot.lane.b32.xlu0 %v541, 4
    %v904 = vpop.permute.xlu0 %903
    %905 = vrot.lane.b32.xlu0 %v544, 4
    %v906 = vpop.permute.xlu0 %905
    %907 = vrot.lane.b32.xlu0 %v546, 4
    %v908 = vpop.permute.xlu0 %907
    %909 = vrot.lane.b32.xlu0 %v549, 4
    %v910 = vpop.permute.xlu0 %909
    %911 = vrot.lane.b32.xlu0 %v551, 4
    %v912 = vpop.permute.xlu0 %911
    %913 = vrot.lane.b32.xlu0 %v554, 4
    %v914 = vpop.permute.xlu0 %913
    %915 = vrot.lane.b32.xlu0 %v556, 4
    %v916 = vpop.permute.xlu0 %915
    %917 = vrot.lane.b32.xlu0 %v559, 4
    %v918 = vpop.permute.xlu0 %917
    %919 = vrot.lane.b32.xlu0 %v561, 4
    %v920 = vpop.permute.xlu0 %919
    %921 = vrot.lane.b32.xlu0 %v564, 4
    %v922 = vpop.permute.xlu0 %921
    %923 = vrot.lane.b32.xlu0 %v566, 4
    %v924 = vpop.permute.xlu0 %923
    %925 = vrot.lane.b32.xlu0 %v569, 4
    %v926 = vpop.permute.xlu0 %925
    %927 = vrot.lane.b32.xlu0 %v571, 4
    %v928 = vpop.permute.xlu0 %927
    %929 = vrot.lane.b32.xlu0 %v574, 4
    %v930 = vpop.permute.xlu0 %929
    %931 = vrot.lane.b32.xlu0 %v576, 4
    %v932 = vpop.permute.xlu0 %931
    %933 = vrot.lane.b32.xlu0 %v579, 4
    %v934 = vpop.permute.xlu0 %933
    %935 = vrot.lane.b32.xlu0 %v581, 4
    %v936 = vpop.permute.xlu0 %935
    %937 = vrot.lane.b32.xlu0 %v584, 4
    %v938 = vpop.permute.xlu0 %937
    %939 = vrot.lane.b32.xlu0 %v586, 4
    %v940 = vpop.permute.xlu0 %939
    %941 = vrot.lane.b32.xlu0 %v589, 4
    %v942 = vpop.permute.xlu0 %941
    %943 = vrot.lane.b32.xlu0 %v591, 4
    %v944 = vpop.permute.xlu0 %943
    %945 = vrot.lane.b32.xlu0 %v594, 4
    %v946 = vpop.permute.xlu0 %945
    %947 = vrot.lane.b32.xlu0 %v596, 4
    %v948 = vpop.permute.xlu0 %947
    %949 = vrot.lane.b32.xlu0 %v599, 4
    %v950 = vpop.permute.xlu0 %949
    %951 = vrot.lane.b32.xlu0 %v601, 4
    %v952 = vpop.permute.xlu0 %951
    %953 = vrot.lane.b32.xlu0 %v604, 4
    %v954 = vpop.permute.xlu0 %953
    %955 = vrot.lane.b32.xlu0 %v606, 4
    %v956 = vpop.permute.xlu0 %955
    %957 = vrot.lane.b32.xlu0 %v609, 4
    %v958 = vpop.permute.xlu0 %957
    %959 = vrot.lane.b32.xlu0 %v611, 4
    %v960 = vpop.permute.xlu0 %959
    %961 = vrot.lane.b32.xlu0 %v614, 4
    %v962 = vpop.permute.xlu0 %961
    %963 = vrot.lane.b32.xlu0 %v616, 4
    %v964 = vpop.permute.xlu0 %963
    %965 = vrot.lane.b32.xlu0 %v619, 4
    %v966 = vpop.permute.xlu0 %965
    %967 = vrot.lane.b32.xlu0 %v621, 4
    %v968 = vpop.permute.xlu0 %967
    %969 = vrot.lane.b32.xlu0 %v624, 4
    %v970 = vpop.permute.xlu0 %969
    %971 = vrot.lane.b32.xlu0 %v626, 4
    %v972 = vpop.permute.xlu0 %971
    %973 = vrot.lane.b32.xlu0 %v629, 4
    %v974 = vpop.permute.xlu0 %973
    %975 = vrot.lane.b32.xlu0 %v631, 4
    %v976 = vpop.permute.xlu0 %975
    %977 = vrot.lane.b32.xlu0 %v634, 4
    %v978 = vpop.permute.xlu0 %977
    %979 = vrot.lane.b32.xlu0 %v636, 4
    %v980 = vpop.permute.xlu0 %979
    %981 = vrot.lane.b32.xlu0 %v639, 4
    %v982 = vpop.permute.xlu0 %981
    %983 = vrot.lane.b32.xlu0 %v641, 4
    %v984 = vpop.permute.xlu0 %983
    %985 = vrot.lane.b32.xlu0 %v644, 4
    %v986 = vpop.permute.xlu0 %985
    %987 = vrot.lane.b32.xlu0 %v646, 4
    %v988 = vpop.permute.xlu0 %987
    %989 = vrot.lane.b32.xlu0 %v649, 4
    %v990 = vpop.permute.xlu0 %989
    %991 = vrot.lane.b32.xlu0 %v651, 4
    %v992 = vpop.permute.xlu0 %991
    %1057 = vrot.lane.b32.xlu0 %v655, 8
    %v1058 = vpop.permute.xlu0 %1057
    %1059 = vrot.lane.b32.xlu0 %v657, 8
    %v1060 = vpop.permute.xlu0 %1059
    %1061 = vrot.lane.b32.xlu0 %v660, 8
    %v1062 = vpop.permute.xlu0 %1061
    %1063 = vrot.lane.b32.xlu0 %v662, 8
    %v1064 = vpop.permute.xlu0 %1063
    %1065 = vrot.lane.b32.xlu0 %v665, 8
    %v1066 = vpop.permute.xlu0 %1065
    %1067 = vrot.lane.b32.xlu0 %v667, 8
    %v1068 = vpop.permute.xlu0 %1067
    %1069 = vrot.lane.b32.xlu0 %v670, 8
    %v1070 = vpop.permute.xlu0 %1069
    %1071 = vrot.lane.b32.xlu0 %v672, 8
    %v1072 = vpop.permute.xlu0 %1071
    %1073 = vrot.lane.b32.xlu0 %v675, 8
    %v1074 = vpop.permute.xlu0 %1073
    %1075 = vrot.lane.b32.xlu0 %v677, 8
    %v1076 = vpop.permute.xlu0 %1075
    %1077 = vrot.lane.b32.xlu0 %v680, 8
    %v1078 = vpop.permute.xlu0 %1077
    %1079 = vrot.lane.b32.xlu0 %v682, 8
    %v1080 = vpop.permute.xlu0 %1079
    %1081 = vrot.lane.b32.xlu0 %v685, 8
    %v1082 = vpop.permute.xlu0 %1081
    %1083 = vrot.lane.b32.xlu0 %v687, 8
    %v1084 = vpop.permute.xlu0 %1083
    %1085 = vrot.lane.b32.xlu0 %v690, 8
    %v1086 = vpop.permute.xlu0 %1085
    %1087 = vrot.lane.b32.xlu0 %v692, 8
    %v1088 = vpop.permute.xlu0 %1087
    %1089 = vrot.lane.b32.xlu0 %v695, 8
    %v1090 = vpop.permute.xlu0 %1089
    %1091 = vrot.lane.b32.xlu0 %v697, 8
    %v1092 = vpop.permute.xlu0 %1091
    %1093 = vrot.lane.b32.xlu0 %v700, 8
    %v1094 = vpop.permute.xlu0 %1093
    %1095 = vrot.lane.b32.xlu0 %v702, 8
    %v1096 = vpop.permute.xlu0 %1095
    %1097 = vrot.lane.b32.xlu0 %v705, 8
    %v1098 = vpop.permute.xlu0 %1097
    %1099 = vrot.lane.b32.xlu0 %v707, 8
    %v1100 = vpop.permute.xlu0 %1099
    %1101 = vrot.lane.b32.xlu0 %v710, 8
    %v1102 = vpop.permute.xlu0 %1101
    %1103 = vrot.lane.b32.xlu0 %v712, 8
    %v1104 = vpop.permute.xlu0 %1103
    %1105 = vrot.lane.b32.xlu0 %v715, 8
    %v1106 = vpop.permute.xlu0 %1105
    %1107 = vrot.lane.b32.xlu0 %v717, 8
    %v1108 = vpop.permute.xlu0 %1107
    %1109 = vrot.lane.b32.xlu0 %v720, 8
    %v1110 = vpop.permute.xlu0 %1109
    %1111 = vrot.lane.b32.xlu0 %v722, 8
    %v1112 = vpop.permute.xlu0 %1111
    %1113 = vrot.lane.b32.xlu0 %v725, 8
    %v1114 = vpop.permute.xlu0 %1113
    %1115 = vrot.lane.b32.xlu0 %v727, 8
    %v1116 = vpop.permute.xlu0 %1115
    %1117 = vrot.lane.b32.xlu0 %v730, 8
    %v1118 = vpop.permute.xlu0 %1117
    %1119 = vrot.lane.b32.xlu0 %v732, 8
    %v1120 = vpop.permute.xlu0 %1119
    %1121 = vrot.lane.b32.xlu0 %v735, 8
    %v1122 = vpop.permute.xlu0 %1121
    %1123 = vrot.lane.b32.xlu0 %v737, 8
    %v1124 = vpop.permute.xlu0 %1123
    %1125 = vrot.lane.b32.xlu0 %v740, 8
    %v1126 = vpop.permute.xlu0 %1125
    %1127 = vrot.lane.b32.xlu0 %v742, 8
    %v1128 = vpop.permute.xlu0 %1127
    %1129 = vrot.lane.b32.xlu0 %v745, 8
    %v1130 = vpop.permute.xlu0 %1129
    %1131 = vrot.lane.b32.xlu0 %v747, 8
    %v1132 = vpop.permute.xlu0 %1131
    %1133 = vrot.lane.b32.xlu0 %v750, 8
    %v1134 = vpop.permute.xlu0 %1133
    %1135 = vrot.lane.b32.xlu0 %v752, 8
    %v1136 = vpop.permute.xlu0 %1135
    %1137 = vrot.lane.b32.xlu0 %v755, 8
    %v1138 = vpop.permute.xlu0 %1137
    %1139 = vrot.lane.b32.xlu0 %v757, 8
    %v1140 = vpop.permute.xlu0 %1139
    %1141 = vrot.lane.b32.xlu0 %v760, 8
    %v1142 = vpop.permute.xlu0 %1141
    %1143 = vrot.lane.b32.xlu0 %v762, 8
    %v1144 = vpop.permute.xlu0 %1143
    %1145 = vrot.lane.b32.xlu0 %v765, 8
    %v1146 = vpop.permute.xlu0 %1145
    %1147 = vrot.lane.b32.xlu0 %v767, 8
    %v1148 = vpop.permute.xlu0 %1147
    %1149 = vrot.lane.b32.xlu0 %v770, 8
    %v1150 = vpop.permute.xlu0 %1149
    %1151 = vrot.lane.b32.xlu0 %v772, 8
    %v1152 = vpop.permute.xlu0 %1151
    %1153 = vrot.lane.b32.xlu0 %v775, 8
    %v1154 = vpop.permute.xlu0 %1153
    %1155 = vrot.lane.b32.xlu0 %v777, 8
    %v1156 = vpop.permute.xlu0 %1155
    %1157 = vrot.lane.b32.xlu0 %v780, 8
    %v1158 = vpop.permute.xlu0 %1157
    %1159 = vrot.lane.b32.xlu0 %v782, 8
    %v1160 = vpop.permute.xlu0 %1159
    %1161 = vrot.lane.b32.xlu0 %v785, 8
    %v1162 = vpop.permute.xlu0 %1161
    %1163 = vrot.lane.b32.xlu0 %v787, 8
    %v1164 = vpop.permute.xlu0 %1163
    %1165 = vrot.lane.b32.xlu0 %v790, 8
    %v1166 = vpop.permute.xlu0 %1165
    %1167 = vrot.lane.b32.xlu0 %v792, 8
    %v1168 = vpop.permute.xlu0 %1167
    %1169 = vrot.lane.b32.xlu0 %v795, 8
    %v1170 = vpop.permute.xlu0 %1169
    %1171 = vrot.lane.b32.xlu0 %v797, 8
    %v1172 = vpop.permute.xlu0 %1171
    %1173 = vrot.lane.b32.xlu0 %v800, 8
    %v1174 = vpop.permute.xlu0 %1173
    %1175 = vrot.lane.b32.xlu0 %v802, 8
    %v1176 = vpop.permute.xlu0 %1175
    %1177 = vrot.lane.b32.xlu0 %v805, 8
    %v1178 = vpop.permute.xlu0 %1177
    %1179 = vrot.lane.b32.xlu0 %v807, 8
    %v1180 = vpop.permute.xlu0 %1179
    %1181 = vrot.lane.b32.xlu0 %v810, 8
    %v1182 = vpop.permute.xlu0 %1181
    %1183 = vrot.lane.b32.xlu0 %v812, 8
    %v1184 = vpop.permute.xlu0 %1183
    %1249 = vrot.lane.b32.xlu0 %v290, 12
    %v1250 = vpop.permute.xlu0 %1249
    %1251 = vrot.lane.b32.xlu0 %v291, 12
    %v1252 = vpop.permute.xlu0 %1251
    %1253 = vrot.lane.b32.xlu0 %v293, 12
    %v1254 = vpop.permute.xlu0 %1253
    %1255 = vrot.lane.b32.xlu0 %v294, 12
    %v1256 = vpop.permute.xlu0 %1255
    %1257 = vrot.lane.b32.xlu0 %v296, 12
    %v1258 = vpop.permute.xlu0 %1257
    %1259 = vrot.lane.b32.xlu0 %v297, 12
    %v1260 = vpop.permute.xlu0 %1259
    %1261 = vrot.lane.b32.xlu0 %v299, 12
    %v1262 = vpop.permute.xlu0 %1261
    %1263 = vrot.lane.b32.xlu0 %v300, 12
    %v1264 = vpop.permute.xlu0 %1263
    %1265 = vrot.lane.b32.xlu0 %v302, 12
    %v1266 = vpop.permute.xlu0 %1265
    %1267 = vrot.lane.b32.xlu0 %v303, 12
    %v1268 = vpop.permute.xlu0 %1267
    %1269 = vrot.lane.b32.xlu0 %v305, 12
    %v1270 = vpop.permute.xlu0 %1269
    %1271 = vrot.lane.b32.xlu0 %v306, 12
    %v1272 = vpop.permute.xlu0 %1271
    %1273 = vrot.lane.b32.xlu0 %v308, 12
    %v1274 = vpop.permute.xlu0 %1273
    %1275 = vrot.lane.b32.xlu0 %v309, 12
    %v1276 = vpop.permute.xlu0 %1275
    %1277 = vrot.lane.b32.xlu0 %v311, 12
    %v1278 = vpop.permute.xlu0 %1277
    %1279 = vrot.lane.b32.xlu0 %v312, 12
    %v1280 = vpop.permute.xlu0 %1279
    %1281 = vrot.lane.b32.xlu0 %v314, 12
    %v1282 = vpop.permute.xlu0 %1281
    %1283 = vrot.lane.b32.xlu0 %v315, 12
    %v1284 = vpop.permute.xlu0 %1283
    %1285 = vrot.lane.b32.xlu0 %v317, 12
    %v1286 = vpop.permute.xlu0 %1285
    %1287 = vrot.lane.b32.xlu0 %v318, 12
    %v1288 = vpop.permute.xlu0 %1287
    %1289 = vrot.lane.b32.xlu0 %v320, 12
    %v1290 = vpop.permute.xlu0 %1289
    %1291 = vrot.lane.b32.xlu0 %v321, 12
    %v1292 = vpop.permute.xlu0 %1291
    %1293 = vrot.lane.b32.xlu0 %v323, 12
    %v1294 = vpop.permute.xlu0 %1293
    %1295 = vrot.lane.b32.xlu0 %v324, 12
    %v1296 = vpop.permute.xlu0 %1295
    %1297 = vrot.lane.b32.xlu0 %v326, 12
    %v1298 = vpop.permute.xlu0 %1297
    %1299 = vrot.lane.b32.xlu0 %v327, 12
    %v1300 = vpop.permute.xlu0 %1299
    %1301 = vrot.lane.b32.xlu0 %v329, 12
    %v1302 = vpop.permute.xlu0 %1301
    %1303 = vrot.lane.b32.xlu0 %v330, 12
    %v1304 = vpop.permute.xlu0 %1303
    %1305 = vrot.lane.b32.xlu0 %v332, 12
    %v1306 = vpop.permute.xlu0 %1305
    %1307 = vrot.lane.b32.xlu0 %v333, 12
    %v1308 = vpop.permute.xlu0 %1307
    %1309 = vrot.lane.b32.xlu0 %v335, 12
    %v1310 = vpop.permute.xlu0 %1309
    %1311 = vrot.lane.b32.xlu0 %v336, 12
    %v1312 = vpop.permute.xlu0 %1311
    %1313 = vrot.lane.b32.xlu0 %v344, 12
    %v1314 = vpop.permute.xlu0 %1313
    %1315 = vrot.lane.b32.xlu0 %v345, 12
    %v1316 = vpop.permute.xlu0 %1315
    %1317 = vrot.lane.b32.xlu0 %v347, 12
    %v1318 = vpop.permute.xlu0 %1317
    %1319 = vrot.lane.b32.xlu0 %v348, 12
    %v1320 = vpop.permute.xlu0 %1319
    %1321 = vrot.lane.b32.xlu0 %v350, 12
    %v1322 = vpop.permute.xlu0 %1321
    %1323 = vrot.lane.b32.xlu0 %v351, 12
    %v1324 = vpop.permute.xlu0 %1323
    %1325 = vrot.lane.b32.xlu0 %v353, 12
    %v1326 = vpop.permute.xlu0 %1325
    %1327 = vrot.lane.b32.xlu0 %v354, 12
    %v1328 = vpop.permute.xlu0 %1327
    %1329 = vrot.lane.b32.xlu0 %v356, 12
    %v1330 = vpop.permute.xlu0 %1329
    %1331 = vrot.lane.b32.xlu0 %v357, 12
    %v1332 = vpop.permute.xlu0 %1331
    %1333 = vrot.lane.b32.xlu0 %v359, 12
    %v1334 = vpop.permute.xlu0 %1333
    %1335 = vrot.lane.b32.xlu0 %v360, 12
    %v1336 = vpop.permute.xlu0 %1335
    %1337 = vrot.lane.b32.xlu0 %v362, 12
    %v1338 = vpop.permute.xlu0 %1337
    %1339 = vrot.lane.b32.xlu0 %v363, 12
    %v1340 = vpop.permute.xlu0 %1339
    %1341 = vrot.lane.b32.xlu0 %v365, 12
    %v1342 = vpop.permute.xlu0 %1341
    %1343 = vrot.lane.b32.xlu0 %v366, 12
    %v1344 = vpop.permute.xlu0 %1343
    %1345 = vrot.lane.b32.xlu0 %v368, 12
    %v1346 = vpop.permute.xlu0 %1345
    %1347 = vrot.lane.b32.xlu0 %v369, 12
    %v1348 = vpop.permute.xlu0 %1347
    %1349 = vrot.lane.b32.xlu0 %v371, 12
    %v1350 = vpop.permute.xlu0 %1349
    %1351 = vrot.lane.b32.xlu0 %v372, 12
    %v1352 = vpop.permute.xlu0 %1351
    %1353 = vrot.lane.b32.xlu0 %v374, 12
    %v1354 = vpop.permute.xlu0 %1353
    %1355 = vrot.lane.b32.xlu0 %v375, 12
    %v1356 = vpop.permute.xlu0 %1355
    %1357 = vrot.lane.b32.xlu0 %v377, 12
    %v1358 = vpop.permute.xlu0 %1357
    %1359 = vrot.lane.b32.xlu0 %v378, 12
    %v1360 = vpop.permute.xlu0 %1359
    %1361 = vrot.lane.b32.xlu0 %v380, 12
    %v1362 = vpop.permute.xlu0 %1361
    %1363 = vrot.lane.b32.xlu0 %v381, 12
    %v1364 = vpop.permute.xlu0 %1363
    %1365 = vrot.lane.b32.xlu0 %v383, 12
    %v1366 = vpop.permute.xlu0 %1365
    %1367 = vrot.lane.b32.xlu0 %v384, 12
    %v1368 = vpop.permute.xlu0 %1367
    %1369 = vrot.lane.b32.xlu0 %v386, 12
    %v1370 = vpop.permute.xlu0 %1369
    %1371 = vrot.lane.b32.xlu0 %v387, 12
    %v1372 = vpop.permute.xlu0 %1371
    %1373 = vrot.lane.b32.xlu0 %v389, 12
    %v1374 = vpop.permute.xlu0 %1373
    %1375 = vrot.lane.b32.xlu0 %v390, 12
    %v1376 = vpop.permute.xlu0 %1375
    %1441 = vrot.lane.b32.xlu0 %v499, 16
    %v1442 = vpop.permute.xlu0 %1441
    %1443 = vrot.lane.b32.xlu0 %v501, 16
    %v1444 = vpop.permute.xlu0 %1443
    %1445 = vrot.lane.b32.xlu0 %v504, 16
    %v1446 = vpop.permute.xlu0 %1445
    %1447 = vrot.lane.b32.xlu0 %v506, 16
    %v1448 = vpop.permute.xlu0 %1447
    %1449 = vrot.lane.b32.xlu0 %v509, 16
    %v1450 = vpop.permute.xlu0 %1449
    %1451 = vrot.lane.b32.xlu0 %v511, 16
    %v1452 = vpop.permute.xlu0 %1451
    %1453 = vrot.lane.b32.xlu0 %v514, 16
    %v1454 = vpop.permute.xlu0 %1453
    %1455 = vrot.lane.b32.xlu0 %v516, 16
    %v1456 = vpop.permute.xlu0 %1455
    %1457 = vrot.lane.b32.xlu0 %v519, 16
    %v1458 = vpop.permute.xlu0 %1457
    %1459 = vrot.lane.b32.xlu0 %v521, 16
    %v1460 = vpop.permute.xlu0 %1459
    %1461 = vrot.lane.b32.xlu0 %v524, 16
    %v1462 = vpop.permute.xlu0 %1461
    %1463 = vrot.lane.b32.xlu0 %v526, 16
    %v1464 = vpop.permute.xlu0 %1463
    %1465 = vrot.lane.b32.xlu0 %v529, 16
    %v1466 = vpop.permute.xlu0 %1465
    %1467 = vrot.lane.b32.xlu0 %v531, 16
    %v1468 = vpop.permute.xlu0 %1467
    %1469 = vrot.lane.b32.xlu0 %v534, 16
    %v1470 = vpop.permute.xlu0 %1469
    %1471 = vrot.lane.b32.xlu0 %v536, 16
    %v1472 = vpop.permute.xlu0 %1471
    %1473 = vrot.lane.b32.xlu0 %v539, 16
    %v1474 = vpop.permute.xlu0 %1473
    %1475 = vrot.lane.b32.xlu0 %v541, 16
    %v1476 = vpop.permute.xlu0 %1475
    %1477 = vrot.lane.b32.xlu0 %v544, 16
    %v1478 = vpop.permute.xlu0 %1477
    %1479 = vrot.lane.b32.xlu0 %v546, 16
    %v1480 = vpop.permute.xlu0 %1479
    %1481 = vrot.lane.b32.xlu0 %v549, 16
    %v1482 = vpop.permute.xlu0 %1481
    %1483 = vrot.lane.b32.xlu0 %v551, 16
    %v1484 = vpop.permute.xlu0 %1483
    %1485 = vrot.lane.b32.xlu0 %v554, 16
    %v1486 = vpop.permute.xlu0 %1485
    %1487 = vrot.lane.b32.xlu0 %v556, 16
    %v1488 = vpop.permute.xlu0 %1487
    %1489 = vrot.lane.b32.xlu0 %v559, 16
    %v1490 = vpop.permute.xlu0 %1489
    %1491 = vrot.lane.b32.xlu0 %v561, 16
    %v1492 = vpop.permute.xlu0 %1491
    %1493 = vrot.lane.b32.xlu0 %v564, 16
    %v1494 = vpop.permute.xlu0 %1493
    %1495 = vrot.lane.b32.xlu0 %v566, 16
    %v1496 = vpop.permute.xlu0 %1495
    %1497 = vrot.lane.b32.xlu0 %v569, 16
    %v1498 = vpop.permute.xlu0 %1497
    %1499 = vrot.lane.b32.xlu0 %v571, 16
    %v1500 = vpop.permute.xlu0 %1499
    %1501 = vrot.lane.b32.xlu0 %v821, 16
    %v1502 = vpop.permute.xlu0 %1501
    %1503 = vrot.lane.b32.xlu0 %v823, 16
    %v1504 = vpop.permute.xlu0 %1503
    %1505 = vrot.lane.b32.xlu0 %v579, 16
    %v1506 = vpop.permute.xlu0 %1505
    %1507 = vrot.lane.b32.xlu0 %v581, 16
    %v1508 = vpop.permute.xlu0 %1507
    %1509 = vrot.lane.b32.xlu0 %v584, 16
    %v1510 = vpop.permute.xlu0 %1509
    %1511 = vrot.lane.b32.xlu0 %v586, 16
    %v1512 = vpop.permute.xlu0 %1511
    %1513 = vrot.lane.b32.xlu0 %v589, 16
    %v1514 = vpop.permute.xlu0 %1513
    %1515 = vrot.lane.b32.xlu0 %v591, 16
    %v1516 = vpop.permute.xlu0 %1515
    %1517 = vrot.lane.b32.xlu0 %v594, 16
    %v1518 = vpop.permute.xlu0 %1517
    %1519 = vrot.lane.b32.xlu0 %v596, 16
    %v1520 = vpop.permute.xlu0 %1519
    %1521 = vrot.lane.b32.xlu0 %v599, 16
    %v1522 = vpop.permute.xlu0 %1521
    %1523 = vrot.lane.b32.xlu0 %v601, 16
    %v1524 = vpop.permute.xlu0 %1523
    %1525 = vrot.lane.b32.xlu0 %v604, 16
    %v1526 = vpop.permute.xlu0 %1525
    %1527 = vrot.lane.b32.xlu0 %v606, 16
    %v1528 = vpop.permute.xlu0 %1527
    %1529 = vrot.lane.b32.xlu0 %v609, 16
    %v1530 = vpop.permute.xlu0 %1529
    %1531 = vrot.lane.b32.xlu0 %v611, 16
    %v1532 = vpop.permute.xlu0 %1531
    %1533 = vrot.lane.b32.xlu0 %v614, 16
    %v1534 = vpop.permute.xlu0 %1533
    %1535 = vrot.lane.b32.xlu0 %v616, 16
    %v1536 = vpop.permute.xlu0 %1535
    %1537 = vrot.lane.b32.xlu0 %v619, 16
    %v1538 = vpop.permute.xlu0 %1537
    %1539 = vrot.lane.b32.xlu0 %v621, 16
    %v1540 = vpop.permute.xlu0 %1539
    %1541 = vrot.lane.b32.xlu0 %v624, 16
    %v1542 = vpop.permute.xlu0 %1541
    %1543 = vrot.lane.b32.xlu0 %v626, 16
    %v1544 = vpop.permute.xlu0 %1543
    %1545 = vrot.lane.b32.xlu0 %v629, 16
    %v1546 = vpop.permute.xlu0 %1545
    %1547 = vrot.lane.b32.xlu0 %v631, 16
    %v1548 = vpop.permute.xlu0 %1547
    %1549 = vrot.lane.b32.xlu0 %v634, 16
    %v1550 = vpop.permute.xlu0 %1549
    %1551 = vrot.lane.b32.xlu0 %v636, 16
    %v1552 = vpop.permute.xlu0 %1551
    %1553 = vrot.lane.b32.xlu0 %v639, 16
    %v1554 = vpop.permute.xlu0 %1553
    %1555 = vrot.lane.b32.xlu0 %v641, 16
    %v1556 = vpop.permute.xlu0 %1555
    %1557 = vrot.lane.b32.xlu0 %v644, 16
    %v1558 = vpop.permute.xlu0 %1557
    %1559 = vrot.lane.b32.xlu0 %v646, 16
    %v1560 = vpop.permute.xlu0 %1559
    %1561 = vrot.lane.b32.xlu0 %v649, 16
    %v1562 = vpop.permute.xlu0 %1561
    %1563 = vrot.lane.b32.xlu0 %v651, 16
    %v1564 = vpop.permute.xlu0 %1563
    %1565 = vrot.lane.b32.xlu0 %v826, 16
    %v1566 = vpop.permute.xlu0 %1565
    %1567 = vrot.lane.b32.xlu0 %v828, 16
    %v1568 = vpop.permute.xlu0 %1567
    %1633 = vrot.lane.b32.xlu0 %v660, 20
    %v1634 = vpop.permute.xlu0 %1633
    %1635 = vrot.lane.b32.xlu0 %v662, 20
    %v1636 = vpop.permute.xlu0 %1635
    %1637 = vrot.lane.b32.xlu0 %v665, 20
    %v1638 = vpop.permute.xlu0 %1637
    %1639 = vrot.lane.b32.xlu0 %v667, 20
    %v1640 = vpop.permute.xlu0 %1639
    %1641 = vrot.lane.b32.xlu0 %v670, 20
    %v1642 = vpop.permute.xlu0 %1641
    %1643 = vrot.lane.b32.xlu0 %v672, 20
    %v1644 = vpop.permute.xlu0 %1643
    %1645 = vrot.lane.b32.xlu0 %v675, 20
    %v1646 = vpop.permute.xlu0 %1645
    %1647 = vrot.lane.b32.xlu0 %v677, 20
    %v1648 = vpop.permute.xlu0 %1647
    %1649 = vrot.lane.b32.xlu0 %v680, 20
    %v1650 = vpop.permute.xlu0 %1649
    %1651 = vrot.lane.b32.xlu0 %v682, 20
    %v1652 = vpop.permute.xlu0 %1651
    %1653 = vrot.lane.b32.xlu0 %v685, 20
    %v1654 = vpop.permute.xlu0 %1653
    %1655 = vrot.lane.b32.xlu0 %v687, 20
    %v1656 = vpop.permute.xlu0 %1655
    %1657 = vrot.lane.b32.xlu0 %v690, 20
    %v1658 = vpop.permute.xlu0 %1657
    %1659 = vrot.lane.b32.xlu0 %v692, 20
    %v1660 = vpop.permute.xlu0 %1659
    %1661 = vrot.lane.b32.xlu0 %v695, 20
    %v1662 = vpop.permute.xlu0 %1661
    %1663 = vrot.lane.b32.xlu0 %v697, 20
    %v1664 = vpop.permute.xlu0 %1663
    %1665 = vrot.lane.b32.xlu0 %v700, 20
    %v1666 = vpop.permute.xlu0 %1665
    %1667 = vrot.lane.b32.xlu0 %v702, 20
    %v1668 = vpop.permute.xlu0 %1667
    %1669 = vrot.lane.b32.xlu0 %v705, 20
    %v1670 = vpop.permute.xlu0 %1669
    %1671 = vrot.lane.b32.xlu0 %v707, 20
    %v1672 = vpop.permute.xlu0 %1671
    %1673 = vrot.lane.b32.xlu0 %v710, 20
    %v1674 = vpop.permute.xlu0 %1673
    %1675 = vrot.lane.b32.xlu0 %v712, 20
    %v1676 = vpop.permute.xlu0 %1675
    %1677 = vrot.lane.b32.xlu0 %v715, 20
    %v1678 = vpop.permute.xlu0 %1677
    %1679 = vrot.lane.b32.xlu0 %v717, 20
    %v1680 = vpop.permute.xlu0 %1679
    %1681 = vrot.lane.b32.xlu0 %v720, 20
    %v1682 = vpop.permute.xlu0 %1681
    %1683 = vrot.lane.b32.xlu0 %v722, 20
    %v1684 = vpop.permute.xlu0 %1683
    %1685 = vrot.lane.b32.xlu0 %v725, 20
    %v1686 = vpop.permute.xlu0 %1685
    %1687 = vrot.lane.b32.xlu0 %v727, 20
    %v1688 = vpop.permute.xlu0 %1687
    %1689 = vrot.lane.b32.xlu0 %v730, 20
    %v1690 = vpop.permute.xlu0 %1689
    %1691 = vrot.lane.b32.xlu0 %v732, 20
    %v1692 = vpop.permute.xlu0 %1691
    %1693 = vrot.lane.b32.xlu0 %v831, 20
    %v1694 = vpop.permute.xlu0 %1693
    %1695 = vrot.lane.b32.xlu0 %v833, 20
    %v1696 = vpop.permute.xlu0 %1695
    %1697 = vrot.lane.b32.xlu0 %v740, 20
    %v1698 = vpop.permute.xlu0 %1697
    %1699 = vrot.lane.b32.xlu0 %v742, 20
    %v1700 = vpop.permute.xlu0 %1699
    %1701 = vrot.lane.b32.xlu0 %v745, 20
    %v1702 = vpop.permute.xlu0 %1701
    %1703 = vrot.lane.b32.xlu0 %v747, 20
    %v1704 = vpop.permute.xlu0 %1703
    %1705 = vrot.lane.b32.xlu0 %v750, 20
    %v1706 = vpop.permute.xlu0 %1705
    %1707 = vrot.lane.b32.xlu0 %v752, 20
    %v1708 = vpop.permute.xlu0 %1707
    %1709 = vrot.lane.b32.xlu0 %v755, 20
    %v1710 = vpop.permute.xlu0 %1709
    %1711 = vrot.lane.b32.xlu0 %v757, 20
    %v1712 = vpop.permute.xlu0 %1711
    %1713 = vrot.lane.b32.xlu0 %v760, 20
    %v1714 = vpop.permute.xlu0 %1713
    %1715 = vrot.lane.b32.xlu0 %v762, 20
    %v1716 = vpop.permute.xlu0 %1715
    %1717 = vrot.lane.b32.xlu0 %v765, 20
    %v1718 = vpop.permute.xlu0 %1717
    %1719 = vrot.lane.b32.xlu0 %v767, 20
    %v1720 = vpop.permute.xlu0 %1719
    %1721 = vrot.lane.b32.xlu0 %v770, 20
    %v1722 = vpop.permute.xlu0 %1721
    %1723 = vrot.lane.b32.xlu0 %v772, 20
    %v1724 = vpop.permute.xlu0 %1723
    %1725 = vrot.lane.b32.xlu0 %v775, 20
    %v1726 = vpop.permute.xlu0 %1725
    %1727 = vrot.lane.b32.xlu0 %v777, 20
    %v1728 = vpop.permute.xlu0 %1727
    %1729 = vrot.lane.b32.xlu0 %v780, 20
    %v1730 = vpop.permute.xlu0 %1729
    %1731 = vrot.lane.b32.xlu0 %v782, 20
    %v1732 = vpop.permute.xlu0 %1731
    %1733 = vrot.lane.b32.xlu0 %v785, 20
    %v1734 = vpop.permute.xlu0 %1733
    %1735 = vrot.lane.b32.xlu0 %v787, 20
    %v1736 = vpop.permute.xlu0 %1735
    %1737 = vrot.lane.b32.xlu0 %v790, 20
    %v1738 = vpop.permute.xlu0 %1737
    %1739 = vrot.lane.b32.xlu0 %v792, 20
    %v1740 = vpop.permute.xlu0 %1739
    %1741 = vrot.lane.b32.xlu0 %v795, 20
    %v1742 = vpop.permute.xlu0 %1741
    %1743 = vrot.lane.b32.xlu0 %v797, 20
    %v1744 = vpop.permute.xlu0 %1743
    %1745 = vrot.lane.b32.xlu0 %v800, 20
    %v1746 = vpop.permute.xlu0 %1745
    %1747 = vrot.lane.b32.xlu0 %v802, 20
    %v1748 = vpop.permute.xlu0 %1747
    %1749 = vrot.lane.b32.xlu0 %v805, 20
    %v1750 = vpop.permute.xlu0 %1749
    %1751 = vrot.lane.b32.xlu0 %v807, 20
    %v1752 = vpop.permute.xlu0 %1751
    %1753 = vrot.lane.b32.xlu0 %v810, 20
    %v1754 = vpop.permute.xlu0 %1753
    %1755 = vrot.lane.b32.xlu0 %v812, 20
    %v1756 = vpop.permute.xlu0 %1755
    %1757 = vrot.lane.b32.xlu0 %v836, 20
    %v1758 = vpop.permute.xlu0 %1757
    %1759 = vrot.lane.b32.xlu0 %v838, 20
    %v1760 = vpop.permute.xlu0 %1759
    %1825 = vrot.lane.b32.xlu0 %v293, 24
    %v1826 = vpop.permute.xlu0 %1825
    %1827 = vrot.lane.b32.xlu0 %v294, 24
    %v1828 = vpop.permute.xlu0 %1827
    %1829 = vrot.lane.b32.xlu0 %v296, 24
    %v1830 = vpop.permute.xlu0 %1829
    %1831 = vrot.lane.b32.xlu0 %v297, 24
    %v1832 = vpop.permute.xlu0 %1831
    %1833 = vrot.lane.b32.xlu0 %v299, 24
    %v1834 = vpop.permute.xlu0 %1833
    %1835 = vrot.lane.b32.xlu0 %v300, 24
    %v1836 = vpop.permute.xlu0 %1835
    %1837 = vrot.lane.b32.xlu0 %v302, 24
    %v1838 = vpop.permute.xlu0 %1837
    %1839 = vrot.lane.b32.xlu0 %v303, 24
    %v1840 = vpop.permute.xlu0 %1839
    %1841 = vrot.lane.b32.xlu0 %v305, 24
    %v1842 = vpop.permute.xlu0 %1841
    %1843 = vrot.lane.b32.xlu0 %v306, 24
    %v1844 = vpop.permute.xlu0 %1843
    %1845 = vrot.lane.b32.xlu0 %v308, 24
    %v1846 = vpop.permute.xlu0 %1845
    %1847 = vrot.lane.b32.xlu0 %v309, 24
    %v1848 = vpop.permute.xlu0 %1847
    %1849 = vrot.lane.b32.xlu0 %v311, 24
    %v1850 = vpop.permute.xlu0 %1849
    %1851 = vrot.lane.b32.xlu0 %v312, 24
    %v1852 = vpop.permute.xlu0 %1851
    %1853 = vrot.lane.b32.xlu0 %v314, 24
    %v1854 = vpop.permute.xlu0 %1853
    %1855 = vrot.lane.b32.xlu0 %v315, 24
    %v1856 = vpop.permute.xlu0 %1855
    %1857 = vrot.lane.b32.xlu0 %v317, 24
    %v1858 = vpop.permute.xlu0 %1857
    %1859 = vrot.lane.b32.xlu0 %v318, 24
    %v1860 = vpop.permute.xlu0 %1859
    %1861 = vrot.lane.b32.xlu0 %v320, 24
    %v1862 = vpop.permute.xlu0 %1861
    %1863 = vrot.lane.b32.xlu0 %v321, 24
    %v1864 = vpop.permute.xlu0 %1863
    %1865 = vrot.lane.b32.xlu0 %v323, 24
    %v1866 = vpop.permute.xlu0 %1865
    %1867 = vrot.lane.b32.xlu0 %v324, 24
    %v1868 = vpop.permute.xlu0 %1867
    %1869 = vrot.lane.b32.xlu0 %v326, 24
    %v1870 = vpop.permute.xlu0 %1869
    %1871 = vrot.lane.b32.xlu0 %v327, 24
    %v1872 = vpop.permute.xlu0 %1871
    %1873 = vrot.lane.b32.xlu0 %v329, 24
    %v1874 = vpop.permute.xlu0 %1873
    %1875 = vrot.lane.b32.xlu0 %v330, 24
    %v1876 = vpop.permute.xlu0 %1875
    %1877 = vrot.lane.b32.xlu0 %v332, 24
    %v1878 = vpop.permute.xlu0 %1877
    %1879 = vrot.lane.b32.xlu0 %v333, 24
    %v1880 = vpop.permute.xlu0 %1879
    %1881 = vrot.lane.b32.xlu0 %v335, 24
    %v1882 = vpop.permute.xlu0 %1881
    %1883 = vrot.lane.b32.xlu0 %v336, 24
    %v1884 = vpop.permute.xlu0 %1883
    %1885 = vrot.lane.b32.xlu0 %v338, 24
    %v1886 = vpop.permute.xlu0 %1885
    %1887 = vrot.lane.b32.xlu0 %v339, 24
    %v1888 = vpop.permute.xlu0 %1887
    %1889 = vrot.lane.b32.xlu0 %v347, 24
    %v1890 = vpop.permute.xlu0 %1889
    %1891 = vrot.lane.b32.xlu0 %v348, 24
    %v1892 = vpop.permute.xlu0 %1891
    %1893 = vrot.lane.b32.xlu0 %v350, 24
    %v1894 = vpop.permute.xlu0 %1893
    %1895 = vrot.lane.b32.xlu0 %v351, 24
    %v1896 = vpop.permute.xlu0 %1895
    %1897 = vrot.lane.b32.xlu0 %v353, 24
    %v1898 = vpop.permute.xlu0 %1897
    %1899 = vrot.lane.b32.xlu0 %v354, 24
    %v1900 = vpop.permute.xlu0 %1899
    %1901 = vrot.lane.b32.xlu0 %v356, 24
    %v1902 = vpop.permute.xlu0 %1901
    %1903 = vrot.lane.b32.xlu0 %v357, 24
    %v1904 = vpop.permute.xlu0 %1903
    %1905 = vrot.lane.b32.xlu0 %v359, 24
    %v1906 = vpop.permute.xlu0 %1905
    %1907 = vrot.lane.b32.xlu0 %v360, 24
    %v1908 = vpop.permute.xlu0 %1907
    %1909 = vrot.lane.b32.xlu0 %v362, 24
    %v1910 = vpop.permute.xlu0 %1909
    %1911 = vrot.lane.b32.xlu0 %v363, 24
    %v1912 = vpop.permute.xlu0 %1911
    %1913 = vrot.lane.b32.xlu0 %v365, 24
    %v1914 = vpop.permute.xlu0 %1913
    %1915 = vrot.lane.b32.xlu0 %v366, 24
    %v1916 = vpop.permute.xlu0 %1915
    %1917 = vrot.lane.b32.xlu0 %v368, 24
    %v1918 = vpop.permute.xlu0 %1917
    %1919 = vrot.lane.b32.xlu0 %v369, 24
    %v1920 = vpop.permute.xlu0 %1919
    %1921 = vrot.lane.b32.xlu0 %v371, 24
    %v1922 = vpop.permute.xlu0 %1921
    %1923 = vrot.lane.b32.xlu0 %v372, 24
    %v1924 = vpop.permute.xlu0 %1923
    %1925 = vrot.lane.b32.xlu0 %v374, 24
    %v1926 = vpop.permute.xlu0 %1925
    %1927 = vrot.lane.b32.xlu0 %v375, 24
    %v1928 = vpop.permute.xlu0 %1927
    %1929 = vrot.lane.b32.xlu0 %v377, 24
    %v1930 = vpop.permute.xlu0 %1929
    %1931 = vrot.lane.b32.xlu0 %v378, 24
    %v1932 = vpop.permute.xlu0 %1931
    %1933 = vrot.lane.b32.xlu0 %v380, 24
    %v1934 = vpop.permute.xlu0 %1933
    %1935 = vrot.lane.b32.xlu0 %v381, 24
    %v1936 = vpop.permute.xlu0 %1935
    %1937 = vrot.lane.b32.xlu0 %v383, 24
    %v1938 = vpop.permute.xlu0 %1937
    %1939 = vrot.lane.b32.xlu0 %v384, 24
    %v1940 = vpop.permute.xlu0 %1939
    %1941 = vrot.lane.b32.xlu0 %v386, 24
    %v1942 = vpop.permute.xlu0 %1941
    %1943 = vrot.lane.b32.xlu0 %v387, 24
    %v1944 = vpop.permute.xlu0 %1943
    %1945 = vrot.lane.b32.xlu0 %v389, 24
    %v1946 = vpop.permute.xlu0 %1945
    %1947 = vrot.lane.b32.xlu0 %v390, 24
    %v1948 = vpop.permute.xlu0 %1947
    %1949 = vrot.lane.b32.xlu0 %v392, 24
    %v1950 = vpop.permute.xlu0 %1949
    %1951 = vrot.lane.b32.xlu0 %v393, 24
    %v1952 = vpop.permute.xlu0 %1951
    %2017 = vrot.lane.b32.xlu0 %v504, 28
    %v2018 = vpop.permute.xlu0 %2017
    %2019 = vrot.lane.b32.xlu0 %v506, 28
    %v2020 = vpop.permute.xlu0 %2019
    %2021 = vrot.lane.b32.xlu0 %v509, 28
    %v2022 = vpop.permute.xlu0 %2021
    %2023 = vrot.lane.b32.xlu0 %v511, 28
    %v2024 = vpop.permute.xlu0 %2023
    %2025 = vrot.lane.b32.xlu0 %v514, 28
    %v2026 = vpop.permute.xlu0 %2025
    %2027 = vrot.lane.b32.xlu0 %v516, 28
    %v2028 = vpop.permute.xlu0 %2027
    %2029 = vrot.lane.b32.xlu0 %v519, 28
    %v2030 = vpop.permute.xlu0 %2029
    %2031 = vrot.lane.b32.xlu0 %v521, 28
    %v2032 = vpop.permute.xlu0 %2031
    %2033 = vrot.lane.b32.xlu0 %v524, 28
    %v2034 = vpop.permute.xlu0 %2033
    %2035 = vrot.lane.b32.xlu0 %v526, 28
    %v2036 = vpop.permute.xlu0 %2035
    %2037 = vrot.lane.b32.xlu0 %v529, 28
    %v2038 = vpop.permute.xlu0 %2037
    %2039 = vrot.lane.b32.xlu0 %v531, 28
    %v2040 = vpop.permute.xlu0 %2039
    %2041 = vrot.lane.b32.xlu0 %v534, 28
    %v2042 = vpop.permute.xlu0 %2041
    %2043 = vrot.lane.b32.xlu0 %v536, 28
    %v2044 = vpop.permute.xlu0 %2043
    %2045 = vrot.lane.b32.xlu0 %v539, 28
    %v2046 = vpop.permute.xlu0 %2045
    %2047 = vrot.lane.b32.xlu0 %v541, 28
    %v2048 = vpop.permute.xlu0 %2047
    %2049 = vrot.lane.b32.xlu0 %v544, 28
    %v2050 = vpop.permute.xlu0 %2049
    %2051 = vrot.lane.b32.xlu0 %v546, 28
    %v2052 = vpop.permute.xlu0 %2051
    %2053 = vrot.lane.b32.xlu0 %v549, 28
    %v2054 = vpop.permute.xlu0 %2053
    %2055 = vrot.lane.b32.xlu0 %v551, 28
    %v2056 = vpop.permute.xlu0 %2055
    %2057 = vrot.lane.b32.xlu0 %v554, 28
    %v2058 = vpop.permute.xlu0 %2057
    %2059 = vrot.lane.b32.xlu0 %v556, 28
    %v2060 = vpop.permute.xlu0 %2059
    %2061 = vrot.lane.b32.xlu0 %v559, 28
    %v2062 = vpop.permute.xlu0 %2061
    %2063 = vrot.lane.b32.xlu0 %v561, 28
    %v2064 = vpop.permute.xlu0 %2063
    %2065 = vrot.lane.b32.xlu0 %v564, 28
    %v2066 = vpop.permute.xlu0 %2065
    %2067 = vrot.lane.b32.xlu0 %v566, 28
    %v2068 = vpop.permute.xlu0 %2067
    %2069 = vrot.lane.b32.xlu0 %v569, 28
    %v2070 = vpop.permute.xlu0 %2069
    %2071 = vrot.lane.b32.xlu0 %v571, 28
    %v2072 = vpop.permute.xlu0 %2071
    %2073 = vrot.lane.b32.xlu0 %v821, 28
    %v2074 = vpop.permute.xlu0 %2073
    %2075 = vrot.lane.b32.xlu0 %v823, 28
    %v2076 = vpop.permute.xlu0 %2075
    %2077 = vrot.lane.b32.xlu0 %v847, 28
    %v2078 = vpop.permute.xlu0 %2077
    %2079 = vrot.lane.b32.xlu0 %v849, 28
    %v2080 = vpop.permute.xlu0 %2079
    %2081 = vrot.lane.b32.xlu0 %v584, 28
    %v2082 = vpop.permute.xlu0 %2081
    %2083 = vrot.lane.b32.xlu0 %v586, 28
    %v2084 = vpop.permute.xlu0 %2083
    %2085 = vrot.lane.b32.xlu0 %v589, 28
    %v2086 = vpop.permute.xlu0 %2085
    %2087 = vrot.lane.b32.xlu0 %v591, 28
    %v2088 = vpop.permute.xlu0 %2087
    %2089 = vrot.lane.b32.xlu0 %v594, 28
    %v2090 = vpop.permute.xlu0 %2089
    %2091 = vrot.lane.b32.xlu0 %v596, 28
    %v2092 = vpop.permute.xlu0 %2091
    %2093 = vrot.lane.b32.xlu0 %v599, 28
    %v2094 = vpop.permute.xlu0 %2093
    %2095 = vrot.lane.b32.xlu0 %v601, 28
    %v2096 = vpop.permute.xlu0 %2095
    %2097 = vrot.lane.b32.xlu0 %v604, 28
    %v2098 = vpop.permute.xlu0 %2097
    %2099 = vrot.lane.b32.xlu0 %v606, 28
    %v2100 = vpop.permute.xlu0 %2099
    %2101 = vrot.lane.b32.xlu0 %v609, 28
    %v2102 = vpop.permute.xlu0 %2101
    %2103 = vrot.lane.b32.xlu0 %v611, 28
    %v2104 = vpop.permute.xlu0 %2103
    %2105 = vrot.lane.b32.xlu0 %v614, 28
    %v2106 = vpop.permute.xlu0 %2105
    %2107 = vrot.lane.b32.xlu0 %v616, 28
    %v2108 = vpop.permute.xlu0 %2107
    %2109 = vrot.lane.b32.xlu0 %v619, 28
    %v2110 = vpop.permute.xlu0 %2109
    %2111 = vrot.lane.b32.xlu0 %v621, 28
    %v2112 = vpop.permute.xlu0 %2111
    %2113 = vrot.lane.b32.xlu0 %v624, 28
    %v2114 = vpop.permute.xlu0 %2113
    %2115 = vrot.lane.b32.xlu0 %v626, 28
    %v2116 = vpop.permute.xlu0 %2115
    %2117 = vrot.lane.b32.xlu0 %v629, 28
    %v2118 = vpop.permute.xlu0 %2117
    %2119 = vrot.lane.b32.xlu0 %v631, 28
    %v2120 = vpop.permute.xlu0 %2119
    %2121 = vrot.lane.b32.xlu0 %v634, 28
    %v2122 = vpop.permute.xlu0 %2121
    %2123 = vrot.lane.b32.xlu0 %v636, 28
    %v2124 = vpop.permute.xlu0 %2123
    %2125 = vrot.lane.b32.xlu0 %v639, 28
    %v2126 = vpop.permute.xlu0 %2125
    %2127 = vrot.lane.b32.xlu0 %v641, 28
    %v2128 = vpop.permute.xlu0 %2127
    %2129 = vrot.lane.b32.xlu0 %v644, 28
    %v2130 = vpop.permute.xlu0 %2129
    %2131 = vrot.lane.b32.xlu0 %v646, 28
    %v2132 = vpop.permute.xlu0 %2131
    %2133 = vrot.lane.b32.xlu0 %v649, 28
    %v2134 = vpop.permute.xlu0 %2133
    %2135 = vrot.lane.b32.xlu0 %v651, 28
    %v2136 = vpop.permute.xlu0 %2135
    %2137 = vrot.lane.b32.xlu0 %v826, 28
    %v2138 = vpop.permute.xlu0 %2137
    %2139 = vrot.lane.b32.xlu0 %v828, 28
    %v2140 = vpop.permute.xlu0 %2139
    %2141 = vrot.lane.b32.xlu0 %v852, 28
    %v2142 = vpop.permute.xlu0 %2141
    %2143 = vrot.lane.b32.xlu0 %v854, 28
    %v2144 = vpop.permute.xlu0 %2143
    %2209 = vrot.lane.b32.xlu0 %v665, 32
    %v2210 = vpop.permute.xlu0 %2209
    %2211 = vrot.lane.b32.xlu0 %v667, 32
    %v2212 = vpop.permute.xlu0 %2211
    %2213 = vrot.lane.b32.xlu0 %v670, 32
    %v2214 = vpop.permute.xlu0 %2213
    %2215 = vrot.lane.b32.xlu0 %v672, 32
    %v2216 = vpop.permute.xlu0 %2215
    %2217 = vrot.lane.b32.xlu0 %v675, 32
    %v2218 = vpop.permute.xlu0 %2217
    %2219 = vrot.lane.b32.xlu0 %v677, 32
    %v2220 = vpop.permute.xlu0 %2219
    %2221 = vrot.lane.b32.xlu0 %v680, 32
    %v2222 = vpop.permute.xlu0 %2221
    %2223 = vrot.lane.b32.xlu0 %v682, 32
    %v2224 = vpop.permute.xlu0 %2223
    %2225 = vrot.lane.b32.xlu0 %v685, 32
    %v2226 = vpop.permute.xlu0 %2225
    %2227 = vrot.lane.b32.xlu0 %v687, 32
    %v2228 = vpop.permute.xlu0 %2227
    %2229 = vrot.lane.b32.xlu0 %v690, 32
    %v2230 = vpop.permute.xlu0 %2229
    %2231 = vrot.lane.b32.xlu0 %v692, 32
    %v2232 = vpop.permute.xlu0 %2231
    %2233 = vrot.lane.b32.xlu0 %v695, 32
    %v2234 = vpop.permute.xlu0 %2233
    %2235 = vrot.lane.b32.xlu0 %v697, 32
    %v2236 = vpop.permute.xlu0 %2235
    %2237 = vrot.lane.b32.xlu0 %v700, 32
    %v2238 = vpop.permute.xlu0 %2237
    %2239 = vrot.lane.b32.xlu0 %v702, 32
    %v2240 = vpop.permute.xlu0 %2239
    %2241 = vrot.lane.b32.xlu0 %v705, 32
    %v2242 = vpop.permute.xlu0 %2241
    %2243 = vrot.lane.b32.xlu0 %v707, 32
    %v2244 = vpop.permute.xlu0 %2243
    %2245 = vrot.lane.b32.xlu0 %v710, 32
    %v2246 = vpop.permute.xlu0 %2245
    %2247 = vrot.lane.b32.xlu0 %v712, 32
    %v2248 = vpop.permute.xlu0 %2247
    %2249 = vrot.lane.b32.xlu0 %v715, 32
    %v2250 = vpop.permute.xlu0 %2249
    %2251 = vrot.lane.b32.xlu0 %v717, 32
    %v2252 = vpop.permute.xlu0 %2251
    %2253 = vrot.lane.b32.xlu0 %v720, 32
    %v2254 = vpop.permute.xlu0 %2253
    %2255 = vrot.lane.b32.xlu0 %v722, 32
    %v2256 = vpop.permute.xlu0 %2255
    %2257 = vrot.lane.b32.xlu0 %v725, 32
    %v2258 = vpop.permute.xlu0 %2257
    %2259 = vrot.lane.b32.xlu0 %v727, 32
    %v2260 = vpop.permute.xlu0 %2259
    %2261 = vrot.lane.b32.xlu0 %v730, 32
    %v2262 = vpop.permute.xlu0 %2261
    %2263 = vrot.lane.b32.xlu0 %v732, 32
    %v2264 = vpop.permute.xlu0 %2263
    %2265 = vrot.lane.b32.xlu0 %v831, 32
    %v2266 = vpop.permute.xlu0 %2265
    %2267 = vrot.lane.b32.xlu0 %v833, 32
    %v2268 = vpop.permute.xlu0 %2267
    %2269 = vrot.lane.b32.xlu0 %v857, 32
    %v2270 = vpop.permute.xlu0 %2269
    %2271 = vrot.lane.b32.xlu0 %v859, 32
    %v2272 = vpop.permute.xlu0 %2271
    %2273 = vrot.lane.b32.xlu0 %v745, 32
    %v2274 = vpop.permute.xlu0 %2273
    %2275 = vrot.lane.b32.xlu0 %v747, 32
    %v2276 = vpop.permute.xlu0 %2275
    %2277 = vrot.lane.b32.xlu0 %v750, 32
    %v2278 = vpop.permute.xlu0 %2277
    %2279 = vrot.lane.b32.xlu0 %v752, 32
    %v2280 = vpop.permute.xlu0 %2279
    %2281 = vrot.lane.b32.xlu0 %v755, 32
    %v2282 = vpop.permute.xlu0 %2281
    %2283 = vrot.lane.b32.xlu0 %v757, 32
    %v2284 = vpop.permute.xlu0 %2283
    %2285 = vrot.lane.b32.xlu0 %v760, 32
    %v2286 = vpop.permute.xlu0 %2285
    %2287 = vrot.lane.b32.xlu0 %v762, 32
    %v2288 = vpop.permute.xlu0 %2287
    %2289 = vrot.lane.b32.xlu0 %v765, 32
    %v2290 = vpop.permute.xlu0 %2289
    %2291 = vrot.lane.b32.xlu0 %v767, 32
    %v2292 = vpop.permute.xlu0 %2291
    %2293 = vrot.lane.b32.xlu0 %v770, 32
    %v2294 = vpop.permute.xlu0 %2293
    %2295 = vrot.lane.b32.xlu0 %v772, 32
    %v2296 = vpop.permute.xlu0 %2295
    %2297 = vrot.lane.b32.xlu0 %v775, 32
    %v2298 = vpop.permute.xlu0 %2297
    %2299 = vrot.lane.b32.xlu0 %v777, 32
    %v2300 = vpop.permute.xlu0 %2299
    %2301 = vrot.lane.b32.xlu0 %v780, 32
    %v2302 = vpop.permute.xlu0 %2301
    %2303 = vrot.lane.b32.xlu0 %v782, 32
    %v2304 = vpop.permute.xlu0 %2303
    %2305 = vrot.lane.b32.xlu0 %v785, 32
    %v2306 = vpop.permute.xlu0 %2305
    %2307 = vrot.lane.b32.xlu0 %v787, 32
    %v2308 = vpop.permute.xlu0 %2307
    %2309 = vrot.lane.b32.xlu0 %v790, 32
    %v2310 = vpop.permute.xlu0 %2309
    %2311 = vrot.lane.b32.xlu0 %v792, 32
    %v2312 = vpop.permute.xlu0 %2311
    %2313 = vrot.lane.b32.xlu0 %v795, 32
    %v2314 = vpop.permute.xlu0 %2313
    %2315 = vrot.lane.b32.xlu0 %v797, 32
    %v2316 = vpop.permute.xlu0 %2315
    %2317 = vrot.lane.b32.xlu0 %v800, 32
    %v2318 = vpop.permute.xlu0 %2317
    %2319 = vrot.lane.b32.xlu0 %v802, 32
    %v2320 = vpop.permute.xlu0 %2319
    %2321 = vrot.lane.b32.xlu0 %v805, 32
    %v2322 = vpop.permute.xlu0 %2321
    %2323 = vrot.lane.b32.xlu0 %v807, 32
    %v2324 = vpop.permute.xlu0 %2323
    %2325 = vrot.lane.b32.xlu0 %v810, 32
    %v2326 = vpop.permute.xlu0 %2325
    %2327 = vrot.lane.b32.xlu0 %v812, 32
    %v2328 = vpop.permute.xlu0 %2327
    %2329 = vrot.lane.b32.xlu0 %v836, 32
    %v2330 = vpop.permute.xlu0 %2329
    %2331 = vrot.lane.b32.xlu0 %v838, 32
    %v2332 = vpop.permute.xlu0 %2331
    %2333 = vrot.lane.b32.xlu0 %v862, 32
    %v2334 = vpop.permute.xlu0 %2333
    %2335 = vrot.lane.b32.xlu0 %v864, 32
    %v2336 = vpop.permute.xlu0 %2335
    %v2401 = vsel %vm48, %v287, %v866
    %v2402 = vsel %vm48, %v288, %v868
    %v2403 = vsel %vm48, %v290, %v870
    %v2404 = vsel %vm48, %v291, %v872
    %v2405 = vsel %vm48, %v293, %v874
    %v2406 = vsel %vm48, %v294, %v876
    %v2407 = vsel %vm48, %v296, %v878
    %v2408 = vsel %vm48, %v297, %v880
    %v2409 = vsel %vm48, %v299, %v882
    %v2410 = vsel %vm48, %v300, %v884
    %v2411 = vsel %vm48, %v302, %v886
    %v2412 = vsel %vm48, %v303, %v888
    %v2413 = vsel %vm48, %v305, %v890
    %v2414 = vsel %vm48, %v306, %v892
    %v2415 = vsel %vm48, %v308, %v894
    %v2416 = vsel %vm48, %v309, %v896
    %v2417 = vsel %vm48, %v311, %v898
    %v2418 = vsel %vm48, %v312, %v900
    %v2419 = vsel %vm48, %v314, %v902
    %v2420 = vsel %vm48, %v315, %v904
    %v2421 = vsel %vm48, %v317, %v906
    %v2422 = vsel %vm48, %v318, %v908
    %v2423 = vsel %vm48, %v320, %v910
    %v2424 = vsel %vm48, %v321, %v912
    %v2425 = vsel %vm48, %v323, %v914
    %v2426 = vsel %vm48, %v324, %v916
    %v2427 = vsel %vm48, %v326, %v918
    %v2428 = vsel %vm48, %v327, %v920
    %v2429 = vsel %vm48, %v329, %v922
    %v2430 = vsel %vm48, %v330, %v924
    %v2431 = vsel %vm48, %v332, %v926
    %v2432 = vsel %vm48, %v333, %v928
    %v2433 = vsel %vm48, %v341, %v930
    %v2434 = vsel %vm48, %v342, %v932
    %v2435 = vsel %vm48, %v344, %v934
    %v2436 = vsel %vm48, %v345, %v936
    %v2437 = vsel %vm48, %v347, %v938
    %v2438 = vsel %vm48, %v348, %v940
    %v2439 = vsel %vm48, %v350, %v942
    %v2440 = vsel %vm48, %v351, %v944
    %v2441 = vsel %vm48, %v353, %v946
    %v2442 = vsel %vm48, %v354, %v948
    %v2443 = vsel %vm48, %v356, %v950
    %v2444 = vsel %vm48, %v357, %v952
    %v2445 = vsel %vm48, %v359, %v954
    %v2446 = vsel %vm48, %v360, %v956
    %v2447 = vsel %vm48, %v362, %v958
    %v2448 = vsel %vm48, %v363, %v960
    %v2449 = vsel %vm48, %v365, %v962
    %v2450 = vsel %vm48, %v366, %v964
    %v2451 = vsel %vm48, %v368, %v966
    %v2452 = vsel %vm48, %v369, %v968
    %v2453 = vsel %vm48, %v371, %v970
    %v2454 = vsel %vm48, %v372, %v972
    %v2455 = vsel %vm48, %v374, %v974
    %v2456 = vsel %vm48, %v375, %v976
    %v2457 = vsel %vm48, %v377, %v978
    %v2458 = vsel %vm48, %v378, %v980
    %v2459 = vsel %vm48, %v380, %v982
    %v2460 = vsel %vm48, %v381, %v984
    %v2461 = vsel %vm48, %v383, %v986
    %v2462 = vsel %vm48, %v384, %v988
    %v2463 = vsel %vm48, %v386, %v990
    %v2464 = vsel %vm48, %v387, %v992
    %vm2465 = vcmask 64512
    %v2466 = vsel %vm2465, %v2401, %v1058
    %v2467 = vsel %vm2465, %v2402, %v1060
    %v2468 = vsel %vm2465, %v2403, %v1062
    %v2469 = vsel %vm2465, %v2404, %v1064
    %v2470 = vsel %vm2465, %v2405, %v1066
    %v2471 = vsel %vm2465, %v2406, %v1068
    %v2472 = vsel %vm2465, %v2407, %v1070
    %v2473 = vsel %vm2465, %v2408, %v1072
    %v2474 = vsel %vm2465, %v2409, %v1074
    %v2475 = vsel %vm2465, %v2410, %v1076
    %v2476 = vsel %vm2465, %v2411, %v1078
    %v2477 = vsel %vm2465, %v2412, %v1080
    %v2478 = vsel %vm2465, %v2413, %v1082
    %v2479 = vsel %vm2465, %v2414, %v1084
    %v2480 = vsel %vm2465, %v2415, %v1086
    %v2481 = vsel %vm2465, %v2416, %v1088
    %v2482 = vsel %vm2465, %v2417, %v1090
    %v2483 = vsel %vm2465, %v2418, %v1092
    %v2484 = vsel %vm2465, %v2419, %v1094
    %v2485 = vsel %vm2465, %v2420, %v1096
    %v2486 = vsel %vm2465, %v2421, %v1098
    %v2487 = vsel %vm2465, %v2422, %v1100
    %v2488 = vsel %vm2465, %v2423, %v1102
    %v2489 = vsel %vm2465, %v2424, %v1104
    %v2490 = vsel %vm2465, %v2425, %v1106
    %v2491 = vsel %vm2465, %v2426, %v1108
    %v2492 = vsel %vm2465, %v2427, %v1110
    %v2493 = vsel %vm2465, %v2428, %v1112
    %v2494 = vsel %vm2465, %v2429, %v1114
    %v2495 = vsel %vm2465, %v2430, %v1116
    %v2496 = vsel %vm2465, %v2431, %v1118
    %v2497 = vsel %vm2465, %v2432, %v1120
    %v2498 = vsel %vm2465, %v2433, %v1122
    %v2499 = vsel %vm2465, %v2434, %v1124
    %v2500 = vsel %vm2465, %v2435, %v1126
    %v2501 = vsel %vm2465, %v2436, %v1128
    %v2502 = vsel %vm2465, %v2437, %v1130
    %v2503 = vsel %vm2465, %v2438, %v1132
    %v2504 = vsel %vm2465, %v2439, %v1134
    %v2505 = vsel %vm2465, %v2440, %v1136
    %v2506 = vsel %vm2465, %v2441, %v1138
    %v2507 = vsel %vm2465, %v2442, %v1140
    %v2508 = vsel %vm2465, %v2443, %v1142
    %v2509 = vsel %vm2465, %v2444, %v1144
    %v2510 = vsel %vm2465, %v2445, %v1146
    %v2511 = vsel %vm2465, %v2446, %v1148
    %v2512 = vsel %vm2465, %v2447, %v1150
    %v2513 = vsel %vm2465, %v2448, %v1152
    %v2514 = vsel %vm2465, %v2449, %v1154
    %v2515 = vsel %vm2465, %v2450, %v1156
    %v2516 = vsel %vm2465, %v2451, %v1158
    %v2517 = vsel %vm2465, %v2452, %v1160
    %v2518 = vsel %vm2465, %v2453, %v1162
    %v2519 = vsel %vm2465, %v2454, %v1164
    %v2520 = vsel %vm2465, %v2455, %v1166
    %v2521 = vsel %vm2465, %v2456, %v1168
    %v2522 = vsel %vm2465, %v2457, %v1170
    %v2523 = vsel %vm2465, %v2458, %v1172
    %v2524 = vsel %vm2465, %v2459, %v1174
    %v2525 = vsel %vm2465, %v2460, %v1176
    %v2526 = vsel %vm2465, %v2461, %v1178
    %v2527 = vsel %vm2465, %v2462, %v1180
    %v2528 = vsel %vm2465, %v2463, %v1182
    %v2529 = vsel %vm2465, %v2464, %v1184
    %vm2530 = vcmask 97280
    %v2531 = vsel %vm2530, %v2466, %v1250
    %v2532 = vsel %vm2530, %v2467, %v1252
    %v2533 = vsel %vm2530, %v2468, %v1254
    %v2534 = vsel %vm2530, %v2469, %v1256
    %v2535 = vsel %vm2530, %v2470, %v1258
    %v2536 = vsel %vm2530, %v2471, %v1260
    %v2537 = vsel %vm2530, %v2472, %v1262
    %v2538 = vsel %vm2530, %v2473, %v1264
    %v2539 = vsel %vm2530, %v2474, %v1266
    %v2540 = vsel %vm2530, %v2475, %v1268
    %v2541 = vsel %vm2530, %v2476, %v1270
    %v2542 = vsel %vm2530, %v2477, %v1272
    %v2543 = vsel %vm2530, %v2478, %v1274
    %v2544 = vsel %vm2530, %v2479, %v1276
    %v2545 = vsel %vm2530, %v2480, %v1278
    %v2546 = vsel %vm2530, %v2481, %v1280
    %v2547 = vsel %vm2530, %v2482, %v1282
    %v2548 = vsel %vm2530, %v2483, %v1284
    %v2549 = vsel %vm2530, %v2484, %v1286
    %v2550 = vsel %vm2530, %v2485, %v1288
    %v2551 = vsel %vm2530, %v2486, %v1290
    %v2552 = vsel %vm2530, %v2487, %v1292
    %v2553 = vsel %vm2530, %v2488, %v1294
    %v2554 = vsel %vm2530, %v2489, %v1296
    %v2555 = vsel %vm2530, %v2490, %v1298
    %v2556 = vsel %vm2530, %v2491, %v1300
    %v2557 = vsel %vm2530, %v2492, %v1302
    %v2558 = vsel %vm2530, %v2493, %v1304
    %v2559 = vsel %vm2530, %v2494, %v1306
    %v2560 = vsel %vm2530, %v2495, %v1308
    %v2561 = vsel %vm2530, %v2496, %v1310
    %v2562 = vsel %vm2530, %v2497, %v1312
    %v2563 = vsel %vm2530, %v2498, %v1314
    %v2564 = vsel %vm2530, %v2499, %v1316
    %v2565 = vsel %vm2530, %v2500, %v1318
    %v2566 = vsel %vm2530, %v2501, %v1320
    %v2567 = vsel %vm2530, %v2502, %v1322
    %v2568 = vsel %vm2530, %v2503, %v1324
    %v2569 = vsel %vm2530, %v2504, %v1326
    %v2570 = vsel %vm2530, %v2505, %v1328
    %v2571 = vsel %vm2530, %v2506, %v1330
    %v2572 = vsel %vm2530, %v2507, %v1332
    %v2573 = vsel %vm2530, %v2508, %v1334
    %v2574 = vsel %vm2530, %v2509, %v1336
    %v2575 = vsel %vm2530, %v2510, %v1338
    %v2576 = vsel %vm2530, %v2511, %v1340
    %v2577 = vsel %vm2530, %v2512, %v1342
    %v2578 = vsel %vm2530, %v2513, %v1344
    %v2579 = vsel %vm2530, %v2514, %v1346
    %v2580 = vsel %vm2530, %v2515, %v1348
    %v2581 = vsel %vm2530, %v2516, %v1350
    %v2582 = vsel %vm2530, %v2517, %v1352
    %v2583 = vsel %vm2530, %v2518, %v1354
    %v2584 = vsel %vm2530, %v2519, %v1356
    %v2585 = vsel %vm2530, %v2520, %v1358
    %v2586 = vsel %vm2530, %v2521, %v1360
    %v2587 = vsel %vm2530, %v2522, %v1362
    %v2588 = vsel %vm2530, %v2523, %v1364
    %v2589 = vsel %vm2530, %v2524, %v1366
    %v2590 = vsel %vm2530, %v2525, %v1368
    %v2591 = vsel %vm2530, %v2526, %v1370
    %v2592 = vsel %vm2530, %v2527, %v1372
    %v2593 = vsel %vm2530, %v2528, %v1374
    %v2594 = vsel %vm2530, %v2529, %v1376
    %vm2595 = vcmask 130048
    %v2596 = vsel %vm2595, %v2531, %v1442
    %v2597 = vsel %vm2595, %v2532, %v1444
    %v2598 = vsel %vm2595, %v2533, %v1446
    %v2599 = vsel %vm2595, %v2534, %v1448
    %v2600 = vsel %vm2595, %v2535, %v1450
    %v2601 = vsel %vm2595, %v2536, %v1452
    %v2602 = vsel %vm2595, %v2537, %v1454
    %v2603 = vsel %vm2595, %v2538, %v1456
    %v2604 = vsel %vm2595, %v2539, %v1458
    %v2605 = vsel %vm2595, %v2540, %v1460
    %v2606 = vsel %vm2595, %v2541, %v1462
    %v2607 = vsel %vm2595, %v2542, %v1464
    %v2608 = vsel %vm2595, %v2543, %v1466
    %v2609 = vsel %vm2595, %v2544, %v1468
    %v2610 = vsel %vm2595, %v2545, %v1470
    %v2611 = vsel %vm2595, %v2546, %v1472
    %v2612 = vsel %vm2595, %v2547, %v1474
    %v2613 = vsel %vm2595, %v2548, %v1476
    %v2614 = vsel %vm2595, %v2549, %v1478
    %v2615 = vsel %vm2595, %v2550, %v1480
    %v2616 = vsel %vm2595, %v2551, %v1482
    %v2617 = vsel %vm2595, %v2552, %v1484
    %v2618 = vsel %vm2595, %v2553, %v1486
    %v2619 = vsel %vm2595, %v2554, %v1488
    %v2620 = vsel %vm2595, %v2555, %v1490
    %v2621 = vsel %vm2595, %v2556, %v1492
    %v2622 = vsel %vm2595, %v2557, %v1494
    %v2623 = vsel %vm2595, %v2558, %v1496
    %v2624 = vsel %vm2595, %v2559, %v1498
    %v2625 = vsel %vm2595, %v2560, %v1500
    %v2626 = vsel %vm2595, %v2561, %v1502
    %v2627 = vsel %vm2595, %v2562, %v1504
    %v2628 = vsel %vm2595, %v2563, %v1506
    %v2629 = vsel %vm2595, %v2564, %v1508
    %v2630 = vsel %vm2595, %v2565, %v1510
    %v2631 = vsel %vm2595, %v2566, %v1512
    %v2632 = vsel %vm2595, %v2567, %v1514
    %v2633 = vsel %vm2595, %v2568, %v1516
    %v2634 = vsel %vm2595, %v2569, %v1518
    %v2635 = vsel %vm2595, %v2570, %v1520
    %v2636 = vsel %vm2595, %v2571, %v1522
    %v2637 = vsel %vm2595, %v2572, %v1524
    %v2638 = vsel %vm2595, %v2573, %v1526
    %v2639 = vsel %vm2595, %v2574, %v1528
    %v2640 = vsel %vm2595, %v2575, %v1530
    %v2641 = vsel %vm2595, %v2576, %v1532
    %v2642 = vsel %vm2595, %v2577, %v1534
    %v2643 = vsel %vm2595, %v2578, %v1536
    %v2644 = vsel %vm2595, %v2579, %v1538
    %v2645 = vsel %vm2595, %v2580, %v1540
    %v2646 = vsel %vm2595, %v2581, %v1542
    %v2647 = vsel %vm2595, %v2582, %v1544
    %v2648 = vsel %vm2595, %v2583, %v1546
    %v2649 = vsel %vm2595, %v2584, %v1548
    %v2650 = vsel %vm2595, %v2585, %v1550
    %v2651 = vsel %vm2595, %v2586, %v1552
    %v2652 = vsel %vm2595, %v2587, %v1554
    %v2653 = vsel %vm2595, %v2588, %v1556
    %v2654 = vsel %vm2595, %v2589, %v1558
    %v2655 = vsel %vm2595, %v2590, %v1560
    %v2656 = vsel %vm2595, %v2591, %v1562
    %v2657 = vsel %vm2595, %v2592, %v1564
    %v2658 = vsel %vm2595, %v2593, %v1566
    %v2659 = vsel %vm2595, %v2594, %v1568
    %vm2660 = vcmask 162816
    %v2661 = vsel %vm2660, %v2596, %v1634
    %v2662 = vsel %vm2660, %v2597, %v1636
    %v2663 = vsel %vm2660, %v2598, %v1638
    %v2664 = vsel %vm2660, %v2599, %v1640
    %v2665 = vsel %vm2660, %v2600, %v1642
    %v2666 = vsel %vm2660, %v2601, %v1644
    %v2667 = vsel %vm2660, %v2602, %v1646
    %v2668 = vsel %vm2660, %v2603, %v1648
    %v2669 = vsel %vm2660, %v2604, %v1650
    %v2670 = vsel %vm2660, %v2605, %v1652
    %v2671 = vsel %vm2660, %v2606, %v1654
    %v2672 = vsel %vm2660, %v2607, %v1656
    %v2673 = vsel %vm2660, %v2608, %v1658
    %v2674 = vsel %vm2660, %v2609, %v1660
    %v2675 = vsel %vm2660, %v2610, %v1662
    %v2676 = vsel %vm2660, %v2611, %v1664
    %v2677 = vsel %vm2660, %v2612, %v1666
    %v2678 = vsel %vm2660, %v2613, %v1668
    %v2679 = vsel %vm2660, %v2614, %v1670
    %v2680 = vsel %vm2660, %v2615, %v1672
    %v2681 = vsel %vm2660, %v2616, %v1674
    %v2682 = vsel %vm2660, %v2617, %v1676
    %v2683 = vsel %vm2660, %v2618, %v1678
    %v2684 = vsel %vm2660, %v2619, %v1680
    %v2685 = vsel %vm2660, %v2620, %v1682
    %v2686 = vsel %vm2660, %v2621, %v1684
    %v2687 = vsel %vm2660, %v2622, %v1686
    %v2688 = vsel %vm2660, %v2623, %v1688
    %v2689 = vsel %vm2660, %v2624, %v1690
    %v2690 = vsel %vm2660, %v2625, %v1692
    %v2691 = vsel %vm2660, %v2626, %v1694
    %v2692 = vsel %vm2660, %v2627, %v1696
    %v2693 = vsel %vm2660, %v2628, %v1698
    %v2694 = vsel %vm2660, %v2629, %v1700
    %v2695 = vsel %vm2660, %v2630, %v1702
    %v2696 = vsel %vm2660, %v2631, %v1704
    %v2697 = vsel %vm2660, %v2632, %v1706
    %v2698 = vsel %vm2660, %v2633, %v1708
    %v2699 = vsel %vm2660, %v2634, %v1710
    %v2700 = vsel %vm2660, %v2635, %v1712
    %v2701 = vsel %vm2660, %v2636, %v1714
    %v2702 = vsel %vm2660, %v2637, %v1716
    %v2703 = vsel %vm2660, %v2638, %v1718
    %v2704 = vsel %vm2660, %v2639, %v1720
    %v2705 = vsel %vm2660, %v2640, %v1722
    %v2706 = vsel %vm2660, %v2641, %v1724
    %v2707 = vsel %vm2660, %v2642, %v1726
    %v2708 = vsel %vm2660, %v2643, %v1728
    %v2709 = vsel %vm2660, %v2644, %v1730
    %v2710 = vsel %vm2660, %v2645, %v1732
    %v2711 = vsel %vm2660, %v2646, %v1734
    %v2712 = vsel %vm2660, %v2647, %v1736
    %v2713 = vsel %vm2660, %v2648, %v1738
    %v2714 = vsel %vm2660, %v2649, %v1740
    %v2715 = vsel %vm2660, %v2650, %v1742
    %v2716 = vsel %vm2660, %v2651, %v1744
    %v2717 = vsel %vm2660, %v2652, %v1746
    %v2718 = vsel %vm2660, %v2653, %v1748
    %v2719 = vsel %vm2660, %v2654, %v1750
    %v2720 = vsel %vm2660, %v2655, %v1752
    %v2721 = vsel %vm2660, %v2656, %v1754
    %v2722 = vsel %vm2660, %v2657, %v1756
    %v2723 = vsel %vm2660, %v2658, %v1758
    %v2724 = vsel %vm2660, %v2659, %v1760
    %vm2725 = vcmask 195584
    %v2726 = vsel %vm2725, %v2661, %v1826
    %v2727 = vsel %vm2725, %v2662, %v1828
    %v2728 = vsel %vm2725, %v2663, %v1830
    %v2729 = vsel %vm2725, %v2664, %v1832
    %v2730 = vsel %vm2725, %v2665, %v1834
    %v2731 = vsel %vm2725, %v2666, %v1836
    %v2732 = vsel %vm2725, %v2667, %v1838
    %v2733 = vsel %vm2725, %v2668, %v1840
    %v2734 = vsel %vm2725, %v2669, %v1842
    %v2735 = vsel %vm2725, %v2670, %v1844
    %v2736 = vsel %vm2725, %v2671, %v1846
    %v2737 = vsel %vm2725, %v2672, %v1848
    %v2738 = vsel %vm2725, %v2673, %v1850
    %v2739 = vsel %vm2725, %v2674, %v1852
    %v2740 = vsel %vm2725, %v2675, %v1854
    %v2741 = vsel %vm2725, %v2676, %v1856
    %v2742 = vsel %vm2725, %v2677, %v1858
    %v2743 = vsel %vm2725, %v2678, %v1860
    %v2744 = vsel %vm2725, %v2679, %v1862
    %v2745 = vsel %vm2725, %v2680, %v1864
    %v2746 = vsel %vm2725, %v2681, %v1866
    %v2747 = vsel %vm2725, %v2682, %v1868
    %v2748 = vsel %vm2725, %v2683, %v1870
    %v2749 = vsel %vm2725, %v2684, %v1872
    %v2750 = vsel %vm2725, %v2685, %v1874
    %v2751 = vsel %vm2725, %v2686, %v1876
    %v2752 = vsel %vm2725, %v2687, %v1878
    %v2753 = vsel %vm2725, %v2688, %v1880
    %v2754 = vsel %vm2725, %v2689, %v1882
    %v2755 = vsel %vm2725, %v2690, %v1884
    %v2756 = vsel %vm2725, %v2691, %v1886
    %v2757 = vsel %vm2725, %v2692, %v1888
    %v2758 = vsel %vm2725, %v2693, %v1890
    %v2759 = vsel %vm2725, %v2694, %v1892
    %v2760 = vsel %vm2725, %v2695, %v1894
    %v2761 = vsel %vm2725, %v2696, %v1896
    %v2762 = vsel %vm2725, %v2697, %v1898
    %v2763 = vsel %vm2725, %v2698, %v1900
    %v2764 = vsel %vm2725, %v2699, %v1902
    %v2765 = vsel %vm2725, %v2700, %v1904
    %v2766 = vsel %vm2725, %v2701, %v1906
    %v2767 = vsel %vm2725, %v2702, %v1908
    %v2768 = vsel %vm2725, %v2703, %v1910
    %v2769 = vsel %vm2725, %v2704, %v1912
    %v2770 = vsel %vm2725, %v2705, %v1914
    %v2771 = vsel %vm2725, %v2706, %v1916
    %v2772 = vsel %vm2725, %v2707, %v1918
    %v2773 = vsel %vm2725, %v2708, %v1920
    %v2774 = vsel %vm2725, %v2709, %v1922
    %v2775 = vsel %vm2725, %v2710, %v1924
    %v2776 = vsel %vm2725, %v2711, %v1926
    %v2777 = vsel %vm2725, %v2712, %v1928
    %v2778 = vsel %vm2725, %v2713, %v1930
    %v2779 = vsel %vm2725, %v2714, %v1932
    %v2780 = vsel %vm2725, %v2715, %v1934
    %v2781 = vsel %vm2725, %v2716, %v1936
    %v2782 = vsel %vm2725, %v2717, %v1938
    %v2783 = vsel %vm2725, %v2718, %v1940
    %v2784 = vsel %vm2725, %v2719, %v1942
    %v2785 = vsel %vm2725, %v2720, %v1944
    %v2786 = vsel %vm2725, %v2721, %v1946
    %v2787 = vsel %vm2725, %v2722, %v1948
    %v2788 = vsel %vm2725, %v2723, %v1950
    %v2789 = vsel %vm2725, %v2724, %v1952
    %vm2790 = vcmask 228352
    %v2791 = vsel %vm2790, %v2726, %v2018
    %v2792 = vsel %vm2790, %v2727, %v2020
    %v2793 = vsel %vm2790, %v2728, %v2022
    %v2794 = vsel %vm2790, %v2729, %v2024
    %v2795 = vsel %vm2790, %v2730, %v2026
    %v2796 = vsel %vm2790, %v2731, %v2028
    %v2797 = vsel %vm2790, %v2732, %v2030
    %v2798 = vsel %vm2790, %v2733, %v2032
    %v2799 = vsel %vm2790, %v2734, %v2034
    %v2800 = vsel %vm2790, %v2735, %v2036
    %v2801 = vsel %vm2790, %v2736, %v2038
    %v2802 = vsel %vm2790, %v2737, %v2040
    %v2803 = vsel %vm2790, %v2738, %v2042
    %v2804 = vsel %vm2790, %v2739, %v2044
    %v2805 = vsel %vm2790, %v2740, %v2046
    %v2806 = vsel %vm2790, %v2741, %v2048
    %v2807 = vsel %vm2790, %v2742, %v2050
    %v2808 = vsel %vm2790, %v2743, %v2052
    %v2809 = vsel %vm2790, %v2744, %v2054
    %v2810 = vsel %vm2790, %v2745, %v2056
    %v2811 = vsel %vm2790, %v2746, %v2058
    %v2812 = vsel %vm2790, %v2747, %v2060
    %v2813 = vsel %vm2790, %v2748, %v2062
    %v2814 = vsel %vm2790, %v2749, %v2064
    %v2815 = vsel %vm2790, %v2750, %v2066
    %v2816 = vsel %vm2790, %v2751, %v2068
    %v2817 = vsel %vm2790, %v2752, %v2070
    %v2818 = vsel %vm2790, %v2753, %v2072
    %v2819 = vsel %vm2790, %v2754, %v2074
    %v2820 = vsel %vm2790, %v2755, %v2076
    %v2821 = vsel %vm2790, %v2756, %v2078
    %v2822 = vsel %vm2790, %v2757, %v2080
    %v2823 = vsel %vm2790, %v2758, %v2082
    %v2824 = vsel %vm2790, %v2759, %v2084
    %v2825 = vsel %vm2790, %v2760, %v2086
    %v2826 = vsel %vm2790, %v2761, %v2088
    %v2827 = vsel %vm2790, %v2762, %v2090
    %v2828 = vsel %vm2790, %v2763, %v2092
    %v2829 = vsel %vm2790, %v2764, %v2094
    %v2830 = vsel %vm2790, %v2765, %v2096
    %v2831 = vsel %vm2790, %v2766, %v2098
    %v2832 = vsel %vm2790, %v2767, %v2100
    %v2833 = vsel %vm2790, %v2768, %v2102
    %v2834 = vsel %vm2790, %v2769, %v2104
    %v2835 = vsel %vm2790, %v2770, %v2106
    %v2836 = vsel %vm2790, %v2771, %v2108
    %v2837 = vsel %vm2790, %v2772, %v2110
    %v2838 = vsel %vm2790, %v2773, %v2112
    %v2839 = vsel %vm2790, %v2774, %v2114
    %v2840 = vsel %vm2790, %v2775, %v2116
    %v2841 = vsel %vm2790, %v2776, %v2118
    %v2842 = vsel %vm2790, %v2777, %v2120
    %v2843 = vsel %vm2790, %v2778, %v2122
    %v2844 = vsel %vm2790, %v2779, %v2124
    %v2845 = vsel %vm2790, %v2780, %v2126
    %v2846 = vsel %vm2790, %v2781, %v2128
    %v2847 = vsel %vm2790, %v2782, %v2130
    %v2848 = vsel %vm2790, %v2783, %v2132
    %v2849 = vsel %vm2790, %v2784, %v2134
    %v2850 = vsel %vm2790, %v2785, %v2136
    %v2851 = vsel %vm2790, %v2786, %v2138
    %v2852 = vsel %vm2790, %v2787, %v2140
    %v2853 = vsel %vm2790, %v2788, %v2142
    %v2854 = vsel %vm2790, %v2789, %v2144
    %vm2855 = vcmask 261120
    %v2856 = vsel %vm2855, %v2791, %v2210
    %v2857 = vsel %vm2855, %v2792, %v2212
    %v2858 = vsel %vm2855, %v2793, %v2214
    %v2859 = vsel %vm2855, %v2794, %v2216
    %v2860 = vsel %vm2855, %v2795, %v2218
    %v2861 = vsel %vm2855, %v2796, %v2220
    %v2862 = vsel %vm2855, %v2797, %v2222
    %v2863 = vsel %vm2855, %v2798, %v2224
    %v2864 = vsel %vm2855, %v2799, %v2226
    %v2865 = vsel %vm2855, %v2800, %v2228
    %v2866 = vsel %vm2855, %v2801, %v2230
    %v2867 = vsel %vm2855, %v2802, %v2232
    %v2868 = vsel %vm2855, %v2803, %v2234
    %v2869 = vsel %vm2855, %v2804, %v2236
    %v2870 = vsel %vm2855, %v2805, %v2238
    %v2871 = vsel %vm2855, %v2806, %v2240
    %v2872 = vsel %vm2855, %v2807, %v2242
    %v2873 = vsel %vm2855, %v2808, %v2244
    %v2874 = vsel %vm2855, %v2809, %v2246
    %v2875 = vsel %vm2855, %v2810, %v2248
    %v2876 = vsel %vm2855, %v2811, %v2250
    %v2877 = vsel %vm2855, %v2812, %v2252
    %v2878 = vsel %vm2855, %v2813, %v2254
    %v2879 = vsel %vm2855, %v2814, %v2256
    %v2880 = vsel %vm2855, %v2815, %v2258
    %v2881 = vsel %vm2855, %v2816, %v2260
    %v2882 = vsel %vm2855, %v2817, %v2262
    %v2883 = vsel %vm2855, %v2818, %v2264
    %v2884 = vsel %vm2855, %v2819, %v2266
    %v2885 = vsel %vm2855, %v2820, %v2268
    %v2886 = vsel %vm2855, %v2821, %v2270
    %v2887 = vsel %vm2855, %v2822, %v2272
    %v2888 = vsel %vm2855, %v2823, %v2274
    %v2889 = vsel %vm2855, %v2824, %v2276
    %v2890 = vsel %vm2855, %v2825, %v2278
    %v2891 = vsel %vm2855, %v2826, %v2280
    %v2892 = vsel %vm2855, %v2827, %v2282
    %v2893 = vsel %vm2855, %v2828, %v2284
    %v2894 = vsel %vm2855, %v2829, %v2286
    %v2895 = vsel %vm2855, %v2830, %v2288
    %v2896 = vsel %vm2855, %v2831, %v2290
    %v2897 = vsel %vm2855, %v2832, %v2292
    %v2898 = vsel %vm2855, %v2833, %v2294
    %v2899 = vsel %vm2855, %v2834, %v2296
    %v2900 = vsel %vm2855, %v2835, %v2298
    %v2901 = vsel %vm2855, %v2836, %v2300
    %v2902 = vsel %vm2855, %v2837, %v2302
    %v2903 = vsel %vm2855, %v2838, %v2304
    %v2904 = vsel %vm2855, %v2839, %v2306
    %v2905 = vsel %vm2855, %v2840, %v2308
    %v2906 = vsel %vm2855, %v2841, %v2310
    %v2907 = vsel %vm2855, %v2842, %v2312
    %v2908 = vsel %vm2855, %v2843, %v2314
    %v2909 = vsel %vm2855, %v2844, %v2316
    %v2910 = vsel %vm2855, %v2845, %v2318
    %v2911 = vsel %vm2855, %v2846, %v2320
    %v2912 = vsel %vm2855, %v2847, %v2322
    %v2913 = vsel %vm2855, %v2848, %v2324
    %v2914 = vsel %vm2855, %v2849, %v2326
    %v2915 = vsel %vm2855, %v2850, %v2328
    %v2916 = vsel %vm2855, %v2851, %v2330
    %v2917 = vsel %vm2855, %v2852, %v2332
    %v2918 = vsel %vm2855, %v2853, %v2334
    %v2919 = vsel %vm2855, %v2854, %v2336
    %v2920 = vld [vmem:[%s1] sm:$0xff]
    %v2921 = vld [vmem:[%s1 + $0x8] sm:$0xff]
    %v2922 = vld [vmem:[%s1 + $0x10] sm:$0xff]
    %v2923 = vld [vmem:[%s1 + $0x18] sm:$0xff]
    %v2924 = vld [vmem:[%s1 + $0x20] sm:$0xf]
    %v2925 = vld [vmem:[#allocation4] sm:$0x1]
    %v2927 = vperm.slane %v2925, 0
    %vm2929 = vcmask 293888
    %v2931 = vsel %vm2929, %v2856, 0
    %v2934 = vsel %vm2929, %v2857, 0
    %v2937 = vsel %vm2929, %v2858, 0
    %v2940 = vsel %vm2929, %v2859, 0
    %v2943 = vsel %vm2929, %v2860, 0
    %v2946 = vsel %vm2929, %v2861, 0
    %v2949 = vsel %vm2929, %v2862, 0
    %v2952 = vsel %vm2929, %v2863, 0
    %v2955 = vsel %vm2929, %v2864, 0
    %v2958 = vsel %vm2929, %v2865, 0
    %v2961 = vsel %vm2929, %v2866, 0
    %v2964 = vsel %vm2929, %v2867, 0
    %v2967 = vsel %vm2929, %v2868, 0
    %v2970 = vsel %vm2929, %v2869, 0
    %v2973 = vsel %vm2929, %v2870, 0
    %v2976 = vsel %vm2929, %v2871, 0
    %v2979 = vsel %vm2929, %v2872, 0
    %v2982 = vsel %vm2929, %v2873, 0
    %v2985 = vsel %vm2929, %v2874, 0
    %v2988 = vsel %vm2929, %v2875, 0
    %v2991 = vsel %vm2929, %v2876, 0
    %v2994 = vsel %vm2929, %v2877, 0
    %v2997 = vsel %vm2929, %v2878, 0
    %v3000 = vsel %vm2929, %v2879, 0
    %v3003 = vsel %vm2929, %v2880, 0
    %v3006 = vsel %vm2929, %v2881, 0
    %v3009 = vsel %vm2929, %v2882, 0
    %v3012 = vsel %vm2929, %v2883, 0
    %v3015 = vsel %vm2929, %v2884, 0
    %v3018 = vsel %vm2929, %v2885, 0
    %v3021 = vsel %vm2929, %v2886, 0
    %v3024 = vsel %vm2929, %v2887, 0
    %v3027 = vsel %vm2929, %v2888, 0
    %v3030 = vsel %vm2929, %v2889, 0
    %v3033 = vsel %vm2929, %v2890, 0
    %v3036 = vsel %vm2929, %v2891, 0
    %v3039 = vsel %vm2929, %v2892, 0
    %v3042 = vsel %vm2929, %v2893, 0
    %v3045 = vsel %vm2929, %v2894, 0
    %v3048 = vsel %vm2929, %v2895, 0
    %v3051 = vsel %vm2929, %v2896, 0
    %v3054 = vsel %vm2929, %v2897, 0
    %v3057 = vsel %vm2929, %v2898, 0
    %v3060 = vsel %vm2929, %v2899, 0
    %v3063 = vsel %vm2929, %v2900, 0
    %v3066 = vsel %vm2929, %v2901, 0
    %v3069 = vsel %vm2929, %v2902, 0
    %v3072 = vsel %vm2929, %v2903, 0
    %v3075 = vsel %vm2929, %v2904, 0
    %v3078 = vsel %vm2929, %v2905, 0
    %v3081 = vsel %vm2929, %v2906, 0
    %v3084 = vsel %vm2929, %v2907, 0
    %v3087 = vsel %vm2929, %v2908, 0
    %v3090 = vsel %vm2929, %v2909, 0
    %v3093 = vsel %vm2929, %v2910, 0
    %v3096 = vsel %vm2929, %v2911, 0
    %v3099 = vsel %vm2929, %v2912, 0
    %v3102 = vsel %vm2929, %v2913, 0
    %v3105 = vsel %vm2929, %v2914, 0
    %v3108 = vsel %vm2929, %v2915, 0
    %v3111 = vsel %vm2929, %v2916, 0
    %v3114 = vsel %vm2929, %v2917, 0
    %v3117 = vsel %vm2929, %v2918, 0
    %v3120 = vsel %vm2929, %v2919, 0
    %vm3122 = vcmask 1043456
    %v3124 = vsel %vm3122, %v2924, 0
    %3126 = vmatpush.msra.mxu0 0.0
    %3127 = vmatpush.msra.mxu0 0.0
    %3128 = vmatpush.msra.mxu0 0.0
    %3129 = vmatpush.msra.mxu0 0.0
    %3130 = vmatpush.msra.mxu0 0.0
    %3131 = vmatpush.msra.mxu0 0.0
    %3132 = vmatpush.msra.mxu0 0.0
    %3133 = vmatpush.msra.mxu0 0.0
    %3134 = vmatpush.msra.mxu0 0.0
    %3135 = vmatpush.msra.mxu0 0.0
    %3136 = vmatpush.msra.mxu0 0.0
    %3137 = vmatpush.msra.mxu0 %v3124
    %3138 = vmatpush.msra.mxu0 %v2923
    %3139 = vmatpush.msra.mxu0 %v2922
    %3140 = vmatpush.msra.mxu0 %v2921
    %3141 = vmatpush.msra.mxu0 %v2920
    %3142 = vmatmul.f32.gmra.mxu0 %v2931
    %v3143 = vpop.f32.mrf.mxu0
    %v3144 = vadd.f32 %v2927, %v3143
    %3145 = vmatmul.f32.gmra.mxu0 %v2934
    %v3146 = vpop.f32.mrf.mxu0
    %v3147 = vadd.f32 %v2927, %v3146
    %3148 = vmatmul.f32.gmra.mxu0 %v2937
    %v3149 = vpop.f32.mrf.mxu0
    %v3150 = vadd.f32 %v2927, %v3149
    %3151 = vmatmul.f32.gmra.mxu0 %v2940
    %v3152 = vpop.f32.mrf.mxu0
    %v3153 = vadd.f32 %v2927, %v3152
    %3154 = vmatmul.f32.gmra.mxu0 %v2943
    %v3155 = vpop.f32.mrf.mxu0
    %v3156 = vadd.f32 %v2927, %v3155
    %3157 = vmatmul.f32.gmra.mxu0 %v2946
    %v3158 = vpop.f32.mrf.mxu0
    %v3159 = vadd.f32 %v2927, %v3158
    %3160 = vmatmul.f32.gmra.mxu0 %v2949
    %v3161 = vpop.f32.mrf.mxu0
    %v3162 = vadd.f32 %v2927, %v3161
    %3163 = vmatmul.f32.gmra.mxu0 %v2952
    %v3164 = vpop.f32.mrf.mxu0
    %v3165 = vadd.f32 %v2927, %v3164
    %3166 = vmatmul.f32.gmra.mxu0 %v2955
    %v3167 = vpop.f32.mrf.mxu0
    %v3168 = vadd.f32 %v2927, %v3167
    %3169 = vmatmul.f32.gmra.mxu0 %v2958
    %v3170 = vpop.f32.mrf.mxu0
    %v3171 = vadd.f32 %v2927, %v3170
    %3172 = vmatmul.f32.gmra.mxu0 %v2961
    %v3173 = vpop.f32.mrf.mxu0
    %v3174 = vadd.f32 %v2927, %v3173
    %3175 = vmatmul.f32.gmra.mxu0 %v2964
    %v3176 = vpop.f32.mrf.mxu0
    %v3177 = vadd.f32 %v2927, %v3176
    %3178 = vmatmul.f32.gmra.mxu0 %v2967
    %v3179 = vpop.f32.mrf.mxu0
    %v3180 = vadd.f32 %v2927, %v3179
    %3181 = vmatmul.f32.gmra.mxu0 %v2970
    %v3182 = vpop.f32.mrf.mxu0
    %v3183 = vadd.f32 %v2927, %v3182
    %3184 = vmatmul.f32.gmra.mxu0 %v2973
    %v3185 = vpop.f32.mrf.mxu0
    %v3186 = vadd.f32 %v2927, %v3185
    %3187 = vmatmul.f32.gmra.mxu0 %v2976
    %v3188 = vpop.f32.mrf.mxu0
    %v3189 = vadd.f32 %v2927, %v3188
    %3190 = vmatmul.f32.gmra.mxu0 %v2979
    %v3191 = vpop.f32.mrf.mxu0
    %v3192 = vadd.f32 %v2927, %v3191
    %3193 = vmatmul.f32.gmra.mxu0 %v2982
    %v3194 = vpop.f32.mrf.mxu0
    %v3195 = vadd.f32 %v2927, %v3194
    %3196 = vmatmul.f32.gmra.mxu0 %v2985
    %v3197 = vpop.f32.mrf.mxu0
    %v3198 = vadd.f32 %v2927, %v3197
    %3199 = vmatmul.f32.gmra.mxu0 %v2988
    %v3200 = vpop.f32.mrf.mxu0
    %v3201 = vadd.f32 %v2927, %v3200
    %3202 = vmatmul.f32.gmra.mxu0 %v2991
    %v3203 = vpop.f32.mrf.mxu0
    %v3204 = vadd.f32 %v2927, %v3203
    %3205 = vmatmul.f32.gmra.mxu0 %v2994
    %v3206 = vpop.f32.mrf.mxu0
    %v3207 = vadd.f32 %v2927, %v3206
    %3208 = vmatmul.f32.gmra.mxu0 %v2997
    %v3209 = vpop.f32.mrf.mxu0
    %v3210 = vadd.f32 %v2927, %v3209
    %3211 = vmatmul.f32.gmra.mxu0 %v3000
    %v3212 = vpop.f32.mrf.mxu0
    %v3213 = vadd.f32 %v2927, %v3212
    %3214 = vmatmul.f32.gmra.mxu0 %v3003
    %v3215 = vpop.f32.mrf.mxu0
    %v3216 = vadd.f32 %v2927, %v3215
    %3217 = vmatmul.f32.gmra.mxu0 %v3006
    %v3218 = vpop.f32.mrf.mxu0
    %v3219 = vadd.f32 %v2927, %v3218
    %3220 = vmatmul.f32.gmra.mxu0 %v3009
    %v3221 = vpop.f32.mrf.mxu0
    %v3222 = vadd.f32 %v2927, %v3221
    %3223 = vmatmul.f32.gmra.mxu0 %v3012
    %v3224 = vpop.f32.mrf.mxu0
    %v3225 = vadd.f32 %v2927, %v3224
    %3226 = vmatmul.f32.gmra.mxu0 %v3015
    %v3227 = vpop.f32.mrf.mxu0
    %v3228 = vadd.f32 %v2927, %v3227
    %3229 = vmatmul.f32.gmra.mxu0 %v3018
    %v3230 = vpop.f32.mrf.mxu0
    %v3231 = vadd.f32 %v2927, %v3230
    %3232 = vmatmul.f32.gmra.mxu0 %v3021
    %v3233 = vpop.f32.mrf.mxu0
    %v3234 = vadd.f32 %v2927, %v3233
    %3235 = vmatmul.f32.gmra.mxu0 %v3024
    %v3236 = vpop.f32.mrf.mxu0
    %v3237 = vadd.f32 %v2927, %v3236
    %3238 = vmatmul.f32.gmra.mxu0 %v3027
    %v3239 = vpop.f32.mrf.mxu0
    %v3240 = vadd.f32 %v2927, %v3239
    %3241 = vmatmul.f32.gmra.mxu0 %v3030
    %v3242 = vpop.f32.mrf.mxu0
    %v3243 = vadd.f32 %v2927, %v3242
    %3244 = vmatmul.f32.gmra.mxu0 %v3033
    %v3245 = vpop.f32.mrf.mxu0
    %v3246 = vadd.f32 %v2927, %v3245
    %3247 = vmatmul.f32.gmra.mxu0 %v3036
    %v3248 = vpop.f32.mrf.mxu0
    %v3249 = vadd.f32 %v2927, %v3248
    %3250 = vmatmul.f32.gmra.mxu0 %v3039
    %v3251 = vpop.f32.mrf.mxu0
    %v3252 = vadd.f32 %v2927, %v3251
    %3253 = vmatmul.f32.gmra.mxu0 %v3042
    %v3254 = vpop.f32.mrf.mxu0
    %v3255 = vadd.f32 %v2927, %v3254
    %3256 = vmatmul.f32.gmra.mxu0 %v3045
    %v3257 = vpop.f32.mrf.mxu0
    %v3258 = vadd.f32 %v2927, %v3257
    %3259 = vmatmul.f32.gmra.mxu0 %v3048
    %v3260 = vpop.f32.mrf.mxu0
    %v3261 = vadd.f32 %v2927, %v3260
    %3262 = vmatmul.f32.gmra.mxu0 %v3051
    %v3263 = vpop.f32.mrf.mxu0
    %v3264 = vadd.f32 %v2927, %v3263
    %3265 = vmatmul.f32.gmra.mxu0 %v3054
    %v3266 = vpop.f32.mrf.mxu0
    %v3267 = vadd.f32 %v2927, %v3266
    %3268 = vmatmul.f32.gmra.mxu0 %v3057
    %v3269 = vpop.f32.mrf.mxu0
    %v3270 = vadd.f32 %v2927, %v3269
    %3271 = vmatmul.f32.gmra.mxu0 %v3060
    %v3272 = vpop.f32.mrf.mxu0
    %v3273 = vadd.f32 %v2927, %v3272
    %3274 = vmatmul.f32.gmra.mxu0 %v3063
    %v3275 = vpop.f32.mrf.mxu0
    %v3276 = vadd.f32 %v2927, %v3275
    %3277 = vmatmul.f32.gmra.mxu0 %v3066
    %v3278 = vpop.f32.mrf.mxu0
    %v3279 = vadd.f32 %v2927, %v3278
    %3280 = vmatmul.f32.gmra.mxu0 %v3069
    %v3281 = vpop.f32.mrf.mxu0
    %v3282 = vadd.f32 %v2927, %v3281
    %3283 = vmatmul.f32.gmra.mxu0 %v3072
    %v3284 = vpop.f32.mrf.mxu0
    %v3285 = vadd.f32 %v2927, %v3284
    %3286 = vmatmul.f32.gmra.mxu0 %v3075
    %v3287 = vpop.f32.mrf.mxu0
    %v3288 = vadd.f32 %v2927, %v3287
    %3289 = vmatmul.f32.gmra.mxu0 %v3078
    %v3290 = vpop.f32.mrf.mxu0
    %v3291 = vadd.f32 %v2927, %v3290
    %3292 = vmatmul.f32.gmra.mxu0 %v3081
    %v3293 = vpop.f32.mrf.mxu0
    %v3294 = vadd.f32 %v2927, %v3293
    %3295 = vmatmul.f32.gmra.mxu0 %v3084
    %v3296 = vpop.f32.mrf.mxu0
    %v3297 = vadd.f32 %v2927, %v3296
    %3298 = vmatmul.f32.gmra.mxu0 %v3087
    %v3299 = vpop.f32.mrf.mxu0
    %v3300 = vadd.f32 %v2927, %v3299
    %3301 = vmatmul.f32.gmra.mxu0 %v3090
    %v3302 = vpop.f32.mrf.mxu0
    %v3303 = vadd.f32 %v2927, %v3302
    %3304 = vmatmul.f32.gmra.mxu0 %v3093
    %v3305 = vpop.f32.mrf.mxu0
    %v3306 = vadd.f32 %v2927, %v3305
    %3307 = vmatmul.f32.gmra.mxu0 %v3096
    %v3308 = vpop.f32.mrf.mxu0
    %v3309 = vadd.f32 %v2927, %v3308
    %3310 = vmatmul.f32.gmra.mxu0 %v3099
    %v3311 = vpop.f32.mrf.mxu0
    %v3312 = vadd.f32 %v2927, %v3311
    %3313 = vmatmul.f32.gmra.mxu0 %v3102
    %v3314 = vpop.f32.mrf.mxu0
    %v3315 = vadd.f32 %v2927, %v3314
    %3316 = vmatmul.f32.gmra.mxu0 %v3105
    %v3317 = vpop.f32.mrf.mxu0
    %v3318 = vadd.f32 %v2927, %v3317
    %3319 = vmatmul.f32.gmra.mxu0 %v3108
    %v3320 = vpop.f32.mrf.mxu0
    %v3321 = vadd.f32 %v2927, %v3320
    %3322 = vmatmul.f32.gmra.mxu0 %v3111
    %v3323 = vpop.f32.mrf.mxu0
    %v3324 = vadd.f32 %v2927, %v3323
    %3325 = vmatmul.f32.gmra.mxu0 %v3114
    %v3326 = vpop.f32.mrf.mxu0
    %v3327 = vadd.f32 %v2927, %v3326
    %3328 = vmatmul.f32.gmra.mxu0 %v3117
    %v3329 = vpop.f32.mrf.mxu0
    %v3330 = vadd.f32 %v2927, %v3329
    %3331 = vmatmul.f32.gmra.mxu0 %v3120
    %v3332 = vpop.f32.mrf.mxu0
    %v3333 = vadd.f32 %v2927, %v3332
    %3334 = vdwg.mxu0
    %v3335 = vmax.f32 %v3144, 0.0
    %v3336 = vmax.f32 %v3147, 0.0
    %v3337 = vmax.f32 %v3150, 0.0
    %v3338 = vmax.f32 %v3153, 0.0
    %v3339 = vmax.f32 %v3156, 0.0
    %v3340 = vmax.f32 %v3159, 0.0
    %v3341 = vmax.f32 %v3162, 0.0
    %v3342 = vmax.f32 %v3165, 0.0
    %v3343 = vmax.f32 %v3168, 0.0
    %v3344 = vmax.f32 %v3171, 0.0
    %v3345 = vmax.f32 %v3174, 0.0
    %v3346 = vmax.f32 %v3177, 0.0
    %v3347 = vmax.f32 %v3180, 0.0
    %v3348 = vmax.f32 %v3183, 0.0
    %v3349 = vmax.f32 %v3186, 0.0
    %v3350 = vmax.f32 %v3189, 0.0
    %v3351 = vmax.f32 %v3192, 0.0
    %v3352 = vmax.f32 %v3195, 0.0
    %v3353 = vmax.f32 %v3198, 0.0
    %v3354 = vmax.f32 %v3201, 0.0
    %v3355 = vmax.f32 %v3204, 0.0
    %v3356 = vmax.f32 %v3207, 0.0
    %v3357 = vmax.f32 %v3210, 0.0
    %v3358 = vmax.f32 %v3213, 0.0
    %v3359 = vmax.f32 %v3216, 0.0
    %v3360 = vmax.f32 %v3219, 0.0
    %v3361 = vmax.f32 %v3222, 0.0
    %v3362 = vmax.f32 %v3225, 0.0
    %v3363 = vmax.f32 %v3228, 0.0
    %v3364 = vmax.f32 %v3231, 0.0
    %v3365 = vmax.f32 %v3234, 0.0
    %v3366 = vmax.f32 %v3237, 0.0
    %v3367 = vmax.f32 %v3240, 0.0
    %v3368 = vmax.f32 %v3243, 0.0
    %v3369 = vmax.f32 %v3246, 0.0
    %v3370 = vmax.f32 %v3249, 0.0
    %v3371 = vmax.f32 %v3252, 0.0
    %v3372 = vmax.f32 %v3255, 0.0
    %v3373 = vmax.f32 %v3258, 0.0
    %v3374 = vmax.f32 %v3261, 0.0
    %v3375 = vmax.f32 %v3264, 0.0
    %v3376 = vmax.f32 %v3267, 0.0
    %v3377 = vmax.f32 %v3270, 0.0
    %v3378 = vmax.f32 %v3273, 0.0
    %v3379 = vmax.f32 %v3276, 0.0
    %v3380 = vmax.f32 %v3279, 0.0
    %v3381 = vmax.f32 %v3282, 0.0
    %v3382 = vmax.f32 %v3285, 0.0
    %v3383 = vmax.f32 %v3288, 0.0
    %v3384 = vmax.f32 %v3291, 0.0
    %v3385 = vmax.f32 %v3294, 0.0
    %v3386 = vmax.f32 %v3297, 0.0
    %v3387 = vmax.f32 %v3300, 0.0
    %v3388 = vmax.f32 %v3303, 0.0
    %v3389 = vmax.f32 %v3306, 0.0
    %v3390 = vmax.f32 %v3309, 0.0
    %v3391 = vmax.f32 %v3312, 0.0
    %v3392 = vmax.f32 %v3315, 0.0
    %v3393 = vmax.f32 %v3318, 0.0
    %v3394 = vmax.f32 %v3321, 0.0
    %v3395 = vmax.f32 %v3324, 0.0
    %v3396 = vmax.f32 %v3327, 0.0
    %v3397 = vmax.f32 %v3330, 0.0
    %v3398 = vmax.f32 %v3333, 0.0
    %3399 = vst.msk [vmem:[#allocation3] sm:$0xff] %vm2855, 0.0
    %3400 = vst.msk [vmem:[#allocation3 + $0x8] sm:$0xff] %vm2855, 0.0
    %vm3401 = vcmask 254976
    %3402 = vst.msk [vmem:[#allocation3 + $0x10] sm:$0x3] %vm3401, 0.0
    %3403 = vst.msk [vmem:[#allocation3 + $0x18] sm:$0xff] %vm2855, 0.0
    %3404 = vst.msk [vmem:[#allocation3 + $0x20] sm:$0xff] %vm2855, 0.0
    %3405 = vst.msk [vmem:[#allocation3 + $0x28] sm:$0x3] %vm3401, 0.0
    %3406 = vst.msk [vmem:[#allocation3 + $0x30] sm:$0xff] %vm2855, 0.0
    %3407 = vst.msk [vmem:[#allocation3 + $0x38] sm:$0xff] %vm2855, 0.0
    %3408 = vst.msk [vmem:[#allocation3 + $0x40] sm:$0x3] %vm3401, 0.0
    %3409 = vst.msk [vmem:[#allocation3 + $0x48] sm:$0xff] %vm2855, 0.0
    %3410 = vst.msk [vmem:[#allocation3 + $0x50] sm:$0xff] %vm2855, 0.0
    %3411 = vst.msk [vmem:[#allocation3 + $0x58] sm:$0x3] %vm3401, 0.0
    %3412 = vst.msk [vmem:[#allocation3 + $0x60] sm:$0xff] %vm2855, 0.0
    %3413 = vst.msk [vmem:[#allocation3 + $0x68] sm:$0xff] %vm2855, 0.0
    %3414 = vst.msk [vmem:[#allocation3 + $0x70] sm:$0x3] %vm3401, 0.0
    %3415 = vst.msk [vmem:[#allocation3 + $0x78] sm:$0xff] %vm2855, 0.0
    %3416 = vst.msk [vmem:[#allocation3 + $0x80] sm:$0xff] %vm2855, 0.0
    %3417 = vst.msk [vmem:[#allocation3 + $0x88] sm:$0x3] %vm3401, 0.0
    %3418 = vst.msk [vmem:[#allocation3 + $0x90] sm:$0xff] %vm2855, 0.0
    %3419 = vst.msk [vmem:[#allocation3 + $0x98] sm:$0xff] %vm2855, 0.0
    %3420 = vst.msk [vmem:[#allocation3 + $0xa0] sm:$0x3] %vm3401, 0.0
    %3421 = vst.msk [vmem:[#allocation3 + $0xa8] sm:$0xff] %vm2855, 0.0
    %3422 = vst.msk [vmem:[#allocation3 + $0xb0] sm:$0xff] %vm2855, 0.0
    %3423 = vst.msk [vmem:[#allocation3 + $0xb8] sm:$0x3] %vm3401, 0.0
    %3424 = vst.msk [vmem:[#allocation3 + $0xc0] sm:$0xff] %vm2855, 0.0
    %3425 = vst.msk [vmem:[#allocation3 + $0xc8] sm:$0xff] %vm2855, 0.0
    %3426 = vst.msk [vmem:[#allocation3 + $0xd0] sm:$0x3] %vm3401, 0.0
    %3427 = vst.msk [vmem:[#allocation3 + $0xd8] sm:$0xff] %vm2855, 0.0
    %3428 = vst.msk [vmem:[#allocation3 + $0xe0] sm:$0xff] %vm2855, 0.0
    %3429 = vst.msk [vmem:[#allocation3 + $0xe8] sm:$0x3] %vm3401, 0.0
    %3430 = vst.msk [vmem:[#allocation3 + $0xf0] sm:$0xff] %vm2855, 0.0
    %3431 = vst.msk [vmem:[#allocation3 + $0xf8] sm:$0xff] %vm2855, 0.0
    %3432 = vst.msk [vmem:[#allocation3 + $0x100] sm:$0x3] %vm3401, 0.0
    %3433 = vst.msk [vmem:[#allocation3 + $0x108] sm:$0xff] %vm2855, 0.0
    %3434 = vst.msk [vmem:[#allocation3 + $0x110] sm:$0xff] %vm2855, 0.0
    %3435 = vst.msk [vmem:[#allocation3 + $0x118] sm:$0x3] %vm3401, 0.0
    %3436 = vst.msk [vmem:[#allocation3 + $0x120] sm:$0xff] %vm2855, 0.0
    %3437 = vst.msk [vmem:[#allocation3 + $0x128] sm:$0xff] %vm2855, 0.0
    %3438 = vst.msk [vmem:[#allocation3 + $0x130] sm:$0x3] %vm3401, 0.0
    %3439 = vst.msk [vmem:[#allocation3 + $0x138] sm:$0xff] %vm2855, 0.0
    %3440 = vst.msk [vmem:[#allocation3 + $0x140] sm:$0xff] %vm2855, 0.0
    %3441 = vst.msk [vmem:[#allocation3 + $0x148] sm:$0x3] %vm3401, 0.0
    %3442 = vst.msk [vmem:[#allocation3 + $0x150] sm:$0xff] %vm2855, 0.0
    %3443 = vst.msk [vmem:[#allocation3 + $0x158] sm:$0xff] %vm2855, 0.0
    %3444 = vst.msk [vmem:[#allocation3 + $0x160] sm:$0x3] %vm3401, 0.0
    %3445 = vst.msk [vmem:[#allocation3 + $0x168] sm:$0xff] %vm2855, 0.0
    %3446 = vst.msk [vmem:[#allocation3 + $0x170] sm:$0xff] %vm2855, 0.0
    %3447 = vst.msk [vmem:[#allocation3 + $0x178] sm:$0x3] %vm3401, 0.0
    %3448 = vst.msk [vmem:[#allocation3 + $0x180] sm:$0xff] %vm2855, 0.0
    %3449 = vst.msk [vmem:[#allocation3 + $0x188] sm:$0xff] %vm2855, 0.0
    %3450 = vst.msk [vmem:[#allocation3 + $0x190] sm:$0x3] %vm3401, 0.0
    %3451 = vst.msk [vmem:[#allocation3 + $0x198] sm:$0xff] %vm2855, 0.0
    %3452 = vst.msk [vmem:[#allocation3 + $0x1a0] sm:$0xff] %vm2855, 0.0
    %3453 = vst.msk [vmem:[#allocation3 + $0x1a8] sm:$0x3] %vm3401, 0.0
    %3454 = vst.msk [vmem:[#allocation3 + $0x1b0] sm:$0xff] %vm2855, 0.0
    %3455 = vst.msk [vmem:[#allocation3 + $0x1b8] sm:$0xff] %vm2855, 0.0
    %3456 = vst.msk [vmem:[#allocation3 + $0x1c0] sm:$0x3] %vm3401, 0.0
    %3457 = vst.msk [vmem:[#allocation3 + $0x1c8] sm:$0xff] %vm2855, 0.0
    %3458 = vst.msk [vmem:[#allocation3 + $0x1d0] sm:$0xff] %vm2855, 0.0
    %3459 = vst.msk [vmem:[#allocation3 + $0x1d8] sm:$0x3] %vm3401, 0.0
    %3460 = vst.msk [vmem:[#allocation3 + $0x1e0] sm:$0xff] %vm2855, 0.0
    %3461 = vst.msk [vmem:[#allocation3 + $0x1e8] sm:$0xff] %vm2855, 0.0
    %3462 = vst.msk [vmem:[#allocation3 + $0x1f0] sm:$0x3] %vm3401, 0.0
    %3463 = vst.msk [vmem:[#allocation3 + $0x1f8] sm:$0xff] %vm2855, 0.0
    %3464 = vst.msk [vmem:[#allocation3 + $0x200] sm:$0xff] %vm2855, 0.0
    %3465 = vst.msk [vmem:[#allocation3 + $0x208] sm:$0x3] %vm3401, 0.0
    %3466 = vst.msk [vmem:[#allocation3 + $0x210] sm:$0xff] %vm2855, 0.0
    %3467 = vst.msk [vmem:[#allocation3 + $0x218] sm:$0xff] %vm2855, 0.0
    %3468 = vst.msk [vmem:[#allocation3 + $0x220] sm:$0x3] %vm3401, 0.0
    %3469 = vst.msk [vmem:[#allocation3 + $0x228] sm:$0xff] %vm2855, 0.0
    %3470 = vst.msk [vmem:[#allocation3 + $0x230] sm:$0xff] %vm2855, 0.0
    %3471 = vst.msk [vmem:[#allocation3 + $0x238] sm:$0x3] %vm3401, 0.0
    %3472 = vst.msk [vmem:[#allocation3 + $0x240] sm:$0xff] %vm2855, 0.0
    %3473 = vst.msk [vmem:[#allocation3 + $0x248] sm:$0xff] %vm2855, 0.0
    %3474 = vst.msk [vmem:[#allocation3 + $0x250] sm:$0x3] %vm3401, 0.0
    %3475 = vst.msk [vmem:[#allocation3 + $0x258] sm:$0xff] %vm2855, 0.0
    %3476 = vst.msk [vmem:[#allocation3 + $0x260] sm:$0xff] %vm2855, 0.0
    %3477 = vst.msk [vmem:[#allocation3 + $0x268] sm:$0x3] %vm3401, 0.0
    %3478 = vst.msk [vmem:[#allocation3 + $0x270] sm:$0xff] %vm2855, 0.0
    %3479 = vst.msk [vmem:[#allocation3 + $0x278] sm:$0xff] %vm2855, 0.0
    %3480 = vst.msk [vmem:[#allocation3 + $0x280] sm:$0x3] %vm3401, 0.0
    %3481 = vst.msk [vmem:[#allocation3 + $0x288] sm:$0xff] %vm2855, 0.0
    %3482 = vst.msk [vmem:[#allocation3 + $0x290] sm:$0xff] %vm2855, 0.0
    %3483 = vst.msk [vmem:[#allocation3 + $0x298] sm:$0x3] %vm3401, 0.0
    %3484 = vst.msk [vmem:[#allocation3 + $0x2a0] sm:$0xff] %vm2855, 0.0
    %3485 = vst.msk [vmem:[#allocation3 + $0x2a8] sm:$0xff] %vm2855, 0.0
    %3486 = vst.msk [vmem:[#allocation3 + $0x2b0] sm:$0x3] %vm3401, 0.0
    %3487 = vst.msk [vmem:[#allocation3 + $0x2b8] sm:$0xff] %vm2855, 0.0
    %3488 = vst.msk [vmem:[#allocation3 + $0x2c0] sm:$0xff] %vm2855, 0.0
    %3489 = vst.msk [vmem:[#allocation3 + $0x2c8] sm:$0x3] %vm3401, 0.0
    %3490 = vst.msk [vmem:[#allocation3 + $0x2d0] sm:$0xff] %vm2855, 0.0
    %3491 = vst.msk [vmem:[#allocation3 + $0x2d8] sm:$0xff] %vm2855, 0.0
    %3492 = vst.msk [vmem:[#allocation3 + $0x2e0] sm:$0x3] %vm3401, 0.0
    %3493 = vst.msk [vmem:[#allocation3 + $0x2e8] sm:$0xff] %vm2855, 0.0
    %3494 = vst.msk [vmem:[#allocation3 + $0x2f0] sm:$0xff] %vm2855, 0.0
    %3495 = vst.msk [vmem:[#allocation3 + $0x2f8] sm:$0x3] %vm3401, 0.0
    %3496 = vst.msk [vmem:[#allocation3 + $0x300] sm:$0xff] %vm2855, 0.0
    %3497 = vst.msk [vmem:[#allocation3 + $0x308] sm:$0xff] %vm2855, 0.0
    %3498 = vst.msk [vmem:[#allocation3 + $0x310] sm:$0x3] %vm3401, 0.0
    %3499 = vst.msk [vmem:[#allocation3 + $0x318] sm:$0xff] %vm2855, 0.0
    %3500 = vst.msk [vmem:[#allocation3 + $0x320] sm:$0xff] %vm2855, 0.0
    %3501 = vst.msk [vmem:[#allocation3 + $0x328] sm:$0x3] %vm3401, 0.0
    %3502 = vst.msk [vmem:[#allocation3 + $0x330] sm:$0xff] %vm2855, 0.0
    %3503 = vst.msk [vmem:[#allocation3 + $0x338] sm:$0xff] %vm2855, 0.0
    %3504 = vst.msk [vmem:[#allocation3 + $0x340] sm:$0x3] %vm3401, 0.0
    %3505 = vst.msk [vmem:[#allocation3 + $0x348] sm:$0xff] %vm2855, 0.0
    %3506 = vst.msk [vmem:[#allocation3 + $0x350] sm:$0xff] %vm2855, 0.0
    %3507 = vst.msk [vmem:[#allocation3 + $0x358] sm:$0x3] %vm3401, 0.0
    %s3508 = scalar_lea.vmem [#allocation3], 24
    %3509 = vst.msk [vmem:[%s3508 + $0x1] sm:$0xff] %vm2855, %v3335
    %3510 = vst.msk [vmem:[%s3508 + $0x9] sm:$0xff] %vm2855, %v3336
    %3511 = vst.msk [vmem:[%s3508 + $0x19] sm:$0xff] %vm2855, %v3337
    %3512 = vst.msk [vmem:[%s3508 + $0x21] sm:$0xff] %vm2855, %v3338
    %3513 = vst.msk [vmem:[%s3508 + $0x31] sm:$0xff] %vm2855, %v3339
    %3514 = vst.msk [vmem:[%s3508 + $0x39] sm:$0xff] %vm2855, %v3340
    %3515 = vst.msk [vmem:[%s3508 + $0x49] sm:$0xff] %vm2855, %v3341
    %3516 = vst.msk [vmem:[%s3508 + $0x51] sm:$0xff] %vm2855, %v3342
    %3517 = vst.msk [vmem:[%s3508 + $0x61] sm:$0xff] %vm2855, %v3343
    %3518 = vst.msk [vmem:[%s3508 + $0x69] sm:$0xff] %vm2855, %v3344
    %3519 = vst.msk [vmem:[%s3508 + $0x79] sm:$0xff] %vm2855, %v3345
    %3520 = vst.msk [vmem:[%s3508 + $0x81] sm:$0xff] %vm2855, %v3346
    %3521 = vst.msk [vmem:[%s3508 + $0x91] sm:$0xff] %vm2855, %v3347
    %3522 = vst.msk [vmem:[%s3508 + $0x99] sm:$0xff] %vm2855, %v3348
    %3523 = vst.msk [vmem:[%s3508 + $0xa9] sm:$0xff] %vm2855, %v3349
    %3524 = vst.msk [vmem:[%s3508 + $0xb1] sm:$0xff] %vm2855, %v3350
    %3525 = vst.msk [vmem:[%s3508 + $0xc1] sm:$0xff] %vm2855, %v3351
    %3526 = vst.msk [vmem:[%s3508 + $0xc9] sm:$0xff] %vm2855, %v3352
    %3527 = vst.msk [vmem:[%s3508 + $0xd9] sm:$0xff] %vm2855, %v3353
    %3528 = vst.msk [vmem:[%s3508 + $0xe1] sm:$0xff] %vm2855, %v3354
    %3529 = vst.msk [vmem:[%s3508 + $0xf1] sm:$0xff] %vm2855, %v3355
    %3530 = vst.msk [vmem:[%s3508 + $0xf9] sm:$0xff] %vm2855, %v3356
    %3531 = vst.msk [vmem:[%s3508 + $0x109] sm:$0xff] %vm2855, %v3357
    %3532 = vst.msk [vmem:[%s3508 + $0x111] sm:$0xff] %vm2855, %v3358
    %3533 = vst.msk [vmem:[%s3508 + $0x121] sm:$0xff] %vm2855, %v3359
    %3534 = vst.msk [vmem:[%s3508 + $0x129] sm:$0xff] %vm2855, %v3360
    %3535 = vst.msk [vmem:[%s3508 + $0x139] sm:$0xff] %vm2855, %v3361
    %3536 = vst.msk [vmem:[%s3508 + $0x141] sm:$0xff] %vm2855, %v3362
    %3537 = vst.msk [vmem:[%s3508 + $0x151] sm:$0xff] %vm2855, %v3363
    %3538 = vst.msk [vmem:[%s3508 + $0x159] sm:$0xff] %vm2855, %v3364
    %3539 = vst.msk [vmem:[%s3508 + $0x169] sm:$0xff] %vm2855, %v3365
    %3540 = vst.msk [vmem:[%s3508 + $0x171] sm:$0xff] %vm2855, %v3366
    %3541 = vst.msk [vmem:[%s3508 + $0x1b1] sm:$0xff] %vm2855, %v3367
    %3542 = vst.msk [vmem:[%s3508 + $0x1b9] sm:$0xff] %vm2855, %v3368
    %3543 = vst.msk [vmem:[%s3508 + $0x1c9] sm:$0xff] %vm2855, %v3369
    %3544 = vst.msk [vmem:[%s3508 + $0x1d1] sm:$0xff] %vm2855, %v3370
    %3545 = vst.msk [vmem:[%s3508 + $0x1e1] sm:$0xff] %vm2855, %v3371
    %3546 = vst.msk [vmem:[%s3508 + $0x1e9] sm:$0xff] %vm2855, %v3372
    %3547 = vst.msk [vmem:[%s3508 + $0x1f9] sm:$0xff] %vm2855, %v3373
    %3548 = vst.msk [vmem:[%s3508 + $0x201] sm:$0xff] %vm2855, %v3374
    %3549 = vst.msk [vmem:[%s3508 + $0x211] sm:$0xff] %vm2855, %v3375
    %3550 = vst.msk [vmem:[%s3508 + $0x219] sm:$0xff] %vm2855, %v3376
    %3551 = vst.msk [vmem:[%s3508 + $0x229] sm:$0xff] %vm2855, %v3377
    %3552 = vst.msk [vmem:[%s3508 + $0x231] sm:$0xff] %vm2855, %v3378
    %3553 = vst.msk [vmem:[%s3508 + $0x241] sm:$0xff] %vm2855, %v3379
    %3554 = vst.msk [vmem:[%s3508 + $0x249] sm:$0xff] %vm2855, %v3380
    %3555 = vst.msk [vmem:[%s3508 + $0x259] sm:$0xff] %vm2855, %v3381
    %3556 = vst.msk [vmem:[%s3508 + $0x261] sm:$0xff] %vm2855, %v3382
    %3557 = vst.msk [vmem:[%s3508 + $0x271] sm:$0xff] %vm2855, %v3383
    %3558 = vst.msk [vmem:[%s3508 + $0x279] sm:$0xff] %vm2855, %v3384
    %3559 = vst.msk [vmem:[%s3508 + $0x289] sm:$0xff] %vm2855, %v3385
    %3560 = vst.msk [vmem:[%s3508 + $0x291] sm:$0xff] %vm2855, %v3386
    %3561 = vst.msk [vmem:[%s3508 + $0x2a1] sm:$0xff] %vm2855, %v3387
    %3562 = vst.msk [vmem:[%s3508 + $0x2a9] sm:$0xff] %vm2855, %v3388
    %3563 = vst.msk [vmem:[%s3508 + $0x2b9] sm:$0xff] %vm2855, %v3389
    %3564 = vst.msk [vmem:[%s3508 + $0x2c1] sm:$0xff] %vm2855, %v3390
    %3565 = vst.msk [vmem:[%s3508 + $0x2d1] sm:$0xff] %vm2855, %v3391
    %3566 = vst.msk [vmem:[%s3508 + $0x2d9] sm:$0xff] %vm2855, %v3392
    %3567 = vst.msk [vmem:[%s3508 + $0x2e9] sm:$0xff] %vm2855, %v3393
    %3568 = vst.msk [vmem:[%s3508 + $0x2f1] sm:$0xff] %vm2855, %v3394
    %3569 = vst.msk [vmem:[%s3508 + $0x301] sm:$0xff] %vm2855, %v3395
    %3570 = vst.msk [vmem:[%s3508 + $0x309] sm:$0xff] %vm2855, %v3396
    %3571 = vst.msk [vmem:[%s3508 + $0x319] sm:$0xff] %vm2855, %v3397
    %3572 = vst.msk [vmem:[%s3508 + $0x321] sm:$0xff] %vm2855, %v3398
    %v3573 = vld [vmem:[#allocation3] sm:$0xff]
    %v3574 = vld [vmem:[#allocation3 + $0x8] sm:$0xff]
    %v3575 = vld [vmem:[#allocation3 + $0x10] sm:$0x3]
    %v3576 = vld [vmem:[#allocation3 + $0x18] sm:$0xff]
    %v3577 = vld [vmem:[#allocation3 + $0x20] sm:$0xff]
    %v3578 = vld [vmem:[#allocation3 + $0x28] sm:$0x3]
    %v3579 = vld [vmem:[#allocation3 + $0x30] sm:$0xff]
    %v3580 = vld [vmem:[#allocation3 + $0x38] sm:$0xff]
    %v3581 = vld [vmem:[#allocation3 + $0x40] sm:$0x3]
    %v3582 = vld [vmem:[#allocation3 + $0x48] sm:$0xff]
    %v3583 = vld [vmem:[#allocation3 + $0x50] sm:$0xff]
    %v3584 = vld [vmem:[#allocation3 + $0x58] sm:$0x3]
    %v3585 = vld [vmem:[#allocation3 + $0x60] sm:$0xff]
    %v3586 = vld [vmem:[#allocation3 + $0x68] sm:$0xff]
    %v3587 = vld [vmem:[#allocation3 + $0x70] sm:$0x3]
    %v3588 = vld [vmem:[#allocation3 + $0x78] sm:$0xff]
    %v3589 = vld [vmem:[#allocation3 + $0x80] sm:$0xff]
    %v3590 = vld [vmem:[#allocation3 + $0x88] sm:$0x3]
    %v3591 = vld [vmem:[#allocation3 + $0x90] sm:$0xff]
    %v3592 = vld [vmem:[#allocation3 + $0x98] sm:$0xff]
    %v3593 = vld [vmem:[#allocation3 + $0xa0] sm:$0x3]
    %v3594 = vld [vmem:[#allocation3 + $0xa8] sm:$0xff]
    %v3595 = vld [vmem:[#allocation3 + $0xb0] sm:$0xff]
    %v3596 = vld [vmem:[#allocation3 + $0xb8] sm:$0x3]
    %v3597 = vld [vmem:[#allocation3 + $0xc0] sm:$0xff]
    %v3598 = vld [vmem:[#allocation3 + $0xc8] sm:$0xff]
    %v3599 = vld [vmem:[#allocation3 + $0xd0] sm:$0x3]
    %v3600 = vld [vmem:[#allocation3 + $0xd8] sm:$0xff]
    %v3601 = vld [vmem:[#allocation3 + $0xe0] sm:$0xff]
    %v3602 = vld [vmem:[#allocation3 + $0xe8] sm:$0x3]
    %v3603 = vld [vmem:[#allocation3 + $0xf0] sm:$0xff]
    %v3604 = vld [vmem:[#allocation3 + $0xf8] sm:$0xff]
    %v3605 = vld [vmem:[#allocation3 + $0x100] sm:$0x3]
    %v3606 = vld [vmem:[#allocation3 + $0x108] sm:$0xff]
    %v3607 = vld [vmem:[#allocation3 + $0x110] sm:$0xff]
    %v3608 = vld [vmem:[#allocation3 + $0x118] sm:$0x3]
    %v3609 = vld [vmem:[#allocation3 + $0x120] sm:$0xff]
    %v3610 = vld [vmem:[#allocation3 + $0x128] sm:$0xff]
    %v3611 = vld [vmem:[#allocation3 + $0x130] sm:$0x3]
    %v3612 = vld [vmem:[#allocation3 + $0x138] sm:$0xff]
    %v3613 = vld [vmem:[#allocation3 + $0x140] sm:$0xff]
    %v3614 = vld [vmem:[#allocation3 + $0x148] sm:$0x3]
    %v3615 = vld [vmem:[#allocation3 + $0x150] sm:$0xff]
    %v3616 = vld [vmem:[#allocation3 + $0x158] sm:$0xff]
    %v3617 = vld [vmem:[#allocation3 + $0x160] sm:$0x3]
    %v3618 = vld [vmem:[#allocation3 + $0x168] sm:$0xff]
    %v3619 = vld [vmem:[#allocation3 + $0x170] sm:$0xff]
    %v3620 = vld [vmem:[#allocation3 + $0x178] sm:$0x3]
    %v3621 = vld [vmem:[#allocation3 + $0x180] sm:$0xff]
    %v3622 = vld [vmem:[#allocation3 + $0x188] sm:$0xff]
    %v3623 = vld [vmem:[#allocation3 + $0x190] sm:$0x3]
    %v3624 = vld [vmem:[#allocation3 + $0x198] sm:$0xff]
    %v3625 = vld [vmem:[#allocation3 + $0x1a0] sm:$0xff]
    %v3626 = vld [vmem:[#allocation3 + $0x1a8] sm:$0x3]
    %v3627 = vld [vmem:[#allocation3 + $0x1b0] sm:$0xff]
    %v3628 = vld [vmem:[#allocation3 + $0x1b8] sm:$0xff]
    %v3629 = vld [vmem:[#allocation3 + $0x1c0] sm:$0x3]
    %v3630 = vld [vmem:[#allocation3 + $0x1c8] sm:$0xff]
    %v3631 = vld [vmem:[#allocation3 + $0x1d0] sm:$0xff]
    %v3632 = vld [vmem:[#allocation3 + $0x1d8] sm:$0x3]
    %v3633 = vld [vmem:[#allocation3 + $0x1e0] sm:$0xff]
    %v3634 = vld [vmem:[#allocation3 + $0x1e8] sm:$0xff]
    %v3635 = vld [vmem:[#allocation3 + $0x1f0] sm:$0x3]
    %v3636 = vld [vmem:[#allocation3 + $0x1f8] sm:$0xff]
    %v3637 = vld [vmem:[#allocation3 + $0x200] sm:$0xff]
    %v3638 = vld [vmem:[#allocation3 + $0x208] sm:$0x3]
    %v3639 = vld [vmem:[#allocation3 + $0x210] sm:$0xff]
    %v3640 = vld [vmem:[#allocation3 + $0x218] sm:$0xff]
    %v3641 = vld [vmem:[#allocation3 + $0x220] sm:$0x3]
    %v3642 = vld [vmem:[#allocation3 + $0x228] sm:$0xff]
    %v3643 = vld [vmem:[#allocation3 + $0x230] sm:$0xff]
    %v3644 = vld [vmem:[#allocation3 + $0x238] sm:$0x3]
    %v3645 = vld [vmem:[#allocation3 + $0x240] sm:$0xff]
    %v3646 = vld [vmem:[#allocation3 + $0x248] sm:$0xff]
    %v3647 = vld [vmem:[#allocation3 + $0x250] sm:$0x3]
    %v3648 = vld [vmem:[#allocation3 + $0x258] sm:$0xff]
    %v3649 = vld [vmem:[#allocation3 + $0x260] sm:$0xff]
    %v3650 = vld [vmem:[#allocation3 + $0x268] sm:$0x3]
    %v3651 = vld [vmem:[#allocation3 + $0x270] sm:$0xff]
    %v3652 = vld [vmem:[#allocation3 + $0x278] sm:$0xff]
    %v3653 = vld [vmem:[#allocation3 + $0x280] sm:$0x3]
    %v3654 = vld [vmem:[#allocation3 + $0x288] sm:$0xff]
    %v3655 = vld [vmem:[#allocation3 + $0x290] sm:$0xff]
    %v3656 = vld [vmem:[#allocation3 + $0x298] sm:$0x3]
    %v3657 = vld [vmem:[#allocation3 + $0x2a0] sm:$0xff]
    %v3658 = vld [vmem:[#allocation3 + $0x2a8] sm:$0xff]
    %v3659 = vld [vmem:[#allocation3 + $0x2b0] sm:$0x3]
    %v3660 = vld [vmem:[#allocation3 + $0x2b8] sm:$0xff]
    %v3661 = vld [vmem:[#allocation3 + $0x2c0] sm:$0xff]
    %v3662 = vld [vmem:[#allocation3 + $0x2c8] sm:$0x3]
    %v3663 = vld [vmem:[#allocation3 + $0x2d0] sm:$0xff]
    %v3664 = vld [vmem:[#allocation3 + $0x2d8] sm:$0xff]
    %v3665 = vld [vmem:[#allocation3 + $0x2e0] sm:$0x3]
    %v3666 = vld [vmem:[#allocation3 + $0x2e8] sm:$0xff]
    %v3667 = vld [vmem:[#allocation3 + $0x2f0] sm:$0xff]
    %v3668 = vld [vmem:[#allocation3 + $0x2f8] sm:$0x3]
    %v3669 = vld [vmem:[#allocation3 + $0x300] sm:$0xff]
    %v3670 = vld [vmem:[#allocation3 + $0x308] sm:$0xff]
    %v3671 = vld [vmem:[#allocation3 + $0x310] sm:$0x3]
    %v3672 = vld [vmem:[#allocation3 + $0x318] sm:$0xff]
    %v3673 = vld [vmem:[#allocation3 + $0x320] sm:$0xff]
    %v3674 = vld [vmem:[#allocation3 + $0x328] sm:$0x3]
    %v3675 = vld [vmem:[#allocation3 + $0x330] sm:$0xff]
    %v3676 = vld [vmem:[#allocation3 + $0x338] sm:$0xff]
    %v3677 = vld [vmem:[#allocation3 + $0x340] sm:$0x3]
    %v3678 = vld [vmem:[#allocation3 + $0x348] sm:$0xff]
    %v3679 = vld [vmem:[#allocation3 + $0x350] sm:$0xff]
    %v3680 = vld [vmem:[#allocation3 + $0x358] sm:$0x3]
    %v3777 = vrot.slane %v3573, 1
    %v3778 = vrot.slane %v3574, 1
    %v3779 = vsel %vm491, %v3777, %v3778
    %v3780 = vrot.slane %v3575, 1
    %v3781 = vsel %vm491, %v3778, %v3780
    %v3782 = vrot.slane %v3576, 1
    %v3783 = vrot.slane %v3577, 1
    %v3784 = vsel %vm491, %v3782, %v3783
    %v3785 = vrot.slane %v3578, 1
    %v3786 = vsel %vm491, %v3783, %v3785
    %v3787 = vrot.slane %v3579, 1
    %v3788 = vrot.slane %v3580, 1
    %v3789 = vsel %vm491, %v3787, %v3788
    %v3790 = vrot.slane %v3581, 1
    %v3791 = vsel %vm491, %v3788, %v3790
    %v3792 = vrot.slane %v3582, 1
    %v3793 = vrot.slane %v3583, 1
    %v3794 = vsel %vm491, %v3792, %v3793
    %v3795 = vrot.slane %v3584, 1
    %v3796 = vsel %vm491, %v3793, %v3795
    %v3797 = vrot.slane %v3585, 1
    %v3798 = vrot.slane %v3586, 1
    %v3799 = vsel %vm491, %v3797, %v3798
    %v3800 = vrot.slane %v3587, 1
    %v3801 = vsel %vm491, %v3798, %v3800
    %v3802 = vrot.slane %v3588, 1
    %v3803 = vrot.slane %v3589, 1
    %v3804 = vsel %vm491, %v3802, %v3803
    %v3805 = vrot.slane %v3590, 1
    %v3806 = vsel %vm491, %v3803, %v3805
    %v3807 = vrot.slane %v3591, 1
    %v3808 = vrot.slane %v3592, 1
    %v3809 = vsel %vm491, %v3807, %v3808
    %v3810 = vrot.slane %v3593, 1
    %v3811 = vsel %vm491, %v3808, %v3810
    %v3812 = vrot.slane %v3594, 1
    %v3813 = vrot.slane %v3595, 1
    %v3814 = vsel %vm491, %v3812, %v3813
    %v3815 = vrot.slane %v3596, 1
    %v3816 = vsel %vm491, %v3813, %v3815
    %v3817 = vrot.slane %v3597, 1
    %v3818 = vrot.slane %v3598, 1
    %v3819 = vsel %vm491, %v3817, %v3818
    %v3820 = vrot.slane %v3599, 1
    %v3821 = vsel %vm491, %v3818, %v3820
    %v3822 = vrot.slane %v3600, 1
    %v3823 = vrot.slane %v3601, 1
    %v3824 = vsel %vm491, %v3822, %v3823
    %v3825 = vrot.slane %v3602, 1
    %v3826 = vsel %vm491, %v3823, %v3825
    %v3827 = vrot.slane %v3603, 1
    %v3828 = vrot.slane %v3604, 1
    %v3829 = vsel %vm491, %v3827, %v3828
    %v3830 = vrot.slane %v3605, 1
    %v3831 = vsel %vm491, %v3828, %v3830
    %v3832 = vrot.slane %v3606, 1
    %v3833 = vrot.slane %v3607, 1
    %v3834 = vsel %vm491, %v3832, %v3833
    %v3835 = vrot.slane %v3608, 1
    %v3836 = vsel %vm491, %v3833, %v3835
    %v3837 = vrot.slane %v3609, 1
    %v3838 = vrot.slane %v3610, 1
    %v3839 = vsel %vm491, %v3837, %v3838
    %v3840 = vrot.slane %v3611, 1
    %v3841 = vsel %vm491, %v3838, %v3840
    %v3842 = vrot.slane %v3612, 1
    %v3843 = vrot.slane %v3613, 1
    %v3844 = vsel %vm491, %v3842, %v3843
    %v3845 = vrot.slane %v3614, 1
    %v3846 = vsel %vm491, %v3843, %v3845
    %v3847 = vrot.slane %v3615, 1
    %v3848 = vrot.slane %v3616, 1
    %v3849 = vsel %vm491, %v3847, %v3848
    %v3850 = vrot.slane %v3617, 1
    %v3851 = vsel %vm491, %v3848, %v3850
    %v3852 = vrot.slane %v3618, 1
    %v3853 = vrot.slane %v3619, 1
    %v3854 = vsel %vm491, %v3852, %v3853
    %v3855 = vrot.slane %v3620, 1
    %v3856 = vsel %vm491, %v3853, %v3855
    %v3857 = vrot.slane %v3627, 1
    %v3858 = vrot.slane %v3628, 1
    %v3859 = vsel %vm491, %v3857, %v3858
    %v3860 = vrot.slane %v3629, 1
    %v3861 = vsel %vm491, %v3858, %v3860
    %v3862 = vrot.slane %v3630, 1
    %v3863 = vrot.slane %v3631, 1
    %v3864 = vsel %vm491, %v3862, %v3863
    %v3865 = vrot.slane %v3632, 1
    %v3866 = vsel %vm491, %v3863, %v3865
    %v3867 = vrot.slane %v3633, 1
    %v3868 = vrot.slane %v3634, 1
    %v3869 = vsel %vm491, %v3867, %v3868
    %v3870 = vrot.slane %v3635, 1
    %v3871 = vsel %vm491, %v3868, %v3870
    %v3872 = vrot.slane %v3636, 1
    %v3873 = vrot.slane %v3637, 1
    %v3874 = vsel %vm491, %v3872, %v3873
    %v3875 = vrot.slane %v3638, 1
    %v3876 = vsel %vm491, %v3873, %v3875
    %v3877 = vrot.slane %v3639, 1
    %v3878 = vrot.slane %v3640, 1
    %v3879 = vsel %vm491, %v3877, %v3878
    %v3880 = vrot.slane %v3641, 1
    %v3881 = vsel %vm491, %v3878, %v3880
    %v3882 = vrot.slane %v3642, 1
    %v3883 = vrot.slane %v3643, 1
    %v3884 = vsel %vm491, %v3882, %v3883
    %v3885 = vrot.slane %v3644, 1
    %v3886 = vsel %vm491, %v3883, %v3885
    %v3887 = vrot.slane %v3645, 1
    %v3888 = vrot.slane %v3646, 1
    %v3889 = vsel %vm491, %v3887, %v3888
    %v3890 = vrot.slane %v3647, 1
    %v3891 = vsel %vm491, %v3888, %v3890
    %v3892 = vrot.slane %v3648, 1
    %v3893 = vrot.slane %v3649, 1
    %v3894 = vsel %vm491, %v3892, %v3893
    %v3895 = vrot.slane %v3650, 1
    %v3896 = vsel %vm491, %v3893, %v3895
    %v3897 = vrot.slane %v3651, 1
    %v3898 = vrot.slane %v3652, 1
    %v3899 = vsel %vm491, %v3897, %v3898
    %v3900 = vrot.slane %v3653, 1
    %v3901 = vsel %vm491, %v3898, %v3900
    %v3902 = vrot.slane %v3654, 1
    %v3903 = vrot.slane %v3655, 1
    %v3904 = vsel %vm491, %v3902, %v3903
    %v3905 = vrot.slane %v3656, 1
    %v3906 = vsel %vm491, %v3903, %v3905
    %v3907 = vrot.slane %v3657, 1
    %v3908 = vrot.slane %v3658, 1
    %v3909 = vsel %vm491, %v3907, %v3908
    %v3910 = vrot.slane %v3659, 1
    %v3911 = vsel %vm491, %v3908, %v3910
    %v3912 = vrot.slane %v3660, 1
    %v3913 = vrot.slane %v3661, 1
    %v3914 = vsel %vm491, %v3912, %v3913
    %v3915 = vrot.slane %v3662, 1
    %v3916 = vsel %vm491, %v3913, %v3915
    %v3917 = vrot.slane %v3663, 1
    %v3918 = vrot.slane %v3664, 1
    %v3919 = vsel %vm491, %v3917, %v3918
    %v3920 = vrot.slane %v3665, 1
    %v3921 = vsel %vm491, %v3918, %v3920
    %v3922 = vrot.slane %v3666, 1
    %v3923 = vrot.slane %v3667, 1
    %v3924 = vsel %vm491, %v3922, %v3923
    %v3925 = vrot.slane %v3668, 1
    %v3926 = vsel %vm491, %v3923, %v3925
    %v3927 = vrot.slane %v3669, 1
    %v3928 = vrot.slane %v3670, 1
    %v3929 = vsel %vm491, %v3927, %v3928
    %v3930 = vrot.slane %v3671, 1
    %v3931 = vsel %vm491, %v3928, %v3930
    %v3932 = vrot.slane %v3672, 1
    %v3933 = vrot.slane %v3673, 1
    %v3934 = vsel %vm491, %v3932, %v3933
    %v3935 = vrot.slane %v3674, 1
    %v3936 = vsel %vm491, %v3933, %v3935
    %v3937 = vrot.slane %v3573, 2
    %v3938 = vrot.slane %v3574, 2
    %v3939 = vsel %vm652, %v3937, %v3938
    %v3940 = vrot.slane %v3575, 2
    %v3941 = vsel %vm652, %v3938, %v3940
    %v3942 = vrot.slane %v3576, 2
    %v3943 = vrot.slane %v3577, 2
    %v3944 = vsel %vm652, %v3942, %v3943
    %v3945 = vrot.slane %v3578, 2
    %v3946 = vsel %vm652, %v3943, %v3945
    %v3947 = vrot.slane %v3579, 2
    %v3948 = vrot.slane %v3580, 2
    %v3949 = vsel %vm652, %v3947, %v3948
    %v3950 = vrot.slane %v3581, 2
    %v3951 = vsel %vm652, %v3948, %v3950
    %v3952 = vrot.slane %v3582, 2
    %v3953 = vrot.slane %v3583, 2
    %v3954 = vsel %vm652, %v3952, %v3953
    %v3955 = vrot.slane %v3584, 2
    %v3956 = vsel %vm652, %v3953, %v3955
    %v3957 = vrot.slane %v3585, 2
    %v3958 = vrot.slane %v3586, 2
    %v3959 = vsel %vm652, %v3957, %v3958
    %v3960 = vrot.slane %v3587, 2
    %v3961 = vsel %vm652, %v3958, %v3960
    %v3962 = vrot.slane %v3588, 2
    %v3963 = vrot.slane %v3589, 2
    %v3964 = vsel %vm652, %v3962, %v3963
    %v3965 = vrot.slane %v3590, 2
    %v3966 = vsel %vm652, %v3963, %v3965
    %v3967 = vrot.slane %v3591, 2
    %v3968 = vrot.slane %v3592, 2
    %v3969 = vsel %vm652, %v3967, %v3968
    %v3970 = vrot.slane %v3593, 2
    %v3971 = vsel %vm652, %v3968, %v3970
    %v3972 = vrot.slane %v3594, 2
    %v3973 = vrot.slane %v3595, 2
    %v3974 = vsel %vm652, %v3972, %v3973
    %v3975 = vrot.slane %v3596, 2
    %v3976 = vsel %vm652, %v3973, %v3975
    %v3977 = vrot.slane %v3597, 2
    %v3978 = vrot.slane %v3598, 2
    %v3979 = vsel %vm652, %v3977, %v3978
    %v3980 = vrot.slane %v3599, 2
    %v3981 = vsel %vm652, %v3978, %v3980
    %v3982 = vrot.slane %v3600, 2
    %v3983 = vrot.slane %v3601, 2
    %v3984 = vsel %vm652, %v3982, %v3983
    %v3985 = vrot.slane %v3602, 2
    %v3986 = vsel %vm652, %v3983, %v3985
    %v3987 = vrot.slane %v3603, 2
    %v3988 = vrot.slane %v3604, 2
    %v3989 = vsel %vm652, %v3987, %v3988
    %v3990 = vrot.slane %v3605, 2
    %v3991 = vsel %vm652, %v3988, %v3990
    %v3992 = vrot.slane %v3606, 2
    %v3993 = vrot.slane %v3607, 2
    %v3994 = vsel %vm652, %v3992, %v3993
    %v3995 = vrot.slane %v3608, 2
    %v3996 = vsel %vm652, %v3993, %v3995
    %v3997 = vrot.slane %v3609, 2
    %v3998 = vrot.slane %v3610, 2
    %v3999 = vsel %vm652, %v3997, %v3998
    %v4000 = vrot.slane %v3611, 2
    %v4001 = vsel %vm652, %v3998, %v4000
    %v4002 = vrot.slane %v3612, 2
    %v4003 = vrot.slane %v3613, 2
    %v4004 = vsel %vm652, %v4002, %v4003
    %v4005 = vrot.slane %v3614, 2
    %v4006 = vsel %vm652, %v4003, %v4005
    %v4007 = vrot.slane %v3615, 2
    %v4008 = vrot.slane %v3616, 2
    %v4009 = vsel %vm652, %v4007, %v4008
    %v4010 = vrot.slane %v3617, 2
    %v4011 = vsel %vm652, %v4008, %v4010
    %v4012 = vrot.slane %v3618, 2
    %v4013 = vrot.slane %v3619, 2
    %v4014 = vsel %vm652, %v4012, %v4013
    %v4015 = vrot.slane %v3620, 2
    %v4016 = vsel %vm652, %v4013, %v4015
    %v4017 = vrot.slane %v3627, 2
    %v4018 = vrot.slane %v3628, 2
    %v4019 = vsel %vm652, %v4017, %v4018
    %v4020 = vrot.slane %v3629, 2
    %v4021 = vsel %vm652, %v4018, %v4020
    %v4022 = vrot.slane %v3630, 2
    %v4023 = vrot.slane %v3631, 2
    %v4024 = vsel %vm652, %v4022, %v4023
    %v4025 = vrot.slane %v3632, 2
    %v4026 = vsel %vm652, %v4023, %v4025
    %v4027 = vrot.slane %v3633, 2
    %v4028 = vrot.slane %v3634, 2
    %v4029 = vsel %vm652, %v4027, %v4028
    %v4030 = vrot.slane %v3635, 2
    %v4031 = vsel %vm652, %v4028, %v4030
    %v4032 = vrot.slane %v3636, 2
    %v4033 = vrot.slane %v3637, 2
    %v4034 = vsel %vm652, %v4032, %v4033
    %v4035 = vrot.slane %v3638, 2
    %v4036 = vsel %vm652, %v4033, %v4035
    %v4037 = vrot.slane %v3639, 2
    %v4038 = vrot.slane %v3640, 2
    %v4039 = vsel %vm652, %v4037, %v4038
    %v4040 = vrot.slane %v3641, 2
    %v4041 = vsel %vm652, %v4038, %v4040
    %v4042 = vrot.slane %v3642, 2
    %v4043 = vrot.slane %v3643, 2
    %v4044 = vsel %vm652, %v4042, %v4043
    %v4045 = vrot.slane %v3644, 2
    %v4046 = vsel %vm652, %v4043, %v4045
    %v4047 = vrot.slane %v3645, 2
    %v4048 = vrot.slane %v3646, 2
    %v4049 = vsel %vm652, %v4047, %v4048
    %v4050 = vrot.slane %v3647, 2
    %v4051 = vsel %vm652, %v4048, %v4050
    %v4052 = vrot.slane %v3648, 2
    %v4053 = vrot.slane %v3649, 2
    %v4054 = vsel %vm652, %v4052, %v4053
    %v4055 = vrot.slane %v3650, 2
    %v4056 = vsel %vm652, %v4053, %v4055
    %v4057 = vrot.slane %v3651, 2
    %v4058 = vrot.slane %v3652, 2
    %v4059 = vsel %vm652, %v4057, %v4058
    %v4060 = vrot.slane %v3653, 2
    %v4061 = vsel %vm652, %v4058, %v4060
    %v4062 = vrot.slane %v3654, 2
    %v4063 = vrot.slane %v3655, 2
    %v4064 = vsel %vm652, %v4062, %v4063
    %v4065 = vrot.slane %v3656, 2
    %v4066 = vsel %vm652, %v4063, %v4065
    %v4067 = vrot.slane %v3657, 2
    %v4068 = vrot.slane %v3658, 2
    %v4069 = vsel %vm652, %v4067, %v4068
    %v4070 = vrot.slane %v3659, 2
    %v4071 = vsel %vm652, %v4068, %v4070
    %v4072 = vrot.slane %v3660, 2
    %v4073 = vrot.slane %v3661, 2
    %v4074 = vsel %vm652, %v4072, %v4073
    %v4075 = vrot.slane %v3662, 2
    %v4076 = vsel %vm652, %v4073, %v4075
    %v4077 = vrot.slane %v3663, 2
    %v4078 = vrot.slane %v3664, 2
    %v4079 = vsel %vm652, %v4077, %v4078
    %v4080 = vrot.slane %v3665, 2
    %v4081 = vsel %vm652, %v4078, %v4080
    %v4082 = vrot.slane %v3666, 2
    %v4083 = vrot.slane %v3667, 2
    %v4084 = vsel %vm652, %v4082, %v4083
    %v4085 = vrot.slane %v3668, 2
    %v4086 = vsel %vm652, %v4083, %v4085
    %v4087 = vrot.slane %v3669, 2
    %v4088 = vrot.slane %v3670, 2
    %v4089 = vsel %vm652, %v4087, %v4088
    %v4090 = vrot.slane %v3671, 2
    %v4091 = vsel %vm652, %v4088, %v4090
    %v4092 = vrot.slane %v3672, 2
    %v4093 = vrot.slane %v3673, 2
    %v4094 = vsel %vm652, %v4092, %v4093
    %v4095 = vrot.slane %v3674, 2
    %v4096 = vsel %vm652, %v4093, %v4095
    %v4103 = vrot.slane %v3621, 1
    %v4104 = vrot.slane %v3622, 1
    %v4105 = vsel %vm491, %v4103, %v4104
    %v4106 = vrot.slane %v3623, 1
    %v4107 = vsel %vm491, %v4104, %v4106
    %v4108 = vrot.slane %v3675, 1
    %v4109 = vrot.slane %v3676, 1
    %v4110 = vsel %vm491, %v4108, %v4109
    %v4111 = vrot.slane %v3677, 1
    %v4112 = vsel %vm491, %v4109, %v4111
    %v4177 = vrot.slane %v3621, 2
    %v4178 = vrot.slane %v3622, 2
    %v4179 = vsel %vm652, %v4177, %v4178
    %v4180 = vrot.slane %v3623, 2
    %v4181 = vsel %vm652, %v4178, %v4180
    %v4182 = vrot.slane %v3675, 2
    %v4183 = vrot.slane %v3676, 2
    %v4184 = vsel %vm652, %v4182, %v4183
    %v4185 = vrot.slane %v3677, 2
    %v4186 = vsel %vm652, %v4183, %v4185
    %v4193 = vrot.slane %v3624, 1
    %v4194 = vrot.slane %v3625, 1
    %v4195 = vsel %vm491, %v4193, %v4194
    %v4196 = vrot.slane %v3626, 1
    %v4197 = vsel %vm491, %v4194, %v4196
    %v4198 = vrot.slane %v3678, 1
    %v4199 = vrot.slane %v3679, 1
    %v4200 = vsel %vm491, %v4198, %v4199
    %v4201 = vrot.slane %v3680, 1
    %v4202 = vsel %vm491, %v4199, %v4201
    %v4203 = vrot.slane %v3624, 2
    %v4204 = vrot.slane %v3625, 2
    %v4205 = vsel %vm652, %v4203, %v4204
    %v4206 = vrot.slane %v3626, 2
    %v4207 = vsel %vm652, %v4204, %v4206
    %v4208 = vrot.slane %v3678, 2
    %v4209 = vrot.slane %v3679, 2
    %v4210 = vsel %vm652, %v4208, %v4209
    %v4211 = vrot.slane %v3680, 2
    %v4212 = vsel %vm652, %v4209, %v4211
    %4213 = vrot.lane.b32.xlu0 %v3779, 32
    %v4214 = vpop.permute.xlu0 %4213
    %4215 = vrot.lane.b32.xlu0 %v3781, 32
    %v4216 = vpop.permute.xlu0 %4215
    %4217 = vrot.lane.b32.xlu0 %v3784, 32
    %v4218 = vpop.permute.xlu0 %4217
    %4219 = vrot.lane.b32.xlu0 %v3786, 32
    %v4220 = vpop.permute.xlu0 %4219
    %4221 = vrot.lane.b32.xlu0 %v3789, 32
    %v4222 = vpop.permute.xlu0 %4221
    %4223 = vrot.lane.b32.xlu0 %v3791, 32
    %v4224 = vpop.permute.xlu0 %4223
    %4225 = vrot.lane.b32.xlu0 %v3794, 32
    %v4226 = vpop.permute.xlu0 %4225
    %4227 = vrot.lane.b32.xlu0 %v3796, 32
    %v4228 = vpop.permute.xlu0 %4227
    %4229 = vrot.lane.b32.xlu0 %v3799, 32
    %v4230 = vpop.permute.xlu0 %4229
    %4231 = vrot.lane.b32.xlu0 %v3801, 32
    %v4232 = vpop.permute.xlu0 %4231
    %4233 = vrot.lane.b32.xlu0 %v3804, 32
    %v4234 = vpop.permute.xlu0 %4233
    %4235 = vrot.lane.b32.xlu0 %v3806, 32
    %v4236 = vpop.permute.xlu0 %4235
    %4237 = vrot.lane.b32.xlu0 %v3809, 32
    %v4238 = vpop.permute.xlu0 %4237
    %4239 = vrot.lane.b32.xlu0 %v3811, 32
    %v4240 = vpop.permute.xlu0 %4239
    %4241 = vrot.lane.b32.xlu0 %v3814, 32
    %v4242 = vpop.permute.xlu0 %4241
    %4243 = vrot.lane.b32.xlu0 %v3816, 32
    %v4244 = vpop.permute.xlu0 %4243
    %4245 = vrot.lane.b32.xlu0 %v3819, 32
    %v4246 = vpop.permute.xlu0 %4245
    %4247 = vrot.lane.b32.xlu0 %v3821, 32
    %v4248 = vpop.permute.xlu0 %4247
    %4249 = vrot.lane.b32.xlu0 %v3824, 32
    %v4250 = vpop.permute.xlu0 %4249
    %4251 = vrot.lane.b32.xlu0 %v3826, 32
    %v4252 = vpop.permute.xlu0 %4251
    %4253 = vrot.lane.b32.xlu0 %v3829, 32
    %v4254 = vpop.permute.xlu0 %4253
    %4255 = vrot.lane.b32.xlu0 %v3831, 32
    %v4256 = vpop.permute.xlu0 %4255
    %4257 = vrot.lane.b32.xlu0 %v3834, 32
    %v4258 = vpop.permute.xlu0 %4257
    %4259 = vrot.lane.b32.xlu0 %v3836, 32
    %v4260 = vpop.permute.xlu0 %4259
    %4261 = vrot.lane.b32.xlu0 %v3839, 32
    %v4262 = vpop.permute.xlu0 %4261
    %4263 = vrot.lane.b32.xlu0 %v3841, 32
    %v4264 = vpop.permute.xlu0 %4263
    %4265 = vrot.lane.b32.xlu0 %v3844, 32
    %v4266 = vpop.permute.xlu0 %4265
    %4267 = vrot.lane.b32.xlu0 %v3846, 32
    %v4268 = vpop.permute.xlu0 %4267
    %4269 = vrot.lane.b32.xlu0 %v3849, 32
    %v4270 = vpop.permute.xlu0 %4269
    %4271 = vrot.lane.b32.xlu0 %v3851, 32
    %v4272 = vpop.permute.xlu0 %4271
    %4273 = vrot.lane.b32.xlu0 %v3854, 32
    %v4274 = vpop.permute.xlu0 %4273
    %4275 = vrot.lane.b32.xlu0 %v3856, 32
    %v4276 = vpop.permute.xlu0 %4275
    %4277 = vrot.lane.b32.xlu0 %v3859, 32
    %v4278 = vpop.permute.xlu0 %4277
    %4279 = vrot.lane.b32.xlu0 %v3861, 32
    %v4280 = vpop.permute.xlu0 %4279
    %4281 = vrot.lane.b32.xlu0 %v3864, 32
    %v4282 = vpop.permute.xlu0 %4281
    %4283 = vrot.lane.b32.xlu0 %v3866, 32
    %v4284 = vpop.permute.xlu0 %4283
    %4285 = vrot.lane.b32.xlu0 %v3869, 32
    %v4286 = vpop.permute.xlu0 %4285
    %4287 = vrot.lane.b32.xlu0 %v3871, 32
    %v4288 = vpop.permute.xlu0 %4287
    %4289 = vrot.lane.b32.xlu0 %v3874, 32
    %v4290 = vpop.permute.xlu0 %4289
    %4291 = vrot.lane.b32.xlu0 %v3876, 32
    %v4292 = vpop.permute.xlu0 %4291
    %4293 = vrot.lane.b32.xlu0 %v3879, 32
    %v4294 = vpop.permute.xlu0 %4293
    %4295 = vrot.lane.b32.xlu0 %v3881, 32
    %v4296 = vpop.permute.xlu0 %4295
    %4297 = vrot.lane.b32.xlu0 %v3884, 32
    %v4298 = vpop.permute.xlu0 %4297
    %4299 = vrot.lane.b32.xlu0 %v3886, 32
    %v4300 = vpop.permute.xlu0 %4299
    %4301 = vrot.lane.b32.xlu0 %v3889, 32
    %v4302 = vpop.permute.xlu0 %4301
    %4303 = vrot.lane.b32.xlu0 %v3891, 32
    %v4304 = vpop.permute.xlu0 %4303
    %4305 = vrot.lane.b32.xlu0 %v3894, 32
    %v4306 = vpop.permute.xlu0 %4305
    %4307 = vrot.lane.b32.xlu0 %v3896, 32
    %v4308 = vpop.permute.xlu0 %4307
    %4309 = vrot.lane.b32.xlu0 %v3899, 32
    %v4310 = vpop.permute.xlu0 %4309
    %4311 = vrot.lane.b32.xlu0 %v3901, 32
    %v4312 = vpop.permute.xlu0 %4311
    %4313 = vrot.lane.b32.xlu0 %v3904, 32
    %v4314 = vpop.permute.xlu0 %4313
    %4315 = vrot.lane.b32.xlu0 %v3906, 32
    %v4316 = vpop.permute.xlu0 %4315
    %4317 = vrot.lane.b32.xlu0 %v3909, 32
    %v4318 = vpop.permute.xlu0 %4317
    %4319 = vrot.lane.b32.xlu0 %v3911, 32
    %v4320 = vpop.permute.xlu0 %4319
    %4321 = vrot.lane.b32.xlu0 %v3914, 32
    %v4322 = vpop.permute.xlu0 %4321
    %4323 = vrot.lane.b32.xlu0 %v3916, 32
    %v4324 = vpop.permute.xlu0 %4323
    %4325 = vrot.lane.b32.xlu0 %v3919, 32
    %v4326 = vpop.permute.xlu0 %4325
    %4327 = vrot.lane.b32.xlu0 %v3921, 32
    %v4328 = vpop.permute.xlu0 %4327
    %4329 = vrot.lane.b32.xlu0 %v3924, 32
    %v4330 = vpop.permute.xlu0 %4329
    %4331 = vrot.lane.b32.xlu0 %v3926, 32
    %v4332 = vpop.permute.xlu0 %4331
    %4333 = vrot.lane.b32.xlu0 %v3929, 32
    %v4334 = vpop.permute.xlu0 %4333
    %4335 = vrot.lane.b32.xlu0 %v3931, 32
    %v4336 = vpop.permute.xlu0 %4335
    %4337 = vrot.lane.b32.xlu0 %v3934, 32
    %v4338 = vpop.permute.xlu0 %4337
    %4339 = vrot.lane.b32.xlu0 %v3936, 32
    %v4340 = vpop.permute.xlu0 %4339
    %4405 = vrot.lane.b32.xlu0 %v3939, 64
    %v4406 = vpop.permute.xlu0 %4405
    %4407 = vrot.lane.b32.xlu0 %v3941, 64
    %v4408 = vpop.permute.xlu0 %4407
    %4409 = vrot.lane.b32.xlu0 %v3944, 64
    %v4410 = vpop.permute.xlu0 %4409
    %4411 = vrot.lane.b32.xlu0 %v3946, 64
    %v4412 = vpop.permute.xlu0 %4411
    %4413 = vrot.lane.b32.xlu0 %v3949, 64
    %v4414 = vpop.permute.xlu0 %4413
    %4415 = vrot.lane.b32.xlu0 %v3951, 64
    %v4416 = vpop.permute.xlu0 %4415
    %4417 = vrot.lane.b32.xlu0 %v3954, 64
    %v4418 = vpop.permute.xlu0 %4417
    %4419 = vrot.lane.b32.xlu0 %v3956, 64
    %v4420 = vpop.permute.xlu0 %4419
    %4421 = vrot.lane.b32.xlu0 %v3959, 64
    %v4422 = vpop.permute.xlu0 %4421
    %4423 = vrot.lane.b32.xlu0 %v3961, 64
    %v4424 = vpop.permute.xlu0 %4423
    %4425 = vrot.lane.b32.xlu0 %v3964, 64
    %v4426 = vpop.permute.xlu0 %4425
    %4427 = vrot.lane.b32.xlu0 %v3966, 64
    %v4428 = vpop.permute.xlu0 %4427
    %4429 = vrot.lane.b32.xlu0 %v3969, 64
    %v4430 = vpop.permute.xlu0 %4429
    %4431 = vrot.lane.b32.xlu0 %v3971, 64
    %v4432 = vpop.permute.xlu0 %4431
    %4433 = vrot.lane.b32.xlu0 %v3974, 64
    %v4434 = vpop.permute.xlu0 %4433
    %4435 = vrot.lane.b32.xlu0 %v3976, 64
    %v4436 = vpop.permute.xlu0 %4435
    %4437 = vrot.lane.b32.xlu0 %v3979, 64
    %v4438 = vpop.permute.xlu0 %4437
    %4439 = vrot.lane.b32.xlu0 %v3981, 64
    %v4440 = vpop.permute.xlu0 %4439
    %4441 = vrot.lane.b32.xlu0 %v3984, 64
    %v4442 = vpop.permute.xlu0 %4441
    %4443 = vrot.lane.b32.xlu0 %v3986, 64
    %v4444 = vpop.permute.xlu0 %4443
    %4445 = vrot.lane.b32.xlu0 %v3989, 64
    %v4446 = vpop.permute.xlu0 %4445
    %4447 = vrot.lane.b32.xlu0 %v3991, 64
    %v4448 = vpop.permute.xlu0 %4447
    %4449 = vrot.lane.b32.xlu0 %v3994, 64
    %v4450 = vpop.permute.xlu0 %4449
    %4451 = vrot.lane.b32.xlu0 %v3996, 64
    %v4452 = vpop.permute.xlu0 %4451
    %4453 = vrot.lane.b32.xlu0 %v3999, 64
    %v4454 = vpop.permute.xlu0 %4453
    %4455 = vrot.lane.b32.xlu0 %v4001, 64
    %v4456 = vpop.permute.xlu0 %4455
    %4457 = vrot.lane.b32.xlu0 %v4004, 64
    %v4458 = vpop.permute.xlu0 %4457
    %4459 = vrot.lane.b32.xlu0 %v4006, 64
    %v4460 = vpop.permute.xlu0 %4459
    %4461 = vrot.lane.b32.xlu0 %v4009, 64
    %v4462 = vpop.permute.xlu0 %4461
    %4463 = vrot.lane.b32.xlu0 %v4011, 64
    %v4464 = vpop.permute.xlu0 %4463
    %4465 = vrot.lane.b32.xlu0 %v4014, 64
    %v4466 = vpop.permute.xlu0 %4465
    %4467 = vrot.lane.b32.xlu0 %v4016, 64
    %v4468 = vpop.permute.xlu0 %4467
    %4469 = vrot.lane.b32.xlu0 %v4019, 64
    %v4470 = vpop.permute.xlu0 %4469
    %4471 = vrot.lane.b32.xlu0 %v4021, 64
    %v4472 = vpop.permute.xlu0 %4471
    %4473 = vrot.lane.b32.xlu0 %v4024, 64
    %v4474 = vpop.permute.xlu0 %4473
    %4475 = vrot.lane.b32.xlu0 %v4026, 64
    %v4476 = vpop.permute.xlu0 %4475
    %4477 = vrot.lane.b32.xlu0 %v4029, 64
    %v4478 = vpop.permute.xlu0 %4477
    %4479 = vrot.lane.b32.xlu0 %v4031, 64
    %v4480 = vpop.permute.xlu0 %4479
    %4481 = vrot.lane.b32.xlu0 %v4034, 64
    %v4482 = vpop.permute.xlu0 %4481
    %4483 = vrot.lane.b32.xlu0 %v4036, 64
    %v4484 = vpop.permute.xlu0 %4483
    %4485 = vrot.lane.b32.xlu0 %v4039, 64
    %v4486 = vpop.permute.xlu0 %4485
    %4487 = vrot.lane.b32.xlu0 %v4041, 64
    %v4488 = vpop.permute.xlu0 %4487
    %4489 = vrot.lane.b32.xlu0 %v4044, 64
    %v4490 = vpop.permute.xlu0 %4489
    %4491 = vrot.lane.b32.xlu0 %v4046, 64
    %v4492 = vpop.permute.xlu0 %4491
    %4493 = vrot.lane.b32.xlu0 %v4049, 64
    %v4494 = vpop.permute.xlu0 %4493
    %4495 = vrot.lane.b32.xlu0 %v4051, 64
    %v4496 = vpop.permute.xlu0 %4495
    %4497 = vrot.lane.b32.xlu0 %v4054, 64
    %v4498 = vpop.permute.xlu0 %4497
    %4499 = vrot.lane.b32.xlu0 %v4056, 64
    %v4500 = vpop.permute.xlu0 %4499
    %4501 = vrot.lane.b32.xlu0 %v4059, 64
    %v4502 = vpop.permute.xlu0 %4501
    %4503 = vrot.lane.b32.xlu0 %v4061, 64
    %v4504 = vpop.permute.xlu0 %4503
    %4505 = vrot.lane.b32.xlu0 %v4064, 64
    %v4506 = vpop.permute.xlu0 %4505
    %4507 = vrot.lane.b32.xlu0 %v4066, 64
    %v4508 = vpop.permute.xlu0 %4507
    %4509 = vrot.lane.b32.xlu0 %v4069, 64
    %v4510 = vpop.permute.xlu0 %4509
    %4511 = vrot.lane.b32.xlu0 %v4071, 64
    %v4512 = vpop.permute.xlu0 %4511
    %4513 = vrot.lane.b32.xlu0 %v4074, 64
    %v4514 = vpop.permute.xlu0 %4513
    %4515 = vrot.lane.b32.xlu0 %v4076, 64
    %v4516 = vpop.permute.xlu0 %4515
    %4517 = vrot.lane.b32.xlu0 %v4079, 64
    %v4518 = vpop.permute.xlu0 %4517
    %4519 = vrot.lane.b32.xlu0 %v4081, 64
    %v4520 = vpop.permute.xlu0 %4519
    %4521 = vrot.lane.b32.xlu0 %v4084, 64
    %v4522 = vpop.permute.xlu0 %4521
    %4523 = vrot.lane.b32.xlu0 %v4086, 64
    %v4524 = vpop.permute.xlu0 %4523
    %4525 = vrot.lane.b32.xlu0 %v4089, 64
    %v4526 = vpop.permute.xlu0 %4525
    %4527 = vrot.lane.b32.xlu0 %v4091, 64
    %v4528 = vpop.permute.xlu0 %4527
    %4529 = vrot.lane.b32.xlu0 %v4094, 64
    %v4530 = vpop.permute.xlu0 %4529
    %4531 = vrot.lane.b32.xlu0 %v4096, 64
    %v4532 = vpop.permute.xlu0 %4531
    %4597 = vrot.lane.b32.xlu0 %v3576, 96
    %v4598 = vpop.permute.xlu0 %4597
    %4599 = vrot.lane.b32.xlu0 %v3577, 96
    %v4600 = vpop.permute.xlu0 %4599
    %4601 = vrot.lane.b32.xlu0 %v3579, 96
    %v4602 = vpop.permute.xlu0 %4601
    %4603 = vrot.lane.b32.xlu0 %v3580, 96
    %v4604 = vpop.permute.xlu0 %4603
    %4605 = vrot.lane.b32.xlu0 %v3582, 96
    %v4606 = vpop.permute.xlu0 %4605
    %4607 = vrot.lane.b32.xlu0 %v3583, 96
    %v4608 = vpop.permute.xlu0 %4607
    %4609 = vrot.lane.b32.xlu0 %v3585, 96
    %v4610 = vpop.permute.xlu0 %4609
    %4611 = vrot.lane.b32.xlu0 %v3586, 96
    %v4612 = vpop.permute.xlu0 %4611
    %4613 = vrot.lane.b32.xlu0 %v3588, 96
    %v4614 = vpop.permute.xlu0 %4613
    %4615 = vrot.lane.b32.xlu0 %v3589, 96
    %v4616 = vpop.permute.xlu0 %4615
    %4617 = vrot.lane.b32.xlu0 %v3591, 96
    %v4618 = vpop.permute.xlu0 %4617
    %4619 = vrot.lane.b32.xlu0 %v3592, 96
    %v4620 = vpop.permute.xlu0 %4619
    %4621 = vrot.lane.b32.xlu0 %v3594, 96
    %v4622 = vpop.permute.xlu0 %4621
    %4623 = vrot.lane.b32.xlu0 %v3595, 96
    %v4624 = vpop.permute.xlu0 %4623
    %4625 = vrot.lane.b32.xlu0 %v3597, 96
    %v4626 = vpop.permute.xlu0 %4625
    %4627 = vrot.lane.b32.xlu0 %v3598, 96
    %v4628 = vpop.permute.xlu0 %4627
    %4629 = vrot.lane.b32.xlu0 %v3600, 96
    %v4630 = vpop.permute.xlu0 %4629
    %4631 = vrot.lane.b32.xlu0 %v3601, 96
    %v4632 = vpop.permute.xlu0 %4631
    %4633 = vrot.lane.b32.xlu0 %v3603, 96
    %v4634 = vpop.permute.xlu0 %4633
    %4635 = vrot.lane.b32.xlu0 %v3604, 96
    %v4636 = vpop.permute.xlu0 %4635
    %4637 = vrot.lane.b32.xlu0 %v3606, 96
    %v4638 = vpop.permute.xlu0 %4637
    %4639 = vrot.lane.b32.xlu0 %v3607, 96
    %v4640 = vpop.permute.xlu0 %4639
    %4641 = vrot.lane.b32.xlu0 %v3609, 96
    %v4642 = vpop.permute.xlu0 %4641
    %4643 = vrot.lane.b32.xlu0 %v3610, 96
    %v4644 = vpop.permute.xlu0 %4643
    %4645 = vrot.lane.b32.xlu0 %v3612, 96
    %v4646 = vpop.permute.xlu0 %4645
    %4647 = vrot.lane.b32.xlu0 %v3613, 96
    %v4648 = vpop.permute.xlu0 %4647
    %4649 = vrot.lane.b32.xlu0 %v3615, 96
    %v4650 = vpop.permute.xlu0 %4649
    %4651 = vrot.lane.b32.xlu0 %v3616, 96
    %v4652 = vpop.permute.xlu0 %4651
    %4653 = vrot.lane.b32.xlu0 %v3618, 96
    %v4654 = vpop.permute.xlu0 %4653
    %4655 = vrot.lane.b32.xlu0 %v3619, 96
    %v4656 = vpop.permute.xlu0 %4655
    %4657 = vrot.lane.b32.xlu0 %v3621, 96
    %v4658 = vpop.permute.xlu0 %4657
    %4659 = vrot.lane.b32.xlu0 %v3622, 96
    %v4660 = vpop.permute.xlu0 %4659
    %4661 = vrot.lane.b32.xlu0 %v3630, 96
    %v4662 = vpop.permute.xlu0 %4661
    %4663 = vrot.lane.b32.xlu0 %v3631, 96
    %v4664 = vpop.permute.xlu0 %4663
    %4665 = vrot.lane.b32.xlu0 %v3633, 96
    %v4666 = vpop.permute.xlu0 %4665
    %4667 = vrot.lane.b32.xlu0 %v3634, 96
    %v4668 = vpop.permute.xlu0 %4667
    %4669 = vrot.lane.b32.xlu0 %v3636, 96
    %v4670 = vpop.permute.xlu0 %4669
    %4671 = vrot.lane.b32.xlu0 %v3637, 96
    %v4672 = vpop.permute.xlu0 %4671
    %4673 = vrot.lane.b32.xlu0 %v3639, 96
    %v4674 = vpop.permute.xlu0 %4673
    %4675 = vrot.lane.b32.xlu0 %v3640, 96
    %v4676 = vpop.permute.xlu0 %4675
    %4677 = vrot.lane.b32.xlu0 %v3642, 96
    %v4678 = vpop.permute.xlu0 %4677
    %4679 = vrot.lane.b32.xlu0 %v3643, 96
    %v4680 = vpop.permute.xlu0 %4679
    %4681 = vrot.lane.b32.xlu0 %v3645, 96
    %v4682 = vpop.permute.xlu0 %4681
    %4683 = vrot.lane.b32.xlu0 %v3646, 96
    %v4684 = vpop.permute.xlu0 %4683
    %4685 = vrot.lane.b32.xlu0 %v3648, 96
    %v4686 = vpop.permute.xlu0 %4685
    %4687 = vrot.lane.b32.xlu0 %v3649, 96
    %v4688 = vpop.permute.xlu0 %4687
    %4689 = vrot.lane.b32.xlu0 %v3651, 96
    %v4690 = vpop.permute.xlu0 %4689
    %4691 = vrot.lane.b32.xlu0 %v3652, 96
    %v4692 = vpop.permute.xlu0 %4691
    %4693 = vrot.lane.b32.xlu0 %v3654, 96
    %v4694 = vpop.permute.xlu0 %4693
    %4695 = vrot.lane.b32.xlu0 %v3655, 96
    %v4696 = vpop.permute.xlu0 %4695
    %4697 = vrot.lane.b32.xlu0 %v3657, 96
    %v4698 = vpop.permute.xlu0 %4697
    %4699 = vrot.lane.b32.xlu0 %v3658, 96
    %v4700 = vpop.permute.xlu0 %4699
    %4701 = vrot.lane.b32.xlu0 %v3660, 96
    %v4702 = vpop.permute.xlu0 %4701
    %4703 = vrot.lane.b32.xlu0 %v3661, 96
    %v4704 = vpop.permute.xlu0 %4703
    %4705 = vrot.lane.b32.xlu0 %v3663, 96
    %v4706 = vpop.permute.xlu0 %4705
    %4707 = vrot.lane.b32.xlu0 %v3664, 96
    %v4708 = vpop.permute.xlu0 %4707
    %4709 = vrot.lane.b32.xlu0 %v3666, 96
    %v4710 = vpop.permute.xlu0 %4709
    %4711 = vrot.lane.b32.xlu0 %v3667, 96
    %v4712 = vpop.permute.xlu0 %4711
    %4713 = vrot.lane.b32.xlu0 %v3669, 96
    %v4714 = vpop.permute.xlu0 %4713
    %4715 = vrot.lane.b32.xlu0 %v3670, 96
    %v4716 = vpop.permute.xlu0 %4715
    %4717 = vrot.lane.b32.xlu0 %v3672, 96
    %v4718 = vpop.permute.xlu0 %4717
    %4719 = vrot.lane.b32.xlu0 %v3673, 96
    %v4720 = vpop.permute.xlu0 %4719
    %4721 = vrot.lane.b32.xlu0 %v3675, 96
    %v4722 = vpop.permute.xlu0 %4721
    %4723 = vrot.lane.b32.xlu0 %v3676, 96
    %v4724 = vpop.permute.xlu0 %4723
    %4789 = vrot.lane.b32.xlu0 %v3944, 32
    %v4790 = vpop.permute.xlu0 %4789
    %4791 = vrot.lane.b32.xlu0 %v3946, 32
    %v4792 = vpop.permute.xlu0 %4791
    %4793 = vrot.lane.b32.xlu0 %v3949, 32
    %v4794 = vpop.permute.xlu0 %4793
    %4795 = vrot.lane.b32.xlu0 %v3951, 32
    %v4796 = vpop.permute.xlu0 %4795
    %4797 = vrot.lane.b32.xlu0 %v3954, 32
    %v4798 = vpop.permute.xlu0 %4797
    %4799 = vrot.lane.b32.xlu0 %v3956, 32
    %v4800 = vpop.permute.xlu0 %4799
    %4801 = vrot.lane.b32.xlu0 %v3959, 32
    %v4802 = vpop.permute.xlu0 %4801
    %4803 = vrot.lane.b32.xlu0 %v3961, 32
    %v4804 = vpop.permute.xlu0 %4803
    %4805 = vrot.lane.b32.xlu0 %v3964, 32
    %v4806 = vpop.permute.xlu0 %4805
    %4807 = vrot.lane.b32.xlu0 %v3966, 32
    %v4808 = vpop.permute.xlu0 %4807
    %4809 = vrot.lane.b32.xlu0 %v3969, 32
    %v4810 = vpop.permute.xlu0 %4809
    %4811 = vrot.lane.b32.xlu0 %v3971, 32
    %v4812 = vpop.permute.xlu0 %4811
    %4813 = vrot.lane.b32.xlu0 %v3974, 32
    %v4814 = vpop.permute.xlu0 %4813
    %4815 = vrot.lane.b32.xlu0 %v3976, 32
    %v4816 = vpop.permute.xlu0 %4815
    %4817 = vrot.lane.b32.xlu0 %v3979, 32
    %v4818 = vpop.permute.xlu0 %4817
    %4819 = vrot.lane.b32.xlu0 %v3981, 32
    %v4820 = vpop.permute.xlu0 %4819
    %4821 = vrot.lane.b32.xlu0 %v3984, 32
    %v4822 = vpop.permute.xlu0 %4821
    %4823 = vrot.lane.b32.xlu0 %v3986, 32
    %v4824 = vpop.permute.xlu0 %4823
    %4825 = vrot.lane.b32.xlu0 %v3989, 32
    %v4826 = vpop.permute.xlu0 %4825
    %4827 = vrot.lane.b32.xlu0 %v3991, 32
    %v4828 = vpop.permute.xlu0 %4827
    %4829 = vrot.lane.b32.xlu0 %v3994, 32
    %v4830 = vpop.permute.xlu0 %4829
    %4831 = vrot.lane.b32.xlu0 %v3996, 32
    %v4832 = vpop.permute.xlu0 %4831
    %4833 = vrot.lane.b32.xlu0 %v3999, 32
    %v4834 = vpop.permute.xlu0 %4833
    %4835 = vrot.lane.b32.xlu0 %v4001, 32
    %v4836 = vpop.permute.xlu0 %4835
    %4837 = vrot.lane.b32.xlu0 %v4004, 32
    %v4838 = vpop.permute.xlu0 %4837
    %4839 = vrot.lane.b32.xlu0 %v4006, 32
    %v4840 = vpop.permute.xlu0 %4839
    %4841 = vrot.lane.b32.xlu0 %v4009, 32
    %v4842 = vpop.permute.xlu0 %4841
    %4843 = vrot.lane.b32.xlu0 %v4011, 32
    %v4844 = vpop.permute.xlu0 %4843
    %4845 = vrot.lane.b32.xlu0 %v4014, 32
    %v4846 = vpop.permute.xlu0 %4845
    %4847 = vrot.lane.b32.xlu0 %v4016, 32
    %v4848 = vpop.permute.xlu0 %4847
    %4849 = vrot.lane.b32.xlu0 %v4179, 32
    %v4850 = vpop.permute.xlu0 %4849
    %4851 = vrot.lane.b32.xlu0 %v4181, 32
    %v4852 = vpop.permute.xlu0 %4851
    %4853 = vrot.lane.b32.xlu0 %v4024, 32
    %v4854 = vpop.permute.xlu0 %4853
    %4855 = vrot.lane.b32.xlu0 %v4026, 32
    %v4856 = vpop.permute.xlu0 %4855
    %4857 = vrot.lane.b32.xlu0 %v4029, 32
    %v4858 = vpop.permute.xlu0 %4857
    %4859 = vrot.lane.b32.xlu0 %v4031, 32
    %v4860 = vpop.permute.xlu0 %4859
    %4861 = vrot.lane.b32.xlu0 %v4034, 32
    %v4862 = vpop.permute.xlu0 %4861
    %4863 = vrot.lane.b32.xlu0 %v4036, 32
    %v4864 = vpop.permute.xlu0 %4863
    %4865 = vrot.lane.b32.xlu0 %v4039, 32
    %v4866 = vpop.permute.xlu0 %4865
    %4867 = vrot.lane.b32.xlu0 %v4041, 32
    %v4868 = vpop.permute.xlu0 %4867
    %4869 = vrot.lane.b32.xlu0 %v4044, 32
    %v4870 = vpop.permute.xlu0 %4869
    %4871 = vrot.lane.b32.xlu0 %v4046, 32
    %v4872 = vpop.permute.xlu0 %4871
    %4873 = vrot.lane.b32.xlu0 %v4049, 32
    %v4874 = vpop.permute.xlu0 %4873
    %4875 = vrot.lane.b32.xlu0 %v4051, 32
    %v4876 = vpop.permute.xlu0 %4875
    %4877 = vrot.lane.b32.xlu0 %v4054, 32
    %v4878 = vpop.permute.xlu0 %4877
    %4879 = vrot.lane.b32.xlu0 %v4056, 32
    %v4880 = vpop.permute.xlu0 %4879
    %4881 = vrot.lane.b32.xlu0 %v4059, 32
    %v4882 = vpop.permute.xlu0 %4881
    %4883 = vrot.lane.b32.xlu0 %v4061, 32
    %v4884 = vpop.permute.xlu0 %4883
    %4885 = vrot.lane.b32.xlu0 %v4064, 32
    %v4886 = vpop.permute.xlu0 %4885
    %4887 = vrot.lane.b32.xlu0 %v4066, 32
    %v4888 = vpop.permute.xlu0 %4887
    %4889 = vrot.lane.b32.xlu0 %v4069, 32
    %v4890 = vpop.permute.xlu0 %4889
    %4891 = vrot.lane.b32.xlu0 %v4071, 32
    %v4892 = vpop.permute.xlu0 %4891
    %4893 = vrot.lane.b32.xlu0 %v4074, 32
    %v4894 = vpop.permute.xlu0 %4893
    %4895 = vrot.lane.b32.xlu0 %v4076, 32
    %v4896 = vpop.permute.xlu0 %4895
    %4897 = vrot.lane.b32.xlu0 %v4079, 32
    %v4898 = vpop.permute.xlu0 %4897
    %4899 = vrot.lane.b32.xlu0 %v4081, 32
    %v4900 = vpop.permute.xlu0 %4899
    %4901 = vrot.lane.b32.xlu0 %v4084, 32
    %v4902 = vpop.permute.xlu0 %4901
    %4903 = vrot.lane.b32.xlu0 %v4086, 32
    %v4904 = vpop.permute.xlu0 %4903
    %4905 = vrot.lane.b32.xlu0 %v4089, 32
    %v4906 = vpop.permute.xlu0 %4905
    %4907 = vrot.lane.b32.xlu0 %v4091, 32
    %v4908 = vpop.permute.xlu0 %4907
    %4909 = vrot.lane.b32.xlu0 %v4094, 32
    %v4910 = vpop.permute.xlu0 %4909
    %4911 = vrot.lane.b32.xlu0 %v4096, 32
    %v4912 = vpop.permute.xlu0 %4911
    %4913 = vrot.lane.b32.xlu0 %v4184, 32
    %v4914 = vpop.permute.xlu0 %4913
    %4915 = vrot.lane.b32.xlu0 %v4186, 32
    %v4916 = vpop.permute.xlu0 %4915
    %4981 = vrot.lane.b32.xlu0 %v3579, 64
    %v4982 = vpop.permute.xlu0 %4981
    %4983 = vrot.lane.b32.xlu0 %v3580, 64
    %v4984 = vpop.permute.xlu0 %4983
    %4985 = vrot.lane.b32.xlu0 %v3582, 64
    %v4986 = vpop.permute.xlu0 %4985
    %4987 = vrot.lane.b32.xlu0 %v3583, 64
    %v4988 = vpop.permute.xlu0 %4987
    %4989 = vrot.lane.b32.xlu0 %v3585, 64
    %v4990 = vpop.permute.xlu0 %4989
    %4991 = vrot.lane.b32.xlu0 %v3586, 64
    %v4992 = vpop.permute.xlu0 %4991
    %4993 = vrot.lane.b32.xlu0 %v3588, 64
    %v4994 = vpop.permute.xlu0 %4993
    %4995 = vrot.lane.b32.xlu0 %v3589, 64
    %v4996 = vpop.permute.xlu0 %4995
    %4997 = vrot.lane.b32.xlu0 %v3591, 64
    %v4998 = vpop.permute.xlu0 %4997
    %4999 = vrot.lane.b32.xlu0 %v3592, 64
    %v5000 = vpop.permute.xlu0 %4999
    %5001 = vrot.lane.b32.xlu0 %v3594, 64
    %v5002 = vpop.permute.xlu0 %5001
    %5003 = vrot.lane.b32.xlu0 %v3595, 64
    %v5004 = vpop.permute.xlu0 %5003
    %5005 = vrot.lane.b32.xlu0 %v3597, 64
    %v5006 = vpop.permute.xlu0 %5005
    %5007 = vrot.lane.b32.xlu0 %v3598, 64
    %v5008 = vpop.permute.xlu0 %5007
    %5009 = vrot.lane.b32.xlu0 %v3600, 64
    %v5010 = vpop.permute.xlu0 %5009
    %5011 = vrot.lane.b32.xlu0 %v3601, 64
    %v5012 = vpop.permute.xlu0 %5011
    %5013 = vrot.lane.b32.xlu0 %v3603, 64
    %v5014 = vpop.permute.xlu0 %5013
    %5015 = vrot.lane.b32.xlu0 %v3604, 64
    %v5016 = vpop.permute.xlu0 %5015
    %5017 = vrot.lane.b32.xlu0 %v3606, 64
    %v5018 = vpop.permute.xlu0 %5017
    %5019 = vrot.lane.b32.xlu0 %v3607, 64
    %v5020 = vpop.permute.xlu0 %5019
    %5021 = vrot.lane.b32.xlu0 %v3609, 64
    %v5022 = vpop.permute.xlu0 %5021
    %5023 = vrot.lane.b32.xlu0 %v3610, 64
    %v5024 = vpop.permute.xlu0 %5023
    %5025 = vrot.lane.b32.xlu0 %v3612, 64
    %v5026 = vpop.permute.xlu0 %5025
    %5027 = vrot.lane.b32.xlu0 %v3613, 64
    %v5028 = vpop.permute.xlu0 %5027
    %5029 = vrot.lane.b32.xlu0 %v3615, 64
    %v5030 = vpop.permute.xlu0 %5029
    %5031 = vrot.lane.b32.xlu0 %v3616, 64
    %v5032 = vpop.permute.xlu0 %5031
    %5033 = vrot.lane.b32.xlu0 %v3618, 64
    %v5034 = vpop.permute.xlu0 %5033
    %5035 = vrot.lane.b32.xlu0 %v3619, 64
    %v5036 = vpop.permute.xlu0 %5035
    %5037 = vrot.lane.b32.xlu0 %v3621, 64
    %v5038 = vpop.permute.xlu0 %5037
    %5039 = vrot.lane.b32.xlu0 %v3622, 64
    %v5040 = vpop.permute.xlu0 %5039
    %5041 = vrot.lane.b32.xlu0 %v3624, 64
    %v5042 = vpop.permute.xlu0 %5041
    %5043 = vrot.lane.b32.xlu0 %v3625, 64
    %v5044 = vpop.permute.xlu0 %5043
    %5045 = vrot.lane.b32.xlu0 %v3633, 64
    %v5046 = vpop.permute.xlu0 %5045
    %5047 = vrot.lane.b32.xlu0 %v3634, 64
    %v5048 = vpop.permute.xlu0 %5047
    %5049 = vrot.lane.b32.xlu0 %v3636, 64
    %v5050 = vpop.permute.xlu0 %5049
    %5051 = vrot.lane.b32.xlu0 %v3637, 64
    %v5052 = vpop.permute.xlu0 %5051
    %5053 = vrot.lane.b32.xlu0 %v3639, 64
    %v5054 = vpop.permute.xlu0 %5053
    %5055 = vrot.lane.b32.xlu0 %v3640, 64
    %v5056 = vpop.permute.xlu0 %5055
    %5057 = vrot.lane.b32.xlu0 %v3642, 64
    %v5058 = vpop.permute.xlu0 %5057
    %5059 = vrot.lane.b32.xlu0 %v3643, 64
    %v5060 = vpop.permute.xlu0 %5059
    %5061 = vrot.lane.b32.xlu0 %v3645, 64
    %v5062 = vpop.permute.xlu0 %5061
    %5063 = vrot.lane.b32.xlu0 %v3646, 64
    %v5064 = vpop.permute.xlu0 %5063
    %5065 = vrot.lane.b32.xlu0 %v3648, 64
    %v5066 = vpop.permute.xlu0 %5065
    %5067 = vrot.lane.b32.xlu0 %v3649, 64
    %v5068 = vpop.permute.xlu0 %5067
    %5069 = vrot.lane.b32.xlu0 %v3651, 64
    %v5070 = vpop.permute.xlu0 %5069
    %5071 = vrot.lane.b32.xlu0 %v3652, 64
    %v5072 = vpop.permute.xlu0 %5071
    %5073 = vrot.lane.b32.xlu0 %v3654, 64
    %v5074 = vpop.permute.xlu0 %5073
    %5075 = vrot.lane.b32.xlu0 %v3655, 64
    %v5076 = vpop.permute.xlu0 %5075
    %5077 = vrot.lane.b32.xlu0 %v3657, 64
    %v5078 = vpop.permute.xlu0 %5077
    %5079 = vrot.lane.b32.xlu0 %v3658, 64
    %v5080 = vpop.permute.xlu0 %5079
    %5081 = vrot.lane.b32.xlu0 %v3660, 64
    %v5082 = vpop.permute.xlu0 %5081
    %5083 = vrot.lane.b32.xlu0 %v3661, 64
    %v5084 = vpop.permute.xlu0 %5083
    %5085 = vrot.lane.b32.xlu0 %v3663, 64
    %v5086 = vpop.permute.xlu0 %5085
    %5087 = vrot.lane.b32.xlu0 %v3664, 64
    %v5088 = vpop.permute.xlu0 %5087
    %5089 = vrot.lane.b32.xlu0 %v3666, 64
    %v5090 = vpop.permute.xlu0 %5089
    %5091 = vrot.lane.b32.xlu0 %v3667, 64
    %v5092 = vpop.permute.xlu0 %5091
    %5093 = vrot.lane.b32.xlu0 %v3669, 64
    %v5094 = vpop.permute.xlu0 %5093
    %5095 = vrot.lane.b32.xlu0 %v3670, 64
    %v5096 = vpop.permute.xlu0 %5095
    %5097 = vrot.lane.b32.xlu0 %v3672, 64
    %v5098 = vpop.permute.xlu0 %5097
    %5099 = vrot.lane.b32.xlu0 %v3673, 64
    %v5100 = vpop.permute.xlu0 %5099
    %5101 = vrot.lane.b32.xlu0 %v3675, 64
    %v5102 = vpop.permute.xlu0 %5101
    %5103 = vrot.lane.b32.xlu0 %v3676, 64
    %v5104 = vpop.permute.xlu0 %5103
    %5105 = vrot.lane.b32.xlu0 %v3678, 64
    %v5106 = vpop.permute.xlu0 %5105
    %5107 = vrot.lane.b32.xlu0 %v3679, 64
    %v5108 = vpop.permute.xlu0 %5107
    %5173 = vrot.lane.b32.xlu0 %v3789, 96
    %v5174 = vpop.permute.xlu0 %5173
    %5175 = vrot.lane.b32.xlu0 %v3791, 96
    %v5176 = vpop.permute.xlu0 %5175
    %5177 = vrot.lane.b32.xlu0 %v3794, 96
    %v5178 = vpop.permute.xlu0 %5177
    %5179 = vrot.lane.b32.xlu0 %v3796, 96
    %v5180 = vpop.permute.xlu0 %5179
    %5181 = vrot.lane.b32.xlu0 %v3799, 96
    %v5182 = vpop.permute.xlu0 %5181
    %5183 = vrot.lane.b32.xlu0 %v3801, 96
    %v5184 = vpop.permute.xlu0 %5183
    %5185 = vrot.lane.b32.xlu0 %v3804, 96
    %v5186 = vpop.permute.xlu0 %5185
    %5187 = vrot.lane.b32.xlu0 %v3806, 96
    %v5188 = vpop.permute.xlu0 %5187
    %5189 = vrot.lane.b32.xlu0 %v3809, 96
    %v5190 = vpop.permute.xlu0 %5189
    %5191 = vrot.lane.b32.xlu0 %v3811, 96
    %v5192 = vpop.permute.xlu0 %5191
    %5193 = vrot.lane.b32.xlu0 %v3814, 96
    %v5194 = vpop.permute.xlu0 %5193
    %5195 = vrot.lane.b32.xlu0 %v3816, 96
    %v5196 = vpop.permute.xlu0 %5195
    %5197 = vrot.lane.b32.xlu0 %v3819, 96
    %v5198 = vpop.permute.xlu0 %5197
    %5199 = vrot.lane.b32.xlu0 %v3821, 96
    %v5200 = vpop.permute.xlu0 %5199
    %5201 = vrot.lane.b32.xlu0 %v3824, 96
    %v5202 = vpop.permute.xlu0 %5201
    %5203 = vrot.lane.b32.xlu0 %v3826, 96
    %v5204 = vpop.permute.xlu0 %5203
    %5205 = vrot.lane.b32.xlu0 %v3829, 96
    %v5206 = vpop.permute.xlu0 %5205
    %5207 = vrot.lane.b32.xlu0 %v3831, 96
    %v5208 = vpop.permute.xlu0 %5207
    %5209 = vrot.lane.b32.xlu0 %v3834, 96
    %v5210 = vpop.permute.xlu0 %5209
    %5211 = vrot.lane.b32.xlu0 %v3836, 96
    %v5212 = vpop.permute.xlu0 %5211
    %5213 = vrot.lane.b32.xlu0 %v3839, 96
    %v5214 = vpop.permute.xlu0 %5213
    %5215 = vrot.lane.b32.xlu0 %v3841, 96
    %v5216 = vpop.permute.xlu0 %5215
    %5217 = vrot.lane.b32.xlu0 %v3844, 96
    %v5218 = vpop.permute.xlu0 %5217
    %5219 = vrot.lane.b32.xlu0 %v3846, 96
    %v5220 = vpop.permute.xlu0 %5219
    %5221 = vrot.lane.b32.xlu0 %v3849, 96
    %v5222 = vpop.permute.xlu0 %5221
    %5223 = vrot.lane.b32.xlu0 %v3851, 96
    %v5224 = vpop.permute.xlu0 %5223
    %5225 = vrot.lane.b32.xlu0 %v3854, 96
    %v5226 = vpop.permute.xlu0 %5225
    %5227 = vrot.lane.b32.xlu0 %v3856, 96
    %v5228 = vpop.permute.xlu0 %5227
    %5229 = vrot.lane.b32.xlu0 %v4105, 96
    %v5230 = vpop.permute.xlu0 %5229
    %5231 = vrot.lane.b32.xlu0 %v4107, 96
    %v5232 = vpop.permute.xlu0 %5231
    %5233 = vrot.lane.b32.xlu0 %v4195, 96
    %v5234 = vpop.permute.xlu0 %5233
    %5235 = vrot.lane.b32.xlu0 %v4197, 96
    %v5236 = vpop.permute.xlu0 %5235
    %5237 = vrot.lane.b32.xlu0 %v3869, 96
    %v5238 = vpop.permute.xlu0 %5237
    %5239 = vrot.lane.b32.xlu0 %v3871, 96
    %v5240 = vpop.permute.xlu0 %5239
    %5241 = vrot.lane.b32.xlu0 %v3874, 96
    %v5242 = vpop.permute.xlu0 %5241
    %5243 = vrot.lane.b32.xlu0 %v3876, 96
    %v5244 = vpop.permute.xlu0 %5243
    %5245 = vrot.lane.b32.xlu0 %v3879, 96
    %v5246 = vpop.permute.xlu0 %5245
    %5247 = vrot.lane.b32.xlu0 %v3881, 96
    %v5248 = vpop.permute.xlu0 %5247
    %5249 = vrot.lane.b32.xlu0 %v3884, 96
    %v5250 = vpop.permute.xlu0 %5249
    %5251 = vrot.lane.b32.xlu0 %v3886, 96
    %v5252 = vpop.permute.xlu0 %5251
    %5253 = vrot.lane.b32.xlu0 %v3889, 96
    %v5254 = vpop.permute.xlu0 %5253
    %5255 = vrot.lane.b32.xlu0 %v3891, 96
    %v5256 = vpop.permute.xlu0 %5255
    %5257 = vrot.lane.b32.xlu0 %v3894, 96
    %v5258 = vpop.permute.xlu0 %5257
    %5259 = vrot.lane.b32.xlu0 %v3896, 96
    %v5260 = vpop.permute.xlu0 %5259
    %5261 = vrot.lane.b32.xlu0 %v3899, 96
    %v5262 = vpop.permute.xlu0 %5261
    %5263 = vrot.lane.b32.xlu0 %v3901, 96
    %v5264 = vpop.permute.xlu0 %5263
    %5265 = vrot.lane.b32.xlu0 %v3904, 96
    %v5266 = vpop.permute.xlu0 %5265
    %5267 = vrot.lane.b32.xlu0 %v3906, 96
    %v5268 = vpop.permute.xlu0 %5267
    %5269 = vrot.lane.b32.xlu0 %v3909, 96
    %v5270 = vpop.permute.xlu0 %5269
    %5271 = vrot.lane.b32.xlu0 %v3911, 96
    %v5272 = vpop.permute.xlu0 %5271
    %5273 = vrot.lane.b32.xlu0 %v3914, 96
    %v5274 = vpop.permute.xlu0 %5273
    %5275 = vrot.lane.b32.xlu0 %v3916, 96
    %v5276 = vpop.permute.xlu0 %5275
    %5277 = vrot.lane.b32.xlu0 %v3919, 96
    %v5278 = vpop.permute.xlu0 %5277
    %5279 = vrot.lane.b32.xlu0 %v3921, 96
    %v5280 = vpop.permute.xlu0 %5279
    %5281 = vrot.lane.b32.xlu0 %v3924, 96
    %v5282 = vpop.permute.xlu0 %5281
    %5283 = vrot.lane.b32.xlu0 %v3926, 96
    %v5284 = vpop.permute.xlu0 %5283
    %5285 = vrot.lane.b32.xlu0 %v3929, 96
    %v5286 = vpop.permute.xlu0 %5285
    %5287 = vrot.lane.b32.xlu0 %v3931, 96
    %v5288 = vpop.permute.xlu0 %5287
    %5289 = vrot.lane.b32.xlu0 %v3934, 96
    %v5290 = vpop.permute.xlu0 %5289
    %5291 = vrot.lane.b32.xlu0 %v3936, 96
    %v5292 = vpop.permute.xlu0 %5291
    %5293 = vrot.lane.b32.xlu0 %v4110, 96
    %v5294 = vpop.permute.xlu0 %5293
    %5295 = vrot.lane.b32.xlu0 %v4112, 96
    %v5296 = vpop.permute.xlu0 %5295
    %5297 = vrot.lane.b32.xlu0 %v4200, 96
    %v5298 = vpop.permute.xlu0 %5297
    %5299 = vrot.lane.b32.xlu0 %v4202, 96
    %v5300 = vpop.permute.xlu0 %5299
    %v5365 = vsel %vm2855, %v3573, %v4214
    %v5366 = vsel %vm2855, %v3574, %v4216
    %v5367 = vsel %vm2855, %v3576, %v4218
    %v5368 = vsel %vm2855, %v3577, %v4220
    %v5369 = vsel %vm2855, %v3579, %v4222
    %v5370 = vsel %vm2855, %v3580, %v4224
    %v5371 = vsel %vm2855, %v3582, %v4226
    %v5372 = vsel %vm2855, %v3583, %v4228
    %v5373 = vsel %vm2855, %v3585, %v4230
    %v5374 = vsel %vm2855, %v3586, %v4232
    %v5375 = vsel %vm2855, %v3588, %v4234
    %v5376 = vsel %vm2855, %v3589, %v4236
    %v5377 = vsel %vm2855, %v3591, %v4238
    %v5378 = vsel %vm2855, %v3592, %v4240
    %v5379 = vsel %vm2855, %v3594, %v4242
    %v5380 = vsel %vm2855, %v3595, %v4244
    %v5381 = vsel %vm2855, %v3597, %v4246
    %v5382 = vsel %vm2855, %v3598, %v4248
    %v5383 = vsel %vm2855, %v3600, %v4250
    %v5384 = vsel %vm2855, %v3601, %v4252
    %v5385 = vsel %vm2855, %v3603, %v4254
    %v5386 = vsel %vm2855, %v3604, %v4256
    %v5387 = vsel %vm2855, %v3606, %v4258
    %v5388 = vsel %vm2855, %v3607, %v4260
    %v5389 = vsel %vm2855, %v3609, %v4262
    %v5390 = vsel %vm2855, %v3610, %v4264
    %v5391 = vsel %vm2855, %v3612, %v4266
    %v5392 = vsel %vm2855, %v3613, %v4268
    %v5393 = vsel %vm2855, %v3615, %v4270
    %v5394 = vsel %vm2855, %v3616, %v4272
    %v5395 = vsel %vm2855, %v3618, %v4274
    %v5396 = vsel %vm2855, %v3619, %v4276
    %v5397 = vsel %vm2855, %v3627, %v4278
    %v5398 = vsel %vm2855, %v3628, %v4280
    %v5399 = vsel %vm2855, %v3630, %v4282
    %v5400 = vsel %vm2855, %v3631, %v4284
    %v5401 = vsel %vm2855, %v3633, %v4286
    %v5402 = vsel %vm2855, %v3634, %v4288
    %v5403 = vsel %vm2855, %v3636, %v4290
    %v5404 = vsel %vm2855, %v3637, %v4292
    %v5405 = vsel %vm2855, %v3639, %v4294
    %v5406 = vsel %vm2855, %v3640, %v4296
    %v5407 = vsel %vm2855, %v3642, %v4298
    %v5408 = vsel %vm2855, %v3643, %v4300
    %v5409 = vsel %vm2855, %v3645, %v4302
    %v5410 = vsel %vm2855, %v3646, %v4304
    %v5411 = vsel %vm2855, %v3648, %v4306
    %v5412 = vsel %vm2855, %v3649, %v4308
    %v5413 = vsel %vm2855, %v3651, %v4310
    %v5414 = vsel %vm2855, %v3652, %v4312
    %v5415 = vsel %vm2855, %v3654, %v4314
    %v5416 = vsel %vm2855, %v3655, %v4316
    %v5417 = vsel %vm2855, %v3657, %v4318
    %v5418 = vsel %vm2855, %v3658, %v4320
    %v5419 = vsel %vm2855, %v3660, %v4322
    %v5420 = vsel %vm2855, %v3661, %v4324
    %v5421 = vsel %vm2855, %v3663, %v4326
    %v5422 = vsel %vm2855, %v3664, %v4328
    %v5423 = vsel %vm2855, %v3666, %v4330
    %v5424 = vsel %vm2855, %v3667, %v4332
    %v5425 = vsel %vm2855, %v3669, %v4334
    %v5426 = vsel %vm2855, %v3670, %v4336
    %v5427 = vsel %vm2855, %v3672, %v4338
    %v5428 = vsel %vm2855, %v3673, %v4340
    %vm5429 = vcmask 523264
    %v5430 = vsel %vm5429, %v5365, %v4406
    %v5431 = vsel %vm5429, %v5366, %v4408
    %v5432 = vsel %vm5429, %v5367, %v4410
    %v5433 = vsel %vm5429, %v5368, %v4412
    %v5434 = vsel %vm5429, %v5369, %v4414
    %v5435 = vsel %vm5429, %v5370, %v4416
    %v5436 = vsel %vm5429, %v5371, %v4418
    %v5437 = vsel %vm5429, %v5372, %v4420
    %v5438 = vsel %vm5429, %v5373, %v4422
    %v5439 = vsel %vm5429, %v5374, %v4424
    %v5440 = vsel %vm5429, %v5375, %v4426
    %v5441 = vsel %vm5429, %v5376, %v4428
    %v5442 = vsel %vm5429, %v5377, %v4430
    %v5443 = vsel %vm5429, %v5378, %v4432
    %v5444 = vsel %vm5429, %v5379, %v4434
    %v5445 = vsel %vm5429, %v5380, %v4436
    %v5446 = vsel %vm5429, %v5381, %v4438
    %v5447 = vsel %vm5429, %v5382, %v4440
    %v5448 = vsel %vm5429, %v5383, %v4442
    %v5449 = vsel %vm5429, %v5384, %v4444
    %v5450 = vsel %vm5429, %v5385, %v4446
    %v5451 = vsel %vm5429, %v5386, %v4448
    %v5452 = vsel %vm5429, %v5387, %v4450
    %v5453 = vsel %vm5429, %v5388, %v4452
    %v5454 = vsel %vm5429, %v5389, %v4454
    %v5455 = vsel %vm5429, %v5390, %v4456
    %v5456 = vsel %vm5429, %v5391, %v4458
    %v5457 = vsel %vm5429, %v5392, %v4460
    %v5458 = vsel %vm5429, %v5393, %v4462
    %v5459 = vsel %vm5429, %v5394, %v4464
    %v5460 = vsel %vm5429, %v5395, %v4466
    %v5461 = vsel %vm5429, %v5396, %v4468
    %v5462 = vsel %vm5429, %v5397, %v4470
    %v5463 = vsel %vm5429, %v5398, %v4472
    %v5464 = vsel %vm5429, %v5399, %v4474
    %v5465 = vsel %vm5429, %v5400, %v4476
    %v5466 = vsel %vm5429, %v5401, %v4478
    %v5467 = vsel %vm5429, %v5402, %v4480
    %v5468 = vsel %vm5429, %v5403, %v4482
    %v5469 = vsel %vm5429, %v5404, %v4484
    %v5470 = vsel %vm5429, %v5405, %v4486
    %v5471 = vsel %vm5429, %v5406, %v4488
    %v5472 = vsel %vm5429, %v5407, %v4490
    %v5473 = vsel %vm5429, %v5408, %v4492
    %v5474 = vsel %vm5429, %v5409, %v4494
    %v5475 = vsel %vm5429, %v5410, %v4496
    %v5476 = vsel %vm5429, %v5411, %v4498
    %v5477 = vsel %vm5429, %v5412, %v4500
    %v5478 = vsel %vm5429, %v5413, %v4502
    %v5479 = vsel %vm5429, %v5414, %v4504
    %v5480 = vsel %vm5429, %v5415, %v4506
    %v5481 = vsel %vm5429, %v5416, %v4508
    %v5482 = vsel %vm5429, %v5417, %v4510
    %v5483 = vsel %vm5429, %v5418, %v4512
    %v5484 = vsel %vm5429, %v5419, %v4514
    %v5485 = vsel %vm5429, %v5420, %v4516
    %v5486 = vsel %vm5429, %v5421, %v4518
    %v5487 = vsel %vm5429, %v5422, %v4520
    %v5488 = vsel %vm5429, %v5423, %v4522
    %v5489 = vsel %vm5429, %v5424, %v4524
    %v5490 = vsel %vm5429, %v5425, %v4526
    %v5491 = vsel %vm5429, %v5426, %v4528
    %v5492 = vsel %vm5429, %v5427, %v4530
    %v5493 = vsel %vm5429, %v5428, %v4532
    %vm5494 = vcmask 785408
    %v5495 = vsel %vm5494, %v5430, %v4598
    %v5496 = vsel %vm5494, %v5431, %v4600
    %v5497 = vsel %vm5494, %v5432, %v4602
    %v5498 = vsel %vm5494, %v5433, %v4604
    %v5499 = vsel %vm5494, %v5434, %v4606
    %v5500 = vsel %vm5494, %v5435, %v4608
    %v5501 = vsel %vm5494, %v5436, %v4610
    %v5502 = vsel %vm5494, %v5437, %v4612
    %v5503 = vsel %vm5494, %v5438, %v4614
    %v5504 = vsel %vm5494, %v5439, %v4616
    %v5505 = vsel %vm5494, %v5440, %v4618
    %v5506 = vsel %vm5494, %v5441, %v4620
    %v5507 = vsel %vm5494, %v5442, %v4622
    %v5508 = vsel %vm5494, %v5443, %v4624
    %v5509 = vsel %vm5494, %v5444, %v4626
    %v5510 = vsel %vm5494, %v5445, %v4628
    %v5511 = vsel %vm5494, %v5446, %v4630
    %v5512 = vsel %vm5494, %v5447, %v4632
    %v5513 = vsel %vm5494, %v5448, %v4634
    %v5514 = vsel %vm5494, %v5449, %v4636
    %v5515 = vsel %vm5494, %v5450, %v4638
    %v5516 = vsel %vm5494, %v5451, %v4640
    %v5517 = vsel %vm5494, %v5452, %v4642
    %v5518 = vsel %vm5494, %v5453, %v4644
    %v5519 = vsel %vm5494, %v5454, %v4646
    %v5520 = vsel %vm5494, %v5455, %v4648
    %v5521 = vsel %vm5494, %v5456, %v4650
    %v5522 = vsel %vm5494, %v5457, %v4652
    %v5523 = vsel %vm5494, %v5458, %v4654
    %v5524 = vsel %vm5494, %v5459, %v4656
    %v5525 = vsel %vm5494, %v5460, %v4658
    %v5526 = vsel %vm5494, %v5461, %v4660
    %v5527 = vsel %vm5494, %v5462, %v4662
    %v5528 = vsel %vm5494, %v5463, %v4664
    %v5529 = vsel %vm5494, %v5464, %v4666
    %v5530 = vsel %vm5494, %v5465, %v4668
    %v5531 = vsel %vm5494, %v5466, %v4670
    %v5532 = vsel %vm5494, %v5467, %v4672
    %v5533 = vsel %vm5494, %v5468, %v4674
    %v5534 = vsel %vm5494, %v5469, %v4676
    %v5535 = vsel %vm5494, %v5470, %v4678
    %v5536 = vsel %vm5494, %v5471, %v4680
    %v5537 = vsel %vm5494, %v5472, %v4682
    %v5538 = vsel %vm5494, %v5473, %v4684
    %v5539 = vsel %vm5494, %v5474, %v4686
    %v5540 = vsel %vm5494, %v5475, %v4688
    %v5541 = vsel %vm5494, %v5476, %v4690
    %v5542 = vsel %vm5494, %v5477, %v4692
    %v5543 = vsel %vm5494, %v5478, %v4694
    %v5544 = vsel %vm5494, %v5479, %v4696
    %v5545 = vsel %vm5494, %v5480, %v4698
    %v5546 = vsel %vm5494, %v5481, %v4700
    %v5547 = vsel %vm5494, %v5482, %v4702
    %v5548 = vsel %vm5494, %v5483, %v4704
    %v5549 = vsel %vm5494, %v5484, %v4706
    %v5550 = vsel %vm5494, %v5485, %v4708
    %v5551 = vsel %vm5494, %v5486, %v4710
    %v5552 = vsel %vm5494, %v5487, %v4712
    %v5553 = vsel %vm5494, %v5488, %v4714
    %v5554 = vsel %vm5494, %v5489, %v4716
    %v5555 = vsel %vm5494, %v5490, %v4718
    %v5556 = vsel %vm5494, %v5491, %v4720
    %v5557 = vsel %vm5494, %v5492, %v4722
    %v5558 = vsel %vm5494, %v5493, %v4724
    %v5559 = vsel %vm2855, %v3784, %v4790
    %v5560 = vsel %vm2855, %v3786, %v4792
    %v5561 = vsel %vm2855, %v3789, %v4794
    %v5562 = vsel %vm2855, %v3791, %v4796
    %v5563 = vsel %vm2855, %v3794, %v4798
    %v5564 = vsel %vm2855, %v3796, %v4800
    %v5565 = vsel %vm2855, %v3799, %v4802
    %v5566 = vsel %vm2855, %v3801, %v4804
    %v5567 = vsel %vm2855, %v3804, %v4806
    %v5568 = vsel %vm2855, %v3806, %v4808
    %v5569 = vsel %vm2855, %v3809, %v4810
    %v5570 = vsel %vm2855, %v3811, %v4812
    %v5571 = vsel %vm2855, %v3814, %v4814
    %v5572 = vsel %vm2855, %v3816, %v4816
    %v5573 = vsel %vm2855, %v3819, %v4818
    %v5574 = vsel %vm2855, %v3821, %v4820
    %v5575 = vsel %vm2855, %v3824, %v4822
    %v5576 = vsel %vm2855, %v3826, %v4824
    %v5577 = vsel %vm2855, %v3829, %v4826
    %v5578 = vsel %vm2855, %v3831, %v4828
    %v5579 = vsel %vm2855, %v3834, %v4830
    %v5580 = vsel %vm2855, %v3836, %v4832
    %v5581 = vsel %vm2855, %v3839, %v4834
    %v5582 = vsel %vm2855, %v3841, %v4836
    %v5583 = vsel %vm2855, %v3844, %v4838
    %v5584 = vsel %vm2855, %v3846, %v4840
    %v5585 = vsel %vm2855, %v3849, %v4842
    %v5586 = vsel %vm2855, %v3851, %v4844
    %v5587 = vsel %vm2855, %v3854, %v4846
    %v5588 = vsel %vm2855, %v3856, %v4848
    %v5589 = vsel %vm2855, %v4105, %v4850
    %v5590 = vsel %vm2855, %v4107, %v4852
    %v5591 = vsel %vm2855, %v3864, %v4854
    %v5592 = vsel %vm2855, %v3866, %v4856
    %v5593 = vsel %vm2855, %v3869, %v4858
    %v5594 = vsel %vm2855, %v3871, %v4860
    %v5595 = vsel %vm2855, %v3874, %v4862
    %v5596 = vsel %vm2855, %v3876, %v4864
    %v5597 = vsel %vm2855, %v3879, %v4866
    %v5598 = vsel %vm2855, %v3881, %v4868
    %v5599 = vsel %vm2855, %v3884, %v4870
    %v5600 = vsel %vm2855, %v3886, %v4872
    %v5601 = vsel %vm2855, %v3889, %v4874
    %v5602 = vsel %vm2855, %v3891, %v4876
    %v5603 = vsel %vm2855, %v3894, %v4878
    %v5604 = vsel %vm2855, %v3896, %v4880
    %v5605 = vsel %vm2855, %v3899, %v4882
    %v5606 = vsel %vm2855, %v3901, %v4884
    %v5607 = vsel %vm2855, %v3904, %v4886
    %v5608 = vsel %vm2855, %v3906, %v4888
    %v5609 = vsel %vm2855, %v3909, %v4890
    %v5610 = vsel %vm2855, %v3911, %v4892
    %v5611 = vsel %vm2855, %v3914, %v4894
    %v5612 = vsel %vm2855, %v3916, %v4896
    %v5613 = vsel %vm2855, %v3919, %v4898
    %v5614 = vsel %vm2855, %v3921, %v4900
    %v5615 = vsel %vm2855, %v3924, %v4902
    %v5616 = vsel %vm2855, %v3926, %v4904
    %v5617 = vsel %vm2855, %v3929, %v4906
    %v5618 = vsel %vm2855, %v3931, %v4908
    %v5619 = vsel %vm2855, %v3934, %v4910
    %v5620 = vsel %vm2855, %v3936, %v4912
    %v5621 = vsel %vm2855, %v4110, %v4914
    %v5622 = vsel %vm2855, %v4112, %v4916
    %v5623 = vsel %vm5429, %v5559, %v4982
    %v5624 = vsel %vm5429, %v5560, %v4984
    %v5625 = vsel %vm5429, %v5561, %v4986
    %v5626 = vsel %vm5429, %v5562, %v4988
    %v5627 = vsel %vm5429, %v5563, %v4990
    %v5628 = vsel %vm5429, %v5564, %v4992
    %v5629 = vsel %vm5429, %v5565, %v4994
    %v5630 = vsel %vm5429, %v5566, %v4996
    %v5631 = vsel %vm5429, %v5567, %v4998
    %v5632 = vsel %vm5429, %v5568, %v5000
    %v5633 = vsel %vm5429, %v5569, %v5002
    %v5634 = vsel %vm5429, %v5570, %v5004
    %v5635 = vsel %vm5429, %v5571, %v5006
    %v5636 = vsel %vm5429, %v5572, %v5008
    %v5637 = vsel %vm5429, %v5573, %v5010
    %v5638 = vsel %vm5429, %v5574, %v5012
    %v5639 = vsel %vm5429, %v5575, %v5014
    %v5640 = vsel %vm5429, %v5576, %v5016
    %v5641 = vsel %vm5429, %v5577, %v5018
    %v5642 = vsel %vm5429, %v5578, %v5020
    %v5643 = vsel %vm5429, %v5579, %v5022
    %v5644 = vsel %vm5429, %v5580, %v5024
    %v5645 = vsel %vm5429, %v5581, %v5026
    %v5646 = vsel %vm5429, %v5582, %v5028
    %v5647 = vsel %vm5429, %v5583, %v5030
    %v5648 = vsel %vm5429, %v5584, %v5032
    %v5649 = vsel %vm5429, %v5585, %v5034
    %v5650 = vsel %vm5429, %v5586, %v5036
    %v5651 = vsel %vm5429, %v5587, %v5038
    %v5652 = vsel %vm5429, %v5588, %v5040
    %v5653 = vsel %vm5429, %v5589, %v5042
    %v5654 = vsel %vm5429, %v5590, %v5044
    %v5655 = vsel %vm5429, %v5591, %v5046
    %v5656 = vsel %vm5429, %v5592, %v5048
    %v5657 = vsel %vm5429, %v5593, %v5050
    %v5658 = vsel %vm5429, %v5594, %v5052
    %v5659 = vsel %vm5429, %v5595, %v5054
    %v5660 = vsel %vm5429, %v5596, %v5056
    %v5661 = vsel %vm5429, %v5597, %v5058
    %v5662 = vsel %vm5429, %v5598, %v5060
    %v5663 = vsel %vm5429, %v5599, %v5062
    %v5664 = vsel %vm5429, %v5600, %v5064
    %v5665 = vsel %vm5429, %v5601, %v5066
    %v5666 = vsel %vm5429, %v5602, %v5068
    %v5667 = vsel %vm5429, %v5603, %v5070
    %v5668 = vsel %vm5429, %v5604, %v5072
    %v5669 = vsel %vm5429, %v5605, %v5074
    %v5670 = vsel %vm5429, %v5606, %v5076
    %v5671 = vsel %vm5429, %v5607, %v5078
    %v5672 = vsel %vm5429, %v5608, %v5080
    %v5673 = vsel %vm5429, %v5609, %v5082
    %v5674 = vsel %vm5429, %v5610, %v5084
    %v5675 = vsel %vm5429, %v5611, %v5086
    %v5676 = vsel %vm5429, %v5612, %v5088
    %v5677 = vsel %vm5429, %v5613, %v5090
    %v5678 = vsel %vm5429, %v5614, %v5092
    %v5679 = vsel %vm5429, %v5615, %v5094
    %v5680 = vsel %vm5429, %v5616, %v5096
    %v5681 = vsel %vm5429, %v5617, %v5098
    %v5682 = vsel %vm5429, %v5618, %v5100
    %v5683 = vsel %vm5429, %v5619, %v5102
    %v5684 = vsel %vm5429, %v5620, %v5104
    %v5685 = vsel %vm5429, %v5621, %v5106
    %v5686 = vsel %vm5429, %v5622, %v5108
    %v5687 = vsel %vm5494, %v5623, %v5174
    %v5688 = vsel %vm5494, %v5624, %v5176
    %v5689 = vsel %vm5494, %v5625, %v5178
    %v5690 = vsel %vm5494, %v5626, %v5180
    %v5691 = vsel %vm5494, %v5627, %v5182
    %v5692 = vsel %vm5494, %v5628, %v5184
    %v5693 = vsel %vm5494, %v5629, %v5186
    %v5694 = vsel %vm5494, %v5630, %v5188
    %v5695 = vsel %vm5494, %v5631, %v5190
    %v5696 = vsel %vm5494, %v5632, %v5192
    %v5697 = vsel %vm5494, %v5633, %v5194
    %v5698 = vsel %vm5494, %v5634, %v5196
    %v5699 = vsel %vm5494, %v5635, %v5198
    %v5700 = vsel %vm5494, %v5636, %v5200
    %v5701 = vsel %vm5494, %v5637, %v5202
    %v5702 = vsel %vm5494, %v5638, %v5204
    %v5703 = vsel %vm5494, %v5639, %v5206
    %v5704 = vsel %vm5494, %v5640, %v5208
    %v5705 = vsel %vm5494, %v5641, %v5210
    %v5706 = vsel %vm5494, %v5642, %v5212
    %v5707 = vsel %vm5494, %v5643, %v5214
    %v5708 = vsel %vm5494, %v5644, %v5216
    %v5709 = vsel %vm5494, %v5645, %v5218
    %v5710 = vsel %vm5494, %v5646, %v5220
    %v5711 = vsel %vm5494, %v5647, %v5222
    %v5712 = vsel %vm5494, %v5648, %v5224
    %v5713 = vsel %vm5494, %v5649, %v5226
    %v5714 = vsel %vm5494, %v5650, %v5228
    %v5715 = vsel %vm5494, %v5651, %v5230
    %v5716 = vsel %vm5494, %v5652, %v5232
    %v5717 = vsel %vm5494, %v5653, %v5234
    %v5718 = vsel %vm5494, %v5654, %v5236
    %v5719 = vsel %vm5494, %v5655, %v5238
    %v5720 = vsel %vm5494, %v5656, %v5240
    %v5721 = vsel %vm5494, %v5657, %v5242
    %v5722 = vsel %vm5494, %v5658, %v5244
    %v5723 = vsel %vm5494, %v5659, %v5246
    %v5724 = vsel %vm5494, %v5660, %v5248
    %v5725 = vsel %vm5494, %v5661, %v5250
    %v5726 = vsel %vm5494, %v5662, %v5252
    %v5727 = vsel %vm5494, %v5663, %v5254
    %v5728 = vsel %vm5494, %v5664, %v5256
    %v5729 = vsel %vm5494, %v5665, %v5258
    %v5730 = vsel %vm5494, %v5666, %v5260
    %v5731 = vsel %vm5494, %v5667, %v5262
    %v5732 = vsel %vm5494, %v5668, %v5264
    %v5733 = vsel %vm5494, %v5669, %v5266
    %v5734 = vsel %vm5494, %v5670, %v5268
    %v5735 = vsel %vm5494, %v5671, %v5270
    %v5736 = vsel %vm5494, %v5672, %v5272
    %v5737 = vsel %vm5494, %v5673, %v5274
    %v5738 = vsel %vm5494, %v5674, %v5276
    %v5739 = vsel %vm5494, %v5675, %v5278
    %v5740 = vsel %vm5494, %v5676, %v5280
    %v5741 = vsel %vm5494, %v5677, %v5282
    %v5742 = vsel %vm5494, %v5678, %v5284
    %v5743 = vsel %vm5494, %v5679, %v5286
    %v5744 = vsel %vm5494, %v5680, %v5288
    %v5745 = vsel %vm5494, %v5681, %v5290
    %v5746 = vsel %vm5494, %v5682, %v5292
    %v5747 = vsel %vm5494, %v5683, %v5294
    %v5748 = vsel %vm5494, %v5684, %v5296
    %v5749 = vsel %vm5494, %v5685, %v5298
    %v5750 = vsel %vm5494, %v5686, %v5300
    %v5751 = vld [vmem:[%s3] sm:$0xff]
    %v5752 = vld [vmem:[%s3 + $0x8] sm:$0xff]
    %v5753 = vld [vmem:[%s3 + $0x10] sm:$0xff]
    %v5754 = vld [vmem:[%s3 + $0x18] sm:$0xff]
    %v5755 = vld [vmem:[%s3 + $0x20] sm:$0xff]
    %v5756 = vld [vmem:[%s3 + $0x28] sm:$0xff]
    %v5757 = vld [vmem:[%s3 + $0x30] sm:$0xff]
    %v5758 = vld [vmem:[%s3 + $0x38] sm:$0xff]
    %v5759 = vld [vmem:[%s3 + $0x40] sm:$0xff]
    %v5760 = vld [vmem:[%s3 + $0x48] sm:$0xff]
    %v5761 = vld [vmem:[%s3 + $0x50] sm:$0xff]
    %v5762 = vld [vmem:[%s3 + $0x58] sm:$0xff]
    %v5763 = vld [vmem:[%s3 + $0x60] sm:$0xff]
    %v5764 = vld [vmem:[%s3 + $0x68] sm:$0xff]
    %v5765 = vld [vmem:[%s3 + $0x70] sm:$0xff]
    %v5766 = vld [vmem:[%s3 + $0x78] sm:$0xff]
    %v5767 = vld [vmem:[%s3 + $0x80] sm:$0xff]
    %v5768 = vld [vmem:[%s3 + $0x88] sm:$0xff]
    %v5769 = vld [vmem:[%s3 + $0x90] sm:$0xff]
    %v5770 = vld [vmem:[%s3 + $0x98] sm:$0xff]
    %v5771 = vld [vmem:[%s3 + $0xa0] sm:$0xff]
    %v5772 = vld [vmem:[%s3 + $0xa8] sm:$0xff]
    %v5773 = vld [vmem:[%s3 + $0xb0] sm:$0xff]
    %v5774 = vld [vmem:[%s3 + $0xb8] sm:$0xff]
    %v5775 = vld [vmem:[%s3 + $0xc0] sm:$0xff]
    %v5776 = vld [vmem:[%s3 + $0xc8] sm:$0xff]
    %v5777 = vld [vmem:[%s3 + $0xd0] sm:$0xff]
    %v5778 = vld [vmem:[%s3 + $0xd8] sm:$0xff]
    %v5779 = vld [vmem:[%s3 + $0xe0] sm:$0xff]
    %v5780 = vld [vmem:[%s3 + $0xe8] sm:$0xff]
    %v5781 = vld [vmem:[%s3 + $0xf0] sm:$0xff]
    %v5782 = vld [vmem:[%s3 + $0xf8] sm:$0xff]
    %v5783 = vld [vmem:[%s3 + $0x100] sm:$0xff]
    %v5784 = vld [vmem:[%s3 + $0x108] sm:$0xff]
    %v5785 = vld [vmem:[%s3 + $0x110] sm:$0xff]
    %v5786 = vld [vmem:[%s3 + $0x118] sm:$0xff]
    %v5787 = vld [vmem:[#allocation6] sm:$0x1]
    %v5789 = vperm.slane %v5787, 0
    %v5791 = vsel %vm2855, %v3949, 0
    %v5793 = vsel %vm2855, %v3951, 0
    %v5795 = vsel %vm2855, %v3954, 0
    %v5797 = vsel %vm2855, %v3956, 0
    %v5799 = vsel %vm2855, %v3959, 0
    %v5801 = vsel %vm2855, %v3961, 0
    %v5803 = vsel %vm2855, %v3964, 0
    %v5805 = vsel %vm2855, %v3966, 0
    %v5807 = vsel %vm2855, %v3969, 0
    %v5809 = vsel %vm2855, %v3971, 0
    %v5811 = vsel %vm2855, %v3974, 0
    %v5813 = vsel %vm2855, %v3976, 0
    %v5815 = vsel %vm2855, %v3979, 0
    %v5817 = vsel %vm2855, %v3981, 0
    %v5819 = vsel %vm2855, %v3984, 0
    %v5821 = vsel %vm2855, %v3986, 0
    %v5823 = vsel %vm2855, %v3989, 0
    %v5825 = vsel %vm2855, %v3991, 0
    %v5827 = vsel %vm2855, %v3994, 0
    %v5829 = vsel %vm2855, %v3996, 0
    %v5831 = vsel %vm2855, %v3999, 0
    %v5833 = vsel %vm2855, %v4001, 0
    %v5835 = vsel %vm2855, %v4004, 0
    %v5837 = vsel %vm2855, %v4006, 0
    %v5839 = vsel %vm2855, %v4009, 0
    %v5841 = vsel %vm2855, %v4011, 0
    %v5843 = vsel %vm2855, %v4014, 0
    %v5845 = vsel %vm2855, %v4016, 0
    %v5847 = vsel %vm2855, %v4179, 0
    %v5849 = vsel %vm2855, %v4181, 0
    %v5851 = vsel %vm2855, %v4205, 0
    %v5853 = vsel %vm2855, %v4207, 0
    %v5855 = vsel %vm2855, %v4029, 0
    %v5857 = vsel %vm2855, %v4031, 0
    %v5859 = vsel %vm2855, %v4034, 0
    %v5861 = vsel %vm2855, %v4036, 0
    %v5863 = vsel %vm2855, %v4039, 0
    %v5865 = vsel %vm2855, %v4041, 0
    %v5867 = vsel %vm2855, %v4044, 0
    %v5869 = vsel %vm2855, %v4046, 0
    %v5871 = vsel %vm2855, %v4049, 0
    %v5873 = vsel %vm2855, %v4051, 0
    %v5875 = vsel %vm2855, %v4054, 0
    %v5877 = vsel %vm2855, %v4056, 0
    %v5879 = vsel %vm2855, %v4059, 0
    %v5881 = vsel %vm2855, %v4061, 0
    %v5883 = vsel %vm2855, %v4064, 0
    %v5885 = vsel %vm2855, %v4066, 0
    %v5887 = vsel %vm2855, %v4069, 0
    %v5889 = vsel %vm2855, %v4071, 0
    %v5891 = vsel %vm2855, %v4074, 0
    %v5893 = vsel %vm2855, %v4076, 0
    %v5895 = vsel %vm2855, %v4079, 0
    %v5897 = vsel %vm2855, %v4081, 0
    %v5899 = vsel %vm2855, %v4084, 0
    %v5901 = vsel %vm2855, %v4086, 0
    %v5903 = vsel %vm2855, %v4089, 0
    %v5905 = vsel %vm2855, %v4091, 0
    %v5907 = vsel %vm2855, %v4094, 0
    %v5909 = vsel %vm2855, %v4096, 0
    %v5911 = vsel %vm2855, %v4184, 0
    %v5913 = vsel %vm2855, %v4186, 0
    %v5915 = vsel %vm2855, %v4210, 0
    %v5917 = vsel %vm2855, %v4212, 0
    %5919 = vmatpush.msra.mxu0 %v5766
    %5920 = vmatpush.msra.mxu0 %v5765
    %5921 = vmatpush.msra.mxu0 %v5764
    %5922 = vmatpush.msra.mxu0 %v5763
    %5923 = vmatpush.msra.mxu0 %v5762
    %5924 = vmatpush.msra.mxu0 %v5761
    %5925 = vmatpush.msra.mxu0 %v5760
    %5926 = vmatpush.msra.mxu0 %v5759
    %5927 = vmatpush.msra.mxu0 %v5758
    %5928 = vmatpush.msra.mxu0 %v5757
    %5929 = vmatpush.msra.mxu0 %v5756
    %5930 = vmatpush.msra.mxu0 %v5755
    %5931 = vmatpush.msra.mxu0 %v5754
    %5932 = vmatpush.msra.mxu0 %v5753
    %5933 = vmatpush.msra.mxu0 %v5752
    %5934 = vmatpush.msra.mxu0 %v5751
    %5935 = vmatmul.f32.gmra.mxu0 %v5495
    %v5936 = vpop.f32.mrf.mxu0
    %v5937 = vadd.f32 %v5789, %v5936
    %5938 = vmatmul.f32.gmra.mxu0 %v5496
    %v5939 = vpop.f32.mrf.mxu0
    %v5940 = vadd.f32 %v5789, %v5939
    %5941 = vmatmul.f32.gmra.mxu0 %v5497
    %v5942 = vpop.f32.mrf.mxu0
    %v5943 = vadd.f32 %v5789, %v5942
    %5944 = vmatmul.f32.gmra.mxu0 %v5498
    %v5945 = vpop.f32.mrf.mxu0
    %v5946 = vadd.f32 %v5789, %v5945
    %5947 = vmatmul.f32.gmra.mxu0 %v5499
    %v5948 = vpop.f32.mrf.mxu0
    %v5949 = vadd.f32 %v5789, %v5948
    %5950 = vmatmul.f32.gmra.mxu0 %v5500
    %v5951 = vpop.f32.mrf.mxu0
    %v5952 = vadd.f32 %v5789, %v5951
    %5953 = vmatmul.f32.gmra.mxu0 %v5501
    %v5954 = vpop.f32.mrf.mxu0
    %v5955 = vadd.f32 %v5789, %v5954
    %5956 = vmatmul.f32.gmra.mxu0 %v5502
    %v5957 = vpop.f32.mrf.mxu0
    %v5958 = vadd.f32 %v5789, %v5957
    %5959 = vmatmul.f32.gmra.mxu0 %v5503
    %v5960 = vpop.f32.mrf.mxu0
    %v5961 = vadd.f32 %v5789, %v5960
    %5962 = vmatmul.f32.gmra.mxu0 %v5504
    %v5963 = vpop.f32.mrf.mxu0
    %v5964 = vadd.f32 %v5789, %v5963
    %5965 = vmatmul.f32.gmra.mxu0 %v5505
    %v5966 = vpop.f32.mrf.mxu0
    %v5967 = vadd.f32 %v5789, %v5966
    %5968 = vmatmul.f32.gmra.mxu0 %v5506
    %v5969 = vpop.f32.mrf.mxu0
    %v5970 = vadd.f32 %v5789, %v5969
    %5971 = vmatmul.f32.gmra.mxu0 %v5507
    %v5972 = vpop.f32.mrf.mxu0
    %v5973 = vadd.f32 %v5789, %v5972
    %5974 = vmatmul.f32.gmra.mxu0 %v5508
    %v5975 = vpop.f32.mrf.mxu0
    %v5976 = vadd.f32 %v5789, %v5975
    %5977 = vmatmul.f32.gmra.mxu0 %v5509
    %v5978 = vpop.f32.mrf.mxu0
    %v5979 = vadd.f32 %v5789, %v5978
    %5980 = vmatmul.f32.gmra.mxu0 %v5510
    %v5981 = vpop.f32.mrf.mxu0
    %v5982 = vadd.f32 %v5789, %v5981
    %5983 = vmatmul.f32.gmra.mxu0 %v5511
    %v5984 = vpop.f32.mrf.mxu0
    %v5985 = vadd.f32 %v5789, %v5984
    %5986 = vmatmul.f32.gmra.mxu0 %v5512
    %v5987 = vpop.f32.mrf.mxu0
    %v5988 = vadd.f32 %v5789, %v5987
    %5989 = vmatmul.f32.gmra.mxu0 %v5513
    %v5990 = vpop.f32.mrf.mxu0
    %v5991 = vadd.f32 %v5789, %v5990
    %5992 = vmatmul.f32.gmra.mxu0 %v5514
    %v5993 = vpop.f32.mrf.mxu0
    %v5994 = vadd.f32 %v5789, %v5993
    %5995 = vmatmul.f32.gmra.mxu0 %v5515
    %v5996 = vpop.f32.mrf.mxu0
    %v5997 = vadd.f32 %v5789, %v5996
    %5998 = vmatmul.f32.gmra.mxu0 %v5516
    %v5999 = vpop.f32.mrf.mxu0
    %v6000 = vadd.f32 %v5789, %v5999
    %6001 = vmatmul.f32.gmra.mxu0 %v5517
    %v6002 = vpop.f32.mrf.mxu0
    %v6003 = vadd.f32 %v5789, %v6002
    %6004 = vmatmul.f32.gmra.mxu0 %v5518
    %v6005 = vpop.f32.mrf.mxu0
    %v6006 = vadd.f32 %v5789, %v6005
    %6007 = vmatmul.f32.gmra.mxu0 %v5519
    %v6008 = vpop.f32.mrf.mxu0
    %v6009 = vadd.f32 %v5789, %v6008
    %6010 = vmatmul.f32.gmra.mxu0 %v5520
    %v6011 = vpop.f32.mrf.mxu0
    %v6012 = vadd.f32 %v5789, %v6011
    %6013 = vmatmul.f32.gmra.mxu0 %v5521
    %v6014 = vpop.f32.mrf.mxu0
    %v6015 = vadd.f32 %v5789, %v6014
    %6016 = vmatmul.f32.gmra.mxu0 %v5522
    %v6017 = vpop.f32.mrf.mxu0
    %v6018 = vadd.f32 %v5789, %v6017
    %6019 = vmatmul.f32.gmra.mxu0 %v5523
    %v6020 = vpop.f32.mrf.mxu0
    %v6021 = vadd.f32 %v5789, %v6020
    %6022 = vmatmul.f32.gmra.mxu0 %v5524
    %v6023 = vpop.f32.mrf.mxu0
    %v6024 = vadd.f32 %v5789, %v6023
    %6025 = vmatmul.f32.gmra.mxu0 %v5525
    %v6026 = vpop.f32.mrf.mxu0
    %v6027 = vadd.f32 %v5789, %v6026
    %6028 = vmatmul.f32.gmra.mxu0 %v5526
    %v6029 = vpop.f32.mrf.mxu0
    %v6030 = vadd.f32 %v5789, %v6029
    %6031 = vmatmul.f32.gmra.mxu0 %v5527
    %v6032 = vpop.f32.mrf.mxu0
    %v6033 = vadd.f32 %v5789, %v6032
    %6034 = vmatmul.f32.gmra.mxu0 %v5528
    %v6035 = vpop.f32.mrf.mxu0
    %v6036 = vadd.f32 %v5789, %v6035
    %6037 = vmatmul.f32.gmra.mxu0 %v5529
    %v6038 = vpop.f32.mrf.mxu0
    %v6039 = vadd.f32 %v5789, %v6038
    %6040 = vmatmul.f32.gmra.mxu0 %v5530
    %v6041 = vpop.f32.mrf.mxu0
    %v6042 = vadd.f32 %v5789, %v6041
    %6043 = vmatmul.f32.gmra.mxu0 %v5531
    %v6044 = vpop.f32.mrf.mxu0
    %v6045 = vadd.f32 %v5789, %v6044
    %6046 = vmatmul.f32.gmra.mxu0 %v5532
    %v6047 = vpop.f32.mrf.mxu0
    %v6048 = vadd.f32 %v5789, %v6047
    %6049 = vmatmul.f32.gmra.mxu0 %v5533
    %v6050 = vpop.f32.mrf.mxu0
    %v6051 = vadd.f32 %v5789, %v6050
    %6052 = vmatmul.f32.gmra.mxu0 %v5534
    %v6053 = vpop.f32.mrf.mxu0
    %v6054 = vadd.f32 %v5789, %v6053
    %6055 = vmatmul.f32.gmra.mxu0 %v5535
    %v6056 = vpop.f32.mrf.mxu0
    %v6057 = vadd.f32 %v5789, %v6056
    %6058 = vmatmul.f32.gmra.mxu0 %v5536
    %v6059 = vpop.f32.mrf.mxu0
    %v6060 = vadd.f32 %v5789, %v6059
    %6061 = vmatmul.f32.gmra.mxu0 %v5537
    %v6062 = vpop.f32.mrf.mxu0
    %v6063 = vadd.f32 %v5789, %v6062
    %6064 = vmatmul.f32.gmra.mxu0 %v5538
    %v6065 = vpop.f32.mrf.mxu0
    %v6066 = vadd.f32 %v5789, %v6065
    %6067 = vmatmul.f32.gmra.mxu0 %v5539
    %v6068 = vpop.f32.mrf.mxu0
    %v6069 = vadd.f32 %v5789, %v6068
    %6070 = vmatmul.f32.gmra.mxu0 %v5540
    %v6071 = vpop.f32.mrf.mxu0
    %v6072 = vadd.f32 %v5789, %v6071
    %6073 = vmatmul.f32.gmra.mxu0 %v5541
    %v6074 = vpop.f32.mrf.mxu0
    %v6075 = vadd.f32 %v5789, %v6074
    %6076 = vmatmul.f32.gmra.mxu0 %v5542
    %v6077 = vpop.f32.mrf.mxu0
    %v6078 = vadd.f32 %v5789, %v6077
    %6079 = vmatmul.f32.gmra.mxu0 %v5543
    %v6080 = vpop.f32.mrf.mxu0
    %v6081 = vadd.f32 %v5789, %v6080
    %6082 = vmatmul.f32.gmra.mxu0 %v5544
    %v6083 = vpop.f32.mrf.mxu0
    %v6084 = vadd.f32 %v5789, %v6083
    %6085 = vmatmul.f32.gmra.mxu0 %v5545
    %v6086 = vpop.f32.mrf.mxu0
    %v6087 = vadd.f32 %v5789, %v6086
    %6088 = vmatmul.f32.gmra.mxu0 %v5546
    %v6089 = vpop.f32.mrf.mxu0
    %v6090 = vadd.f32 %v5789, %v6089
    %6091 = vmatmul.f32.gmra.mxu0 %v5547
    %v6092 = vpop.f32.mrf.mxu0
    %v6093 = vadd.f32 %v5789, %v6092
    %6094 = vmatmul.f32.gmra.mxu0 %v5548
    %v6095 = vpop.f32.mrf.mxu0
    %v6096 = vadd.f32 %v5789, %v6095
    %6097 = vmatmul.f32.gmra.mxu0 %v5549
    %v6098 = vpop.f32.mrf.mxu0
    %v6099 = vadd.f32 %v5789, %v6098
    %6100 = vmatmul.f32.gmra.mxu0 %v5550
    %v6101 = vpop.f32.mrf.mxu0
    %v6102 = vadd.f32 %v5789, %v6101
    %6103 = vmatmul.f32.gmra.mxu0 %v5551
    %v6104 = vpop.f32.mrf.mxu0
    %v6105 = vadd.f32 %v5789, %v6104
    %6106 = vmatmul.f32.gmra.mxu0 %v5552
    %v6107 = vpop.f32.mrf.mxu0
    %v6108 = vadd.f32 %v5789, %v6107
    %6109 = vmatmul.f32.gmra.mxu0 %v5553
    %v6110 = vpop.f32.mrf.mxu0
    %v6111 = vadd.f32 %v5789, %v6110
    %6112 = vmatmul.f32.gmra.mxu0 %v5554
    %v6113 = vpop.f32.mrf.mxu0
    %v6114 = vadd.f32 %v5789, %v6113
    %6115 = vmatmul.f32.gmra.mxu0 %v5555
    %v6116 = vpop.f32.mrf.mxu0
    %v6117 = vadd.f32 %v5789, %v6116
    %6118 = vmatmul.f32.gmra.mxu0 %v5556
    %v6119 = vpop.f32.mrf.mxu0
    %v6120 = vadd.f32 %v5789, %v6119
    %6121 = vmatmul.f32.gmra.mxu0 %v5557
    %v6122 = vpop.f32.mrf.mxu0
    %v6123 = vadd.f32 %v5789, %v6122
    %6124 = vmatmul.f32.gmra.mxu0 %v5558
    %v6125 = vpop.f32.mrf.mxu0
    %v6126 = vadd.f32 %v5789, %v6125
    %6127 = vdwg.mxu0
    %6128 = vmatpush.msra.mxu0 %v5782
    %6129 = vmatpush.msra.mxu0 %v5781
    %6130 = vmatpush.msra.mxu0 %v5780
    %6131 = vmatpush.msra.mxu0 %v5779
    %6132 = vmatpush.msra.mxu0 %v5778
    %6133 = vmatpush.msra.mxu0 %v5777
    %6134 = vmatpush.msra.mxu0 %v5776
    %6135 = vmatpush.msra.mxu0 %v5775
    %6136 = vmatpush.msra.mxu0 %v5774
    %6137 = vmatpush.msra.mxu0 %v5773
    %6138 = vmatpush.msra.mxu0 %v5772
    %6139 = vmatpush.msra.mxu0 %v5771
    %6140 = vmatpush.msra.mxu0 %v5770
    %6141 = vmatpush.msra.mxu0 %v5769
    %6142 = vmatpush.msra.mxu0 %v5768
    %6143 = vmatpush.msra.mxu0 %v5767
    %6144 = vmatmul.f32.gmra.mxu0 %v5687
    %v6145 = vpop.f32.mrf.mxu0
    %v6146 = vadd.f32 %v5937, %v6145
    %6147 = vmatmul.f32.gmra.mxu0 %v5688
    %v6148 = vpop.f32.mrf.mxu0
    %v6149 = vadd.f32 %v5940, %v6148
    %6150 = vmatmul.f32.gmra.mxu0 %v5689
    %v6151 = vpop.f32.mrf.mxu0
    %v6152 = vadd.f32 %v5943, %v6151
    %6153 = vmatmul.f32.gmra.mxu0 %v5690
    %v6154 = vpop.f32.mrf.mxu0
    %v6155 = vadd.f32 %v5946, %v6154
    %6156 = vmatmul.f32.gmra.mxu0 %v5691
    %v6157 = vpop.f32.mrf.mxu0
    %v6158 = vadd.f32 %v5949, %v6157
    %6159 = vmatmul.f32.gmra.mxu0 %v5692
    %v6160 = vpop.f32.mrf.mxu0
    %v6161 = vadd.f32 %v5952, %v6160
    %6162 = vmatmul.f32.gmra.mxu0 %v5693
    %v6163 = vpop.f32.mrf.mxu0
    %v6164 = vadd.f32 %v5955, %v6163
    %6165 = vmatmul.f32.gmra.mxu0 %v5694
    %v6166 = vpop.f32.mrf.mxu0
    %v6167 = vadd.f32 %v5958, %v6166
    %6168 = vmatmul.f32.gmra.mxu0 %v5695
    %v6169 = vpop.f32.mrf.mxu0
    %v6170 = vadd.f32 %v5961, %v6169
    %6171 = vmatmul.f32.gmra.mxu0 %v5696
    %v6172 = vpop.f32.mrf.mxu0
    %v6173 = vadd.f32 %v5964, %v6172
    %6174 = vmatmul.f32.gmra.mxu0 %v5697
    %v6175 = vpop.f32.mrf.mxu0
    %v6176 = vadd.f32 %v5967, %v6175
    %6177 = vmatmul.f32.gmra.mxu0 %v5698
    %v6178 = vpop.f32.mrf.mxu0
    %v6179 = vadd.f32 %v5970, %v6178
    %6180 = vmatmul.f32.gmra.mxu0 %v5699
    %v6181 = vpop.f32.mrf.mxu0
    %v6182 = vadd.f32 %v5973, %v6181
    %6183 = vmatmul.f32.gmra.mxu0 %v5700
    %v6184 = vpop.f32.mrf.mxu0
    %v6185 = vadd.f32 %v5976, %v6184
    %6186 = vmatmul.f32.gmra.mxu0 %v5701
    %v6187 = vpop.f32.mrf.mxu0
    %v6188 = vadd.f32 %v5979, %v6187
    %6189 = vmatmul.f32.gmra.mxu0 %v5702
    %v6190 = vpop.f32.mrf.mxu0
    %v6191 = vadd.f32 %v5982, %v6190
    %6192 = vmatmul.f32.gmra.mxu0 %v5703
    %v6193 = vpop.f32.mrf.mxu0
    %v6194 = vadd.f32 %v5985, %v6193
    %6195 = vmatmul.f32.gmra.mxu0 %v5704
    %v6196 = vpop.f32.mrf.mxu0
    %v6197 = vadd.f32 %v5988, %v6196
    %6198 = vmatmul.f32.gmra.mxu0 %v5705
    %v6199 = vpop.f32.mrf.mxu0
    %v6200 = vadd.f32 %v5991, %v6199
    %6201 = vmatmul.f32.gmra.mxu0 %v5706
    %v6202 = vpop.f32.mrf.mxu0
    %v6203 = vadd.f32 %v5994, %v6202
    %6204 = vmatmul.f32.gmra.mxu0 %v5707
    %v6205 = vpop.f32.mrf.mxu0
    %v6206 = vadd.f32 %v5997, %v6205
    %6207 = vmatmul.f32.gmra.mxu0 %v5708
    %v6208 = vpop.f32.mrf.mxu0
    %v6209 = vadd.f32 %v6000, %v6208
    %6210 = vmatmul.f32.gmra.mxu0 %v5709
    %v6211 = vpop.f32.mrf.mxu0
    %v6212 = vadd.f32 %v6003, %v6211
    %6213 = vmatmul.f32.gmra.mxu0 %v5710
    %v6214 = vpop.f32.mrf.mxu0
    %v6215 = vadd.f32 %v6006, %v6214
    %6216 = vmatmul.f32.gmra.mxu0 %v5711
    %v6217 = vpop.f32.mrf.mxu0
    %v6218 = vadd.f32 %v6009, %v6217
    %6219 = vmatmul.f32.gmra.mxu0 %v5712
    %v6220 = vpop.f32.mrf.mxu0
    %v6221 = vadd.f32 %v6012, %v6220
    %6222 = vmatmul.f32.gmra.mxu0 %v5713
    %v6223 = vpop.f32.mrf.mxu0
    %v6224 = vadd.f32 %v6015, %v6223
    %6225 = vmatmul.f32.gmra.mxu0 %v5714
    %v6226 = vpop.f32.mrf.mxu0
    %v6227 = vadd.f32 %v6018, %v6226
    %6228 = vmatmul.f32.gmra.mxu0 %v5715
    %v6229 = vpop.f32.mrf.mxu0
    %v6230 = vadd.f32 %v6021, %v6229
    %6231 = vmatmul.f32.gmra.mxu0 %v5716
    %v6232 = vpop.f32.mrf.mxu0
    %v6233 = vadd.f32 %v6024, %v6232
    %6234 = vmatmul.f32.gmra.mxu0 %v5717
    %v6235 = vpop.f32.mrf.mxu0
    %v6236 = vadd.f32 %v6027, %v6235
    %6237 = vmatmul.f32.gmra.mxu0 %v5718
    %v6238 = vpop.f32.mrf.mxu0
    %v6239 = vadd.f32 %v6030, %v6238
    %6240 = vmatmul.f32.gmra.mxu0 %v5719
    %v6241 = vpop.f32.mrf.mxu0
    %v6242 = vadd.f32 %v6033, %v6241
    %6243 = vmatmul.f32.gmra.mxu0 %v5720
    %v6244 = vpop.f32.mrf.mxu0
    %v6245 = vadd.f32 %v6036, %v6244
    %6246 = vmatmul.f32.gmra.mxu0 %v5721
    %v6247 = vpop.f32.mrf.mxu0
    %v6248 = vadd.f32 %v6039, %v6247
    %6249 = vmatmul.f32.gmra.mxu0 %v5722
    %v6250 = vpop.f32.mrf.mxu0
    %v6251 = vadd.f32 %v6042, %v6250
    %6252 = vmatmul.f32.gmra.mxu0 %v5723
    %v6253 = vpop.f32.mrf.mxu0
    %v6254 = vadd.f32 %v6045, %v6253
    %6255 = vmatmul.f32.gmra.mxu0 %v5724
    %v6256 = vpop.f32.mrf.mxu0
    %v6257 = vadd.f32 %v6048, %v6256
    %6258 = vmatmul.f32.gmra.mxu0 %v5725
    %v6259 = vpop.f32.mrf.mxu0
    %v6260 = vadd.f32 %v6051, %v6259
    %6261 = vmatmul.f32.gmra.mxu0 %v5726
    %v6262 = vpop.f32.mrf.mxu0
    %v6263 = vadd.f32 %v6054, %v6262
    %6264 = vmatmul.f32.gmra.mxu0 %v5727
    %v6265 = vpop.f32.mrf.mxu0
    %v6266 = vadd.f32 %v6057, %v6265
    %6267 = vmatmul.f32.gmra.mxu0 %v5728
    %v6268 = vpop.f32.mrf.mxu0
    %v6269 = vadd.f32 %v6060, %v6268
    %6270 = vmatmul.f32.gmra.mxu0 %v5729
    %v6271 = vpop.f32.mrf.mxu0
    %v6272 = vadd.f32 %v6063, %v6271
    %6273 = vmatmul.f32.gmra.mxu0 %v5730
    %v6274 = vpop.f32.mrf.mxu0
    %v6275 = vadd.f32 %v6066, %v6274
    %6276 = vmatmul.f32.gmra.mxu0 %v5731
    %v6277 = vpop.f32.mrf.mxu0
    %v6278 = vadd.f32 %v6069, %v6277
    %6279 = vmatmul.f32.gmra.mxu0 %v5732
    %v6280 = vpop.f32.mrf.mxu0
    %v6281 = vadd.f32 %v6072, %v6280
    %6282 = vmatmul.f32.gmra.mxu0 %v5733
    %v6283 = vpop.f32.mrf.mxu0
    %v6284 = vadd.f32 %v6075, %v6283
    %6285 = vmatmul.f32.gmra.mxu0 %v5734
    %v6286 = vpop.f32.mrf.mxu0
    %v6287 = vadd.f32 %v6078, %v6286
    %6288 = vmatmul.f32.gmra.mxu0 %v5735
    %v6289 = vpop.f32.mrf.mxu0
    %v6290 = vadd.f32 %v6081, %v6289
    %6291 = vmatmul.f32.gmra.mxu0 %v5736
    %v6292 = vpop.f32.mrf.mxu0
    %v6293 = vadd.f32 %v6084, %v6292
    %6294 = vmatmul.f32.gmra.mxu0 %v5737
    %v6295 = vpop.f32.mrf.mxu0
    %v6296 = vadd.f32 %v6087, %v6295
    %6297 = vmatmul.f32.gmra.mxu0 %v5738
    %v6298 = vpop.f32.mrf.mxu0
    %v6299 = vadd.f32 %v6090, %v6298
    %6300 = vmatmul.f32.gmra.mxu0 %v5739
    %v6301 = vpop.f32.mrf.mxu0
    %v6302 = vadd.f32 %v6093, %v6301
    %6303 = vmatmul.f32.gmra.mxu0 %v5740
    %v6304 = vpop.f32.mrf.mxu0
    %v6305 = vadd.f32 %v6096, %v6304
    %6306 = vmatmul.f32.gmra.mxu0 %v5741
    %v6307 = vpop.f32.mrf.mxu0
    %v6308 = vadd.f32 %v6099, %v6307
    %6309 = vmatmul.f32.gmra.mxu0 %v5742
    %v6310 = vpop.f32.mrf.mxu0
    %v6311 = vadd.f32 %v6102, %v6310
    %6312 = vmatmul.f32.gmra.mxu0 %v5743
    %v6313 = vpop.f32.mrf.mxu0
    %v6314 = vadd.f32 %v6105, %v6313
    %6315 = vmatmul.f32.gmra.mxu0 %v5744
    %v6316 = vpop.f32.mrf.mxu0
    %v6317 = vadd.f32 %v6108, %v6316
    %6318 = vmatmul.f32.gmra.mxu0 %v5745
    %v6319 = vpop.f32.mrf.mxu0
    %v6320 = vadd.f32 %v6111, %v6319
    %6321 = vmatmul.f32.gmra.mxu0 %v5746
    %v6322 = vpop.f32.mrf.mxu0
    %v6323 = vadd.f32 %v6114, %v6322
    %6324 = vmatmul.f32.gmra.mxu0 %v5747
    %v6325 = vpop.f32.mrf.mxu0
    %v6326 = vadd.f32 %v6117, %v6325
    %6327 = vmatmul.f32.gmra.mxu0 %v5748
    %v6328 = vpop.f32.mrf.mxu0
    %v6329 = vadd.f32 %v6120, %v6328
    %6330 = vmatmul.f32.gmra.mxu0 %v5749
    %v6331 = vpop.f32.mrf.mxu0
    %v6332 = vadd.f32 %v6123, %v6331
    %6333 = vmatmul.f32.gmra.mxu0 %v5750
    %v6334 = vpop.f32.mrf.mxu0
    %v6335 = vadd.f32 %v6126, %v6334
    %6336 = vdwg.mxu0
    %6337 = vmatpush.msra.mxu0 0.0
    %6338 = vmatpush.msra.mxu0 0.0
    %6339 = vmatpush.msra.mxu0 0.0
    %6340 = vmatpush.msra.mxu0 0.0
    %6341 = vmatpush.msra.mxu0 0.0
    %6342 = vmatpush.msra.mxu0 0.0
    %6343 = vmatpush.msra.mxu0 0.0
    %6344 = vmatpush.msra.mxu0 0.0
    %6345 = vmatpush.msra.mxu0 0.0
    %6346 = vmatpush.msra.mxu0 0.0
    %6347 = vmatpush.msra.mxu0 0.0
    %6348 = vmatpush.msra.mxu0 0.0
    %6349 = vmatpush.msra.mxu0 %v5786
    %6350 = vmatpush.msra.mxu0 %v5785
    %6351 = vmatpush.msra.mxu0 %v5784
    %6352 = vmatpush.msra.mxu0 %v5783
    %6353 = vmatmul.f32.gmra.mxu0 %v5791
    %v6354 = vpop.f32.mrf.mxu0
    %v6355 = vadd.f32 %v6146, %v6354
    %6356 = vmatmul.f32.gmra.mxu0 %v5793
    %v6357 = vpop.f32.mrf.mxu0
    %v6358 = vadd.f32 %v6149, %v6357
    %6359 = vmatmul.f32.gmra.mxu0 %v5795
    %v6360 = vpop.f32.mrf.mxu0
    %v6361 = vadd.f32 %v6152, %v6360
    %6362 = vmatmul.f32.gmra.mxu0 %v5797
    %v6363 = vpop.f32.mrf.mxu0
    %v6364 = vadd.f32 %v6155, %v6363
    %6365 = vmatmul.f32.gmra.mxu0 %v5799
    %v6366 = vpop.f32.mrf.mxu0
    %v6367 = vadd.f32 %v6158, %v6366
    %6368 = vmatmul.f32.gmra.mxu0 %v5801
    %v6369 = vpop.f32.mrf.mxu0
    %v6370 = vadd.f32 %v6161, %v6369
    %6371 = vmatmul.f32.gmra.mxu0 %v5803
    %v6372 = vpop.f32.mrf.mxu0
    %v6373 = vadd.f32 %v6164, %v6372
    %6374 = vmatmul.f32.gmra.mxu0 %v5805
    %v6375 = vpop.f32.mrf.mxu0
    %v6376 = vadd.f32 %v6167, %v6375
    %6377 = vmatmul.f32.gmra.mxu0 %v5807
    %v6378 = vpop.f32.mrf.mxu0
    %v6379 = vadd.f32 %v6170, %v6378
    %6380 = vmatmul.f32.gmra.mxu0 %v5809
    %v6381 = vpop.f32.mrf.mxu0
    %v6382 = vadd.f32 %v6173, %v6381
    %6383 = vmatmul.f32.gmra.mxu0 %v5811
    %v6384 = vpop.f32.mrf.mxu0
    %v6385 = vadd.f32 %v6176, %v6384
    %6386 = vmatmul.f32.gmra.mxu0 %v5813
    %v6387 = vpop.f32.mrf.mxu0
    %v6388 = vadd.f32 %v6179, %v6387
    %6389 = vmatmul.f32.gmra.mxu0 %v5815
    %v6390 = vpop.f32.mrf.mxu0
    %v6391 = vadd.f32 %v6182, %v6390
    %6392 = vmatmul.f32.gmra.mxu0 %v5817
    %v6393 = vpop.f32.mrf.mxu0
    %v6394 = vadd.f32 %v6185, %v6393
    %6395 = vmatmul.f32.gmra.mxu0 %v5819
    %v6396 = vpop.f32.mrf.mxu0
    %v6397 = vadd.f32 %v6188, %v6396
    %6398 = vmatmul.f32.gmra.mxu0 %v5821
    %v6399 = vpop.f32.mrf.mxu0
    %v6400 = vadd.f32 %v6191, %v6399
    %6401 = vmatmul.f32.gmra.mxu0 %v5823
    %v6402 = vpop.f32.mrf.mxu0
    %v6403 = vadd.f32 %v6194, %v6402
    %6404 = vmatmul.f32.gmra.mxu0 %v5825
    %v6405 = vpop.f32.mrf.mxu0
    %v6406 = vadd.f32 %v6197, %v6405
    %6407 = vmatmul.f32.gmra.mxu0 %v5827
    %v6408 = vpop.f32.mrf.mxu0
    %v6409 = vadd.f32 %v6200, %v6408
    %6410 = vmatmul.f32.gmra.mxu0 %v5829
    %v6411 = vpop.f32.mrf.mxu0
    %v6412 = vadd.f32 %v6203, %v6411
    %6413 = vmatmul.f32.gmra.mxu0 %v5831
    %v6414 = vpop.f32.mrf.mxu0
    %v6415 = vadd.f32 %v6206, %v6414
    %6416 = vmatmul.f32.gmra.mxu0 %v5833
    %v6417 = vpop.f32.mrf.mxu0
    %v6418 = vadd.f32 %v6209, %v6417
    %6419 = vmatmul.f32.gmra.mxu0 %v5835
    %v6420 = vpop.f32.mrf.mxu0
    %v6421 = vadd.f32 %v6212, %v6420
    %6422 = vmatmul.f32.gmra.mxu0 %v5837
    %v6423 = vpop.f32.mrf.mxu0
    %v6424 = vadd.f32 %v6215, %v6423
    %6425 = vmatmul.f32.gmra.mxu0 %v5839
    %v6426 = vpop.f32.mrf.mxu0
    %v6427 = vadd.f32 %v6218, %v6426
    %6428 = vmatmul.f32.gmra.mxu0 %v5841
    %v6429 = vpop.f32.mrf.mxu0
    %v6430 = vadd.f32 %v6221, %v6429
    %6431 = vmatmul.f32.gmra.mxu0 %v5843
    %v6432 = vpop.f32.mrf.mxu0
    %v6433 = vadd.f32 %v6224, %v6432
    %6434 = vmatmul.f32.gmra.mxu0 %v5845
    %v6435 = vpop.f32.mrf.mxu0
    %v6436 = vadd.f32 %v6227, %v6435
    %6437 = vmatmul.f32.gmra.mxu0 %v5847
    %v6438 = vpop.f32.mrf.mxu0
    %v6439 = vadd.f32 %v6230, %v6438
    %6440 = vmatmul.f32.gmra.mxu0 %v5849
    %v6441 = vpop.f32.mrf.mxu0
    %v6442 = vadd.f32 %v6233, %v6441
    %6443 = vmatmul.f32.gmra.mxu0 %v5851
    %v6444 = vpop.f32.mrf.mxu0
    %v6445 = vadd.f32 %v6236, %v6444
    %6446 = vmatmul.f32.gmra.mxu0 %v5853
    %v6447 = vpop.f32.mrf.mxu0
    %v6448 = vadd.f32 %v6239, %v6447
    %6449 = vmatmul.f32.gmra.mxu0 %v5855
    %v6450 = vpop.f32.mrf.mxu0
    %v6451 = vadd.f32 %v6242, %v6450
    %6452 = vmatmul.f32.gmra.mxu0 %v5857
    %v6453 = vpop.f32.mrf.mxu0
    %v6454 = vadd.f32 %v6245, %v6453
    %6455 = vmatmul.f32.gmra.mxu0 %v5859
    %v6456 = vpop.f32.mrf.mxu0
    %v6457 = vadd.f32 %v6248, %v6456
    %6458 = vmatmul.f32.gmra.mxu0 %v5861
    %v6459 = vpop.f32.mrf.mxu0
    %v6460 = vadd.f32 %v6251, %v6459
    %6461 = vmatmul.f32.gmra.mxu0 %v5863
    %v6462 = vpop.f32.mrf.mxu0
    %v6463 = vadd.f32 %v6254, %v6462
    %6464 = vmatmul.f32.gmra.mxu0 %v5865
    %v6465 = vpop.f32.mrf.mxu0
    %v6466 = vadd.f32 %v6257, %v6465
    %6467 = vmatmul.f32.gmra.mxu0 %v5867
    %v6468 = vpop.f32.mrf.mxu0
    %v6469 = vadd.f32 %v6260, %v6468
    %6470 = vmatmul.f32.gmra.mxu0 %v5869
    %v6471 = vpop.f32.mrf.mxu0
    %v6472 = vadd.f32 %v6263, %v6471
    %6473 = vmatmul.f32.gmra.mxu0 %v5871
    %v6474 = vpop.f32.mrf.mxu0
    %v6475 = vadd.f32 %v6266, %v6474
    %6476 = vmatmul.f32.gmra.mxu0 %v5873
    %v6477 = vpop.f32.mrf.mxu0
    %v6478 = vadd.f32 %v6269, %v6477
    %6479 = vmatmul.f32.gmra.mxu0 %v5875
    %v6480 = vpop.f32.mrf.mxu0
    %v6481 = vadd.f32 %v6272, %v6480
    %6482 = vmatmul.f32.gmra.mxu0 %v5877
    %v6483 = vpop.f32.mrf.mxu0
    %v6484 = vadd.f32 %v6275, %v6483
    %6485 = vmatmul.f32.gmra.mxu0 %v5879
    %v6486 = vpop.f32.mrf.mxu0
    %v6487 = vadd.f32 %v6278, %v6486
    %6488 = vmatmul.f32.gmra.mxu0 %v5881
    %v6489 = vpop.f32.mrf.mxu0
    %v6490 = vadd.f32 %v6281, %v6489
    %6491 = vmatmul.f32.gmra.mxu0 %v5883
    %v6492 = vpop.f32.mrf.mxu0
    %v6493 = vadd.f32 %v6284, %v6492
    %6494 = vmatmul.f32.gmra.mxu0 %v5885
    %v6495 = vpop.f32.mrf.mxu0
    %v6496 = vadd.f32 %v6287, %v6495
    %6497 = vmatmul.f32.gmra.mxu0 %v5887
    %v6498 = vpop.f32.mrf.mxu0
    %v6499 = vadd.f32 %v6290, %v6498
    %6500 = vmatmul.f32.gmra.mxu0 %v5889
    %v6501 = vpop.f32.mrf.mxu0
    %v6502 = vadd.f32 %v6293, %v6501
    %6503 = vmatmul.f32.gmra.mxu0 %v5891
    %v6504 = vpop.f32.mrf.mxu0
    %v6505 = vadd.f32 %v6296, %v6504
    %6506 = vmatmul.f32.gmra.mxu0 %v5893
    %v6507 = vpop.f32.mrf.mxu0
    %v6508 = vadd.f32 %v6299, %v6507
    %6509 = vmatmul.f32.gmra.mxu0 %v5895
    %v6510 = vpop.f32.mrf.mxu0
    %v6511 = vadd.f32 %v6302, %v6510
    %6512 = vmatmul.f32.gmra.mxu0 %v5897
    %v6513 = vpop.f32.mrf.mxu0
    %v6514 = vadd.f32 %v6305, %v6513
    %6515 = vmatmul.f32.gmra.mxu0 %v5899
    %v6516 = vpop.f32.mrf.mxu0
    %v6517 = vadd.f32 %v6308, %v6516
    %6518 = vmatmul.f32.gmra.mxu0 %v5901
    %v6519 = vpop.f32.mrf.mxu0
    %v6520 = vadd.f32 %v6311, %v6519
    %6521 = vmatmul.f32.gmra.mxu0 %v5903
    %v6522 = vpop.f32.mrf.mxu0
    %v6523 = vadd.f32 %v6314, %v6522
    %6524 = vmatmul.f32.gmra.mxu0 %v5905
    %v6525 = vpop.f32.mrf.mxu0
    %v6526 = vadd.f32 %v6317, %v6525
    %6527 = vmatmul.f32.gmra.mxu0 %v5907
    %v6528 = vpop.f32.mrf.mxu0
    %v6529 = vadd.f32 %v6320, %v6528
    %6530 = vmatmul.f32.gmra.mxu0 %v5909
    %v6531 = vpop.f32.mrf.mxu0
    %v6532 = vadd.f32 %v6323, %v6531
    %6533 = vmatmul.f32.gmra.mxu0 %v5911
    %v6534 = vpop.f32.mrf.mxu0
    %v6535 = vadd.f32 %v6326, %v6534
    %6536 = vmatmul.f32.gmra.mxu0 %v5913
    %v6537 = vpop.f32.mrf.mxu0
    %v6538 = vadd.f32 %v6329, %v6537
    %6539 = vmatmul.f32.gmra.mxu0 %v5915
    %v6540 = vpop.f32.mrf.mxu0
    %v6541 = vadd.f32 %v6332, %v6540
    %6542 = vmatmul.f32.gmra.mxu0 %v5917
    %v6543 = vpop.f32.mrf.mxu0
    %v6544 = vadd.f32 %v6335, %v6543
    %6545 = vdwg.mxu0
    %v6546 = vmax.f32 %v6355, 0.0
    %v6547 = vmax.f32 %v6358, 0.0
    %v6548 = vmax.f32 %v6361, 0.0
    %v6549 = vmax.f32 %v6364, 0.0
    %v6550 = vmax.f32 %v6367, 0.0
    %v6551 = vmax.f32 %v6370, 0.0
    %v6552 = vmax.f32 %v6373, 0.0
    %v6553 = vmax.f32 %v6376, 0.0
    %v6554 = vmax.f32 %v6379, 0.0
    %v6555 = vmax.f32 %v6382, 0.0
    %v6556 = vmax.f32 %v6385, 0.0
    %v6557 = vmax.f32 %v6388, 0.0
    %v6558 = vmax.f32 %v6391, 0.0
    %v6559 = vmax.f32 %v6394, 0.0
    %v6560 = vmax.f32 %v6397, 0.0
    %v6561 = vmax.f32 %v6400, 0.0
    %v6562 = vmax.f32 %v6403, 0.0
    %v6563 = vmax.f32 %v6406, 0.0
    %v6564 = vmax.f32 %v6409, 0.0
    %v6565 = vmax.f32 %v6412, 0.0
    %v6566 = vmax.f32 %v6415, 0.0
    %v6567 = vmax.f32 %v6418, 0.0
    %v6568 = vmax.f32 %v6421, 0.0
    %v6569 = vmax.f32 %v6424, 0.0
    %v6570 = vmax.f32 %v6427, 0.0
    %v6571 = vmax.f32 %v6430, 0.0
    %v6572 = vmax.f32 %v6433, 0.0
    %v6573 = vmax.f32 %v6436, 0.0
    %v6574 = vmax.f32 %v6439, 0.0
    %v6575 = vmax.f32 %v6442, 0.0
    %v6576 = vmax.f32 %v6445, 0.0
    %v6577 = vmax.f32 %v6448, 0.0
    %v6578 = vmax.f32 %v6451, 0.0
    %v6579 = vmax.f32 %v6454, 0.0
    %v6580 = vmax.f32 %v6457, 0.0
    %v6581 = vmax.f32 %v6460, 0.0
    %v6582 = vmax.f32 %v6463, 0.0
    %v6583 = vmax.f32 %v6466, 0.0
    %v6584 = vmax.f32 %v6469, 0.0
    %v6585 = vmax.f32 %v6472, 0.0
    %v6586 = vmax.f32 %v6475, 0.0
    %v6587 = vmax.f32 %v6478, 0.0
    %v6588 = vmax.f32 %v6481, 0.0
    %v6589 = vmax.f32 %v6484, 0.0
    %v6590 = vmax.f32 %v6487, 0.0
    %v6591 = vmax.f32 %v6490, 0.0
    %v6592 = vmax.f32 %v6493, 0.0
    %v6593 = vmax.f32 %v6496, 0.0
    %v6594 = vmax.f32 %v6499, 0.0
    %v6595 = vmax.f32 %v6502, 0.0
    %v6596 = vmax.f32 %v6505, 0.0
    %v6597 = vmax.f32 %v6508, 0.0
    %v6598 = vmax.f32 %v6511, 0.0
    %v6599 = vmax.f32 %v6514, 0.0
    %v6600 = vmax.f32 %v6517, 0.0
    %v6601 = vmax.f32 %v6520, 0.0
    %v6602 = vmax.f32 %v6523, 0.0
    %v6603 = vmax.f32 %v6526, 0.0
    %v6604 = vmax.f32 %v6529, 0.0
    %v6605 = vmax.f32 %v6532, 0.0
    %v6606 = vmax.f32 %v6535, 0.0
    %v6607 = vmax.f32 %v6538, 0.0
    %v6608 = vmax.f32 %v6541, 0.0
    %v6609 = vmax.f32 %v6544, 0.0
    %v6610 = vpack.c.bf16 %v6546, %v6546
    %v6611 = vpack.c.bf16 %v6547, %v6547
    %v6612 = vpack.c.bf16 %v6548, %v6548
    %v6613 = vpack.c.bf16 %v6549, %v6549
    %v6614 = vpack.c.bf16 %v6550, %v6550
    %v6615 = vpack.c.bf16 %v6551, %v6551
    %v6616 = vpack.c.bf16 %v6552, %v6552
    %v6617 = vpack.c.bf16 %v6553, %v6553
    %v6618 = vpack.c.bf16 %v6554, %v6554
    %v6619 = vpack.c.bf16 %v6555, %v6555
    %v6620 = vpack.c.bf16 %v6556, %v6556
    %v6621 = vpack.c.bf16 %v6557, %v6557
    %v6622 = vpack.c.bf16 %v6558, %v6558
    %v6623 = vpack.c.bf16 %v6559, %v6559
    %v6624 = vpack.c.bf16 %v6560, %v6560
    %v6625 = vpack.c.bf16 %v6561, %v6561
    %v6626 = vpack.c.bf16 %v6562, %v6562
    %v6627 = vpack.c.bf16 %v6563, %v6563
    %v6628 = vpack.c.bf16 %v6564, %v6564
    %v6629 = vpack.c.bf16 %v6565, %v6565
    %v6630 = vpack.c.bf16 %v6566, %v6566
    %v6631 = vpack.c.bf16 %v6567, %v6567
    %v6632 = vpack.c.bf16 %v6568, %v6568
    %v6633 = vpack.c.bf16 %v6569, %v6569
    %v6634 = vpack.c.bf16 %v6570, %v6570
    %v6635 = vpack.c.bf16 %v6571, %v6571
    %v6636 = vpack.c.bf16 %v6572, %v6572
    %v6637 = vpack.c.bf16 %v6573, %v6573
    %v6638 = vpack.c.bf16 %v6574, %v6574
    %v6639 = vpack.c.bf16 %v6575, %v6575
    %v6640 = vpack.c.bf16 %v6576, %v6576
    %v6641 = vpack.c.bf16 %v6577, %v6577
    %v6642 = vpack.c.bf16 %v6578, %v6578
    %v6643 = vpack.c.bf16 %v6579, %v6579
    %v6644 = vpack.c.bf16 %v6580, %v6580
    %v6645 = vpack.c.bf16 %v6581, %v6581
    %v6646 = vpack.c.bf16 %v6582, %v6582
    %v6647 = vpack.c.bf16 %v6583, %v6583
    %v6648 = vpack.c.bf16 %v6584, %v6584
    %v6649 = vpack.c.bf16 %v6585, %v6585
    %v6650 = vpack.c.bf16 %v6586, %v6586
    %v6651 = vpack.c.bf16 %v6587, %v6587
    %v6652 = vpack.c.bf16 %v6588, %v6588
    %v6653 = vpack.c.bf16 %v6589, %v6589
    %v6654 = vpack.c.bf16 %v6590, %v6590
    %v6655 = vpack.c.bf16 %v6591, %v6591
    %v6656 = vpack.c.bf16 %v6592, %v6592
    %v6657 = vpack.c.bf16 %v6593, %v6593
    %v6658 = vpack.c.bf16 %v6594, %v6594
    %v6659 = vpack.c.bf16 %v6595, %v6595
    %v6660 = vpack.c.bf16 %v6596, %v6596
    %v6661 = vpack.c.bf16 %v6597, %v6597
    %v6662 = vpack.c.bf16 %v6598, %v6598
    %v6663 = vpack.c.bf16 %v6599, %v6599
    %v6664 = vpack.c.bf16 %v6600, %v6600
    %v6665 = vpack.c.bf16 %v6601, %v6601
    %v6666 = vpack.c.bf16 %v6602, %v6602
    %v6667 = vpack.c.bf16 %v6603, %v6603
    %v6668 = vpack.c.bf16 %v6604, %v6604
    %v6669 = vpack.c.bf16 %v6605, %v6605
    %v6670 = vpack.c.bf16 %v6606, %v6606
    %v6671 = vpack.c.bf16 %v6607, %v6607
    %v6672 = vpack.c.bf16 %v6608, %v6608
    %v6673 = vpack.c.bf16 %v6609, %v6609
    %vm6674 = vcmask 519168
    %6675 = vst.msk [vmem:[%s5] sm:$0xf] %vm6674, %v6610
    %6676 = vst.msk [vmem:[%s5 + $0x4] sm:$0xf] %vm6674, %v6611
    %6677 = vst.msk [vmem:[%s5 + $0x8] sm:$0xf] %vm6674, %v6612
    %6678 = vst.msk [vmem:[%s5 + $0xc] sm:$0xf] %vm6674, %v6613
    %6679 = vst.msk [vmem:[%s5 + $0x10] sm:$0xf] %vm6674, %v6614
    %6680 = vst.msk [vmem:[%s5 + $0x14] sm:$0xf] %vm6674, %v6615
    %6681 = vst.msk [vmem:[%s5 + $0x18] sm:$0xf] %vm6674, %v6616
    %6682 = vst.msk [vmem:[%s5 + $0x1c] sm:$0xf] %vm6674, %v6617
    %6683 = vst.msk [vmem:[%s5 + $0x20] sm:$0xf] %vm6674, %v6618
    %6684 = vst.msk [vmem:[%s5 + $0x24] sm:$0xf] %vm6674, %v6619
    %6685 = vst.msk [vmem:[%s5 + $0x28] sm:$0xf] %vm6674, %v6620
    %6686 = vst.msk [vmem:[%s5 + $0x2c] sm:$0xf] %vm6674, %v6621
    %6687 = vst.msk [vmem:[%s5 + $0x30] sm:$0xf] %vm6674, %v6622
    %6688 = vst.msk [vmem:[%s5 + $0x34] sm:$0xf] %vm6674, %v6623
    %6689 = vst.msk [vmem:[%s5 + $0x38] sm:$0xf] %vm6674, %v6624
    %6690 = vst.msk [vmem:[%s5 + $0x3c] sm:$0xf] %vm6674, %v6625
    %6691 = vst.msk [vmem:[%s5 + $0x40] sm:$0xf] %vm6674, %v6626
    %6692 = vst.msk [vmem:[%s5 + $0x44] sm:$0xf] %vm6674, %v6627
    %6693 = vst.msk [vmem:[%s5 + $0x48] sm:$0xf] %vm6674, %v6628
    %6694 = vst.msk [vmem:[%s5 + $0x4c] sm:$0xf] %vm6674, %v6629
    %6695 = vst.msk [vmem:[%s5 + $0x50] sm:$0xf] %vm6674, %v6630
    %6696 = vst.msk [vmem:[%s5 + $0x54] sm:$0xf] %vm6674, %v6631
    %6697 = vst.msk [vmem:[%s5 + $0x58] sm:$0xf] %vm6674, %v6632
    %6698 = vst.msk [vmem:[%s5 + $0x5c] sm:$0xf] %vm6674, %v6633
    %6699 = vst.msk [vmem:[%s5 + $0x60] sm:$0xf] %vm6674, %v6634
    %6700 = vst.msk [vmem:[%s5 + $0x64] sm:$0xf] %vm6674, %v6635
    %6701 = vst.msk [vmem:[%s5 + $0x68] sm:$0xf] %vm6674, %v6636
    %6702 = vst.msk [vmem:[%s5 + $0x6c] sm:$0xf] %vm6674, %v6637
    %6703 = vst.msk [vmem:[%s5 + $0x70] sm:$0xf] %vm6674, %v6638
    %6704 = vst.msk [vmem:[%s5 + $0x74] sm:$0xf] %vm6674, %v6639
    %6705 = vst.msk [vmem:[%s5 + $0x78] sm:$0xf] %vm6674, %v6640
    %6706 = vst.msk [vmem:[%s5 + $0x7c] sm:$0xf] %vm6674, %v6641
    %6707 = vst.msk [vmem:[%s5 + $0x80] sm:$0xf] %vm6674, %v6642
    %6708 = vst.msk [vmem:[%s5 + $0x84] sm:$0xf] %vm6674, %v6643
    %6709 = vst.msk [vmem:[%s5 + $0x88] sm:$0xf] %vm6674, %v6644
    %6710 = vst.msk [vmem:[%s5 + $0x8c] sm:$0xf] %vm6674, %v6645
    %6711 = vst.msk [vmem:[%s5 + $0x90] sm:$0xf] %vm6674, %v6646
    %6712 = vst.msk [vmem:[%s5 + $0x94] sm:$0xf] %vm6674, %v6647
    %6713 = vst.msk [vmem:[%s5 + $0x98] sm:$0xf] %vm6674, %v6648
    %6714 = vst.msk [vmem:[%s5 + $0x9c] sm:$0xf] %vm6674, %v6649
    %6715 = vst.msk [vmem:[%s5 + $0xa0] sm:$0xf] %vm6674, %v6650
    %6716 = vst.msk [vmem:[%s5 + $0xa4] sm:$0xf] %vm6674, %v6651
    %6717 = vst.msk [vmem:[%s5 + $0xa8] sm:$0xf] %vm6674, %v6652
    %6718 = vst.msk [vmem:[%s5 + $0xac] sm:$0xf] %vm6674, %v6653
    %6719 = vst.msk [vmem:[%s5 + $0xb0] sm:$0xf] %vm6674, %v6654
    %6720 = vst.msk [vmem:[%s5 + $0xb4] sm:$0xf] %vm6674, %v6655
    %6721 = vst.msk [vmem:[%s5 + $0xb8] sm:$0xf] %vm6674, %v6656
    %6722 = vst.msk [vmem:[%s5 + $0xbc] sm:$0xf] %vm6674, %v6657
    %6723 = vst.msk [vmem:[%s5 + $0xc0] sm:$0xf] %vm6674, %v6658
    %6724 = vst.msk [vmem:[%s5 + $0xc4] sm:$0xf] %vm6674, %v6659
    %6725 = vst.msk [vmem:[%s5 + $0xc8] sm:$0xf] %vm6674, %v6660
    %6726 = vst.msk [vmem:[%s5 + $0xcc] sm:$0xf] %vm6674, %v6661
    %6727 = vst.msk [vmem:[%s5 + $0xd0] sm:$0xf] %vm6674, %v6662
    %6728 = vst.msk [vmem:[%s5 + $0xd4] sm:$0xf] %vm6674, %v6663
    %6729 = vst.msk [vmem:[%s5 + $0xd8] sm:$0xf] %vm6674, %v6664
    %6730 = vst.msk [vmem:[%s5 + $0xdc] sm:$0xf] %vm6674, %v6665
    %6731 = vst.msk [vmem:[%s5 + $0xe0] sm:$0xf] %vm6674, %v6666
    %6732 = vst.msk [vmem:[%s5 + $0xe4] sm:$0xf] %vm6674, %v6667
    %6733 = vst.msk [vmem:[%s5 + $0xe8] sm:$0xf] %vm6674, %v6668
    %6734 = vst.msk [vmem:[%s5 + $0xec] sm:$0xf] %vm6674, %v6669
    %6735 = vst.msk [vmem:[%s5 + $0xf0] sm:$0xf] %vm6674, %v6670
    %6736 = vst.msk [vmem:[%s5 + $0xf4] sm:$0xf] %vm6674, %v6671
    %6737 = vst.msk [vmem:[%s5 + $0xf8] sm:$0xf] %vm6674, %v6672
    %6738 = vst.msk [vmem:[%s5 + $0xfc] sm:$0xf] %vm6674, %v6673
    // Predicated region
    $region30: #{actor_critic_forward.2} parent=1 // pred_check
      _
    $region31: #{actor_critic_forward.2} parent=1 // pred_check_branch
      %6740 = sbr.rel (0) target = $region33
    $region32: #{actor_critic_forward.2} parent=1 // pred_region
      _
    $region33: #{actor_critic_forward.2} parent=1 // pred_fallthru
      _
    // Predicated region
    $region34: #{actor_critic_forward.2} parent=1 // pred_check
      _
    $region35: #{actor_critic_forward.2} parent=1 // pred_check_branch
      %6742 = sbr.rel (0) target = $region37
    $region36: #{actor_critic_forward.2} parent=1 // pred_region
      _
    $region37: #{actor_critic_forward.2} parent=1 // pred_fallthru
      _
    %6743 = vsyncpa [#allocation5], 1
    %6744 = vsyncpa [#allocation7], 1

</llo_original>
